<compile_context>
chip_gen: v5e
topology: v5e:2x2
jax: 0.10.0
libtpu: 0.0.40
codegen_flags: <defaults>
</compile_context>

<pallas_src>
import functools
import math

import jax
import jax.numpy as jnp
from jax import lax
from jax.experimental import pallas as pl
from jax.experimental.pallas import tpu as pltpu

# ----------------------------- model hyper-parameters -----------------------------
HIDDEN_DIM = 32
NUM_HEADS = 4
NUM_LAYERS = 2
HEAD_DIM = HIDDEN_DIM // NUM_HEADS
NUM_GROUPS = 40          # interaction groups ("batch" ids) in the demo
GROUP_SIZE = 8           # genes per group (>= 2 so attention is applied)
GROUPS_PER_TILE = 20     # divides NUM_GROUPS -> 2 tiles of M = 160 rows, no padding


# ----------------------------------- kernel ---------------------------------------
def _gene_interaction_kernel(x_ref, fw_ref, fb_ref, ob_ref, pw_ref, mask_ref, pool_ref,
                             betas_ref, pb_ref, out_ref, *,
                             hidden, num_heads, num_layers, group_size, groups_per_tile):
    head_dim = hidden // num_heads
    g, gs = groups_per_tile, group_size
    m = g * gs
    wcols = (3 + num_heads) * hidden
    scale = 1.0 / math.sqrt(head_dim)

    x = x_ref[...]                       # (M, H) f32
    neg = mask_ref[...]                  # (gs, gs) additive no-self mask: 0 / -1e30 (f32)

    dyn = x
    static = None
    for i in range(num_layers):          # static unroll (num_layers = 2)
        # fused projection: columns = [static | Q | K | (V @ Wo) head0..head3] -> (M, 224)
        # bf16 MXU operands, f32 accumulation.
        proj = jnp.dot(dyn.astype(jnp.bfloat16), fw_ref[i],
                       preferred_element_type=jnp.float32) + fb_ref[i]
        if i == 0:
            static = jnp.maximum(proj[:, :hidden], 0.0)     # ReLU(x @ Ws + bs)

        # groups are sublane-tile aligned (gs = 8), so this reshape is layout-trivial
        proj3 = proj.reshape(g, gs, wcols)                  # (G, gs, 224)
        acc3 = jnp.zeros((g, gs, hidden), jnp.float32)
        for hd in range(num_heads):                          # static unroll over 4 heads
            q3 = proj3[..., hidden + hd * head_dim: hidden + (hd + 1) * head_dim]
            k3 = proj3[..., 2 * hidden + hd * head_dim: 2 * hidden + (hd + 1) * head_dim]
            vo3 = proj3[..., (3 + hd) * hidden: (4 + hd) * hidden]   # = v_h @ Wo[h] (+ bias)
            # compact per-group scores (G, gs, gs) -- exp count = M * gs, not M * M
            s = jnp.einsum('gqd,gkd->gqk',
                           q3.astype(jnp.bfloat16), k3.astype(jnp.bfloat16),
                           preferred_element_type=jnp.float32) * scale + neg[None]
            p = jnp.exp(s - jnp.max(s, axis=-1, keepdims=True))      # f32 softmax
            attn = p * pl.reciprocal(jnp.sum(p, axis=-1, keepdims=True), approx=True)
            acc3 = acc3 + jnp.einsum('gqk,gkc->gqc',
                                     attn.astype(jnp.bfloat16), vo3.astype(jnp.bfloat16),
                                     preferred_element_type=jnp.float32)

        dyn = dyn + betas_ref[i] * (acc3.reshape(m, hidden) + ob_ref[i])   # ReZero (dropout=id)

    # prediction head: VPU multiply by the broadcast prediction row (no N=1 MXU matmul),
    # per-group mean via one pooling matmul, then a lane-dense (1, G) write.
    diff = dyn - static
    weighted = diff * diff * pw_ref[...]                                   # (M, H)
    grp = jnp.dot(pool_ref[...], weighted, preferred_element_type=jnp.float32)  # (G, H)
    scores_row = jnp.sum(grp.T, axis=0, keepdims=True) + pb_ref[0]         # (1, G) lane-dense
    out_ref[...] = scores_row.reshape(1, 1, g)


# ----------------------------------- wrapper ---------------------------------------
@functools.partial(jax.jit,
                   static_argnames=("num_groups", "group_size", "groups_per_tile"))
def gene_interaction_forward(gene_embeddings, params, *, num_groups, group_size,
                             groups_per_tile=GROUPS_PER_TILE):
    """gene_embeddings: [num_groups * group_size, H] -> interaction scores [num_groups, 1]."""
    h = gene_embeddings.shape[-1]
    num_layers = params["att_w"].shape[0]
    num_heads = NUM_HEADS
    head_dim = h // num_heads

    num_tiles = -(-num_groups // groups_per_tile)
    m_tile = groups_per_tile * group_size
    assert m_tile % 8 == 0, "rows per tile must be a multiple of 8"
    total = num_groups * group_size
    padded_total = num_tiles * m_tile

    x = gene_embeddings.astype(jnp.float32)
    if padded_total != total:
        x = jnp.pad(x, ((0, padded_total - total), (0, 0)))   # padded groups discarded later

    # ---- fuse weights (tiny einsums/concats, traced under jit) ----
    att_w, att_b = params["att_w"], params["att_b"]           # (L,4,h,h), (L,4,1,h)
    wq, wk, wv, wo = att_w[:, 0], att_w[:, 1], att_w[:, 2], att_w[:, 3]
    bq, bk, bv, bo = att_b[:, 0], att_b[:, 1], att_b[:, 2], att_b[:, 3]
    wv4 = wv.reshape(num_layers, h, num_heads, head_dim)
    wo4 = wo.reshape(num_layers, num_heads, head_dim, h)
    wvo = jnp.einsum("lihd,lhdo->liho", wv4, wo4,
                     precision=lax.Precision.HIGHEST).reshape(num_layers, h, num_heads * h)
    bv4 = bv.reshape(num_layers, num_heads, head_dim)
    bvo = jnp.einsum("lhd,lhdo->lho", bv4, wo4,
                     precision=lax.Precision.HIGHEST).reshape(num_layers, 1, num_heads * h)
    static_w = jnp.broadcast_to(params["static_w"][None], (num_layers, h, h))
    static_b = jnp.broadcast_to(params["static_b"][None], (num_layers, 1, h))
    # fused weights in bf16 (MXU-native); biases / residual math stay f32
    fused_w = jnp.concatenate([static_w, wq, wk, wvo], axis=-1).astype(jnp.bfloat16)  # (L,32,224)
    fused_b = jnp.concatenate([static_b, bq, bk, bvo], axis=-1)                       # (L,1,224)
    pred_row = params["pred_w"].T                                                     # (1, h)

    # grid-invariant small matrices hoisted out of the kernel (constant index maps -> resident)
    self_mask = jnp.where(jnp.eye(group_size, dtype=bool), -1e30, 0.0).astype(jnp.float32)
    gidx = jnp.arange(groups_per_tile, dtype=jnp.int32)[:, None]
    ridx = jnp.arange(m_tile, dtype=jnp.int32)[None, :]
    pool = jnp.where(ridx // group_size == gidx,
                     1.0 / group_size, 0.0).astype(jnp.float32)          # (G, M) mean-pool

    wcols = (3 + num_heads) * h
    kernel = functools.partial(
        _gene_interaction_kernel, hidden=h, num_heads=num_heads,
        num_layers=num_layers, group_size=group_size, groups_per_tile=groups_per_tile)

    out = pl.pallas_call(
        kernel,
        out_shape=jax.ShapeDtypeStruct((num_tiles, 1, groups_per_tile), jnp.float32),
        grid=(num_tiles,),
        in_specs=[
            pl.BlockSpec((m_tile, h), lambda t: (t, 0)),                   # x tile (160, 32)
            pl.BlockSpec((num_layers, h, wcols), lambda t: (0, 0, 0)),     # fused weights (bf16)
            pl.BlockSpec((num_layers, 1, wcols), lambda t: (0, 0, 0)),     # fused biases
            pl.BlockSpec((num_layers, 1, h), lambda t: (0, 0, 0)),         # out_proj bias
            pl.BlockSpec((1, h), lambda t: (0, 0)),                        # prediction row
            pl.BlockSpec((group_size, group_size), lambda t: (0, 0)),      # no-self mask
            pl.BlockSpec((groups_per_tile, m_tile), lambda t: (0, 0)),     # mean-pool matrix
            pl.BlockSpec(memory_space=pltpu.MemorySpace.SMEM),             # betas
            pl.BlockSpec(memory_space=pltpu.MemorySpace.SMEM),             # prediction bias
        ],
        out_specs=pl.BlockSpec((1, 1, groups_per_tile), lambda t: (t, 0, 0)),
        compiler_params=pltpu.CompilerParams(
            dimension_semantics=("parallel",)),   # independent tiles -> shards over v7x TCs
    )(x, fused_w, fused_b, bo, pred_row, self_mask, pool,
      params["betas"], params["pred_b"])

    return out.reshape(num_tiles * groups_per_tile, 1)[:num_groups]


# -------------------------- deterministic parameter init ---------------------------
def init_params(key, hidden_dim=HIDDEN_DIM, num_layers=NUM_LAYERS):
    ks = jax.random.split(key, 5)
    s = 1.0 / math.sqrt(hidden_dim)
    xav = math.sqrt(6.0 / (hidden_dim + 1))
    return {
        # stored pre-transposed: [in, out]
        "static_w": jax.random.uniform(ks[0], (hidden_dim, hidden_dim), jnp.float32, -s, s),
        "static_b": jax.random.uniform(ks[1], (1, hidden_dim), jnp.float32, -s, s),
        "att_w": jax.random.uniform(ks[2], (num_layers, 4, hidden_dim, hidden_dim),
                                    jnp.float32, -s, s),
        "att_b": jax.random.uniform(ks[3], (num_layers, 4, 1, hidden_dim),
                                    jnp.float32, -s, s),
        "betas": jnp.full((num_layers,), 0.01, jnp.float32),      # nn.init.constant_(beta, 0.01)
        "pred_w": jax.random.uniform(ks[4], (hidden_dim, 1), jnp.float32, -xav, xav),
        "pred_b": jnp.zeros((1,), jnp.float32),
    }


# --------------------------- pure-JAX reference (checking) --------------------------
def reference_forward(gene_embeddings, params, num_groups, group_size):
    h = gene_embeddings.shape[-1]
    x = gene_embeddings.reshape(num_groups, group_size, h)
    static = jax.nn.relu(x @ params["static_w"] + params["static_b"][0])
    dyn = x
    mask = jnp.eye(group_size, dtype=bool)[None, None]
    for i in range(NUM_LAYERS):
        wq, wk, wv, wo = (params["att_w"][i, j] for j in range(4))
        bq, bk, bv, bo = (params["att_b"][i, j, 0] for j in range(4))
        q = (dyn @ wq + bq).reshape(num_groups, group_size, NUM_HEADS, HEAD_DIM)
        k = (dyn @ wk + bk).reshape(num_groups, group_size, NUM_HEADS, HEAD_DIM)
        v = (dyn @ wv + bv).reshape(num_groups, group_size, NUM_HEADS, HEAD_DIM)
        s = jnp.einsum("bqhd,bkhd->bhqk", q, k) / math.sqrt(HEAD_DIM)
        s = jnp.where(mask, -jnp.inf, s)
        attn = jnp.nan_to_num(jax.nn.softmax(s, axis=-1))
        o = jnp.einsum("bhqk,bkhd->bqhd", attn, v).reshape(num_groups, group_size, h)
        o = o @ wo + bo
        dyn = dyn + params["betas"][i] * o
    diff_sq = (dyn - static) ** 2
    gene_scores = (diff_sq @ params["pred_w"])[..., 0] + params["pred_b"][0]
    return gene_scores.mean(axis=-1, keepdims=True)


# ------------------------------------- main -----------------------------------------
if __name__ == "__main__":
    key = jax.random.PRNGKey(0)
    k_x, k_p = jax.random.split(key)
    total_genes = NUM_GROUPS * GROUP_SIZE
    gene_embeddings = jax.random.normal(k_x, (total_genes, HIDDEN_DIM), jnp.float32)
    # contiguous equal-size group assignment (sorted batch vector), documented for clarity
    batch = jnp.repeat(jnp.arange(NUM_GROUPS, dtype=jnp.int32), GROUP_SIZE)  # noqa: F841
    params = init_params(k_p)

    scores = gene_interaction_forward(gene_embeddings, params,
                                      num_groups=NUM_GROUPS, group_size=GROUP_SIZE,
                                      groups_per_tile=GROUPS_PER_TILE)
    scores = jax.block_until_ready(scores)

    ref = reference_forward(gene_embeddings, params, NUM_GROUPS, GROUP_SIZE)
    # tolerance covers bf16 MXU operands (f32 accumulation) + approx softmax reciprocal
    # vs the default-precision f32 XLA reference
    assert scores.shape == (NUM_GROUPS, 1)
    assert jnp.allclose(scores, ref, rtol=2e-2, atol=2e-2), (scores, ref)

    print("KERNEL_OK")
</pallas_src>

<mosaic_0001>
module attributes {stable_mosaic.version = 11 : i64} {
  func.func @_gene_interaction_kernel(%arg0: i32, %arg1: memref<160x32xf32, #tpu.memory_space<vmem>>, %arg2: memref<2x32x224xbf16, #tpu.memory_space<vmem>>, %arg3: memref<2x1x224xf32, #tpu.memory_space<vmem>>, %arg4: memref<2x1x32xf32, #tpu.memory_space<vmem>>, %arg5: memref<1x32xf32, #tpu.memory_space<vmem>>, %arg6: memref<8x8xf32, #tpu.memory_space<vmem>>, %arg7: memref<20x160xf32, #tpu.memory_space<vmem>>, %arg8: memref<2xf32, #tpu.memory_space<smem>>, %arg9: memref<1xf32, #tpu.memory_space<smem>>, %arg10: memref<1x1x20xf32, #tpu.memory_space<vmem>>) attributes {dimension_semantics = [#tpu.dimension_semantics<parallel>], iteration_bounds = array<i64: 2>, scalar_prefetch = 0 : i64, scratch_operands = 0 : i64, tpu.core_type = #tpu.core_type<tc>, window_params = [{transform_indices = @transform_0, window_bounds = array<i64: 160, 32>}, {pipeline_mode = #tpu.pipeline_mode<synchronous>, transform_indices = @transform_1, window_bounds = array<i64: 2, 32, 224>}, {pipeline_mode = #tpu.pipeline_mode<synchronous>, transform_indices = @transform_2, window_bounds = array<i64: 2, 1, 224>}, {pipeline_mode = #tpu.pipeline_mode<synchronous>, transform_indices = @transform_3, window_bounds = array<i64: 2, 1, 32>}, {pipeline_mode = #tpu.pipeline_mode<synchronous>, transform_indices = @transform_4, window_bounds = array<i64: 1, 32>}, {pipeline_mode = #tpu.pipeline_mode<synchronous>, transform_indices = @transform_5, window_bounds = array<i64: 8, 8>}, {pipeline_mode = #tpu.pipeline_mode<synchronous>, transform_indices = @transform_6, window_bounds = array<i64: 20, 160>}, {transform_indices = @transform_7, window_bounds = array<i64: 2>}, {transform_indices = @transform_8, window_bounds = array<i64: 1>}, {transform_indices = @transform_9, window_bounds = array<i64: 1, 1, 20>}]} {
    %c0 = arith.constant 0 : index
    %c0_0 = arith.constant 0 : index
    %0 = vector.load %arg1[%c0, %c0_0] : memref<160x32xf32, #tpu.memory_space<vmem>>, vector<160x32xf32>
    %c0_1 = arith.constant 0 : index
    %c0_2 = arith.constant 0 : index
    %1 = vector.load %arg6[%c0_1, %c0_2] : memref<8x8xf32, #tpu.memory_space<vmem>>, vector<8x8xf32>
    %2 = arith.truncf %0 : vector<160x32xf32> to vector<160x32xbf16>
    %c0_3 = arith.constant 0 : index
    %c0_4 = arith.constant 0 : index
    %c0_5 = arith.constant 0 : index
    %3 = vector.load %arg2[%c0_3, %c0_4, %c0_5] : memref<2x32x224xbf16, #tpu.memory_space<vmem>>, vector<1x32x224xbf16>
    %4 = vector.shape_cast %3 : vector<1x32x224xbf16> to vector<32x224xbf16>
    %cst = arith.constant dense<0.000000e+00> : vector<160x224xf32>
    %5 = tpu.matmul %2, %4, %cst {dimension_numbers = #tpu.dot_dimension_numbers<[1], [0], [0], [1], [0, 0, 1, 1], [], []>} : vector<160x32xbf16>, vector<32x224xbf16>, vector<160x224xf32> -> vector<160x224xf32>
    %c0_6 = arith.constant 0 : index
    %c0_7 = arith.constant 0 : index
    %c0_8 = arith.constant 0 : index
    %6 = vector.load %arg3[%c0_6, %c0_7, %c0_8] : memref<2x1x224xf32, #tpu.memory_space<vmem>>, vector<1x1x224xf32>
    %7 = vector.shape_cast %6 : vector<1x1x224xf32> to vector<1x224xf32>
    %8 = vector.broadcast %7 : vector<1x224xf32> to vector<160x224xf32>
    %9 = arith.addf %5, %8 : vector<160x224xf32>
    %10 = vector.extract_strided_slice %9 {offsets = [0, 0], sizes = [160, 32], strides = [1, 1]} : vector<160x224xf32> to vector<160x32xf32>
    %cst_9 = arith.constant 0.000000e+00 : f32
    %11 = vector.broadcast %cst_9 : f32 to vector<160x32xf32>
    %12 = arith.maximumf %10, %11 : vector<160x32xf32>
    %13 = vector.shape_cast %9 : vector<160x224xf32> to vector<20x8x224xf32>
    %cst_10 = arith.constant 0.000000e+00 : f32
    %14 = vector.broadcast %cst_10 : f32 to vector<20x8x32xf32>
    %15 = vector.extract_strided_slice %13 {offsets = [0, 0, 32], sizes = [20, 8, 8], strides = [1, 1, 1]} : vector<20x8x224xf32> to vector<20x8x8xf32>
    %16 = vector.extract_strided_slice %13 {offsets = [0, 0, 64], sizes = [20, 8, 8], strides = [1, 1, 1]} : vector<20x8x224xf32> to vector<20x8x8xf32>
    %17 = vector.extract_strided_slice %13 {offsets = [0, 0, 96], sizes = [20, 8, 32], strides = [1, 1, 1]} : vector<20x8x224xf32> to vector<20x8x32xf32>
    %18 = arith.truncf %15 : vector<20x8x8xf32> to vector<20x8x8xbf16>
    %19 = arith.truncf %16 : vector<20x8x8xf32> to vector<20x8x8xbf16>
    "tpu.trace_start"() <{level = 10 : i32, message = "gqd,gkd->gqk"}> : () -> ()
    %cst_11 = arith.constant dense<0.000000e+00> : vector<20x8x8xf32>
    %20 = tpu.matmul %18, %19, %cst_11 {dimension_numbers = #tpu.dot_dimension_numbers<[2], [2], [1], [1], [0, 0, 0, 1, 1, 1], [0], [0]>} : vector<20x8x8xbf16>, vector<20x8x8xbf16>, vector<20x8x8xf32> -> vector<20x8x8xf32>
    "tpu.trace_stop"() : () -> ()
    %cst_12 = arith.constant 0.353553385 : f32
    %21 = vector.broadcast %cst_12 : f32 to vector<20x8x8xf32>
    %22 = arith.mulf %20, %21 : vector<20x8x8xf32>
    %23 = vector.shape_cast %1 : vector<8x8xf32> to vector<1x8x8xf32>
    %24 = vector.broadcast %23 : vector<1x8x8xf32> to vector<20x8x8xf32>
    %25 = arith.addf %22, %24 : vector<20x8x8xf32>
    %cst_13 = arith.constant dense<0xFF800000> : vector<20x8xf32>
    %26 = vector.multi_reduction <maximumf>, %25, %cst_13 [2] : vector<20x8x8xf32> to vector<20x8xf32>
    %27 = vector.shape_cast %26 : vector<20x8xf32> to vector<20x8x1xf32>
    %28 = vector.broadcast %27 : vector<20x8x1xf32> to vector<20x8x8xf32>
    %29 = arith.subf %25, %28 : vector<20x8x8xf32>
    %30 = math.exp %29 : vector<20x8x8xf32>
    %cst_14 = arith.constant dense<0.000000e+00> : vector<20x8xf32>
    %31 = vector.multi_reduction <add>, %30, %cst_14 [2] : vector<20x8x8xf32> to vector<20x8xf32>
    %32 = vector.shape_cast %31 : vector<20x8xf32> to vector<20x8x1xf32>
    %33 = tpu.reciprocal %32 {approx = true} : vector<20x8x1xf32> -> vector<20x8x1xf32>
    %34 = vector.broadcast %33 : vector<20x8x1xf32> to vector<20x8x8xf32>
    %35 = arith.mulf %30, %34 : vector<20x8x8xf32>
    %36 = arith.truncf %35 : vector<20x8x8xf32> to vector<20x8x8xbf16>
    %37 = arith.truncf %17 : vector<20x8x32xf32> to vector<20x8x32xbf16>
    "tpu.trace_start"() <{level = 10 : i32, message = "gqk,gkc->gqc"}> : () -> ()
    %cst_15 = arith.constant dense<0.000000e+00> : vector<20x8x32xf32>
    %38 = tpu.matmul %36, %37, %cst_15 {dimension_numbers = #tpu.dot_dimension_numbers<[2], [1], [1], [2], [0, 0, 0, 1, 1, 2], [0], [0]>} : vector<20x8x8xbf16>, vector<20x8x32xbf16>, vector<20x8x32xf32> -> vector<20x8x32xf32>
    "tpu.trace_stop"() : () -> ()
    %39 = arith.addf %14, %38 : vector<20x8x32xf32>
    %40 = vector.extract_strided_slice %13 {offsets = [0, 0, 40], sizes = [20, 8, 8], strides = [1, 1, 1]} : vector<20x8x224xf32> to vector<20x8x8xf32>
    %41 = vector.extract_strided_slice %13 {offsets = [0, 0, 72], sizes = [20, 8, 8], strides = [1, 1, 1]} : vector<20x8x224xf32> to vector<20x8x8xf32>
    %42 = vector.extract_strided_slice %13 {offsets = [0, 0, 128], sizes = [20, 8, 32], strides = [1, 1, 1]} : vector<20x8x224xf32> to vector<20x8x32xf32>
    %43 = arith.truncf %40 : vector<20x8x8xf32> to vector<20x8x8xbf16>
    %44 = arith.truncf %41 : vector<20x8x8xf32> to vector<20x8x8xbf16>
    "tpu.trace_start"() <{level = 10 : i32, message = "gqd,gkd->gqk"}> : () -> ()
    %cst_16 = arith.constant dense<0.000000e+00> : vector<20x8x8xf32>
    %45 = tpu.matmul %43, %44, %cst_16 {dimension_numbers = #tpu.dot_dimension_numbers<[2], [2], [1], [1], [0, 0, 0, 1, 1, 1], [0], [0]>} : vector<20x8x8xbf16>, vector<20x8x8xbf16>, vector<20x8x8xf32> -> vector<20x8x8xf32>
    "tpu.trace_stop"() : () -> ()
    %cst_17 = arith.constant 0.353553385 : f32
    %46 = vector.broadcast %cst_17 : f32 to vector<20x8x8xf32>
    %47 = arith.mulf %45, %46 : vector<20x8x8xf32>
    %48 = vector.shape_cast %1 : vector<8x8xf32> to vector<1x8x8xf32>
    %49 = vector.broadcast %48 : vector<1x8x8xf32> to vector<20x8x8xf32>
    %50 = arith.addf %47, %49 : vector<20x8x8xf32>
    %cst_18 = arith.constant dense<0xFF800000> : vector<20x8xf32>
    %51 = vector.multi_reduction <maximumf>, %50, %cst_18 [2] : vector<20x8x8xf32> to vector<20x8xf32>
    %52 = vector.shape_cast %51 : vector<20x8xf32> to vector<20x8x1xf32>
    %53 = vector.broadcast %52 : vector<20x8x1xf32> to vector<20x8x8xf32>
    %54 = arith.subf %50, %53 : vector<20x8x8xf32>
    %55 = math.exp %54 : vector<20x8x8xf32>
    %cst_19 = arith.constant dense<0.000000e+00> : vector<20x8xf32>
    %56 = vector.multi_reduction <add>, %55, %cst_19 [2] : vector<20x8x8xf32> to vector<20x8xf32>
    %57 = vector.shape_cast %56 : vector<20x8xf32> to vector<20x8x1xf32>
    %58 = tpu.reciprocal %57 {approx = true} : vector<20x8x1xf32> -> vector<20x8x1xf32>
    %59 = vector.broadcast %58 : vector<20x8x1xf32> to vector<20x8x8xf32>
    %60 = arith.mulf %55, %59 : vector<20x8x8xf32>
    %61 = arith.truncf %60 : vector<20x8x8xf32> to vector<20x8x8xbf16>
    %62 = arith.truncf %42 : vector<20x8x32xf32> to vector<20x8x32xbf16>
    "tpu.trace_start"() <{level = 10 : i32, message = "gqk,gkc->gqc"}> : () -> ()
    %cst_20 = arith.constant dense<0.000000e+00> : vector<20x8x32xf32>
    %63 = tpu.matmul %61, %62, %cst_20 {dimension_numbers = #tpu.dot_dimension_numbers<[2], [1], [1], [2], [0, 0, 0, 1, 1, 2], [0], [0]>} : vector<20x8x8xbf16>, vector<20x8x32xbf16>, vector<20x8x32xf32> -> vector<20x8x32xf32>
    "tpu.trace_stop"() : () -> ()
    %64 = arith.addf %39, %63 : vector<20x8x32xf32>
    %65 = vector.extract_strided_slice %13 {offsets = [0, 0, 48], sizes = [20, 8, 8], strides = [1, 1, 1]} : vector<20x8x224xf32> to vector<20x8x8xf32>
    %66 = vector.extract_strided_slice %13 {offsets = [0, 0, 80], sizes = [20, 8, 8], strides = [1, 1, 1]} : vector<20x8x224xf32> to vector<20x8x8xf32>
    %67 = vector.extract_strided_slice %13 {offsets = [0, 0, 160], sizes = [20, 8, 32], strides = [1, 1, 1]} : vector<20x8x224xf32> to vector<20x8x32xf32>
    %68 = arith.truncf %65 : vector<20x8x8xf32> to vector<20x8x8xbf16>
    %69 = arith.truncf %66 : vector<20x8x8xf32> to vector<20x8x8xbf16>
    "tpu.trace_start"() <{level = 10 : i32, message = "gqd,gkd->gqk"}> : () -> ()
    %cst_21 = arith.constant dense<0.000000e+00> : vector<20x8x8xf32>
    %70 = tpu.matmul %68, %69, %cst_21 {dimension_numbers = #tpu.dot_dimension_numbers<[2], [2], [1], [1], [0, 0, 0, 1, 1, 1], [0], [0]>} : vector<20x8x8xbf16>, vector<20x8x8xbf16>, vector<20x8x8xf32> -> vector<20x8x8xf32>
    "tpu.trace_stop"() : () -> ()
    %cst_22 = arith.constant 0.353553385 : f32
    %71 = vector.broadcast %cst_22 : f32 to vector<20x8x8xf32>
    %72 = arith.mulf %70, %71 : vector<20x8x8xf32>
    %73 = vector.shape_cast %1 : vector<8x8xf32> to vector<1x8x8xf32>
    %74 = vector.broadcast %73 : vector<1x8x8xf32> to vector<20x8x8xf32>
    %75 = arith.addf %72, %74 : vector<20x8x8xf32>
    %cst_23 = arith.constant dense<0xFF800000> : vector<20x8xf32>
    %76 = vector.multi_reduction <maximumf>, %75, %cst_23 [2] : vector<20x8x8xf32> to vector<20x8xf32>
    %77 = vector.shape_cast %76 : vector<20x8xf32> to vector<20x8x1xf32>
    %78 = vector.broadcast %77 : vector<20x8x1xf32> to vector<20x8x8xf32>
    %79 = arith.subf %75, %78 : vector<20x8x8xf32>
    %80 = math.exp %79 : vector<20x8x8xf32>
    %cst_24 = arith.constant dense<0.000000e+00> : vector<20x8xf32>
    %81 = vector.multi_reduction <add>, %80, %cst_24 [2] : vector<20x8x8xf32> to vector<20x8xf32>
    %82 = vector.shape_cast %81 : vector<20x8xf32> to vector<20x8x1xf32>
    %83 = tpu.reciprocal %82 {approx = true} : vector<20x8x1xf32> -> vector<20x8x1xf32>
    %84 = vector.broadcast %83 : vector<20x8x1xf32> to vector<20x8x8xf32>
    %85 = arith.mulf %80, %84 : vector<20x8x8xf32>
    %86 = arith.truncf %85 : vector<20x8x8xf32> to vector<20x8x8xbf16>
    %87 = arith.truncf %67 : vector<20x8x32xf32> to vector<20x8x32xbf16>
    "tpu.trace_start"() <{level = 10 : i32, message = "gqk,gkc->gqc"}> : () -> ()
    %cst_25 = arith.constant dense<0.000000e+00> : vector<20x8x32xf32>
    %88 = tpu.matmul %86, %87, %cst_25 {dimension_numbers = #tpu.dot_dimension_numbers<[2], [1], [1], [2], [0, 0, 0, 1, 1, 2], [0], [0]>} : vector<20x8x8xbf16>, vector<20x8x32xbf16>, vector<20x8x32xf32> -> vector<20x8x32xf32>
    "tpu.trace_stop"() : () -> ()
    %89 = arith.addf %64, %88 : vector<20x8x32xf32>
    %90 = vector.extract_strided_slice %13 {offsets = [0, 0, 56], sizes = [20, 8, 8], strides = [1, 1, 1]} : vector<20x8x224xf32> to vector<20x8x8xf32>
    %91 = vector.extract_strided_slice %13 {offsets = [0, 0, 88], sizes = [20, 8, 8], strides = [1, 1, 1]} : vector<20x8x224xf32> to vector<20x8x8xf32>
    %92 = vector.extract_strided_slice %13 {offsets = [0, 0, 192], sizes = [20, 8, 32], strides = [1, 1, 1]} : vector<20x8x224xf32> to vector<20x8x32xf32>
    %93 = arith.truncf %90 : vector<20x8x8xf32> to vector<20x8x8xbf16>
    %94 = arith.truncf %91 : vector<20x8x8xf32> to vector<20x8x8xbf16>
    "tpu.trace_start"() <{level = 10 : i32, message = "gqd,gkd->gqk"}> : () -> ()
    %cst_26 = arith.constant dense<0.000000e+00> : vector<20x8x8xf32>
    %95 = tpu.matmul %93, %94, %cst_26 {dimension_numbers = #tpu.dot_dimension_numbers<[2], [2], [1], [1], [0, 0, 0, 1, 1, 1], [0], [0]>} : vector<20x8x8xbf16>, vector<20x8x8xbf16>, vector<20x8x8xf32> -> vector<20x8x8xf32>
    "tpu.trace_stop"() : () -> ()
    %cst_27 = arith.constant 0.353553385 : f32
    %96 = vector.broadcast %cst_27 : f32 to vector<20x8x8xf32>
    %97 = arith.mulf %95, %96 : vector<20x8x8xf32>
    %98 = vector.shape_cast %1 : vector<8x8xf32> to vector<1x8x8xf32>
    %99 = vector.broadcast %98 : vector<1x8x8xf32> to vector<20x8x8xf32>
    %100 = arith.addf %97, %99 : vector<20x8x8xf32>
    %cst_28 = arith.constant dense<0xFF800000> : vector<20x8xf32>
    %101 = vector.multi_reduction <maximumf>, %100, %cst_28 [2] : vector<20x8x8xf32> to vector<20x8xf32>
    %102 = vector.shape_cast %101 : vector<20x8xf32> to vector<20x8x1xf32>
    %103 = vector.broadcast %102 : vector<20x8x1xf32> to vector<20x8x8xf32>
    %104 = arith.subf %100, %103 : vector<20x8x8xf32>
    %105 = math.exp %104 : vector<20x8x8xf32>
    %cst_29 = arith.constant dense<0.000000e+00> : vector<20x8xf32>
    %106 = vector.multi_reduction <add>, %105, %cst_29 [2] : vector<20x8x8xf32> to vector<20x8xf32>
    %107 = vector.shape_cast %106 : vector<20x8xf32> to vector<20x8x1xf32>
    %108 = tpu.reciprocal %107 {approx = true} : vector<20x8x1xf32> -> vector<20x8x1xf32>
    %109 = vector.broadcast %108 : vector<20x8x1xf32> to vector<20x8x8xf32>
    %110 = arith.mulf %105, %109 : vector<20x8x8xf32>
    %111 = arith.truncf %110 : vector<20x8x8xf32> to vector<20x8x8xbf16>
    %112 = arith.truncf %92 : vector<20x8x32xf32> to vector<20x8x32xbf16>
    "tpu.trace_start"() <{level = 10 : i32, message = "gqk,gkc->gqc"}> : () -> ()
    %cst_30 = arith.constant dense<0.000000e+00> : vector<20x8x32xf32>
    %113 = tpu.matmul %111, %112, %cst_30 {dimension_numbers = #tpu.dot_dimension_numbers<[2], [1], [1], [2], [0, 0, 0, 1, 1, 2], [0], [0]>} : vector<20x8x8xbf16>, vector<20x8x32xbf16>, vector<20x8x32xf32> -> vector<20x8x32xf32>
    "tpu.trace_stop"() : () -> ()
    %114 = arith.addf %89, %113 : vector<20x8x32xf32>
    %c0_31 = arith.constant 0 : index
    %115 = memref.load %arg8[%c0_31] : memref<2xf32, #tpu.memory_space<smem>>
    %116 = vector.shape_cast %114 : vector<20x8x32xf32> to vector<160x32xf32>
    %c0_32 = arith.constant 0 : index
    %c0_33 = arith.constant 0 : index
    %c0_34 = arith.constant 0 : index
    %117 = vector.load %arg4[%c0_32, %c0_33, %c0_34] : memref<2x1x32xf32, #tpu.memory_space<vmem>>, vector<1x1x32xf32>
    %118 = vector.shape_cast %117 : vector<1x1x32xf32> to vector<1x32xf32>
    %119 = vector.broadcast %118 : vector<1x32xf32> to vector<160x32xf32>
    %120 = arith.addf %116, %119 : vector<160x32xf32>
    %121 = vector.broadcast %115 : f32 to vector<160x32xf32>
    %122 = arith.mulf %121, %120 : vector<160x32xf32>
    %123 = arith.addf %0, %122 : vector<160x32xf32>
    %124 = arith.truncf %123 : vector<160x32xf32> to vector<160x32xbf16>
    %c1 = arith.constant 1 : index
    %c0_35 = arith.constant 0 : index
    %c0_36 = arith.constant 0 : index
    %125 = vector.load %arg2[%c1, %c0_35, %c0_36] : memref<2x32x224xbf16, #tpu.memory_space<vmem>>, vector<1x32x224xbf16>
    %126 = vector.shape_cast %125 : vector<1x32x224xbf16> to vector<32x224xbf16>
    %cst_37 = arith.constant dense<0.000000e+00> : vector<160x224xf32>
    %127 = tpu.matmul %124, %126, %cst_37 {dimension_numbers = #tpu.dot_dimension_numbers<[1], [0], [0], [1], [0, 0, 1, 1], [], []>} : vector<160x32xbf16>, vector<32x224xbf16>, vector<160x224xf32> -> vector<160x224xf32>
    %c1_38 = arith.constant 1 : index
    %c0_39 = arith.constant 0 : index
    %c0_40 = arith.constant 0 : index
    %128 = vector.load %arg3[%c1_38, %c0_39, %c0_40] : memref<2x1x224xf32, #tpu.memory_space<vmem>>, vector<1x1x224xf32>
    %129 = vector.shape_cast %128 : vector<1x1x224xf32> to vector<1x224xf32>
    %130 = vector.broadcast %129 : vector<1x224xf32> to vector<160x224xf32>
    %131 = arith.addf %127, %130 : vector<160x224xf32>
    %132 = vector.shape_cast %131 : vector<160x224xf32> to vector<20x8x224xf32>
    %cst_41 = arith.constant 0.000000e+00 : f32
    %133 = vector.broadcast %cst_41 : f32 to vector<20x8x32xf32>
    %134 = vector.extract_strided_slice %132 {offsets = [0, 0, 32], sizes = [20, 8, 8], strides = [1, 1, 1]} : vector<20x8x224xf32> to vector<20x8x8xf32>
    %135 = vector.extract_strided_slice %132 {offsets = [0, 0, 64], sizes = [20, 8, 8], strides = [1, 1, 1]} : vector<20x8x224xf32> to vector<20x8x8xf32>
    %136 = vector.extract_strided_slice %132 {offsets = [0, 0, 96], sizes = [20, 8, 32], strides = [1, 1, 1]} : vector<20x8x224xf32> to vector<20x8x32xf32>
    %137 = arith.truncf %134 : vector<20x8x8xf32> to vector<20x8x8xbf16>
    %138 = arith.truncf %135 : vector<20x8x8xf32> to vector<20x8x8xbf16>
    "tpu.trace_start"() <{level = 10 : i32, message = "gqd,gkd->gqk"}> : () -> ()
    %cst_42 = arith.constant dense<0.000000e+00> : vector<20x8x8xf32>
    %139 = tpu.matmul %137, %138, %cst_42 {dimension_numbers = #tpu.dot_dimension_numbers<[2], [2], [1], [1], [0, 0, 0, 1, 1, 1], [0], [0]>} : vector<20x8x8xbf16>, vector<20x8x8xbf16>, vector<20x8x8xf32> -> vector<20x8x8xf32>
    "tpu.trace_stop"() : () -> ()
    %cst_43 = arith.constant 0.353553385 : f32
    %140 = vector.broadcast %cst_43 : f32 to vector<20x8x8xf32>
    %141 = arith.mulf %139, %140 : vector<20x8x8xf32>
    %142 = vector.shape_cast %1 : vector<8x8xf32> to vector<1x8x8xf32>
    %143 = vector.broadcast %142 : vector<1x8x8xf32> to vector<20x8x8xf32>
    %144 = arith.addf %141, %143 : vector<20x8x8xf32>
    %cst_44 = arith.constant dense<0xFF800000> : vector<20x8xf32>
    %145 = vector.multi_reduction <maximumf>, %144, %cst_44 [2] : vector<20x8x8xf32> to vector<20x8xf32>
    %146 = vector.shape_cast %145 : vector<20x8xf32> to vector<20x8x1xf32>
    %147 = vector.broadcast %146 : vector<20x8x1xf32> to vector<20x8x8xf32>
    %148 = arith.subf %144, %147 : vector<20x8x8xf32>
    %149 = math.exp %148 : vector<20x8x8xf32>
    %cst_45 = arith.constant dense<0.000000e+00> : vector<20x8xf32>
    %150 = vector.multi_reduction <add>, %149, %cst_45 [2] : vector<20x8x8xf32> to vector<20x8xf32>
    %151 = vector.shape_cast %150 : vector<20x8xf32> to vector<20x8x1xf32>
    %152 = tpu.reciprocal %151 {approx = true} : vector<20x8x1xf32> -> vector<20x8x1xf32>
    %153 = vector.broadcast %152 : vector<20x8x1xf32> to vector<20x8x8xf32>
    %154 = arith.mulf %149, %153 : vector<20x8x8xf32>
    %155 = arith.truncf %154 : vector<20x8x8xf32> to vector<20x8x8xbf16>
    %156 = arith.truncf %136 : vector<20x8x32xf32> to vector<20x8x32xbf16>
    "tpu.trace_start"() <{level = 10 : i32, message = "gqk,gkc->gqc"}> : () -> ()
    %cst_46 = arith.constant dense<0.000000e+00> : vector<20x8x32xf32>
    %157 = tpu.matmul %155, %156, %cst_46 {dimension_numbers = #tpu.dot_dimension_numbers<[2], [1], [1], [2], [0, 0, 0, 1, 1, 2], [0], [0]>} : vector<20x8x8xbf16>, vector<20x8x32xbf16>, vector<20x8x32xf32> -> vector<20x8x32xf32>
    "tpu.trace_stop"() : () -> ()
    %158 = arith.addf %133, %157 : vector<20x8x32xf32>
    %159 = vector.extract_strided_slice %132 {offsets = [0, 0, 40], sizes = [20, 8, 8], strides = [1, 1, 1]} : vector<20x8x224xf32> to vector<20x8x8xf32>
    %160 = vector.extract_strided_slice %132 {offsets = [0, 0, 72], sizes = [20, 8, 8], strides = [1, 1, 1]} : vector<20x8x224xf32> to vector<20x8x8xf32>
    %161 = vector.extract_strided_slice %132 {offsets = [0, 0, 128], sizes = [20, 8, 32], strides = [1, 1, 1]} : vector<20x8x224xf32> to vector<20x8x32xf32>
    %162 = arith.truncf %159 : vector<20x8x8xf32> to vector<20x8x8xbf16>
    %163 = arith.truncf %160 : vector<20x8x8xf32> to vector<20x8x8xbf16>
    "tpu.trace_start"() <{level = 10 : i32, message = "gqd,gkd->gqk"}> : () -> ()
    %cst_47 = arith.constant dense<0.000000e+00> : vector<20x8x8xf32>
    %164 = tpu.matmul %162, %163, %cst_47 {dimension_numbers = #tpu.dot_dimension_numbers<[2], [2], [1], [1], [0, 0, 0, 1, 1, 1], [0], [0]>} : vector<20x8x8xbf16>, vector<20x8x8xbf16>, vector<20x8x8xf32> -> vector<20x8x8xf32>
    "tpu.trace_stop"() : () -> ()
    %cst_48 = arith.constant 0.353553385 : f32
    %165 = vector.broadcast %cst_48 : f32 to vector<20x8x8xf32>
    %166 = arith.mulf %164, %165 : vector<20x8x8xf32>
    %167 = vector.shape_cast %1 : vector<8x8xf32> to vector<1x8x8xf32>
    %168 = vector.broadcast %167 : vector<1x8x8xf32> to vector<20x8x8xf32>
    %169 = arith.addf %166, %168 : vector<20x8x8xf32>
    %cst_49 = arith.constant dense<0xFF800000> : vector<20x8xf32>
    %170 = vector.multi_reduction <maximumf>, %169, %cst_49 [2] : vector<20x8x8xf32> to vector<20x8xf32>
    %171 = vector.shape_cast %170 : vector<20x8xf32> to vector<20x8x1xf32>
    %172 = vector.broadcast %171 : vector<20x8x1xf32> to vector<20x8x8xf32>
    %173 = arith.subf %169, %172 : vector<20x8x8xf32>
    %174 = math.exp %173 : vector<20x8x8xf32>
    %cst_50 = arith.constant dense<0.000000e+00> : vector<20x8xf32>
    %175 = vector.multi_reduction <add>, %174, %cst_50 [2] : vector<20x8x8xf32> to vector<20x8xf32>
    %176 = vector.shape_cast %175 : vector<20x8xf32> to vector<20x8x1xf32>
    %177 = tpu.reciprocal %176 {approx = true} : vector<20x8x1xf32> -> vector<20x8x1xf32>
    %178 = vector.broadcast %177 : vector<20x8x1xf32> to vector<20x8x8xf32>
    %179 = arith.mulf %174, %178 : vector<20x8x8xf32>
    %180 = arith.truncf %179 : vector<20x8x8xf32> to vector<20x8x8xbf16>
    %181 = arith.truncf %161 : vector<20x8x32xf32> to vector<20x8x32xbf16>
    "tpu.trace_start"() <{level = 10 : i32, message = "gqk,gkc->gqc"}> : () -> ()
    %cst_51 = arith.constant dense<0.000000e+00> : vector<20x8x32xf32>
    %182 = tpu.matmul %180, %181, %cst_51 {dimension_numbers = #tpu.dot_dimension_numbers<[2], [1], [1], [2], [0, 0, 0, 1, 1, 2], [0], [0]>} : vector<20x8x8xbf16>, vector<20x8x32xbf16>, vector<20x8x32xf32> -> vector<20x8x32xf32>
    "tpu.trace_stop"() : () -> ()
    %183 = arith.addf %158, %182 : vector<20x8x32xf32>
    %184 = vector.extract_strided_slice %132 {offsets = [0, 0, 48], sizes = [20, 8, 8], strides = [1, 1, 1]} : vector<20x8x224xf32> to vector<20x8x8xf32>
    %185 = vector.extract_strided_slice %132 {offsets = [0, 0, 80], sizes = [20, 8, 8], strides = [1, 1, 1]} : vector<20x8x224xf32> to vector<20x8x8xf32>
    %186 = vector.extract_strided_slice %132 {offsets = [0, 0, 160], sizes = [20, 8, 32], strides = [1, 1, 1]} : vector<20x8x224xf32> to vector<20x8x32xf32>
    %187 = arith.truncf %184 : vector<20x8x8xf32> to vector<20x8x8xbf16>
    %188 = arith.truncf %185 : vector<20x8x8xf32> to vector<20x8x8xbf16>
    "tpu.trace_start"() <{level = 10 : i32, message = "gqd,gkd->gqk"}> : () -> ()
    %cst_52 = arith.constant dense<0.000000e+00> : vector<20x8x8xf32>
    %189 = tpu.matmul %187, %188, %cst_52 {dimension_numbers = #tpu.dot_dimension_numbers<[2], [2], [1], [1], [0, 0, 0, 1, 1, 1], [0], [0]>} : vector<20x8x8xbf16>, vector<20x8x8xbf16>, vector<20x8x8xf32> -> vector<20x8x8xf32>
    "tpu.trace_stop"() : () -> ()
    %cst_53 = arith.constant 0.353553385 : f32
    %190 = vector.broadcast %cst_53 : f32 to vector<20x8x8xf32>
    %191 = arith.mulf %189, %190 : vector<20x8x8xf32>
    %192 = vector.shape_cast %1 : vector<8x8xf32> to vector<1x8x8xf32>
    %193 = vector.broadcast %192 : vector<1x8x8xf32> to vector<20x8x8xf32>
    %194 = arith.addf %191, %193 : vector<20x8x8xf32>
    %cst_54 = arith.constant dense<0xFF800000> : vector<20x8xf32>
    %195 = vector.multi_reduction <maximumf>, %194, %cst_54 [2] : vector<20x8x8xf32> to vector<20x8xf32>
    %196 = vector.shape_cast %195 : vector<20x8xf32> to vector<20x8x1xf32>
    %197 = vector.broadcast %196 : vector<20x8x1xf32> to vector<20x8x8xf32>
    %198 = arith.subf %194, %197 : vector<20x8x8xf32>
    %199 = math.exp %198 : vector<20x8x8xf32>
    %cst_55 = arith.constant dense<0.000000e+00> : vector<20x8xf32>
    %200 = vector.multi_reduction <add>, %199, %cst_55 [2] : vector<20x8x8xf32> to vector<20x8xf32>
    %201 = vector.shape_cast %200 : vector<20x8xf32> to vector<20x8x1xf32>
    %202 = tpu.reciprocal %201 {approx = true} : vector<20x8x1xf32> -> vector<20x8x1xf32>
    %203 = vector.broadcast %202 : vector<20x8x1xf32> to vector<20x8x8xf32>
    %204 = arith.mulf %199, %203 : vector<20x8x8xf32>
    %205 = arith.truncf %204 : vector<20x8x8xf32> to vector<20x8x8xbf16>
    %206 = arith.truncf %186 : vector<20x8x32xf32> to vector<20x8x32xbf16>
    "tpu.trace_start"() <{level = 10 : i32, message = "gqk,gkc->gqc"}> : () -> ()
    %cst_56 = arith.constant dense<0.000000e+00> : vector<20x8x32xf32>
    %207 = tpu.matmul %205, %206, %cst_56 {dimension_numbers = #tpu.dot_dimension_numbers<[2], [1], [1], [2], [0, 0, 0, 1, 1, 2], [0], [0]>} : vector<20x8x8xbf16>, vector<20x8x32xbf16>, vector<20x8x32xf32> -> vector<20x8x32xf32>
    "tpu.trace_stop"() : () -> ()
    %208 = arith.addf %183, %207 : vector<20x8x32xf32>
    %209 = vector.extract_strided_slice %132 {offsets = [0, 0, 56], sizes = [20, 8, 8], strides = [1, 1, 1]} : vector<20x8x224xf32> to vector<20x8x8xf32>
    %210 = vector.extract_strided_slice %132 {offsets = [0, 0, 88], sizes = [20, 8, 8], strides = [1, 1, 1]} : vector<20x8x224xf32> to vector<20x8x8xf32>
    %211 = vector.extract_strided_slice %132 {offsets = [0, 0, 192], sizes = [20, 8, 32], strides = [1, 1, 1]} : vector<20x8x224xf32> to vector<20x8x32xf32>
    %212 = arith.truncf %209 : vector<20x8x8xf32> to vector<20x8x8xbf16>
    %213 = arith.truncf %210 : vector<20x8x8xf32> to vector<20x8x8xbf16>
    "tpu.trace_start"() <{level = 10 : i32, message = "gqd,gkd->gqk"}> : () -> ()
    %cst_57 = arith.constant dense<0.000000e+00> : vector<20x8x8xf32>
    %214 = tpu.matmul %212, %213, %cst_57 {dimension_numbers = #tpu.dot_dimension_numbers<[2], [2], [1], [1], [0, 0, 0, 1, 1, 1], [0], [0]>} : vector<20x8x8xbf16>, vector<20x8x8xbf16>, vector<20x8x8xf32> -> vector<20x8x8xf32>
    "tpu.trace_stop"() : () -> ()
    %cst_58 = arith.constant 0.353553385 : f32
    %215 = vector.broadcast %cst_58 : f32 to vector<20x8x8xf32>
    %216 = arith.mulf %214, %215 : vector<20x8x8xf32>
    %217 = vector.shape_cast %1 : vector<8x8xf32> to vector<1x8x8xf32>
    %218 = vector.broadcast %217 : vector<1x8x8xf32> to vector<20x8x8xf32>
    %219 = arith.addf %216, %218 : vector<20x8x8xf32>
    %cst_59 = arith.constant dense<0xFF800000> : vector<20x8xf32>
    %220 = vector.multi_reduction <maximumf>, %219, %cst_59 [2] : vector<20x8x8xf32> to vector<20x8xf32>
    %221 = vector.shape_cast %220 : vector<20x8xf32> to vector<20x8x1xf32>
    %222 = vector.broadcast %221 : vector<20x8x1xf32> to vector<20x8x8xf32>
    %223 = arith.subf %219, %222 : vector<20x8x8xf32>
    %224 = math.exp %223 : vector<20x8x8xf32>
    %cst_60 = arith.constant dense<0.000000e+00> : vector<20x8xf32>
    %225 = vector.multi_reduction <add>, %224, %cst_60 [2] : vector<20x8x8xf32> to vector<20x8xf32>
    %226 = vector.shape_cast %225 : vector<20x8xf32> to vector<20x8x1xf32>
    %227 = tpu.reciprocal %226 {approx = true} : vector<20x8x1xf32> -> vector<20x8x1xf32>
    %228 = vector.broadcast %227 : vector<20x8x1xf32> to vector<20x8x8xf32>
    %229 = arith.mulf %224, %228 : vector<20x8x8xf32>
    %230 = arith.truncf %229 : vector<20x8x8xf32> to vector<20x8x8xbf16>
    %231 = arith.truncf %211 : vector<20x8x32xf32> to vector<20x8x32xbf16>
    "tpu.trace_start"() <{level = 10 : i32, message = "gqk,gkc->gqc"}> : () -> ()
    %cst_61 = arith.constant dense<0.000000e+00> : vector<20x8x32xf32>
    %232 = tpu.matmul %230, %231, %cst_61 {dimension_numbers = #tpu.dot_dimension_numbers<[2], [1], [1], [2], [0, 0, 0, 1, 1, 2], [0], [0]>} : vector<20x8x8xbf16>, vector<20x8x32xbf16>, vector<20x8x32xf32> -> vector<20x8x32xf32>
    "tpu.trace_stop"() : () -> ()
    %233 = arith.addf %208, %232 : vector<20x8x32xf32>
    %c1_62 = arith.constant 1 : index
    %234 = memref.load %arg8[%c1_62] : memref<2xf32, #tpu.memory_space<smem>>
    %235 = vector.shape_cast %233 : vector<20x8x32xf32> to vector<160x32xf32>
    %c1_63 = arith.constant 1 : index
    %c0_64 = arith.constant 0 : index
    %c0_65 = arith.constant 0 : index
    %236 = vector.load %arg4[%c1_63, %c0_64, %c0_65] : memref<2x1x32xf32, #tpu.memory_space<vmem>>, vector<1x1x32xf32>
    %237 = vector.shape_cast %236 : vector<1x1x32xf32> to vector<1x32xf32>
    %238 = vector.broadcast %237 : vector<1x32xf32> to vector<160x32xf32>
    %239 = arith.addf %235, %238 : vector<160x32xf32>
    %240 = vector.broadcast %234 : f32 to vector<160x32xf32>
    %241 = arith.mulf %240, %239 : vector<160x32xf32>
    %242 = arith.addf %123, %241 : vector<160x32xf32>
    %243 = arith.subf %242, %12 : vector<160x32xf32>
    %244 = arith.mulf %243, %243 : vector<160x32xf32>
    %c0_66 = arith.constant 0 : index
    %c0_67 = arith.constant 0 : index
    %245 = vector.load %arg5[%c0_66, %c0_67] : memref<1x32xf32, #tpu.memory_space<vmem>>, vector<1x32xf32>
    %246 = vector.broadcast %245 : vector<1x32xf32> to vector<160x32xf32>
    %247 = arith.mulf %244, %246 : vector<160x32xf32>
    %c0_68 = arith.constant 0 : index
    %c0_69 = arith.constant 0 : index
    %248 = vector.load %arg7[%c0_68, %c0_69] : memref<20x160xf32, #tpu.memory_space<vmem>>, vector<20x160xf32>
    %cst_70 = arith.constant dense<0.000000e+00> : vector<20x32xf32>
    %249 = tpu.matmul %248, %247, %cst_70 {dimension_numbers = #tpu.dot_dimension_numbers<[1], [0], [0], [1], [0, 0, 1, 1], [], []>} : vector<20x160xf32>, vector<160x32xf32>, vector<20x32xf32> -> vector<20x32xf32>
    %250 = tpu.transpose %249, [1, 0] : vector<20x32xf32> -> vector<32x20xf32>
    %cst_71 = arith.constant dense<0.000000e+00> : vector<20xf32>
    %251 = vector.multi_reduction <add>, %250, %cst_71 [0] : vector<32x20xf32> to vector<20xf32>
    %252 = vector.shape_cast %251 : vector<20xf32> to vector<1x20xf32>
    %c0_72 = arith.constant 0 : index
    %253 = memref.load %arg9[%c0_72] : memref<1xf32, #tpu.memory_space<smem>>
    %254 = vector.broadcast %253 : f32 to vector<1x20xf32>
    %255 = arith.addf %252, %254 : vector<1x20xf32>
    %256 = vector.shape_cast %255 : vector<1x20xf32> to vector<1x1x20xf32>
    %c0_73 = arith.constant 0 : index
    %c0_74 = arith.constant 0 : index
    %c0_75 = arith.constant 0 : index
    %257 = vector.load %arg10[%c0_73, %c0_74, %c0_75] : memref<1x1x20xf32, #tpu.memory_space<vmem>>, vector<1x1x20xf32>
    tpu.vector_store %arg10[%c0_73, %c0_74, %c0_75], %256 {strides = array<i32>} : memref<1x1x20xf32, #tpu.memory_space<vmem>>, vector<1x1x20xf32>,
    return
  }
  func.func @transform_0(%arg0: i32) -> (i32, i32) {
    %c0_i32 = arith.constant 0 : i32
    %c0_i32_0 = arith.constant 0 : i32
    return %arg0, %c0_i32 : i32, i32
  }
  func.func @transform_1(%arg0: i32) -> (i32, i32, i32) {
    %c0_i32 = arith.constant 0 : i32
    %c0_i32_0 = arith.constant 0 : i32
    %c0_i32_1 = arith.constant 0 : i32
    %c0_i32_2 = arith.constant 0 : i32
    return %c0_i32, %c0_i32_0, %c0_i32_1 : i32, i32, i32
  }
  func.func @transform_2(%arg0: i32) -> (i32, i32, i32) {
    %c0_i32 = arith.constant 0 : i32
    %c0_i32_0 = arith.constant 0 : i32
    %c0_i32_1 = arith.constant 0 : i32
    %c0_i32_2 = arith.constant 0 : i32
    return %c0_i32, %c0_i32_0, %c0_i32_1 : i32, i32, i32
  }
  func.func @transform_3(%arg0: i32) -> (i32, i32, i32) {
    %c0_i32 = arith.constant 0 : i32
    %c0_i32_0 = arith.constant 0 : i32
    %c0_i32_1 = arith.constant 0 : i32
    %c0_i32_2 = arith.constant 0 : i32
    return %c0_i32, %c0_i32_0, %c0_i32_1 : i32, i32, i32
  }
  func.func @transform_4(%arg0: i32) -> (i32, i32) {
    %c0_i32 = arith.constant 0 : i32
    %c0_i32_0 = arith.constant 0 : i32
    %c0_i32_1 = arith.constant 0 : i32
    return %c0_i32, %c0_i32_0 : i32, i32
  }
  func.func @transform_5(%arg0: i32) -> (i32, i32) {
    %c0_i32 = arith.constant 0 : i32
    %c0_i32_0 = arith.constant 0 : i32
    %c0_i32_1 = arith.constant 0 : i32
    return %c0_i32, %c0_i32_0 : i32, i32
  }
  func.func @transform_6(%arg0: i32) -> (i32, i32) {
    %c0_i32 = arith.constant 0 : i32
    %c0_i32_0 = arith.constant 0 : i32
    %c0_i32_1 = arith.constant 0 : i32
    return %c0_i32, %c0_i32_0 : i32, i32
  }
  func.func @transform_7(%arg0: i32) -> i32 {
    %c0_i32 = arith.constant 0 : i32
    %c0_i32_0 = arith.constant 0 : i32
    return %c0_i32 : i32
  }
  func.func @transform_8(%arg0: i32) -> i32 {
    %c0_i32 = arith.constant 0 : i32
    %c0_i32_0 = arith.constant 0 : i32
    return %c0_i32 : i32
  }
  func.func @transform_9(%arg0: i32) -> (i32, i32, i32) {
    %c0_i32 = arith.constant 0 : i32
    %c0_i32_0 = arith.constant 0 : i32
    %c0_i32_1 = arith.constant 0 : i32
    return %arg0, %c0_i32, %c0_i32_0 : i32, i32, i32
  }
}

</mosaic_0001>

<llo_original>
// kernel: squeeze.15
$region0: #{squeeze.15}
  %s0 = inlined_call_operand.vmem [shape: f32[2,32], index: 0, kind: input, shape index: {}]
  %s1 = inlined_call_operand.vmem [shape: f32[2,4,8], index: 1, kind: output, shape index: {}]
  $region1: #{squeeze.15} parent=0
    #allocation0 [shape = 'u8[8192]{0}', space=vmem, size = 0x2000, scoped, tag = 'scoped mem for output reshape']
    #allocation1 [shape = 'u8[4096]{0}', space=vmem, size = 0x1000, scoped, tag = 'scoped mem for input reshape']
    %s3 = ssub.s32 4, 1
    %v4 = vld [vmem:[%s0] sm:%s3]
    %5 = vst [vmem:[#allocation1] sm:%s3] %v4
    %v6 = vld [vmem:[#allocation1] sm:$0x3]
    %vm7 = vcmask 64512
    %8 = vst.msk [vmem:[#allocation0] ss:$8 sm:$0x3] %vm7, %v6
    %v9 = vld [vmem:[#allocation1] sm:$0x3]
    %10 = vrot.lane.b32.xlu0 %v9, 120
    %v11 = vpop.permute.xlu0 %10
    %vm12 = vcmask 64512
    %s13 = scalar_lea.vmem [#allocation0], 1
    %14 = vst.msk [vmem:[%s13] ss:$8 sm:$0x3] %vm12, %v11
    %v15 = vld [vmem:[#allocation1] sm:$0x3]
    %16 = vrot.lane.b32.xlu0 %v15, 112
    %v17 = vpop.permute.xlu0 %16
    %vm18 = vcmask 64512
    %s19 = scalar_lea.vmem [#allocation0], 2
    %20 = vst.msk [vmem:[%s19] ss:$8 sm:$0x3] %vm18, %v17
    %v21 = vld [vmem:[#allocation1] sm:$0x3]
    %22 = vrot.lane.b32.xlu0 %v21, 104
    %v23 = vpop.permute.xlu0 %22
    %vm24 = vcmask 64512
    %s25 = scalar_lea.vmem [#allocation0], 3
    %26 = vst.msk [vmem:[%s25] ss:$8 sm:$0x3] %vm24, %v23
    %s28 = ssub.s32 16, 1
    %v29 = vld [vmem:[#allocation0] sm:%s28]
    %s31 = ssub.s32 16, 1
    %32 = vst [vmem:[%s1] sm:%s31] %v29
    %s33 = scalar_lea.vmem [#allocation0], 8
    %v34 = vld [vmem:[%s33] sm:%s28]
    %s36 = ssub.s32 16, 1
    %s37 = scalar_lea.vmem %s1, 4
    %38 = vst [vmem:[%s37] sm:%s36] %v34

// kernel: gene_interaction_forward.1
$region0: #{gene_interaction_forward.1}
  #allocation0 [shape = 'u32[]', space=smem, size = 0x4, offset = 0x4, fixed_abs, tag = 'smem constant byte address 0x4 - core index']
  #allocation1 [shape = 'u32[72,128]{1,0:T(1,128)}', space=vmem, size = 0x9000, scoped, tag = 'internal scratch']
  #allocation2 [shape = 'f32[1]{0:T(128)S(6)}', space=smem, size = 0x200, scoped, tag = 'scoped memory for gene_interaction_forward.1']
  %s0 = inlined_call_operand.vmem [shape: f32[320,32], index: 0, kind: input, shape index: {}]
  %s1 = inlined_call_operand.vmem [shape: bf16[2,32,224], index: 1, kind: input, shape index: {}]
  %s2 = inlined_call_operand.vmem [shape: f32[2,1,224], index: 2, kind: input, shape index: {}]
  %s3 = inlined_call_operand.vmem [shape: f32[2,1,32], index: 3, kind: input, shape index: {}]
  %s4 = inlined_call_operand.vmem [shape: f32[1,32], index: 4, kind: input, shape index: {}]
  %s5 = inlined_call_operand.vmem [shape: f32[8,8], index: 5, kind: input, shape index: {}]
  %s6 = inlined_call_operand.vmem [shape: f32[20,160], index: 6, kind: input, shape index: {}]
  %s7 = inlined_call_operand.vmem [shape: f32[2], index: 7, kind: input, shape index: {}]
  %s8 = inlined_call_operand.<no memory space> [shape: f32[1], index: 8, kind: input, shape index: {}]
  %s9 = inlined_call_operand.vmem [shape: f32[2,1,20], index: 9, kind: output, shape index: {}]
  %s10 = sld [smem:[#allocation0]]
  $region73: #{gene_interaction_forward.1} parent=0
    _
  %s12 = ssub.s32 1, %s10
  %s13 = scalar_select 0, %s12, %s10
  %14 = sst [smem:[#allocation2]] %s8
  $region1: #{gene_interaction_forward.1} parent=0
    #allocation3 [shape = 'u8[512]{0}', space=smem, size = 0x200, scoped, tag = 'input window, operand 7, single buffered']
    #allocation4 [shape = 's32[2]{0}', space=sflag, size = 0x8, scoped, tag = 'scoped memory for gene_interaction_forward.1']
    %15 = vsyncpa [#allocation4], 0
    loop: start=0, step=1, limit=4
    $region2: #{gene_interaction_forward.1} parent=1 // loop_pre_header
      _
    $region3: #{gene_interaction_forward.1} parent=1 // loop_header
      %s17 = sphi 0, %s21
      %p18 = scmp.ge.s32.totalorder %s17, 4
      %s27 = sphi 0, %s29
      %s30 = sphi 0, %s27
      %s31 = sphi 0, %s30
      %s47 = sphi 0, %s31
      %s51 = sphi 0, %s51
      %s53 = sphi 0, %s51
      %s54 = sphi 0, %s53
      %s68 = sphi 0, %s54
      %s72 = sphi 0, %s72
      %s74 = sphi 0, %s72
      %s75 = sphi 0, %s74
      %s89 = sphi 0, %s75
      %s93 = sphi 0, %s93
      %s95 = sphi 0, %s93
      %s96 = sphi 0, %s95
      %s110 = sphi 0, %s96
      %s114 = sphi 0, %s114
      %s116 = sphi 0, %s114
      %s117 = sphi 0, %s116
      %s131 = sphi 0, %s117
      %s135 = sphi 0, %s135
      %s137 = sphi 0, %s135
      %s138 = sphi 0, %s137
      %s152 = sphi 0, %s138
      %s156 = sphi 0, %s156
      %s158 = sphi 0, %s156
      %s159 = sphi 0, %s158
      %s173 = sphi 0, %s159
      %s177 = sphi 0, %s177
      %s179 = sphi 0, %s177
      %s180 = sphi 0, %s179
      %s194 = sphi 0, %s180
      %s198 = sphi 0, %s198
      %s200 = sphi 0, %s198
      %s201 = sphi 0, %s200
      %s215 = sphi 0, %s201
      %s221 = sphi 0, %s223
      %s224 = sphi 0, %s221
      %s225 = sphi 0, %s224
      %s241 = sphi 0, %s225
    $region4: #{gene_interaction_forward.1} parent=1 // loop_header_branch
      %20 = sbr.rel (%p18) target = $region8
    $region5: #{gene_interaction_forward.1} parent=1 // loop_body
      %s22 = ssub.s32 %s17, 1
      %s23 = ssub.s32 %s17, 2
      %s24 = sadd.s32 %s17, 1
      %s25 = ssub.s32 %s17, %s24
      %p26 = scmp.eq.s32.totalorder %s25, 0
      %s28 = sadd.s32 %s27, 1
      %s29 = scalar_select %p26, %s27, %s28
      %p32 = pneg %p26
      %p33 = scmp.eq.s32.totalorder %s17, 1
      %p34 = por %p32, %p33
      %p35 = scmp.ne.s32.totalorder %s27, %s30
      %p36 = scmp.eq.s32.totalorder %s17, 0
      %p37 = por %p35, %p36
      %p38 = scmp.ne.s32.totalorder %s27, %s30
      %p39 = scmp.eq.s32.totalorder %s22, 1
      %p40 = por %p38, %p39
      %p41 = scmp.ne.s32.totalorder %s30, %s31
      %p42 = scmp.eq.s32.totalorder %s22, 0
      %p43 = por %p41, %p42
      %p44 = scmp.ne.s32.totalorder %s30, %s31
      %p45 = scmp.eq.s32.totalorder %s23, 1
      %p46 = por %p44, %p45
      %p48 = scmp.ne.s32.totalorder %s31, %s47
      %p49 = scmp.eq.s32.totalorder %s23, 0
      %p50 = por %p48, %p49
      %s52 = sadd.s32 %s51, 1
      %p55 = scmp.eq.s32.totalorder %s17, 1
      %p56 = scmp.ne.s32.totalorder %s51, %s53
      %p57 = scmp.eq.s32.totalorder %s17, 0
      %p58 = por %p56, %p57
      %p59 = scmp.ne.s32.totalorder %s51, %s53
      %p60 = scmp.eq.s32.totalorder %s22, 1
      %p61 = por %p59, %p60
      %p62 = scmp.ne.s32.totalorder %s53, %s54
      %p63 = scmp.eq.s32.totalorder %s22, 0
      %p64 = por %p62, %p63
      %p65 = scmp.ne.s32.totalorder %s53, %s54
      %p66 = scmp.eq.s32.totalorder %s23, 1
      %p67 = por %p65, %p66
      %p69 = scmp.ne.s32.totalorder %s54, %s68
      %p70 = scmp.eq.s32.totalorder %s23, 0
      %p71 = por %p69, %p70
      %s73 = sadd.s32 %s72, 1
      %p76 = scmp.eq.s32.totalorder %s17, 1
      %p77 = scmp.ne.s32.totalorder %s72, %s74
      %p78 = scmp.eq.s32.totalorder %s17, 0
      %p79 = por %p77, %p78
      %p80 = scmp.ne.s32.totalorder %s72, %s74
      %p81 = scmp.eq.s32.totalorder %s22, 1
      %p82 = por %p80, %p81
      %p83 = scmp.ne.s32.totalorder %s74, %s75
      %p84 = scmp.eq.s32.totalorder %s22, 0
      %p85 = por %p83, %p84
      %p86 = scmp.ne.s32.totalorder %s74, %s75
      %p87 = scmp.eq.s32.totalorder %s23, 1
      %p88 = por %p86, %p87
      %p90 = scmp.ne.s32.totalorder %s75, %s89
      %p91 = scmp.eq.s32.totalorder %s23, 0
      %p92 = por %p90, %p91
      %s94 = sadd.s32 %s93, 1
      %p97 = scmp.eq.s32.totalorder %s17, 1
      %p98 = scmp.ne.s32.totalorder %s93, %s95
      %p99 = scmp.eq.s32.totalorder %s17, 0
      %p100 = por %p98, %p99
      %p101 = scmp.ne.s32.totalorder %s93, %s95
      %p102 = scmp.eq.s32.totalorder %s22, 1
      %p103 = por %p101, %p102
      %p104 = scmp.ne.s32.totalorder %s95, %s96
      %p105 = scmp.eq.s32.totalorder %s22, 0
      %p106 = por %p104, %p105
      %p107 = scmp.ne.s32.totalorder %s95, %s96
      %p108 = scmp.eq.s32.totalorder %s23, 1
      %p109 = por %p107, %p108
      %p111 = scmp.ne.s32.totalorder %s96, %s110
      %p112 = scmp.eq.s32.totalorder %s23, 0
      %p113 = por %p111, %p112
      %s115 = sadd.s32 %s114, 1
      %p118 = scmp.eq.s32.totalorder %s17, 1
      %p119 = scmp.ne.s32.totalorder %s114, %s116
      %p120 = scmp.eq.s32.totalorder %s17, 0
      %p121 = por %p119, %p120
      %p122 = scmp.ne.s32.totalorder %s114, %s116
      %p123 = scmp.eq.s32.totalorder %s22, 1
      %p124 = por %p122, %p123
      %p125 = scmp.ne.s32.totalorder %s116, %s117
      %p126 = scmp.eq.s32.totalorder %s22, 0
      %p127 = por %p125, %p126
      %p128 = scmp.ne.s32.totalorder %s116, %s117
      %p129 = scmp.eq.s32.totalorder %s23, 1
      %p130 = por %p128, %p129
      %p132 = scmp.ne.s32.totalorder %s117, %s131
      %p133 = scmp.eq.s32.totalorder %s23, 0
      %p134 = por %p132, %p133
      %s136 = sadd.s32 %s135, 1
      %p139 = scmp.eq.s32.totalorder %s17, 1
      %p140 = scmp.ne.s32.totalorder %s135, %s137
      %p141 = scmp.eq.s32.totalorder %s17, 0
      %p142 = por %p140, %p141
      %p143 = scmp.ne.s32.totalorder %s135, %s137
      %p144 = scmp.eq.s32.totalorder %s22, 1
      %p145 = por %p143, %p144
      %p146 = scmp.ne.s32.totalorder %s137, %s138
      %p147 = scmp.eq.s32.totalorder %s22, 0
      %p148 = por %p146, %p147
      %p149 = scmp.ne.s32.totalorder %s137, %s138
      %p150 = scmp.eq.s32.totalorder %s23, 1
      %p151 = por %p149, %p150
      %p153 = scmp.ne.s32.totalorder %s138, %s152
      %p154 = scmp.eq.s32.totalorder %s23, 0
      %p155 = por %p153, %p154
      %s157 = sadd.s32 %s156, 1
      %p160 = scmp.eq.s32.totalorder %s17, 1
      %p161 = scmp.ne.s32.totalorder %s156, %s158
      %p162 = scmp.eq.s32.totalorder %s17, 0
      %p163 = por %p161, %p162
      %p164 = scmp.ne.s32.totalorder %s156, %s158
      %p165 = scmp.eq.s32.totalorder %s22, 1
      %p166 = por %p164, %p165
      %p167 = scmp.ne.s32.totalorder %s158, %s159
      %p168 = scmp.eq.s32.totalorder %s22, 0
      %p169 = por %p167, %p168
      %p170 = scmp.ne.s32.totalorder %s158, %s159
      %p171 = scmp.eq.s32.totalorder %s23, 1
      %p172 = por %p170, %p171
      %p174 = scmp.ne.s32.totalorder %s159, %s173
      %p175 = scmp.eq.s32.totalorder %s23, 0
      %p176 = por %p174, %p175
      %s178 = sadd.s32 %s177, 1
      %p181 = scmp.eq.s32.totalorder %s17, 1
      %p182 = scmp.ne.s32.totalorder %s177, %s179
      %p183 = scmp.eq.s32.totalorder %s17, 0
      %p184 = por %p182, %p183
      %p185 = scmp.ne.s32.totalorder %s177, %s179
      %p186 = scmp.eq.s32.totalorder %s22, 1
      %p187 = por %p185, %p186
      %p188 = scmp.ne.s32.totalorder %s179, %s180
      %p189 = scmp.eq.s32.totalorder %s22, 0
      %p190 = por %p188, %p189
      %p191 = scmp.ne.s32.totalorder %s179, %s180
      %p192 = scmp.eq.s32.totalorder %s23, 1
      %p193 = por %p191, %p192
      %p195 = scmp.ne.s32.totalorder %s180, %s194
      %p196 = scmp.eq.s32.totalorder %s23, 0
      %p197 = por %p195, %p196
      %s199 = sadd.s32 %s198, 1
      %p202 = scmp.eq.s32.totalorder %s17, 1
      %p203 = scmp.ne.s32.totalorder %s198, %s200
      %p204 = scmp.eq.s32.totalorder %s17, 0
      %p205 = por %p203, %p204
      %p206 = scmp.ne.s32.totalorder %s198, %s200
      %p207 = scmp.eq.s32.totalorder %s22, 1
      %p208 = por %p206, %p207
      %p209 = scmp.ne.s32.totalorder %s200, %s201
      %p210 = scmp.eq.s32.totalorder %s22, 0
      %p211 = por %p209, %p210
      %p212 = scmp.ne.s32.totalorder %s200, %s201
      %p213 = scmp.eq.s32.totalorder %s23, 1
      %p214 = por %p212, %p213
      %p216 = scmp.ne.s32.totalorder %s201, %s215
      %p217 = scmp.eq.s32.totalorder %s23, 0
      %p218 = por %p216, %p217
      %s219 = ssub.s32 %s17, %s24
      %p220 = scmp.eq.s32.totalorder %s219, 0
      %s222 = sadd.s32 %s221, 1
      %s223 = scalar_select %p220, %s221, %s222
      %p226 = pneg %p220
      %p227 = scmp.eq.s32.totalorder %s17, 1
      %p228 = por %p226, %p227
      %p229 = scmp.ne.s32.totalorder %s221, %s224
      %p230 = scmp.eq.s32.totalorder %s17, 0
      %p231 = por %p229, %p230
      %p232 = scmp.ne.s32.totalorder %s221, %s224
      %p233 = scmp.eq.s32.totalorder %s22, 1
      %p234 = por %p232, %p233
      %p235 = scmp.ne.s32.totalorder %s224, %s225
      %p236 = scmp.eq.s32.totalorder %s22, 0
      %p237 = por %p235, %p236
      %p238 = scmp.ne.s32.totalorder %s224, %s225
      %p239 = scmp.eq.s32.totalorder %s23, 1
      %p240 = por %p238, %p239
      %p242 = scmp.ne.s32.totalorder %s225, %s241
      %p243 = scmp.eq.s32.totalorder %s23, 0
      %p244 = por %p242, %p243
      %p245 = scmp.le.s32.totalorder 1, %s17
      %p246 = scmp.lt.s32.totalorder %s17, 3
      %p247 = pnand %p245, %p246
      %p248 = pneg %p247
      // Predicated region
      $region9: #{gene_interaction_forward.1} parent=5 // pred_check
        _
      $region10: #{gene_interaction_forward.1} parent=5 // pred_check_branch
        %250 = sbr.rel (%p247) target = $region12
      $region11: #{gene_interaction_forward.1} parent=5 // pred_region
        %s251 = ssub.s32 %s17, 1
        // Predicated region
        $region13: #{gene_interaction_forward.1} parent=11 // pred_check
          %p252 = pneg %p64
        $region14: #{gene_interaction_forward.1} parent=11 // pred_check_branch
          %254 = sbr.rel (%p252) target = $region16
        $region15: #{gene_interaction_forward.1} parent=11 // pred_region
          _
        $region16: #{gene_interaction_forward.1} parent=11 // pred_fallthru
          _
        // Predicated region
        $region17: #{gene_interaction_forward.1} parent=11 // pred_check
          %p255 = pneg %p85
        $region18: #{gene_interaction_forward.1} parent=11 // pred_check_branch
          %257 = sbr.rel (%p255) target = $region20
        $region19: #{gene_interaction_forward.1} parent=11 // pred_region
          _
        $region20: #{gene_interaction_forward.1} parent=11 // pred_fallthru
          _
        // Predicated region
        $region21: #{gene_interaction_forward.1} parent=11 // pred_check
          %p258 = pneg %p106
        $region22: #{gene_interaction_forward.1} parent=11 // pred_check_branch
          %260 = sbr.rel (%p258) target = $region24
        $region23: #{gene_interaction_forward.1} parent=11 // pred_region
          _
        $region24: #{gene_interaction_forward.1} parent=11 // pred_fallthru
          _
        // Predicated region
        $region25: #{gene_interaction_forward.1} parent=11 // pred_check
          %p261 = pneg %p127
        $region26: #{gene_interaction_forward.1} parent=11 // pred_check_branch
          %263 = sbr.rel (%p261) target = $region28
        $region27: #{gene_interaction_forward.1} parent=11 // pred_region
          _
        $region28: #{gene_interaction_forward.1} parent=11 // pred_fallthru
          _
        // Predicated region
        $region29: #{gene_interaction_forward.1} parent=11 // pred_check
          %p264 = pneg %p148
        $region30: #{gene_interaction_forward.1} parent=11 // pred_check_branch
          %266 = sbr.rel (%p264) target = $region32
        $region31: #{gene_interaction_forward.1} parent=11 // pred_region
          _
        $region32: #{gene_interaction_forward.1} parent=11 // pred_fallthru
          _
        // Predicated region
        $region33: #{gene_interaction_forward.1} parent=11 // pred_check
          %p267 = pneg %p169
        $region34: #{gene_interaction_forward.1} parent=11 // pred_check_branch
          %269 = sbr.rel (%p267) target = $region36
        $region35: #{gene_interaction_forward.1} parent=11 // pred_region
          _
        $region36: #{gene_interaction_forward.1} parent=11 // pred_fallthru
          _
        // Predicated region
        $region37: #{gene_interaction_forward.1} parent=11 // pred_check
          %p270 = pneg %p190
        $region38: #{gene_interaction_forward.1} parent=11 // pred_check_branch
          %272 = sbr.rel (%p270) target = $region40
        $region39: #{gene_interaction_forward.1} parent=11 // pred_region
          %274 = vsyncadd [#allocation4], 0
          %s276 = sshll.u32 %s7, 4
          %s277 = int_to_ptr.vmem [resolvable:$true] %s276
          %279 = dma.vmem_to_smem %s277, 16, [#allocation3], [#allocation4]
        $region40: #{gene_interaction_forward.1} parent=11 // pred_fallthru
          _
        // Predicated region
        $region41: #{gene_interaction_forward.1} parent=11 // pred_check
          %p280 = pneg %p211
        $region42: #{gene_interaction_forward.1} parent=11 // pred_check_branch
          %282 = sbr.rel (%p280) target = $region44
        $region43: #{gene_interaction_forward.1} parent=11 // pred_region
          _
        $region44: #{gene_interaction_forward.1} parent=11 // pred_fallthru
          _
      $region12: #{gene_interaction_forward.1} parent=5 // pred_fallthru
        _
      %p283 = scmp.lt.s32.totalorder %s17, 2
      // Predicated region
      $region45: #{gene_interaction_forward.1} parent=5 // pred_check
        %p284 = pneg %p283
      $region46: #{gene_interaction_forward.1} parent=5 // pred_check_branch
        %286 = sbr.rel (%p284) target = $region48
      $region47: #{gene_interaction_forward.1} parent=5 // pred_region
        // Predicated region
        $region49: #{gene_interaction_forward.1} parent=47 // pred_check
          %p287 = pneg %p37
        $region50: #{gene_interaction_forward.1} parent=47 // pred_check_branch
          %289 = sbr.rel (%p287) target = $region52
        $region51: #{gene_interaction_forward.1} parent=47 // pred_region
          %s290 = smul.u32 20, %s17
          %p291 = scmp.lt.s32.totalorder %s290, 39
          %s292 = scalar_select %p291, %s290, 39
          %s293 = smul.addr %s292, 8
          %s294 = scalar_lea.vmem %s0, %s293
          %s295 = smul.u32 20, %s17
        $region52: #{gene_interaction_forward.1} parent=47 // pred_fallthru
          _
      $region48: #{gene_interaction_forward.1} parent=5 // pred_fallthru
        _
      %p296 = scmp.le.s32.totalorder 1, %s17
      %p297 = scmp.lt.s32.totalorder %s17, 3
      %p298 = pnand %p296, %p297
      %p299 = pneg %p298
      // Predicated region
      $region53: #{gene_interaction_forward.1} parent=5 // pred_check
        _
      $region54: #{gene_interaction_forward.1} parent=5 // pred_check_branch
        %301 = sbr.rel (%p298) target = $region56
      $region55: #{gene_interaction_forward.1} parent=5 // pred_region
        %s302 = ssub.s32 %s17, 1
        // Predicated region
        $region57: #{gene_interaction_forward.1} parent=55 // pred_check
          %p303 = pneg %p190
        $region58: #{gene_interaction_forward.1} parent=55 // pred_check_branch
          %305 = sbr.rel (%p303) target = $region60
        $region59: #{gene_interaction_forward.1} parent=55 // pred_region
          %307 = dma.done [#allocation4], 16
        $region60: #{gene_interaction_forward.1} parent=55 // pred_fallthru
          _
        %308 = sfence
        %s309 = smul.u32 20, %s22
        %p310 = scmp.lt.s32.totalorder %s309, 39
        %s311 = scalar_select %p310, %s309, 39
        %s312 = smul.addr %s311, 8
        %s313 = scalar_lea.vmem %s0, %s312
        %p314 = pneg %p43
        %p315 = pneg %p40
        %p316 = pneg %p64
        %p317 = pneg %p61
        %p318 = pneg %p85
        %p319 = pneg %p82
        %p320 = pneg %p106
        %p321 = pneg %p103
        %p322 = pneg %p127
        %p323 = pneg %p124
        %p324 = pneg %p148
        %p325 = pneg %p145
        %p326 = pneg %p169
        %p327 = pneg %p166
        %p328 = pneg %p190
        %p329 = pneg %p187
        %p330 = pneg %p211
        %p331 = pneg %p208
        %p332 = pneg %p237
        %p333 = pneg %p234
        %p334 = scmp.lt.s32.totalorder %s22, 1
        %s335 = scalar_select %p334, %s22, 1
        %s336 = scalar_lea.vmem %s9, %s335
        %s337 = smul.u32 20, %s22
        %p338 = scmp.lt.s32.totalorder %s337, 39
        %s339 = scalar_select %p338, %s337, 39
        %s340 = smul.addr %s339, 8
        %s341 = scalar_lea.vmem %s0, %s340
        %s342 = smul.u32 20, %s22
        %p343 = scmp.lt.s32.totalorder %s22, 1
        %s344 = scalar_select %p343, %s22, 1
        %s345 = scalar_lea.vmem %s9, %s344
        %v347 = vld [vmem:[%s341] sm:$0xff]
        %v348 = vld [vmem:[%s341 + $0x8] sm:$0xff]
        %v349 = vld [vmem:[%s341 + $0x10] sm:$0xff]
        %v350 = vld [vmem:[%s341 + $0x18] sm:$0xff]
        %v351 = vld [vmem:[%s341 + $0x20] sm:$0xff]
        %v352 = vld [vmem:[%s341 + $0x28] sm:$0xff]
        %v353 = vld [vmem:[%s341 + $0x30] sm:$0xff]
        %v354 = vld [vmem:[%s341 + $0x38] sm:$0xff]
        %v355 = vld [vmem:[%s341 + $0x40] sm:$0xff]
        %v356 = vld [vmem:[%s341 + $0x48] sm:$0xff]
        %v357 = vld [vmem:[%s341 + $0x50] sm:$0xff]
        %v358 = vld [vmem:[%s341 + $0x58] sm:$0xff]
        %v359 = vld [vmem:[%s341 + $0x60] sm:$0xff]
        %v360 = vld [vmem:[%s341 + $0x68] sm:$0xff]
        %v361 = vld [vmem:[%s341 + $0x70] sm:$0xff]
        %v362 = vld [vmem:[%s341 + $0x78] sm:$0xff]
        %v363 = vld [vmem:[%s341 + $0x80] sm:$0xff]
        %v364 = vld [vmem:[%s341 + $0x88] sm:$0xff]
        %v365 = vld [vmem:[%s341 + $0x90] sm:$0xff]
        %v366 = vld [vmem:[%s341 + $0x98] sm:$0xff]
        %v367 = vld [vmem:[%s5] sm:$0xff]
        %v368 = vpack.c.bf16 %v348, %v347
        %v369 = vpack.c.bf16 %v350, %v349
        %v370 = vpack.c.bf16 %v352, %v351
        %v371 = vpack.c.bf16 %v354, %v353
        %v372 = vpack.c.bf16 %v356, %v355
        %v373 = vpack.c.bf16 %v358, %v357
        %v374 = vpack.c.bf16 %v360, %v359
        %v375 = vpack.c.bf16 %v362, %v361
        %v376 = vpack.c.bf16 %v364, %v363
        %v377 = vpack.c.bf16 %v366, %v365
        %v378 = vld [vmem:[%s1] sm:$0xff]
        %v379 = vld [vmem:[%s1 + $0x8] sm:$0xff]
        %v380 = vld [vmem:[%s1 + $0x10] sm:$0xff]
        %v381 = vld [vmem:[%s1 + $0x18] sm:$0xff]
        %v382 = vld [vmem:[%s2] sm:$0x3]
        %v384 = vperm.slane %v382, 0
        %v385 = vperm.slane %v382, 1
        %v392 = vunpack.c.l.b16 %v378
        %v393 = vunpack.c.h.b16 %v378
        %v394 = vunpack.c.l.b16 %v379
        %v395 = vunpack.c.h.b16 %v379
        %v396 = vunpack.c.l.b16 %v380
        %v397 = vunpack.c.h.b16 %v380
        %v398 = vunpack.c.l.b16 %v381
        %v399 = vunpack.c.h.b16 %v381
        %v400 = vpack.c.b16 %v394, %v392
        %v401 = vpack.c.b16 %v395, %v393
        %v402 = vpack.c.b16 %v398, %v396
        %v403 = vpack.c.b16 %v399, %v397
        %vm408 = vcmask 261120
        %v410 = vsel %vm408, %v368, 0
        %v413 = vsel %vm408, %v369, 0
        %v416 = vsel %vm408, %v370, 0
        %v419 = vsel %vm408, %v371, 0
        %v422 = vsel %vm408, %v372, 0
        %v425 = vsel %vm408, %v373, 0
        %v428 = vsel %vm408, %v374, 0
        %v431 = vsel %vm408, %v375, 0
        %v434 = vsel %vm408, %v376, 0
        %v437 = vsel %vm408, %v377, 0
        %439 = vmatpush.bf16.msra.mxu0 0
        %440 = vmatpush.bf16.msra.mxu0 0
        %441 = vmatpush.bf16.msra.mxu0 0
        %442 = vmatpush.bf16.msra.mxu0 0
        %443 = vmatpush.bf16.msra.mxu0 0
        %444 = vmatpush.bf16.msra.mxu0 0
        %445 = vmatpush.bf16.msra.mxu0 %v402
        %446 = vmatpush.bf16.msra.mxu0 %v400
        %447 = vmatmul.bf16.gmra.mxu0 %v410
        %v448 = vpop.f32.mrf.mxu0
        %v449 = vadd.f32 %v384, %v448
        %v450 = vpop.f32.mrf.mxu0
        %v451 = vadd.f32 %v384, %v450
        %452 = vmatmul.bf16.gmra.mxu0 %v413
        %v453 = vpop.f32.mrf.mxu0
        %v454 = vadd.f32 %v384, %v453
        %v455 = vpop.f32.mrf.mxu0
        %v456 = vadd.f32 %v384, %v455
        %457 = vmatmul.bf16.gmra.mxu0 %v416
        %v458 = vpop.f32.mrf.mxu0
        %v459 = vadd.f32 %v384, %v458
        %v460 = vpop.f32.mrf.mxu0
        %v461 = vadd.f32 %v384, %v460
        %462 = vmatmul.bf16.gmra.mxu0 %v419
        %v463 = vpop.f32.mrf.mxu0
        %v464 = vadd.f32 %v384, %v463
        %v465 = vpop.f32.mrf.mxu0
        %v466 = vadd.f32 %v384, %v465
        %467 = vmatmul.bf16.gmra.mxu0 %v422
        %v468 = vpop.f32.mrf.mxu0
        %v469 = vadd.f32 %v384, %v468
        %v470 = vpop.f32.mrf.mxu0
        %v471 = vadd.f32 %v384, %v470
        %472 = vmatmul.bf16.gmra.mxu0 %v425
        %v473 = vpop.f32.mrf.mxu0
        %v474 = vadd.f32 %v384, %v473
        %v475 = vpop.f32.mrf.mxu0
        %v476 = vadd.f32 %v384, %v475
        %477 = vmatmul.bf16.gmra.mxu0 %v428
        %v478 = vpop.f32.mrf.mxu0
        %v479 = vadd.f32 %v384, %v478
        %v480 = vpop.f32.mrf.mxu0
        %v481 = vadd.f32 %v384, %v480
        %482 = vmatmul.bf16.gmra.mxu0 %v431
        %v483 = vpop.f32.mrf.mxu0
        %v484 = vadd.f32 %v384, %v483
        %v485 = vpop.f32.mrf.mxu0
        %v486 = vadd.f32 %v384, %v485
        %487 = vmatmul.bf16.gmra.mxu0 %v434
        %v488 = vpop.f32.mrf.mxu0
        %v489 = vadd.f32 %v384, %v488
        %v490 = vpop.f32.mrf.mxu0
        %v491 = vadd.f32 %v384, %v490
        %492 = vmatmul.bf16.gmra.mxu0 %v437
        %v493 = vpop.f32.mrf.mxu0
        %v494 = vadd.f32 %v384, %v493
        %v495 = vpop.f32.mrf.mxu0
        %v496 = vadd.f32 %v384, %v495
        %497 = vdwg.mxu0
        %498 = vmatpush.bf16.msra.mxu0 0
        %499 = vmatpush.bf16.msra.mxu0 0
        %500 = vmatpush.bf16.msra.mxu0 0
        %501 = vmatpush.bf16.msra.mxu0 0
        %502 = vmatpush.bf16.msra.mxu0 0
        %503 = vmatpush.bf16.msra.mxu0 0
        %504 = vmatpush.bf16.msra.mxu0 %v403
        %505 = vmatpush.bf16.msra.mxu0 %v401
        %506 = vmatmul.bf16.gmra.mxu0 %v410
        %v507 = vpop.f32.mrf.mxu0
        %v508 = vadd.f32 %v385, %v507
        %v509 = vpop.f32.mrf.mxu0
        %v510 = vadd.f32 %v385, %v509
        %511 = vmatmul.bf16.gmra.mxu0 %v413
        %v512 = vpop.f32.mrf.mxu0
        %v513 = vadd.f32 %v385, %v512
        %v514 = vpop.f32.mrf.mxu0
        %v515 = vadd.f32 %v385, %v514
        %516 = vmatmul.bf16.gmra.mxu0 %v416
        %v517 = vpop.f32.mrf.mxu0
        %v518 = vadd.f32 %v385, %v517
        %v519 = vpop.f32.mrf.mxu0
        %v520 = vadd.f32 %v385, %v519
        %521 = vmatmul.bf16.gmra.mxu0 %v419
        %v522 = vpop.f32.mrf.mxu0
        %v523 = vadd.f32 %v385, %v522
        %v524 = vpop.f32.mrf.mxu0
        %v525 = vadd.f32 %v385, %v524
        %526 = vmatmul.bf16.gmra.mxu0 %v422
        %v527 = vpop.f32.mrf.mxu0
        %v528 = vadd.f32 %v385, %v527
        %v529 = vpop.f32.mrf.mxu0
        %v530 = vadd.f32 %v385, %v529
        %531 = vmatmul.bf16.gmra.mxu0 %v425
        %v532 = vpop.f32.mrf.mxu0
        %v533 = vadd.f32 %v385, %v532
        %v534 = vpop.f32.mrf.mxu0
        %v535 = vadd.f32 %v385, %v534
        %536 = vmatmul.bf16.gmra.mxu0 %v428
        %v537 = vpop.f32.mrf.mxu0
        %v538 = vadd.f32 %v385, %v537
        %v539 = vpop.f32.mrf.mxu0
        %v540 = vadd.f32 %v385, %v539
        %541 = vmatmul.bf16.gmra.mxu0 %v431
        %v542 = vpop.f32.mrf.mxu0
        %v543 = vadd.f32 %v385, %v542
        %v544 = vpop.f32.mrf.mxu0
        %v545 = vadd.f32 %v385, %v544
        %546 = vmatmul.bf16.gmra.mxu0 %v434
        %v547 = vpop.f32.mrf.mxu0
        %v548 = vadd.f32 %v385, %v547
        %v549 = vpop.f32.mrf.mxu0
        %v550 = vadd.f32 %v385, %v549
        %551 = vmatmul.bf16.gmra.mxu0 %v437
        %v552 = vpop.f32.mrf.mxu0
        %v553 = vadd.f32 %v385, %v552
        %v554 = vpop.f32.mrf.mxu0
        %v555 = vadd.f32 %v385, %v554
        %556 = vdwg.mxu0
        %v557 = vmax.f32 %v449, 0.0
        %v558 = vmax.f32 %v451, 0.0
        %v559 = vmax.f32 %v454, 0.0
        %v560 = vmax.f32 %v456, 0.0
        %v561 = vmax.f32 %v459, 0.0
        %v562 = vmax.f32 %v461, 0.0
        %v563 = vmax.f32 %v464, 0.0
        %v564 = vmax.f32 %v466, 0.0
        %v565 = vmax.f32 %v469, 0.0
        %v566 = vmax.f32 %v471, 0.0
        %v567 = vmax.f32 %v474, 0.0
        %v568 = vmax.f32 %v476, 0.0
        %v569 = vmax.f32 %v479, 0.0
        %v570 = vmax.f32 %v481, 0.0
        %v571 = vmax.f32 %v484, 0.0
        %v572 = vmax.f32 %v486, 0.0
        %v573 = vmax.f32 %v489, 0.0
        %v574 = vmax.f32 %v491, 0.0
        %v575 = vmax.f32 %v494, 0.0
        %v576 = vmax.f32 %v496, 0.0
        %v577 = vpack.c.bf16 %v449, %v449
        %v578 = vpack.c.bf16 %v451, %v451
        %v579 = vpack.c.bf16 %v454, %v454
        %v580 = vpack.c.bf16 %v456, %v456
        %v581 = vpack.c.bf16 %v459, %v459
        %v582 = vpack.c.bf16 %v461, %v461
        %v583 = vpack.c.bf16 %v464, %v464
        %v584 = vpack.c.bf16 %v466, %v466
        %v585 = vpack.c.bf16 %v469, %v469
        %v586 = vpack.c.bf16 %v471, %v471
        %v587 = vpack.c.bf16 %v474, %v474
        %v588 = vpack.c.bf16 %v476, %v476
        %v589 = vpack.c.bf16 %v479, %v479
        %v590 = vpack.c.bf16 %v481, %v481
        %v591 = vpack.c.bf16 %v484, %v484
        %v592 = vpack.c.bf16 %v486, %v486
        %v593 = vpack.c.bf16 %v489, %v489
        %v594 = vpack.c.bf16 %v491, %v491
        %v595 = vpack.c.bf16 %v494, %v494
        %v596 = vpack.c.bf16 %v496, %v496
        %v598 = vunpack.c.l.b16 %v577
        %v599 = vpack.c.b16 %v598, %v598
        %600 = vrot.lane.b32.xlu0 %v599, 96
        %v601 = vpop.permute.xlu0 %600
        %602 = vrot.lane.b32.xlu0 %v599, 64
        %v603 = vpop.permute.xlu0 %602
        %vm604 = vcmask 64512
        %v606 = vsel %vm604, %v601, 0
        %v609 = vsel %vm604, %v603, 0
        %611 = vmatpush.bf16.xpose.msra.mxu0 0
        %612 = vmatpush.bf16.xpose.msra.mxu0 0
        %613 = vmatpush.bf16.xpose.msra.mxu0 0
        %614 = vmatpush.bf16.xpose.msra.mxu0 0
        %615 = vmatpush.bf16.xpose.msra.mxu0 0
        %616 = vmatpush.bf16.xpose.msra.mxu0 0
        %617 = vmatpush.bf16.xpose.msra.mxu0 0
        %618 = vmatpush.bf16.xpose.msra.mxu0 %v609
        %619 = vmatmul.bf16.gmra.mxu0 %v606
        %v620 = vpop.f32.mrf.mxu0
        %v621 = vadd.f32 0.0, %v620
        %v622 = vpop.f32.mrf.mxu0
        %623 = vdwg.mxu0
        %v625 = vunpack.c.l.b16 %v578
        %v626 = vpack.c.b16 %v625, %v625
        %627 = vrot.lane.b32.xlu0 %v626, 96
        %v628 = vpop.permute.xlu0 %627
        %629 = vrot.lane.b32.xlu0 %v626, 64
        %v630 = vpop.permute.xlu0 %629
        %v632 = vsel %vm604, %v628, 0
        %v635 = vsel %vm604, %v630, 0
        %637 = vmatpush.bf16.xpose.msra.mxu0 0
        %638 = vmatpush.bf16.xpose.msra.mxu0 0
        %639 = vmatpush.bf16.xpose.msra.mxu0 0
        %640 = vmatpush.bf16.xpose.msra.mxu0 0
        %641 = vmatpush.bf16.xpose.msra.mxu0 0
        %642 = vmatpush.bf16.xpose.msra.mxu0 0
        %643 = vmatpush.bf16.xpose.msra.mxu0 0
        %644 = vmatpush.bf16.xpose.msra.mxu0 %v635
        %645 = vmatmul.bf16.gmra.mxu0 %v632
        %v646 = vpop.f32.mrf.mxu0
        %v647 = vadd.f32 0.0, %v646
        %v648 = vpop.f32.mrf.mxu0
        %649 = vdwg.mxu0
        %v651 = vunpack.c.l.b16 %v579
        %v652 = vpack.c.b16 %v651, %v651
        %653 = vrot.lane.b32.xlu0 %v652, 96
        %v654 = vpop.permute.xlu0 %653
        %655 = vrot.lane.b32.xlu0 %v652, 64
        %v656 = vpop.permute.xlu0 %655
        %v658 = vsel %vm604, %v654, 0
        %v661 = vsel %vm604, %v656, 0
        %663 = vmatpush.bf16.xpose.msra.mxu0 0
        %664 = vmatpush.bf16.xpose.msra.mxu0 0
        %665 = vmatpush.bf16.xpose.msra.mxu0 0
        %666 = vmatpush.bf16.xpose.msra.mxu0 0
        %667 = vmatpush.bf16.xpose.msra.mxu0 0
        %668 = vmatpush.bf16.xpose.msra.mxu0 0
        %669 = vmatpush.bf16.xpose.msra.mxu0 0
        %670 = vmatpush.bf16.xpose.msra.mxu0 %v661
        %671 = vmatmul.bf16.gmra.mxu0 %v658
        %v672 = vpop.f32.mrf.mxu0
        %v673 = vadd.f32 0.0, %v672
        %v674 = vpop.f32.mrf.mxu0
        %675 = vdwg.mxu0
        %v677 = vunpack.c.l.b16 %v580
        %v678 = vpack.c.b16 %v677, %v677
        %679 = vrot.lane.b32.xlu0 %v678, 96
        %v680 = vpop.permute.xlu0 %679
        %681 = vrot.lane.b32.xlu0 %v678, 64
        %v682 = vpop.permute.xlu0 %681
        %v684 = vsel %vm604, %v680, 0
        %v687 = vsel %vm604, %v682, 0
        %689 = vmatpush.bf16.xpose.msra.mxu0 0
        %690 = vmatpush.bf16.xpose.msra.mxu0 0
        %691 = vmatpush.bf16.xpose.msra.mxu0 0
        %692 = vmatpush.bf16.xpose.msra.mxu0 0
        %693 = vmatpush.bf16.xpose.msra.mxu0 0
        %694 = vmatpush.bf16.xpose.msra.mxu0 0
        %695 = vmatpush.bf16.xpose.msra.mxu0 0
        %696 = vmatpush.bf16.xpose.msra.mxu0 %v687
        %697 = vmatmul.bf16.gmra.mxu0 %v684
        %v698 = vpop.f32.mrf.mxu0
        %v699 = vadd.f32 0.0, %v698
        %v700 = vpop.f32.mrf.mxu0
        %701 = vdwg.mxu0
        %v703 = vunpack.c.l.b16 %v581
        %v704 = vpack.c.b16 %v703, %v703
        %705 = vrot.lane.b32.xlu0 %v704, 96
        %v706 = vpop.permute.xlu0 %705
        %707 = vrot.lane.b32.xlu0 %v704, 64
        %v708 = vpop.permute.xlu0 %707
        %v710 = vsel %vm604, %v706, 0
        %v713 = vsel %vm604, %v708, 0
        %715 = vmatpush.bf16.xpose.msra.mxu0 0
        %716 = vmatpush.bf16.xpose.msra.mxu0 0
        %717 = vmatpush.bf16.xpose.msra.mxu0 0
        %718 = vmatpush.bf16.xpose.msra.mxu0 0
        %719 = vmatpush.bf16.xpose.msra.mxu0 0
        %720 = vmatpush.bf16.xpose.msra.mxu0 0
        %721 = vmatpush.bf16.xpose.msra.mxu0 0
        %722 = vmatpush.bf16.xpose.msra.mxu0 %v713
        %723 = vmatmul.bf16.gmra.mxu0 %v710
        %v724 = vpop.f32.mrf.mxu0
        %v725 = vadd.f32 0.0, %v724
        %v726 = vpop.f32.mrf.mxu0
        %727 = vdwg.mxu0
        %v729 = vunpack.c.l.b16 %v582
        %v730 = vpack.c.b16 %v729, %v729
        %731 = vrot.lane.b32.xlu0 %v730, 96
        %v732 = vpop.permute.xlu0 %731
        %733 = vrot.lane.b32.xlu0 %v730, 64
        %v734 = vpop.permute.xlu0 %733
        %v736 = vsel %vm604, %v732, 0
        %v739 = vsel %vm604, %v734, 0
        %741 = vmatpush.bf16.xpose.msra.mxu0 0
        %742 = vmatpush.bf16.xpose.msra.mxu0 0
        %743 = vmatpush.bf16.xpose.msra.mxu0 0
        %744 = vmatpush.bf16.xpose.msra.mxu0 0
        %745 = vmatpush.bf16.xpose.msra.mxu0 0
        %746 = vmatpush.bf16.xpose.msra.mxu0 0
        %747 = vmatpush.bf16.xpose.msra.mxu0 0
        %748 = vmatpush.bf16.xpose.msra.mxu0 %v739
        %749 = vmatmul.bf16.gmra.mxu0 %v736
        %v750 = vpop.f32.mrf.mxu0
        %v751 = vadd.f32 0.0, %v750
        %v752 = vpop.f32.mrf.mxu0
        %753 = vdwg.mxu0
        %v755 = vunpack.c.l.b16 %v583
        %v756 = vpack.c.b16 %v755, %v755
        %757 = vrot.lane.b32.xlu0 %v756, 96
        %v758 = vpop.permute.xlu0 %757
        %759 = vrot.lane.b32.xlu0 %v756, 64
        %v760 = vpop.permute.xlu0 %759
        %v762 = vsel %vm604, %v758, 0
        %v765 = vsel %vm604, %v760, 0
        %767 = vmatpush.bf16.xpose.msra.mxu0 0
        %768 = vmatpush.bf16.xpose.msra.mxu0 0
        %769 = vmatpush.bf16.xpose.msra.mxu0 0
        %770 = vmatpush.bf16.xpose.msra.mxu0 0
        %771 = vmatpush.bf16.xpose.msra.mxu0 0
        %772 = vmatpush.bf16.xpose.msra.mxu0 0
        %773 = vmatpush.bf16.xpose.msra.mxu0 0
        %774 = vmatpush.bf16.xpose.msra.mxu0 %v765
        %775 = vmatmul.bf16.gmra.mxu0 %v762
        %v776 = vpop.f32.mrf.mxu0
        %v777 = vadd.f32 0.0, %v776
        %v778 = vpop.f32.mrf.mxu0
        %779 = vdwg.mxu0
        %v781 = vunpack.c.l.b16 %v584
        %v782 = vpack.c.b16 %v781, %v781
        %783 = vrot.lane.b32.xlu0 %v782, 96
        %v784 = vpop.permute.xlu0 %783
        %785 = vrot.lane.b32.xlu0 %v782, 64
        %v786 = vpop.permute.xlu0 %785
        %v788 = vsel %vm604, %v784, 0
        %v791 = vsel %vm604, %v786, 0
        %793 = vmatpush.bf16.xpose.msra.mxu0 0
        %794 = vmatpush.bf16.xpose.msra.mxu0 0
        %795 = vmatpush.bf16.xpose.msra.mxu0 0
        %796 = vmatpush.bf16.xpose.msra.mxu0 0
        %797 = vmatpush.bf16.xpose.msra.mxu0 0
        %798 = vmatpush.bf16.xpose.msra.mxu0 0
        %799 = vmatpush.bf16.xpose.msra.mxu0 0
        %800 = vmatpush.bf16.xpose.msra.mxu0 %v791
        %801 = vmatmul.bf16.gmra.mxu0 %v788
        %v802 = vpop.f32.mrf.mxu0
        %v803 = vadd.f32 0.0, %v802
        %v804 = vpop.f32.mrf.mxu0
        %805 = vdwg.mxu0
        %v807 = vunpack.c.l.b16 %v585
        %v808 = vpack.c.b16 %v807, %v807
        %809 = vrot.lane.b32.xlu0 %v808, 96
        %v810 = vpop.permute.xlu0 %809
        %811 = vrot.lane.b32.xlu0 %v808, 64
        %v812 = vpop.permute.xlu0 %811
        %v814 = vsel %vm604, %v810, 0
        %v817 = vsel %vm604, %v812, 0
        %819 = vmatpush.bf16.xpose.msra.mxu0 0
        %820 = vmatpush.bf16.xpose.msra.mxu0 0
        %821 = vmatpush.bf16.xpose.msra.mxu0 0
        %822 = vmatpush.bf16.xpose.msra.mxu0 0
        %823 = vmatpush.bf16.xpose.msra.mxu0 0
        %824 = vmatpush.bf16.xpose.msra.mxu0 0
        %825 = vmatpush.bf16.xpose.msra.mxu0 0
        %826 = vmatpush.bf16.xpose.msra.mxu0 %v817
        %827 = vmatmul.bf16.gmra.mxu0 %v814
        %v828 = vpop.f32.mrf.mxu0
        %v829 = vadd.f32 0.0, %v828
        %v830 = vpop.f32.mrf.mxu0
        %831 = vdwg.mxu0
        %v833 = vunpack.c.l.b16 %v586
        %v834 = vpack.c.b16 %v833, %v833
        %835 = vrot.lane.b32.xlu0 %v834, 96
        %v836 = vpop.permute.xlu0 %835
        %837 = vrot.lane.b32.xlu0 %v834, 64
        %v838 = vpop.permute.xlu0 %837
        %v840 = vsel %vm604, %v836, 0
        %v843 = vsel %vm604, %v838, 0
        %845 = vmatpush.bf16.xpose.msra.mxu0 0
        %846 = vmatpush.bf16.xpose.msra.mxu0 0
        %847 = vmatpush.bf16.xpose.msra.mxu0 0
        %848 = vmatpush.bf16.xpose.msra.mxu0 0
        %849 = vmatpush.bf16.xpose.msra.mxu0 0
        %850 = vmatpush.bf16.xpose.msra.mxu0 0
        %851 = vmatpush.bf16.xpose.msra.mxu0 0
        %852 = vmatpush.bf16.xpose.msra.mxu0 %v843
        %853 = vmatmul.bf16.gmra.mxu0 %v840
        %v854 = vpop.f32.mrf.mxu0
        %v855 = vadd.f32 0.0, %v854
        %v856 = vpop.f32.mrf.mxu0
        %857 = vdwg.mxu0
        %v859 = vunpack.c.l.b16 %v587
        %v860 = vpack.c.b16 %v859, %v859
        %861 = vrot.lane.b32.xlu0 %v860, 96
        %v862 = vpop.permute.xlu0 %861
        %863 = vrot.lane.b32.xlu0 %v860, 64
        %v864 = vpop.permute.xlu0 %863
        %v866 = vsel %vm604, %v862, 0
        %v869 = vsel %vm604, %v864, 0
        %871 = vmatpush.bf16.xpose.msra.mxu0 0
        %872 = vmatpush.bf16.xpose.msra.mxu0 0
        %873 = vmatpush.bf16.xpose.msra.mxu0 0
        %874 = vmatpush.bf16.xpose.msra.mxu0 0
        %875 = vmatpush.bf16.xpose.msra.mxu0 0
        %876 = vmatpush.bf16.xpose.msra.mxu0 0
        %877 = vmatpush.bf16.xpose.msra.mxu0 0
        %878 = vmatpush.bf16.xpose.msra.mxu0 %v869
        %879 = vmatmul.bf16.gmra.mxu0 %v866
        %v880 = vpop.f32.mrf.mxu0
        %v881 = vadd.f32 0.0, %v880
        %v882 = vpop.f32.mrf.mxu0
        %883 = vdwg.mxu0
        %v885 = vunpack.c.l.b16 %v588
        %v886 = vpack.c.b16 %v885, %v885
        %887 = vrot.lane.b32.xlu0 %v886, 96
        %v888 = vpop.permute.xlu0 %887
        %889 = vrot.lane.b32.xlu0 %v886, 64
        %v890 = vpop.permute.xlu0 %889
        %v892 = vsel %vm604, %v888, 0
        %v895 = vsel %vm604, %v890, 0
        %897 = vmatpush.bf16.xpose.msra.mxu0 0
        %898 = vmatpush.bf16.xpose.msra.mxu0 0
        %899 = vmatpush.bf16.xpose.msra.mxu0 0
        %900 = vmatpush.bf16.xpose.msra.mxu0 0
        %901 = vmatpush.bf16.xpose.msra.mxu0 0
        %902 = vmatpush.bf16.xpose.msra.mxu0 0
        %903 = vmatpush.bf16.xpose.msra.mxu0 0
        %904 = vmatpush.bf16.xpose.msra.mxu0 %v895
        %905 = vmatmul.bf16.gmra.mxu0 %v892
        %v906 = vpop.f32.mrf.mxu0
        %v907 = vadd.f32 0.0, %v906
        %v908 = vpop.f32.mrf.mxu0
        %909 = vdwg.mxu0
        %v911 = vunpack.c.l.b16 %v589
        %v912 = vpack.c.b16 %v911, %v911
        %913 = vrot.lane.b32.xlu0 %v912, 96
        %v914 = vpop.permute.xlu0 %913
        %915 = vrot.lane.b32.xlu0 %v912, 64
        %v916 = vpop.permute.xlu0 %915
        %v918 = vsel %vm604, %v914, 0
        %v921 = vsel %vm604, %v916, 0
        %923 = vmatpush.bf16.xpose.msra.mxu0 0
        %924 = vmatpush.bf16.xpose.msra.mxu0 0
        %925 = vmatpush.bf16.xpose.msra.mxu0 0
        %926 = vmatpush.bf16.xpose.msra.mxu0 0
        %927 = vmatpush.bf16.xpose.msra.mxu0 0
        %928 = vmatpush.bf16.xpose.msra.mxu0 0
        %929 = vmatpush.bf16.xpose.msra.mxu0 0
        %930 = vmatpush.bf16.xpose.msra.mxu0 %v921
        %931 = vmatmul.bf16.gmra.mxu0 %v918
        %v932 = vpop.f32.mrf.mxu0
        %v933 = vadd.f32 0.0, %v932
        %v934 = vpop.f32.mrf.mxu0
        %935 = vdwg.mxu0
        %v937 = vunpack.c.l.b16 %v590
        %v938 = vpack.c.b16 %v937, %v937
        %939 = vrot.lane.b32.xlu0 %v938, 96
        %v940 = vpop.permute.xlu0 %939
        %941 = vrot.lane.b32.xlu0 %v938, 64
        %v942 = vpop.permute.xlu0 %941
        %v944 = vsel %vm604, %v940, 0
        %v947 = vsel %vm604, %v942, 0
        %949 = vmatpush.bf16.xpose.msra.mxu0 0
        %950 = vmatpush.bf16.xpose.msra.mxu0 0
        %951 = vmatpush.bf16.xpose.msra.mxu0 0
        %952 = vmatpush.bf16.xpose.msra.mxu0 0
        %953 = vmatpush.bf16.xpose.msra.mxu0 0
        %954 = vmatpush.bf16.xpose.msra.mxu0 0
        %955 = vmatpush.bf16.xpose.msra.mxu0 0
        %956 = vmatpush.bf16.xpose.msra.mxu0 %v947
        %957 = vmatmul.bf16.gmra.mxu0 %v944
        %v958 = vpop.f32.mrf.mxu0
        %v959 = vadd.f32 0.0, %v958
        %v960 = vpop.f32.mrf.mxu0
        %961 = vdwg.mxu0
        %v963 = vunpack.c.l.b16 %v591
        %v964 = vpack.c.b16 %v963, %v963
        %965 = vrot.lane.b32.xlu0 %v964, 96
        %v966 = vpop.permute.xlu0 %965
        %967 = vrot.lane.b32.xlu0 %v964, 64
        %v968 = vpop.permute.xlu0 %967
        %v970 = vsel %vm604, %v966, 0
        %v973 = vsel %vm604, %v968, 0
        %975 = vmatpush.bf16.xpose.msra.mxu0 0
        %976 = vmatpush.bf16.xpose.msra.mxu0 0
        %977 = vmatpush.bf16.xpose.msra.mxu0 0
        %978 = vmatpush.bf16.xpose.msra.mxu0 0
        %979 = vmatpush.bf16.xpose.msra.mxu0 0
        %980 = vmatpush.bf16.xpose.msra.mxu0 0
        %981 = vmatpush.bf16.xpose.msra.mxu0 0
        %982 = vmatpush.bf16.xpose.msra.mxu0 %v973
        %983 = vmatmul.bf16.gmra.mxu0 %v970
        %v984 = vpop.f32.mrf.mxu0
        %v985 = vadd.f32 0.0, %v984
        %v986 = vpop.f32.mrf.mxu0
        %987 = vdwg.mxu0
        %v989 = vunpack.c.l.b16 %v592
        %v990 = vpack.c.b16 %v989, %v989
        %991 = vrot.lane.b32.xlu0 %v990, 96
        %v992 = vpop.permute.xlu0 %991
        %993 = vrot.lane.b32.xlu0 %v990, 64
        %v994 = vpop.permute.xlu0 %993
        %v996 = vsel %vm604, %v992, 0
        %v999 = vsel %vm604, %v994, 0
        %1001 = vmatpush.bf16.xpose.msra.mxu0 0
        %1002 = vmatpush.bf16.xpose.msra.mxu0 0
        %1003 = vmatpush.bf16.xpose.msra.mxu0 0
        %1004 = vmatpush.bf16.xpose.msra.mxu0 0
        %1005 = vmatpush.bf16.xpose.msra.mxu0 0
        %1006 = vmatpush.bf16.xpose.msra.mxu0 0
        %1007 = vmatpush.bf16.xpose.msra.mxu0 0
        %1008 = vmatpush.bf16.xpose.msra.mxu0 %v999
        %1009 = vmatmul.bf16.gmra.mxu0 %v996
        %v1010 = vpop.f32.mrf.mxu0
        %v1011 = vadd.f32 0.0, %v1010
        %v1012 = vpop.f32.mrf.mxu0
        %1013 = vdwg.mxu0
        %v1015 = vunpack.c.l.b16 %v593
        %v1016 = vpack.c.b16 %v1015, %v1015
        %1017 = vrot.lane.b32.xlu0 %v1016, 96
        %v1018 = vpop.permute.xlu0 %1017
        %1019 = vrot.lane.b32.xlu0 %v1016, 64
        %v1020 = vpop.permute.xlu0 %1019
        %v1022 = vsel %vm604, %v1018, 0
        %v1025 = vsel %vm604, %v1020, 0
        %1027 = vmatpush.bf16.xpose.msra.mxu0 0
        %1028 = vmatpush.bf16.xpose.msra.mxu0 0
        %1029 = vmatpush.bf16.xpose.msra.mxu0 0
        %1030 = vmatpush.bf16.xpose.msra.mxu0 0
        %1031 = vmatpush.bf16.xpose.msra.mxu0 0
        %1032 = vmatpush.bf16.xpose.msra.mxu0 0
        %1033 = vmatpush.bf16.xpose.msra.mxu0 0
        %1034 = vmatpush.bf16.xpose.msra.mxu0 %v1025
        %1035 = vmatmul.bf16.gmra.mxu0 %v1022
        %v1036 = vpop.f32.mrf.mxu0
        %v1037 = vadd.f32 0.0, %v1036
        %v1038 = vpop.f32.mrf.mxu0
        %1039 = vdwg.mxu0
        %v1041 = vunpack.c.l.b16 %v594
        %v1042 = vpack.c.b16 %v1041, %v1041
        %1043 = vrot.lane.b32.xlu0 %v1042, 96
        %v1044 = vpop.permute.xlu0 %1043
        %1045 = vrot.lane.b32.xlu0 %v1042, 64
        %v1046 = vpop.permute.xlu0 %1045
        %v1048 = vsel %vm604, %v1044, 0
        %v1051 = vsel %vm604, %v1046, 0
        %1053 = vmatpush.bf16.xpose.msra.mxu0 0
        %1054 = vmatpush.bf16.xpose.msra.mxu0 0
        %1055 = vmatpush.bf16.xpose.msra.mxu0 0
        %1056 = vmatpush.bf16.xpose.msra.mxu0 0
        %1057 = vmatpush.bf16.xpose.msra.mxu0 0
        %1058 = vmatpush.bf16.xpose.msra.mxu0 0
        %1059 = vmatpush.bf16.xpose.msra.mxu0 0
        %1060 = vmatpush.bf16.xpose.msra.mxu0 %v1051
        %1061 = vmatmul.bf16.gmra.mxu0 %v1048
        %v1062 = vpop.f32.mrf.mxu0
        %v1063 = vadd.f32 0.0, %v1062
        %v1064 = vpop.f32.mrf.mxu0
        %1065 = vdwg.mxu0
        %v1067 = vunpack.c.l.b16 %v595
        %v1068 = vpack.c.b16 %v1067, %v1067
        %1069 = vrot.lane.b32.xlu0 %v1068, 96
        %v1070 = vpop.permute.xlu0 %1069
        %1071 = vrot.lane.b32.xlu0 %v1068, 64
        %v1072 = vpop.permute.xlu0 %1071
        %v1074 = vsel %vm604, %v1070, 0
        %v1077 = vsel %vm604, %v1072, 0
        %1079 = vmatpush.bf16.xpose.msra.mxu0 0
        %1080 = vmatpush.bf16.xpose.msra.mxu0 0
        %1081 = vmatpush.bf16.xpose.msra.mxu0 0
        %1082 = vmatpush.bf16.xpose.msra.mxu0 0
        %1083 = vmatpush.bf16.xpose.msra.mxu0 0
        %1084 = vmatpush.bf16.xpose.msra.mxu0 0
        %1085 = vmatpush.bf16.xpose.msra.mxu0 0
        %1086 = vmatpush.bf16.xpose.msra.mxu0 %v1077
        %1087 = vmatmul.bf16.gmra.mxu0 %v1074
        %v1088 = vpop.f32.mrf.mxu0
        %v1089 = vadd.f32 0.0, %v1088
        %v1090 = vpop.f32.mrf.mxu0
        %1091 = vdwg.mxu0
        %v1093 = vunpack.c.l.b16 %v596
        %v1094 = vpack.c.b16 %v1093, %v1093
        %1095 = vrot.lane.b32.xlu0 %v1094, 96
        %v1096 = vpop.permute.xlu0 %1095
        %1097 = vrot.lane.b32.xlu0 %v1094, 64
        %v1098 = vpop.permute.xlu0 %1097
        %v1100 = vsel %vm604, %v1096, 0
        %v1103 = vsel %vm604, %v1098, 0
        %1105 = vmatpush.bf16.xpose.msra.mxu0 0
        %1106 = vmatpush.bf16.xpose.msra.mxu0 0
        %1107 = vmatpush.bf16.xpose.msra.mxu0 0
        %1108 = vmatpush.bf16.xpose.msra.mxu0 0
        %1109 = vmatpush.bf16.xpose.msra.mxu0 0
        %1110 = vmatpush.bf16.xpose.msra.mxu0 0
        %1111 = vmatpush.bf16.xpose.msra.mxu0 0
        %1112 = vmatpush.bf16.xpose.msra.mxu0 %v1103
        %1113 = vmatmul.bf16.gmra.mxu0 %v1100
        %v1114 = vpop.f32.mrf.mxu0
        %v1115 = vadd.f32 0.0, %v1114
        %v1116 = vpop.f32.mrf.mxu0
        %1117 = vdwg.mxu0
        %v1118 = vmul.f32 %v621, 0.35355338
        %v1119 = vmul.f32 %v647, 0.35355338
        %v1120 = vmul.f32 %v673, 0.35355338
        %v1121 = vmul.f32 %v699, 0.35355338
        %v1122 = vmul.f32 %v725, 0.35355338
        %v1123 = vmul.f32 %v751, 0.35355338
        %v1124 = vmul.f32 %v777, 0.35355338
        %v1125 = vmul.f32 %v803, 0.35355338
        %v1126 = vmul.f32 %v829, 0.35355338
        %v1127 = vmul.f32 %v855, 0.35355338
        %v1128 = vmul.f32 %v881, 0.35355338
        %v1129 = vmul.f32 %v907, 0.35355338
        %v1130 = vmul.f32 %v933, 0.35355338
        %v1131 = vmul.f32 %v959, 0.35355338
        %v1132 = vmul.f32 %v985, 0.35355338
        %v1133 = vmul.f32 %v1011, 0.35355338
        %v1134 = vmul.f32 %v1037, 0.35355338
        %v1135 = vmul.f32 %v1063, 0.35355338
        %v1136 = vmul.f32 %v1089, 0.35355338
        %v1137 = vmul.f32 %v1115, 0.35355338
        %v1138 = vadd.f32 %v1118, %v367
        %v1139 = vadd.f32 %v1119, %v367
        %v1140 = vadd.f32 %v1120, %v367
        %v1141 = vadd.f32 %v1121, %v367
        %v1142 = vadd.f32 %v1122, %v367
        %v1143 = vadd.f32 %v1123, %v367
        %v1144 = vadd.f32 %v1124, %v367
        %v1145 = vadd.f32 %v1125, %v367
        %v1146 = vadd.f32 %v1126, %v367
        %v1147 = vadd.f32 %v1127, %v367
        %v1148 = vadd.f32 %v1128, %v367
        %v1149 = vadd.f32 %v1129, %v367
        %v1150 = vadd.f32 %v1130, %v367
        %v1151 = vadd.f32 %v1131, %v367
        %v1152 = vadd.f32 %v1132, %v367
        %v1153 = vadd.f32 %v1133, %v367
        %v1154 = vadd.f32 %v1134, %v367
        %v1155 = vadd.f32 %v1135, %v367
        %v1156 = vadd.f32 %v1136, %v367
        %v1157 = vadd.f32 %v1137, %v367
        %v1158 = vsel %vm604, %v1138, -inf
        %1159 = vmax.xlane.f32.xlu0 %v1158
        %v1160 = vpop.xlane.xlu0 %1159
        %v1161 = vsel %vm604, %v1139, -inf
        %1162 = vmax.xlane.f32.xlu0 %v1161
        %v1163 = vpop.xlane.xlu0 %1162
        %v1164 = vsel %vm604, %v1140, -inf
        %1165 = vmax.xlane.f32.xlu0 %v1164
        %v1166 = vpop.xlane.xlu0 %1165
        %v1167 = vsel %vm604, %v1141, -inf
        %1168 = vmax.xlane.f32.xlu0 %v1167
        %v1169 = vpop.xlane.xlu0 %1168
        %v1170 = vsel %vm604, %v1142, -inf
        %1171 = vmax.xlane.f32.xlu0 %v1170
        %v1172 = vpop.xlane.xlu0 %1171
        %v1173 = vsel %vm604, %v1143, -inf
        %1174 = vmax.xlane.f32.xlu0 %v1173
        %v1175 = vpop.xlane.xlu0 %1174
        %v1176 = vsel %vm604, %v1144, -inf
        %1177 = vmax.xlane.f32.xlu0 %v1176
        %v1178 = vpop.xlane.xlu0 %1177
        %v1179 = vsel %vm604, %v1145, -inf
        %1180 = vmax.xlane.f32.xlu0 %v1179
        %v1181 = vpop.xlane.xlu0 %1180
        %v1182 = vsel %vm604, %v1146, -inf
        %1183 = vmax.xlane.f32.xlu0 %v1182
        %v1184 = vpop.xlane.xlu0 %1183
        %v1185 = vsel %vm604, %v1147, -inf
        %1186 = vmax.xlane.f32.xlu0 %v1185
        %v1187 = vpop.xlane.xlu0 %1186
        %v1188 = vsel %vm604, %v1148, -inf
        %1189 = vmax.xlane.f32.xlu0 %v1188
        %v1190 = vpop.xlane.xlu0 %1189
        %v1191 = vsel %vm604, %v1149, -inf
        %1192 = vmax.xlane.f32.xlu0 %v1191
        %v1193 = vpop.xlane.xlu0 %1192
        %v1194 = vsel %vm604, %v1150, -inf
        %1195 = vmax.xlane.f32.xlu0 %v1194
        %v1196 = vpop.xlane.xlu0 %1195
        %v1197 = vsel %vm604, %v1151, -inf
        %1198 = vmax.xlane.f32.xlu0 %v1197
        %v1199 = vpop.xlane.xlu0 %1198
        %v1200 = vsel %vm604, %v1152, -inf
        %1201 = vmax.xlane.f32.xlu0 %v1200
        %v1202 = vpop.xlane.xlu0 %1201
        %v1203 = vsel %vm604, %v1153, -inf
        %1204 = vmax.xlane.f32.xlu0 %v1203
        %v1205 = vpop.xlane.xlu0 %1204
        %v1206 = vsel %vm604, %v1154, -inf
        %1207 = vmax.xlane.f32.xlu0 %v1206
        %v1208 = vpop.xlane.xlu0 %1207
        %v1209 = vsel %vm604, %v1155, -inf
        %1210 = vmax.xlane.f32.xlu0 %v1209
        %v1211 = vpop.xlane.xlu0 %1210
        %v1212 = vsel %vm604, %v1156, -inf
        %1213 = vmax.xlane.f32.xlu0 %v1212
        %v1214 = vpop.xlane.xlu0 %1213
        %v1215 = vsel %vm604, %v1157, -inf
        %1216 = vmax.xlane.f32.xlu0 %v1215
        %v1217 = vpop.xlane.xlu0 %1216
        %v1218 = vsub.f32 %v1138, %v1160
        %v1219 = vsub.f32 %v1139, %v1163
        %v1220 = vsub.f32 %v1140, %v1166
        %v1221 = vsub.f32 %v1141, %v1169
        %v1222 = vsub.f32 %v1142, %v1172
        %v1223 = vsub.f32 %v1143, %v1175
        %v1224 = vsub.f32 %v1144, %v1178
        %v1225 = vsub.f32 %v1145, %v1181
        %v1226 = vsub.f32 %v1146, %v1184
        %v1227 = vsub.f32 %v1147, %v1187
        %v1228 = vsub.f32 %v1148, %v1190
        %v1229 = vsub.f32 %v1149, %v1193
        %v1230 = vsub.f32 %v1150, %v1196
        %v1231 = vsub.f32 %v1151, %v1199
        %v1232 = vsub.f32 %v1152, %v1202
        %v1233 = vsub.f32 %v1153, %v1205
        %v1234 = vsub.f32 %v1154, %v1208
        %v1235 = vsub.f32 %v1155, %v1211
        %v1236 = vsub.f32 %v1156, %v1214
        %v1237 = vsub.f32 %v1157, %v1217
        %v1238 = vmul.f32 %v1218, 1.442695
        %v1239 = vpow.pop %v1238
        %v1240 = vmul.f32 %v1219, 1.442695
        %v1241 = vpow.pop %v1240
        %v1242 = vmul.f32 %v1220, 1.442695
        %v1243 = vpow.pop %v1242
        %v1244 = vmul.f32 %v1221, 1.442695
        %v1245 = vpow.pop %v1244
        %v1246 = vmul.f32 %v1222, 1.442695
        %v1247 = vpow.pop %v1246
        %v1248 = vmul.f32 %v1223, 1.442695
        %v1249 = vpow.pop %v1248
        %v1250 = vmul.f32 %v1224, 1.442695
        %v1251 = vpow.pop %v1250
        %v1252 = vmul.f32 %v1225, 1.442695
        %v1253 = vpow.pop %v1252
        %v1254 = vmul.f32 %v1226, 1.442695
        %v1255 = vpow.pop %v1254
        %v1256 = vmul.f32 %v1227, 1.442695
        %v1257 = vpow.pop %v1256
        %v1258 = vmul.f32 %v1228, 1.442695
        %v1259 = vpow.pop %v1258
        %v1260 = vmul.f32 %v1229, 1.442695
        %v1261 = vpow.pop %v1260
        %v1262 = vmul.f32 %v1230, 1.442695
        %v1263 = vpow.pop %v1262
        %v1264 = vmul.f32 %v1231, 1.442695
        %v1265 = vpow.pop %v1264
        %v1266 = vmul.f32 %v1232, 1.442695
        %v1267 = vpow.pop %v1266
        %v1268 = vmul.f32 %v1233, 1.442695
        %v1269 = vpow.pop %v1268
        %v1270 = vmul.f32 %v1234, 1.442695
        %v1271 = vpow.pop %v1270
        %v1272 = vmul.f32 %v1235, 1.442695
        %v1273 = vpow.pop %v1272
        %v1274 = vmul.f32 %v1236, 1.442695
        %v1275 = vpow.pop %v1274
        %v1276 = vmul.f32 %v1237, 1.442695
        %v1277 = vpow.pop %v1276
        %v1278 = vsel %vm604, %v1239, 0.0
        %1279 = vadd.xlane.f32.xlu0 %v1278
        %v1280 = vpop.xlane.xlu0 %1279
        %v1281 = vsel %vm604, %v1241, 0.0
        %1282 = vadd.xlane.f32.xlu0 %v1281
        %v1283 = vpop.xlane.xlu0 %1282
        %v1284 = vsel %vm604, %v1243, 0.0
        %1285 = vadd.xlane.f32.xlu0 %v1284
        %v1286 = vpop.xlane.xlu0 %1285
        %v1287 = vsel %vm604, %v1245, 0.0
        %1288 = vadd.xlane.f32.xlu0 %v1287
        %v1289 = vpop.xlane.xlu0 %1288
        %v1290 = vsel %vm604, %v1247, 0.0
        %1291 = vadd.xlane.f32.xlu0 %v1290
        %v1292 = vpop.xlane.xlu0 %1291
        %v1293 = vsel %vm604, %v1249, 0.0
        %1294 = vadd.xlane.f32.xlu0 %v1293
        %v1295 = vpop.xlane.xlu0 %1294
        %v1296 = vsel %vm604, %v1251, 0.0
        %1297 = vadd.xlane.f32.xlu0 %v1296
        %v1298 = vpop.xlane.xlu0 %1297
        %v1299 = vsel %vm604, %v1253, 0.0
        %1300 = vadd.xlane.f32.xlu0 %v1299
        %v1301 = vpop.xlane.xlu0 %1300
        %v1302 = vsel %vm604, %v1255, 0.0
        %1303 = vadd.xlane.f32.xlu0 %v1302
        %v1304 = vpop.xlane.xlu0 %1303
        %v1305 = vsel %vm604, %v1257, 0.0
        %1306 = vadd.xlane.f32.xlu0 %v1305
        %v1307 = vpop.xlane.xlu0 %1306
        %v1308 = vsel %vm604, %v1259, 0.0
        %1309 = vadd.xlane.f32.xlu0 %v1308
        %v1310 = vpop.xlane.xlu0 %1309
        %v1311 = vsel %vm604, %v1261, 0.0
        %1312 = vadd.xlane.f32.xlu0 %v1311
        %v1313 = vpop.xlane.xlu0 %1312
        %v1314 = vsel %vm604, %v1263, 0.0
        %1315 = vadd.xlane.f32.xlu0 %v1314
        %v1316 = vpop.xlane.xlu0 %1315
        %v1317 = vsel %vm604, %v1265, 0.0
        %1318 = vadd.xlane.f32.xlu0 %v1317
        %v1319 = vpop.xlane.xlu0 %1318
        %v1320 = vsel %vm604, %v1267, 0.0
        %1321 = vadd.xlane.f32.xlu0 %v1320
        %v1322 = vpop.xlane.xlu0 %1321
        %v1323 = vsel %vm604, %v1269, 0.0
        %1324 = vadd.xlane.f32.xlu0 %v1323
        %v1325 = vpop.xlane.xlu0 %1324
        %v1326 = vsel %vm604, %v1271, 0.0
        %1327 = vadd.xlane.f32.xlu0 %v1326
        %v1328 = vpop.xlane.xlu0 %1327
        %v1329 = vsel %vm604, %v1273, 0.0
        %1330 = vadd.xlane.f32.xlu0 %v1329
        %v1331 = vpop.xlane.xlu0 %1330
        %v1332 = vsel %vm604, %v1275, 0.0
        %1333 = vadd.xlane.f32.xlu0 %v1332
        %v1334 = vpop.xlane.xlu0 %1333
        %v1335 = vsel %vm604, %v1277, 0.0
        %1336 = vadd.xlane.f32.xlu0 %v1335
        %v1337 = vpop.xlane.xlu0 %1336
        %v1338 = vrcp.pop %v1280
        %v1339 = vrcp.pop %v1283
        %v1340 = vrcp.pop %v1286
        %v1341 = vrcp.pop %v1289
        %v1342 = vrcp.pop %v1292
        %v1343 = vrcp.pop %v1295
        %v1344 = vrcp.pop %v1298
        %v1345 = vrcp.pop %v1301
        %v1346 = vrcp.pop %v1304
        %v1347 = vrcp.pop %v1307
        %v1348 = vrcp.pop %v1310
        %v1349 = vrcp.pop %v1313
        %v1350 = vrcp.pop %v1316
        %v1351 = vrcp.pop %v1319
        %v1352 = vrcp.pop %v1322
        %v1353 = vrcp.pop %v1325
        %v1354 = vrcp.pop %v1328
        %v1355 = vrcp.pop %v1331
        %v1356 = vrcp.pop %v1334
        %v1357 = vrcp.pop %v1337
        %v1358 = vmul.f32 %v1239, %v1338
        %v1359 = vmul.f32 %v1241, %v1339
        %v1360 = vmul.f32 %v1243, %v1340
        %v1361 = vmul.f32 %v1245, %v1341
        %v1362 = vmul.f32 %v1247, %v1342
        %v1363 = vmul.f32 %v1249, %v1343
        %v1364 = vmul.f32 %v1251, %v1344
        %v1365 = vmul.f32 %v1253, %v1345
        %v1366 = vmul.f32 %v1255, %v1346
        %v1367 = vmul.f32 %v1257, %v1347
        %v1368 = vmul.f32 %v1259, %v1348
        %v1369 = vmul.f32 %v1261, %v1349
        %v1370 = vmul.f32 %v1263, %v1350
        %v1371 = vmul.f32 %v1265, %v1351
        %v1372 = vmul.f32 %v1267, %v1352
        %v1373 = vmul.f32 %v1269, %v1353
        %v1374 = vmul.f32 %v1271, %v1354
        %v1375 = vmul.f32 %v1273, %v1355
        %v1376 = vmul.f32 %v1275, %v1356
        %v1377 = vmul.f32 %v1277, %v1357
        %v1378 = vpack.c.bf16 %v1358, %v1358
        %v1379 = vpack.c.bf16 %v1359, %v1359
        %v1380 = vpack.c.bf16 %v1360, %v1360
        %v1381 = vpack.c.bf16 %v1361, %v1361
        %v1382 = vpack.c.bf16 %v1362, %v1362
        %v1383 = vpack.c.bf16 %v1363, %v1363
        %v1384 = vpack.c.bf16 %v1364, %v1364
        %v1385 = vpack.c.bf16 %v1365, %v1365
        %v1386 = vpack.c.bf16 %v1366, %v1366
        %v1387 = vpack.c.bf16 %v1367, %v1367
        %v1388 = vpack.c.bf16 %v1368, %v1368
        %v1389 = vpack.c.bf16 %v1369, %v1369
        %v1390 = vpack.c.bf16 %v1370, %v1370
        %v1391 = vpack.c.bf16 %v1371, %v1371
        %v1392 = vpack.c.bf16 %v1372, %v1372
        %v1393 = vpack.c.bf16 %v1373, %v1373
        %v1394 = vpack.c.bf16 %v1374, %v1374
        %v1395 = vpack.c.bf16 %v1375, %v1375
        %v1396 = vpack.c.bf16 %v1376, %v1376
        %v1397 = vpack.c.bf16 %v1377, %v1377
        %1398 = vrot.lane.b32.xlu0 %v599, 88
        %v1399 = vpop.permute.xlu0 %1398
        %1400 = vrot.lane.b32.xlu0 %v599, 56
        %v1401 = vpop.permute.xlu0 %1400
        %v1403 = vsel %vm604, %v1399, 0
        %v1406 = vsel %vm604, %v1401, 0
        %1408 = vmatpush.bf16.xpose.msra.mxu0 0
        %1409 = vmatpush.bf16.xpose.msra.mxu0 0
        %1410 = vmatpush.bf16.xpose.msra.mxu0 0
        %1411 = vmatpush.bf16.xpose.msra.mxu0 0
        %1412 = vmatpush.bf16.xpose.msra.mxu0 0
        %1413 = vmatpush.bf16.xpose.msra.mxu0 0
        %1414 = vmatpush.bf16.xpose.msra.mxu0 0
        %1415 = vmatpush.bf16.xpose.msra.mxu0 %v1406
        %1416 = vmatmul.bf16.gmra.mxu0 %v1403
        %v1417 = vpop.f32.mrf.mxu0
        %v1418 = vadd.f32 0.0, %v1417
        %v1419 = vpop.f32.mrf.mxu0
        %1420 = vdwg.mxu0
        %1421 = vrot.lane.b32.xlu0 %v626, 88
        %v1422 = vpop.permute.xlu0 %1421
        %1423 = vrot.lane.b32.xlu0 %v626, 56
        %v1424 = vpop.permute.xlu0 %1423
        %v1426 = vsel %vm604, %v1422, 0
        %v1429 = vsel %vm604, %v1424, 0
        %1431 = vmatpush.bf16.xpose.msra.mxu0 0
        %1432 = vmatpush.bf16.xpose.msra.mxu0 0
        %1433 = vmatpush.bf16.xpose.msra.mxu0 0
        %1434 = vmatpush.bf16.xpose.msra.mxu0 0
        %1435 = vmatpush.bf16.xpose.msra.mxu0 0
        %1436 = vmatpush.bf16.xpose.msra.mxu0 0
        %1437 = vmatpush.bf16.xpose.msra.mxu0 0
        %1438 = vmatpush.bf16.xpose.msra.mxu0 %v1429
        %1439 = vmatmul.bf16.gmra.mxu0 %v1426
        %v1440 = vpop.f32.mrf.mxu0
        %v1441 = vadd.f32 0.0, %v1440
        %v1442 = vpop.f32.mrf.mxu0
        %1443 = vdwg.mxu0
        %1444 = vrot.lane.b32.xlu0 %v652, 88
        %v1445 = vpop.permute.xlu0 %1444
        %1446 = vrot.lane.b32.xlu0 %v652, 56
        %v1447 = vpop.permute.xlu0 %1446
        %v1449 = vsel %vm604, %v1445, 0
        %v1452 = vsel %vm604, %v1447, 0
        %1454 = vmatpush.bf16.xpose.msra.mxu0 0
        %1455 = vmatpush.bf16.xpose.msra.mxu0 0
        %1456 = vmatpush.bf16.xpose.msra.mxu0 0
        %1457 = vmatpush.bf16.xpose.msra.mxu0 0
        %1458 = vmatpush.bf16.xpose.msra.mxu0 0
        %1459 = vmatpush.bf16.xpose.msra.mxu0 0
        %1460 = vmatpush.bf16.xpose.msra.mxu0 0
        %1461 = vmatpush.bf16.xpose.msra.mxu0 %v1452
        %1462 = vmatmul.bf16.gmra.mxu0 %v1449
        %v1463 = vpop.f32.mrf.mxu0
        %v1464 = vadd.f32 0.0, %v1463
        %v1465 = vpop.f32.mrf.mxu0
        %1466 = vdwg.mxu0
        %1467 = vrot.lane.b32.xlu0 %v678, 88
        %v1468 = vpop.permute.xlu0 %1467
        %1469 = vrot.lane.b32.xlu0 %v678, 56
        %v1470 = vpop.permute.xlu0 %1469
        %v1472 = vsel %vm604, %v1468, 0
        %v1475 = vsel %vm604, %v1470, 0
        %1477 = vmatpush.bf16.xpose.msra.mxu0 0
        %1478 = vmatpush.bf16.xpose.msra.mxu0 0
        %1479 = vmatpush.bf16.xpose.msra.mxu0 0
        %1480 = vmatpush.bf16.xpose.msra.mxu0 0
        %1481 = vmatpush.bf16.xpose.msra.mxu0 0
        %1482 = vmatpush.bf16.xpose.msra.mxu0 0
        %1483 = vmatpush.bf16.xpose.msra.mxu0 0
        %1484 = vmatpush.bf16.xpose.msra.mxu0 %v1475
        %1485 = vmatmul.bf16.gmra.mxu0 %v1472
        %v1486 = vpop.f32.mrf.mxu0
        %v1487 = vadd.f32 0.0, %v1486
        %v1488 = vpop.f32.mrf.mxu0
        %1489 = vdwg.mxu0
        %1490 = vrot.lane.b32.xlu0 %v704, 88
        %v1491 = vpop.permute.xlu0 %1490
        %1492 = vrot.lane.b32.xlu0 %v704, 56
        %v1493 = vpop.permute.xlu0 %1492
        %v1495 = vsel %vm604, %v1491, 0
        %v1498 = vsel %vm604, %v1493, 0
        %1500 = vmatpush.bf16.xpose.msra.mxu0 0
        %1501 = vmatpush.bf16.xpose.msra.mxu0 0
        %1502 = vmatpush.bf16.xpose.msra.mxu0 0
        %1503 = vmatpush.bf16.xpose.msra.mxu0 0
        %1504 = vmatpush.bf16.xpose.msra.mxu0 0
        %1505 = vmatpush.bf16.xpose.msra.mxu0 0
        %1506 = vmatpush.bf16.xpose.msra.mxu0 0
        %1507 = vmatpush.bf16.xpose.msra.mxu0 %v1498
        %1508 = vmatmul.bf16.gmra.mxu0 %v1495
        %v1509 = vpop.f32.mrf.mxu0
        %v1510 = vadd.f32 0.0, %v1509
        %v1511 = vpop.f32.mrf.mxu0
        %1512 = vdwg.mxu0
        %1513 = vrot.lane.b32.xlu0 %v730, 88
        %v1514 = vpop.permute.xlu0 %1513
        %1515 = vrot.lane.b32.xlu0 %v730, 56
        %v1516 = vpop.permute.xlu0 %1515
        %v1518 = vsel %vm604, %v1514, 0
        %v1521 = vsel %vm604, %v1516, 0
        %1523 = vmatpush.bf16.xpose.msra.mxu0 0
        %1524 = vmatpush.bf16.xpose.msra.mxu0 0
        %1525 = vmatpush.bf16.xpose.msra.mxu0 0
        %1526 = vmatpush.bf16.xpose.msra.mxu0 0
        %1527 = vmatpush.bf16.xpose.msra.mxu0 0
        %1528 = vmatpush.bf16.xpose.msra.mxu0 0
        %1529 = vmatpush.bf16.xpose.msra.mxu0 0
        %1530 = vmatpush.bf16.xpose.msra.mxu0 %v1521
        %1531 = vmatmul.bf16.gmra.mxu0 %v1518
        %v1532 = vpop.f32.mrf.mxu0
        %v1533 = vadd.f32 0.0, %v1532
        %v1534 = vpop.f32.mrf.mxu0
        %1535 = vdwg.mxu0
        %1536 = vrot.lane.b32.xlu0 %v756, 88
        %v1537 = vpop.permute.xlu0 %1536
        %1538 = vrot.lane.b32.xlu0 %v756, 56
        %v1539 = vpop.permute.xlu0 %1538
        %v1541 = vsel %vm604, %v1537, 0
        %v1544 = vsel %vm604, %v1539, 0
        %1546 = vmatpush.bf16.xpose.msra.mxu0 0
        %1547 = vmatpush.bf16.xpose.msra.mxu0 0
        %1548 = vmatpush.bf16.xpose.msra.mxu0 0
        %1549 = vmatpush.bf16.xpose.msra.mxu0 0
        %1550 = vmatpush.bf16.xpose.msra.mxu0 0
        %1551 = vmatpush.bf16.xpose.msra.mxu0 0
        %1552 = vmatpush.bf16.xpose.msra.mxu0 0
        %1553 = vmatpush.bf16.xpose.msra.mxu0 %v1544
        %1554 = vmatmul.bf16.gmra.mxu0 %v1541
        %v1555 = vpop.f32.mrf.mxu0
        %v1556 = vadd.f32 0.0, %v1555
        %v1557 = vpop.f32.mrf.mxu0
        %1558 = vdwg.mxu0
        %1559 = vrot.lane.b32.xlu0 %v782, 88
        %v1560 = vpop.permute.xlu0 %1559
        %1561 = vrot.lane.b32.xlu0 %v782, 56
        %v1562 = vpop.permute.xlu0 %1561
        %v1564 = vsel %vm604, %v1560, 0
        %v1567 = vsel %vm604, %v1562, 0
        %1569 = vmatpush.bf16.xpose.msra.mxu0 0
        %1570 = vmatpush.bf16.xpose.msra.mxu0 0
        %1571 = vmatpush.bf16.xpose.msra.mxu0 0
        %1572 = vmatpush.bf16.xpose.msra.mxu0 0
        %1573 = vmatpush.bf16.xpose.msra.mxu0 0
        %1574 = vmatpush.bf16.xpose.msra.mxu0 0
        %1575 = vmatpush.bf16.xpose.msra.mxu0 0
        %1576 = vmatpush.bf16.xpose.msra.mxu0 %v1567
        %1577 = vmatmul.bf16.gmra.mxu0 %v1564
        %v1578 = vpop.f32.mrf.mxu0
        %v1579 = vadd.f32 0.0, %v1578
        %v1580 = vpop.f32.mrf.mxu0
        %1581 = vdwg.mxu0
        %1582 = vrot.lane.b32.xlu0 %v808, 88
        %v1583 = vpop.permute.xlu0 %1582
        %1584 = vrot.lane.b32.xlu0 %v808, 56
        %v1585 = vpop.permute.xlu0 %1584
        %v1587 = vsel %vm604, %v1583, 0
        %v1590 = vsel %vm604, %v1585, 0
        %1592 = vmatpush.bf16.xpose.msra.mxu0 0
        %1593 = vmatpush.bf16.xpose.msra.mxu0 0
        %1594 = vmatpush.bf16.xpose.msra.mxu0 0
        %1595 = vmatpush.bf16.xpose.msra.mxu0 0
        %1596 = vmatpush.bf16.xpose.msra.mxu0 0
        %1597 = vmatpush.bf16.xpose.msra.mxu0 0
        %1598 = vmatpush.bf16.xpose.msra.mxu0 0
        %1599 = vmatpush.bf16.xpose.msra.mxu0 %v1590
        %1600 = vmatmul.bf16.gmra.mxu0 %v1587
        %v1601 = vpop.f32.mrf.mxu0
        %v1602 = vadd.f32 0.0, %v1601
        %v1603 = vpop.f32.mrf.mxu0
        %1604 = vdwg.mxu0
        %1605 = vrot.lane.b32.xlu0 %v834, 88
        %v1606 = vpop.permute.xlu0 %1605
        %1607 = vrot.lane.b32.xlu0 %v834, 56
        %v1608 = vpop.permute.xlu0 %1607
        %v1610 = vsel %vm604, %v1606, 0
        %v1613 = vsel %vm604, %v1608, 0
        %1615 = vmatpush.bf16.xpose.msra.mxu0 0
        %1616 = vmatpush.bf16.xpose.msra.mxu0 0
        %1617 = vmatpush.bf16.xpose.msra.mxu0 0
        %1618 = vmatpush.bf16.xpose.msra.mxu0 0
        %1619 = vmatpush.bf16.xpose.msra.mxu0 0
        %1620 = vmatpush.bf16.xpose.msra.mxu0 0
        %1621 = vmatpush.bf16.xpose.msra.mxu0 0
        %1622 = vmatpush.bf16.xpose.msra.mxu0 %v1613
        %1623 = vmatmul.bf16.gmra.mxu0 %v1610
        %v1624 = vpop.f32.mrf.mxu0
        %v1625 = vadd.f32 0.0, %v1624
        %v1626 = vpop.f32.mrf.mxu0
        %1627 = vdwg.mxu0
        %1628 = vrot.lane.b32.xlu0 %v860, 88
        %v1629 = vpop.permute.xlu0 %1628
        %1630 = vrot.lane.b32.xlu0 %v860, 56
        %v1631 = vpop.permute.xlu0 %1630
        %v1633 = vsel %vm604, %v1629, 0
        %v1636 = vsel %vm604, %v1631, 0
        %1638 = vmatpush.bf16.xpose.msra.mxu0 0
        %1639 = vmatpush.bf16.xpose.msra.mxu0 0
        %1640 = vmatpush.bf16.xpose.msra.mxu0 0
        %1641 = vmatpush.bf16.xpose.msra.mxu0 0
        %1642 = vmatpush.bf16.xpose.msra.mxu0 0
        %1643 = vmatpush.bf16.xpose.msra.mxu0 0
        %1644 = vmatpush.bf16.xpose.msra.mxu0 0
        %1645 = vmatpush.bf16.xpose.msra.mxu0 %v1636
        %1646 = vmatmul.bf16.gmra.mxu0 %v1633
        %v1647 = vpop.f32.mrf.mxu0
        %v1648 = vadd.f32 0.0, %v1647
        %v1649 = vpop.f32.mrf.mxu0
        %1650 = vdwg.mxu0
        %1651 = vrot.lane.b32.xlu0 %v886, 88
        %v1652 = vpop.permute.xlu0 %1651
        %1653 = vrot.lane.b32.xlu0 %v886, 56
        %v1654 = vpop.permute.xlu0 %1653
        %v1656 = vsel %vm604, %v1652, 0
        %v1659 = vsel %vm604, %v1654, 0
        %1661 = vmatpush.bf16.xpose.msra.mxu0 0
        %1662 = vmatpush.bf16.xpose.msra.mxu0 0
        %1663 = vmatpush.bf16.xpose.msra.mxu0 0
        %1664 = vmatpush.bf16.xpose.msra.mxu0 0
        %1665 = vmatpush.bf16.xpose.msra.mxu0 0
        %1666 = vmatpush.bf16.xpose.msra.mxu0 0
        %1667 = vmatpush.bf16.xpose.msra.mxu0 0
        %1668 = vmatpush.bf16.xpose.msra.mxu0 %v1659
        %1669 = vmatmul.bf16.gmra.mxu0 %v1656
        %v1670 = vpop.f32.mrf.mxu0
        %v1671 = vadd.f32 0.0, %v1670
        %v1672 = vpop.f32.mrf.mxu0
        %1673 = vdwg.mxu0
        %1674 = vrot.lane.b32.xlu0 %v912, 88
        %v1675 = vpop.permute.xlu0 %1674
        %1676 = vrot.lane.b32.xlu0 %v912, 56
        %v1677 = vpop.permute.xlu0 %1676
        %v1679 = vsel %vm604, %v1675, 0
        %v1682 = vsel %vm604, %v1677, 0
        %1684 = vmatpush.bf16.xpose.msra.mxu0 0
        %1685 = vmatpush.bf16.xpose.msra.mxu0 0
        %1686 = vmatpush.bf16.xpose.msra.mxu0 0
        %1687 = vmatpush.bf16.xpose.msra.mxu0 0
        %1688 = vmatpush.bf16.xpose.msra.mxu0 0
        %1689 = vmatpush.bf16.xpose.msra.mxu0 0
        %1690 = vmatpush.bf16.xpose.msra.mxu0 0
        %1691 = vmatpush.bf16.xpose.msra.mxu0 %v1682
        %1692 = vmatmul.bf16.gmra.mxu0 %v1679
        %v1693 = vpop.f32.mrf.mxu0
        %v1694 = vadd.f32 0.0, %v1693
        %v1695 = vpop.f32.mrf.mxu0
        %1696 = vdwg.mxu0
        %1697 = vrot.lane.b32.xlu0 %v938, 88
        %v1698 = vpop.permute.xlu0 %1697
        %1699 = vrot.lane.b32.xlu0 %v938, 56
        %v1700 = vpop.permute.xlu0 %1699
        %v1702 = vsel %vm604, %v1698, 0
        %v1705 = vsel %vm604, %v1700, 0
        %1707 = vmatpush.bf16.xpose.msra.mxu0 0
        %1708 = vmatpush.bf16.xpose.msra.mxu0 0
        %1709 = vmatpush.bf16.xpose.msra.mxu0 0
        %1710 = vmatpush.bf16.xpose.msra.mxu0 0
        %1711 = vmatpush.bf16.xpose.msra.mxu0 0
        %1712 = vmatpush.bf16.xpose.msra.mxu0 0
        %1713 = vmatpush.bf16.xpose.msra.mxu0 0
        %1714 = vmatpush.bf16.xpose.msra.mxu0 %v1705
        %1715 = vmatmul.bf16.gmra.mxu0 %v1702
        %v1716 = vpop.f32.mrf.mxu0
        %v1717 = vadd.f32 0.0, %v1716
        %v1718 = vpop.f32.mrf.mxu0
        %1719 = vdwg.mxu0
        %1720 = vrot.lane.b32.xlu0 %v964, 88
        %v1721 = vpop.permute.xlu0 %1720
        %1722 = vrot.lane.b32.xlu0 %v964, 56
        %v1723 = vpop.permute.xlu0 %1722
        %v1725 = vsel %vm604, %v1721, 0
        %v1728 = vsel %vm604, %v1723, 0
        %1730 = vmatpush.bf16.xpose.msra.mxu0 0
        %1731 = vmatpush.bf16.xpose.msra.mxu0 0
        %1732 = vmatpush.bf16.xpose.msra.mxu0 0
        %1733 = vmatpush.bf16.xpose.msra.mxu0 0
        %1734 = vmatpush.bf16.xpose.msra.mxu0 0
        %1735 = vmatpush.bf16.xpose.msra.mxu0 0
        %1736 = vmatpush.bf16.xpose.msra.mxu0 0
        %1737 = vmatpush.bf16.xpose.msra.mxu0 %v1728
        %1738 = vmatmul.bf16.gmra.mxu0 %v1725
        %v1739 = vpop.f32.mrf.mxu0
        %v1740 = vadd.f32 0.0, %v1739
        %v1741 = vpop.f32.mrf.mxu0
        %1742 = vdwg.mxu0
        %1743 = vrot.lane.b32.xlu0 %v990, 88
        %v1744 = vpop.permute.xlu0 %1743
        %1745 = vrot.lane.b32.xlu0 %v990, 56
        %v1746 = vpop.permute.xlu0 %1745
        %v1748 = vsel %vm604, %v1744, 0
        %v1751 = vsel %vm604, %v1746, 0
        %1753 = vmatpush.bf16.xpose.msra.mxu0 0
        %1754 = vmatpush.bf16.xpose.msra.mxu0 0
        %1755 = vmatpush.bf16.xpose.msra.mxu0 0
        %1756 = vmatpush.bf16.xpose.msra.mxu0 0
        %1757 = vmatpush.bf16.xpose.msra.mxu0 0
        %1758 = vmatpush.bf16.xpose.msra.mxu0 0
        %1759 = vmatpush.bf16.xpose.msra.mxu0 0
        %1760 = vmatpush.bf16.xpose.msra.mxu0 %v1751
        %1761 = vmatmul.bf16.gmra.mxu0 %v1748
        %v1762 = vpop.f32.mrf.mxu0
        %v1763 = vadd.f32 0.0, %v1762
        %v1764 = vpop.f32.mrf.mxu0
        %1765 = vdwg.mxu0
        %1766 = vrot.lane.b32.xlu0 %v1016, 88
        %v1767 = vpop.permute.xlu0 %1766
        %1768 = vrot.lane.b32.xlu0 %v1016, 56
        %v1769 = vpop.permute.xlu0 %1768
        %v1771 = vsel %vm604, %v1767, 0
        %v1774 = vsel %vm604, %v1769, 0
        %1776 = vmatpush.bf16.xpose.msra.mxu0 0
        %1777 = vmatpush.bf16.xpose.msra.mxu0 0
        %1778 = vmatpush.bf16.xpose.msra.mxu0 0
        %1779 = vmatpush.bf16.xpose.msra.mxu0 0
        %1780 = vmatpush.bf16.xpose.msra.mxu0 0
        %1781 = vmatpush.bf16.xpose.msra.mxu0 0
        %1782 = vmatpush.bf16.xpose.msra.mxu0 0
        %1783 = vmatpush.bf16.xpose.msra.mxu0 %v1774
        %1784 = vmatmul.bf16.gmra.mxu0 %v1771
        %v1785 = vpop.f32.mrf.mxu0
        %v1786 = vadd.f32 0.0, %v1785
        %v1787 = vpop.f32.mrf.mxu0
        %1788 = vdwg.mxu0
        %1789 = vrot.lane.b32.xlu0 %v1042, 88
        %v1790 = vpop.permute.xlu0 %1789
        %1791 = vrot.lane.b32.xlu0 %v1042, 56
        %v1792 = vpop.permute.xlu0 %1791
        %v1794 = vsel %vm604, %v1790, 0
        %v1797 = vsel %vm604, %v1792, 0
        %1799 = vmatpush.bf16.xpose.msra.mxu0 0
        %1800 = vmatpush.bf16.xpose.msra.mxu0 0
        %1801 = vmatpush.bf16.xpose.msra.mxu0 0
        %1802 = vmatpush.bf16.xpose.msra.mxu0 0
        %1803 = vmatpush.bf16.xpose.msra.mxu0 0
        %1804 = vmatpush.bf16.xpose.msra.mxu0 0
        %1805 = vmatpush.bf16.xpose.msra.mxu0 0
        %1806 = vmatpush.bf16.xpose.msra.mxu0 %v1797
        %1807 = vmatmul.bf16.gmra.mxu0 %v1794
        %v1808 = vpop.f32.mrf.mxu0
        %v1809 = vadd.f32 0.0, %v1808
        %v1810 = vpop.f32.mrf.mxu0
        %1811 = vdwg.mxu0
        %1812 = vrot.lane.b32.xlu0 %v1068, 88
        %v1813 = vpop.permute.xlu0 %1812
        %1814 = vrot.lane.b32.xlu0 %v1068, 56
        %v1815 = vpop.permute.xlu0 %1814
        %v1817 = vsel %vm604, %v1813, 0
        %v1820 = vsel %vm604, %v1815, 0
        %1822 = vmatpush.bf16.xpose.msra.mxu0 0
        %1823 = vmatpush.bf16.xpose.msra.mxu0 0
        %1824 = vmatpush.bf16.xpose.msra.mxu0 0
        %1825 = vmatpush.bf16.xpose.msra.mxu0 0
        %1826 = vmatpush.bf16.xpose.msra.mxu0 0
        %1827 = vmatpush.bf16.xpose.msra.mxu0 0
        %1828 = vmatpush.bf16.xpose.msra.mxu0 0
        %1829 = vmatpush.bf16.xpose.msra.mxu0 %v1820
        %1830 = vmatmul.bf16.gmra.mxu0 %v1817
        %v1831 = vpop.f32.mrf.mxu0
        %v1832 = vadd.f32 0.0, %v1831
        %v1833 = vpop.f32.mrf.mxu0
        %1834 = vdwg.mxu0
        %1835 = vrot.lane.b32.xlu0 %v1094, 88
        %v1836 = vpop.permute.xlu0 %1835
        %1837 = vrot.lane.b32.xlu0 %v1094, 56
        %v1838 = vpop.permute.xlu0 %1837
        %v1840 = vsel %vm604, %v1836, 0
        %v1843 = vsel %vm604, %v1838, 0
        %1845 = vmatpush.bf16.xpose.msra.mxu0 0
        %1846 = vmatpush.bf16.xpose.msra.mxu0 0
        %1847 = vmatpush.bf16.xpose.msra.mxu0 0
        %1848 = vmatpush.bf16.xpose.msra.mxu0 0
        %1849 = vmatpush.bf16.xpose.msra.mxu0 0
        %1850 = vmatpush.bf16.xpose.msra.mxu0 0
        %1851 = vmatpush.bf16.xpose.msra.mxu0 0
        %1852 = vmatpush.bf16.xpose.msra.mxu0 %v1843
        %1853 = vmatmul.bf16.gmra.mxu0 %v1840
        %v1854 = vpop.f32.mrf.mxu0
        %v1855 = vadd.f32 0.0, %v1854
        %v1856 = vpop.f32.mrf.mxu0
        %1857 = vdwg.mxu0
        %v1858 = vmul.f32 %v1418, 0.35355338
        %v1859 = vmul.f32 %v1441, 0.35355338
        %v1860 = vmul.f32 %v1464, 0.35355338
        %v1861 = vmul.f32 %v1487, 0.35355338
        %v1862 = vmul.f32 %v1510, 0.35355338
        %v1863 = vmul.f32 %v1533, 0.35355338
        %v1864 = vmul.f32 %v1556, 0.35355338
        %v1865 = vmul.f32 %v1579, 0.35355338
        %v1866 = vmul.f32 %v1602, 0.35355338
        %v1867 = vmul.f32 %v1625, 0.35355338
        %v1868 = vmul.f32 %v1648, 0.35355338
        %v1869 = vmul.f32 %v1671, 0.35355338
        %v1870 = vmul.f32 %v1694, 0.35355338
        %v1871 = vmul.f32 %v1717, 0.35355338
        %v1872 = vmul.f32 %v1740, 0.35355338
        %v1873 = vmul.f32 %v1763, 0.35355338
        %v1874 = vmul.f32 %v1786, 0.35355338
        %v1875 = vmul.f32 %v1809, 0.35355338
        %v1876 = vmul.f32 %v1832, 0.35355338
        %v1877 = vmul.f32 %v1855, 0.35355338
        %v1878 = vadd.f32 %v1858, %v367
        %v1879 = vadd.f32 %v1859, %v367
        %v1880 = vadd.f32 %v1860, %v367
        %v1881 = vadd.f32 %v1861, %v367
        %v1882 = vadd.f32 %v1862, %v367
        %v1883 = vadd.f32 %v1863, %v367
        %v1884 = vadd.f32 %v1864, %v367
        %v1885 = vadd.f32 %v1865, %v367
        %v1886 = vadd.f32 %v1866, %v367
        %v1887 = vadd.f32 %v1867, %v367
        %v1888 = vadd.f32 %v1868, %v367
        %v1889 = vadd.f32 %v1869, %v367
        %v1890 = vadd.f32 %v1870, %v367
        %v1891 = vadd.f32 %v1871, %v367
        %v1892 = vadd.f32 %v1872, %v367
        %v1893 = vadd.f32 %v1873, %v367
        %v1894 = vadd.f32 %v1874, %v367
        %v1895 = vadd.f32 %v1875, %v367
        %v1896 = vadd.f32 %v1876, %v367
        %v1897 = vadd.f32 %v1877, %v367
        %v1898 = vsel %vm604, %v1878, -inf
        %1899 = vmax.xlane.f32.xlu0 %v1898
        %v1900 = vpop.xlane.xlu0 %1899
        %v1901 = vsel %vm604, %v1879, -inf
        %1902 = vmax.xlane.f32.xlu0 %v1901
        %v1903 = vpop.xlane.xlu0 %1902
        %v1904 = vsel %vm604, %v1880, -inf
        %1905 = vmax.xlane.f32.xlu0 %v1904
        %v1906 = vpop.xlane.xlu0 %1905
        %v1907 = vsel %vm604, %v1881, -inf
        %1908 = vmax.xlane.f32.xlu0 %v1907
        %v1909 = vpop.xlane.xlu0 %1908
        %v1910 = vsel %vm604, %v1882, -inf
        %1911 = vmax.xlane.f32.xlu0 %v1910
        %v1912 = vpop.xlane.xlu0 %1911
        %v1913 = vsel %vm604, %v1883, -inf
        %1914 = vmax.xlane.f32.xlu0 %v1913
        %v1915 = vpop.xlane.xlu0 %1914
        %v1916 = vsel %vm604, %v1884, -inf
        %1917 = vmax.xlane.f32.xlu0 %v1916
        %v1918 = vpop.xlane.xlu0 %1917
        %v1919 = vsel %vm604, %v1885, -inf
        %1920 = vmax.xlane.f32.xlu0 %v1919
        %v1921 = vpop.xlane.xlu0 %1920
        %v1922 = vsel %vm604, %v1886, -inf
        %1923 = vmax.xlane.f32.xlu0 %v1922
        %v1924 = vpop.xlane.xlu0 %1923
        %v1925 = vsel %vm604, %v1887, -inf
        %1926 = vmax.xlane.f32.xlu0 %v1925
        %v1927 = vpop.xlane.xlu0 %1926
        %v1928 = vsel %vm604, %v1888, -inf
        %1929 = vmax.xlane.f32.xlu0 %v1928
        %v1930 = vpop.xlane.xlu0 %1929
        %v1931 = vsel %vm604, %v1889, -inf
        %1932 = vmax.xlane.f32.xlu0 %v1931
        %v1933 = vpop.xlane.xlu0 %1932
        %v1934 = vsel %vm604, %v1890, -inf
        %1935 = vmax.xlane.f32.xlu0 %v1934
        %v1936 = vpop.xlane.xlu0 %1935
        %v1937 = vsel %vm604, %v1891, -inf
        %1938 = vmax.xlane.f32.xlu0 %v1937
        %v1939 = vpop.xlane.xlu0 %1938
        %v1940 = vsel %vm604, %v1892, -inf
        %1941 = vmax.xlane.f32.xlu0 %v1940
        %v1942 = vpop.xlane.xlu0 %1941
        %v1943 = vsel %vm604, %v1893, -inf
        %1944 = vmax.xlane.f32.xlu0 %v1943
        %v1945 = vpop.xlane.xlu0 %1944
        %v1946 = vsel %vm604, %v1894, -inf
        %1947 = vmax.xlane.f32.xlu0 %v1946
        %v1948 = vpop.xlane.xlu0 %1947
        %v1949 = vsel %vm604, %v1895, -inf
        %1950 = vmax.xlane.f32.xlu0 %v1949
        %v1951 = vpop.xlane.xlu0 %1950
        %v1952 = vsel %vm604, %v1896, -inf
        %1953 = vmax.xlane.f32.xlu0 %v1952
        %v1954 = vpop.xlane.xlu0 %1953
        %v1955 = vsel %vm604, %v1897, -inf
        %1956 = vmax.xlane.f32.xlu0 %v1955
        %v1957 = vpop.xlane.xlu0 %1956
        %v1958 = vsub.f32 %v1878, %v1900
        %v1959 = vsub.f32 %v1879, %v1903
        %v1960 = vsub.f32 %v1880, %v1906
        %v1961 = vsub.f32 %v1881, %v1909
        %v1962 = vsub.f32 %v1882, %v1912
        %v1963 = vsub.f32 %v1883, %v1915
        %v1964 = vsub.f32 %v1884, %v1918
        %v1965 = vsub.f32 %v1885, %v1921
        %v1966 = vsub.f32 %v1886, %v1924
        %v1967 = vsub.f32 %v1887, %v1927
        %v1968 = vsub.f32 %v1888, %v1930
        %v1969 = vsub.f32 %v1889, %v1933
        %v1970 = vsub.f32 %v1890, %v1936
        %v1971 = vsub.f32 %v1891, %v1939
        %v1972 = vsub.f32 %v1892, %v1942
        %v1973 = vsub.f32 %v1893, %v1945
        %v1974 = vsub.f32 %v1894, %v1948
        %v1975 = vsub.f32 %v1895, %v1951
        %v1976 = vsub.f32 %v1896, %v1954
        %v1977 = vsub.f32 %v1897, %v1957
        %v1978 = vmul.f32 %v1958, 1.442695
        %v1979 = vpow.pop %v1978
        %v1980 = vmul.f32 %v1959, 1.442695
        %v1981 = vpow.pop %v1980
        %v1982 = vmul.f32 %v1960, 1.442695
        %v1983 = vpow.pop %v1982
        %v1984 = vmul.f32 %v1961, 1.442695
        %v1985 = vpow.pop %v1984
        %v1986 = vmul.f32 %v1962, 1.442695
        %v1987 = vpow.pop %v1986
        %v1988 = vmul.f32 %v1963, 1.442695
        %v1989 = vpow.pop %v1988
        %v1990 = vmul.f32 %v1964, 1.442695
        %v1991 = vpow.pop %v1990
        %v1992 = vmul.f32 %v1965, 1.442695
        %v1993 = vpow.pop %v1992
        %v1994 = vmul.f32 %v1966, 1.442695
        %v1995 = vpow.pop %v1994
        %v1996 = vmul.f32 %v1967, 1.442695
        %v1997 = vpow.pop %v1996
        %v1998 = vmul.f32 %v1968, 1.442695
        %v1999 = vpow.pop %v1998
        %v2000 = vmul.f32 %v1969, 1.442695
        %v2001 = vpow.pop %v2000
        %v2002 = vmul.f32 %v1970, 1.442695
        %v2003 = vpow.pop %v2002
        %v2004 = vmul.f32 %v1971, 1.442695
        %v2005 = vpow.pop %v2004
        %v2006 = vmul.f32 %v1972, 1.442695
        %v2007 = vpow.pop %v2006
        %v2008 = vmul.f32 %v1973, 1.442695
        %v2009 = vpow.pop %v2008
        %v2010 = vmul.f32 %v1974, 1.442695
        %v2011 = vpow.pop %v2010
        %v2012 = vmul.f32 %v1975, 1.442695
        %v2013 = vpow.pop %v2012
        %v2014 = vmul.f32 %v1976, 1.442695
        %v2015 = vpow.pop %v2014
        %v2016 = vmul.f32 %v1977, 1.442695
        %v2017 = vpow.pop %v2016
        %v2018 = vsel %vm604, %v1979, 0.0
        %2019 = vadd.xlane.f32.xlu0 %v2018
        %v2020 = vpop.xlane.xlu0 %2019
        %v2021 = vsel %vm604, %v1981, 0.0
        %2022 = vadd.xlane.f32.xlu0 %v2021
        %v2023 = vpop.xlane.xlu0 %2022
        %v2024 = vsel %vm604, %v1983, 0.0
        %2025 = vadd.xlane.f32.xlu0 %v2024
        %v2026 = vpop.xlane.xlu0 %2025
        %v2027 = vsel %vm604, %v1985, 0.0
        %2028 = vadd.xlane.f32.xlu0 %v2027
        %v2029 = vpop.xlane.xlu0 %2028
        %v2030 = vsel %vm604, %v1987, 0.0
        %2031 = vadd.xlane.f32.xlu0 %v2030
        %v2032 = vpop.xlane.xlu0 %2031
        %v2033 = vsel %vm604, %v1989, 0.0
        %2034 = vadd.xlane.f32.xlu0 %v2033
        %v2035 = vpop.xlane.xlu0 %2034
        %v2036 = vsel %vm604, %v1991, 0.0
        %2037 = vadd.xlane.f32.xlu0 %v2036
        %v2038 = vpop.xlane.xlu0 %2037
        %v2039 = vsel %vm604, %v1993, 0.0
        %2040 = vadd.xlane.f32.xlu0 %v2039
        %v2041 = vpop.xlane.xlu0 %2040
        %v2042 = vsel %vm604, %v1995, 0.0
        %2043 = vadd.xlane.f32.xlu0 %v2042
        %v2044 = vpop.xlane.xlu0 %2043
        %v2045 = vsel %vm604, %v1997, 0.0
        %2046 = vadd.xlane.f32.xlu0 %v2045
        %v2047 = vpop.xlane.xlu0 %2046
        %v2048 = vsel %vm604, %v1999, 0.0
        %2049 = vadd.xlane.f32.xlu0 %v2048
        %v2050 = vpop.xlane.xlu0 %2049
        %v2051 = vsel %vm604, %v2001, 0.0
        %2052 = vadd.xlane.f32.xlu0 %v2051
        %v2053 = vpop.xlane.xlu0 %2052
        %v2054 = vsel %vm604, %v2003, 0.0
        %2055 = vadd.xlane.f32.xlu0 %v2054
        %v2056 = vpop.xlane.xlu0 %2055
        %v2057 = vsel %vm604, %v2005, 0.0
        %2058 = vadd.xlane.f32.xlu0 %v2057
        %v2059 = vpop.xlane.xlu0 %2058
        %v2060 = vsel %vm604, %v2007, 0.0
        %2061 = vadd.xlane.f32.xlu0 %v2060
        %v2062 = vpop.xlane.xlu0 %2061
        %v2063 = vsel %vm604, %v2009, 0.0
        %2064 = vadd.xlane.f32.xlu0 %v2063
        %v2065 = vpop.xlane.xlu0 %2064
        %v2066 = vsel %vm604, %v2011, 0.0
        %2067 = vadd.xlane.f32.xlu0 %v2066
        %v2068 = vpop.xlane.xlu0 %2067
        %v2069 = vsel %vm604, %v2013, 0.0
        %2070 = vadd.xlane.f32.xlu0 %v2069
        %v2071 = vpop.xlane.xlu0 %2070
        %v2072 = vsel %vm604, %v2015, 0.0
        %2073 = vadd.xlane.f32.xlu0 %v2072
        %v2074 = vpop.xlane.xlu0 %2073
        %v2075 = vsel %vm604, %v2017, 0.0
        %2076 = vadd.xlane.f32.xlu0 %v2075
        %v2077 = vpop.xlane.xlu0 %2076
        %v2078 = vrcp.pop %v2020
        %v2079 = vrcp.pop %v2023
        %v2080 = vrcp.pop %v2026
        %v2081 = vrcp.pop %v2029
        %v2082 = vrcp.pop %v2032
        %v2083 = vrcp.pop %v2035
        %v2084 = vrcp.pop %v2038
        %v2085 = vrcp.pop %v2041
        %v2086 = vrcp.pop %v2044
        %v2087 = vrcp.pop %v2047
        %v2088 = vrcp.pop %v2050
        %v2089 = vrcp.pop %v2053
        %v2090 = vrcp.pop %v2056
        %v2091 = vrcp.pop %v2059
        %v2092 = vrcp.pop %v2062
        %v2093 = vrcp.pop %v2065
        %v2094 = vrcp.pop %v2068
        %v2095 = vrcp.pop %v2071
        %v2096 = vrcp.pop %v2074
        %v2097 = vrcp.pop %v2077
        %v2098 = vmul.f32 %v1979, %v2078
        %v2099 = vmul.f32 %v1981, %v2079
        %v2100 = vmul.f32 %v1983, %v2080
        %v2101 = vmul.f32 %v1985, %v2081
        %v2102 = vmul.f32 %v1987, %v2082
        %v2103 = vmul.f32 %v1989, %v2083
        %v2104 = vmul.f32 %v1991, %v2084
        %v2105 = vmul.f32 %v1993, %v2085
        %v2106 = vmul.f32 %v1995, %v2086
        %v2107 = vmul.f32 %v1997, %v2087
        %v2108 = vmul.f32 %v1999, %v2088
        %v2109 = vmul.f32 %v2001, %v2089
        %v2110 = vmul.f32 %v2003, %v2090
        %v2111 = vmul.f32 %v2005, %v2091
        %v2112 = vmul.f32 %v2007, %v2092
        %v2113 = vmul.f32 %v2009, %v2093
        %v2114 = vmul.f32 %v2011, %v2094
        %v2115 = vmul.f32 %v2013, %v2095
        %v2116 = vmul.f32 %v2015, %v2096
        %v2117 = vmul.f32 %v2017, %v2097
        %v2118 = vpack.c.bf16 %v2098, %v2098
        %v2119 = vpack.c.bf16 %v2099, %v2099
        %v2120 = vpack.c.bf16 %v2100, %v2100
        %v2121 = vpack.c.bf16 %v2101, %v2101
        %v2122 = vpack.c.bf16 %v2102, %v2102
        %v2123 = vpack.c.bf16 %v2103, %v2103
        %v2124 = vpack.c.bf16 %v2104, %v2104
        %v2125 = vpack.c.bf16 %v2105, %v2105
        %v2126 = vpack.c.bf16 %v2106, %v2106
        %v2127 = vpack.c.bf16 %v2107, %v2107
        %v2128 = vpack.c.bf16 %v2108, %v2108
        %v2129 = vpack.c.bf16 %v2109, %v2109
        %v2130 = vpack.c.bf16 %v2110, %v2110
        %v2131 = vpack.c.bf16 %v2111, %v2111
        %v2132 = vpack.c.bf16 %v2112, %v2112
        %v2133 = vpack.c.bf16 %v2113, %v2113
        %v2134 = vpack.c.bf16 %v2114, %v2114
        %v2135 = vpack.c.bf16 %v2115, %v2115
        %v2136 = vpack.c.bf16 %v2116, %v2116
        %v2137 = vpack.c.bf16 %v2117, %v2117
        %v2138 = vpack.c.bf16 %v508, %v508
        %v2139 = vpack.c.bf16 %v510, %v510
        %v2140 = vpack.c.bf16 %v513, %v513
        %v2141 = vpack.c.bf16 %v515, %v515
        %v2142 = vpack.c.bf16 %v518, %v518
        %v2143 = vpack.c.bf16 %v520, %v520
        %v2144 = vpack.c.bf16 %v523, %v523
        %v2145 = vpack.c.bf16 %v525, %v525
        %v2146 = vpack.c.bf16 %v528, %v528
        %v2147 = vpack.c.bf16 %v530, %v530
        %v2148 = vpack.c.bf16 %v533, %v533
        %v2149 = vpack.c.bf16 %v535, %v535
        %v2150 = vpack.c.bf16 %v538, %v538
        %v2151 = vpack.c.bf16 %v540, %v540
        %v2152 = vpack.c.bf16 %v543, %v543
        %v2153 = vpack.c.bf16 %v545, %v545
        %v2154 = vpack.c.bf16 %v548, %v548
        %v2155 = vpack.c.bf16 %v550, %v550
        %v2156 = vpack.c.bf16 %v553, %v553
        %v2157 = vpack.c.bf16 %v555, %v555
        %v2159 = vsel %vm604, %v2118, 0
        %vm2161 = vcmask 1043456
        %v2163 = vsel %vm2161, %v2138, 0
        %2165 = vmatpush.bf16.msra.mxu0 0
        %2166 = vmatpush.bf16.msra.mxu0 0
        %2167 = vmatpush.bf16.msra.mxu0 0
        %2168 = vmatpush.bf16.msra.mxu0 0
        %2169 = vmatpush.bf16.msra.mxu0 0
        %2170 = vmatpush.bf16.msra.mxu0 0
        %2171 = vmatpush.bf16.msra.mxu0 0
        %2172 = vmatpush.bf16.msra.mxu0 %v2163
        %2173 = vmatmul.bf16.gmra.mxu0 %v2159
        %v2174 = vpop.f32.mrf.mxu0
        %v2175 = vadd.f32 0.0, %v2174
        %v2176 = vpop.f32.mrf.mxu0
        %2177 = vdwg.mxu0
        %v2179 = vsel %vm604, %v2119, 0
        %v2182 = vsel %vm2161, %v2139, 0
        %2184 = vmatpush.bf16.msra.mxu0 0
        %2185 = vmatpush.bf16.msra.mxu0 0
        %2186 = vmatpush.bf16.msra.mxu0 0
        %2187 = vmatpush.bf16.msra.mxu0 0
        %2188 = vmatpush.bf16.msra.mxu0 0
        %2189 = vmatpush.bf16.msra.mxu0 0
        %2190 = vmatpush.bf16.msra.mxu0 0
        %2191 = vmatpush.bf16.msra.mxu0 %v2182
        %2192 = vmatmul.bf16.gmra.mxu0 %v2179
        %v2193 = vpop.f32.mrf.mxu0
        %v2194 = vadd.f32 0.0, %v2193
        %v2195 = vpop.f32.mrf.mxu0
        %2196 = vdwg.mxu0
        %v2198 = vsel %vm604, %v2120, 0
        %v2201 = vsel %vm2161, %v2140, 0
        %2203 = vmatpush.bf16.msra.mxu0 0
        %2204 = vmatpush.bf16.msra.mxu0 0
        %2205 = vmatpush.bf16.msra.mxu0 0
        %2206 = vmatpush.bf16.msra.mxu0 0
        %2207 = vmatpush.bf16.msra.mxu0 0
        %2208 = vmatpush.bf16.msra.mxu0 0
        %2209 = vmatpush.bf16.msra.mxu0 0
        %2210 = vmatpush.bf16.msra.mxu0 %v2201
        %2211 = vmatmul.bf16.gmra.mxu0 %v2198
        %v2212 = vpop.f32.mrf.mxu0
        %v2213 = vadd.f32 0.0, %v2212
        %v2214 = vpop.f32.mrf.mxu0
        %2215 = vdwg.mxu0
        %v2217 = vsel %vm604, %v2121, 0
        %v2220 = vsel %vm2161, %v2141, 0
        %2222 = vmatpush.bf16.msra.mxu0 0
        %2223 = vmatpush.bf16.msra.mxu0 0
        %2224 = vmatpush.bf16.msra.mxu0 0
        %2225 = vmatpush.bf16.msra.mxu0 0
        %2226 = vmatpush.bf16.msra.mxu0 0
        %2227 = vmatpush.bf16.msra.mxu0 0
        %2228 = vmatpush.bf16.msra.mxu0 0
        %2229 = vmatpush.bf16.msra.mxu0 %v2220
        %2230 = vmatmul.bf16.gmra.mxu0 %v2217
        %v2231 = vpop.f32.mrf.mxu0
        %v2232 = vadd.f32 0.0, %v2231
        %v2233 = vpop.f32.mrf.mxu0
        %2234 = vdwg.mxu0
        %v2236 = vsel %vm604, %v2122, 0
        %v2239 = vsel %vm2161, %v2142, 0
        %2241 = vmatpush.bf16.msra.mxu0 0
        %2242 = vmatpush.bf16.msra.mxu0 0
        %2243 = vmatpush.bf16.msra.mxu0 0
        %2244 = vmatpush.bf16.msra.mxu0 0
        %2245 = vmatpush.bf16.msra.mxu0 0
        %2246 = vmatpush.bf16.msra.mxu0 0
        %2247 = vmatpush.bf16.msra.mxu0 0
        %2248 = vmatpush.bf16.msra.mxu0 %v2239
        %2249 = vmatmul.bf16.gmra.mxu0 %v2236
        %v2250 = vpop.f32.mrf.mxu0
        %v2251 = vadd.f32 0.0, %v2250
        %v2252 = vpop.f32.mrf.mxu0
        %2253 = vdwg.mxu0
        %v2255 = vsel %vm604, %v2123, 0
        %v2258 = vsel %vm2161, %v2143, 0
        %2260 = vmatpush.bf16.msra.mxu0 0
        %2261 = vmatpush.bf16.msra.mxu0 0
        %2262 = vmatpush.bf16.msra.mxu0 0
        %2263 = vmatpush.bf16.msra.mxu0 0
        %2264 = vmatpush.bf16.msra.mxu0 0
        %2265 = vmatpush.bf16.msra.mxu0 0
        %2266 = vmatpush.bf16.msra.mxu0 0
        %2267 = vmatpush.bf16.msra.mxu0 %v2258
        %2268 = vmatmul.bf16.gmra.mxu0 %v2255
        %v2269 = vpop.f32.mrf.mxu0
        %v2270 = vadd.f32 0.0, %v2269
        %v2271 = vpop.f32.mrf.mxu0
        %2272 = vdwg.mxu0
        %v2274 = vsel %vm604, %v2124, 0
        %v2277 = vsel %vm2161, %v2144, 0
        %2279 = vmatpush.bf16.msra.mxu0 0
        %2280 = vmatpush.bf16.msra.mxu0 0
        %2281 = vmatpush.bf16.msra.mxu0 0
        %2282 = vmatpush.bf16.msra.mxu0 0
        %2283 = vmatpush.bf16.msra.mxu0 0
        %2284 = vmatpush.bf16.msra.mxu0 0
        %2285 = vmatpush.bf16.msra.mxu0 0
        %2286 = vmatpush.bf16.msra.mxu0 %v2277
        %2287 = vmatmul.bf16.gmra.mxu0 %v2274
        %v2288 = vpop.f32.mrf.mxu0
        %v2289 = vadd.f32 0.0, %v2288
        %v2290 = vpop.f32.mrf.mxu0
        %2291 = vdwg.mxu0
        %v2293 = vsel %vm604, %v2125, 0
        %v2296 = vsel %vm2161, %v2145, 0
        %2298 = vmatpush.bf16.msra.mxu0 0
        %2299 = vmatpush.bf16.msra.mxu0 0
        %2300 = vmatpush.bf16.msra.mxu0 0
        %2301 = vmatpush.bf16.msra.mxu0 0
        %2302 = vmatpush.bf16.msra.mxu0 0
        %2303 = vmatpush.bf16.msra.mxu0 0
        %2304 = vmatpush.bf16.msra.mxu0 0
        %2305 = vmatpush.bf16.msra.mxu0 %v2296
        %2306 = vmatmul.bf16.gmra.mxu0 %v2293
        %v2307 = vpop.f32.mrf.mxu0
        %v2308 = vadd.f32 0.0, %v2307
        %v2309 = vpop.f32.mrf.mxu0
        %2310 = vdwg.mxu0
        %v2312 = vsel %vm604, %v2126, 0
        %v2315 = vsel %vm2161, %v2146, 0
        %2317 = vmatpush.bf16.msra.mxu0 0
        %2318 = vmatpush.bf16.msra.mxu0 0
        %2319 = vmatpush.bf16.msra.mxu0 0
        %2320 = vmatpush.bf16.msra.mxu0 0
        %2321 = vmatpush.bf16.msra.mxu0 0
        %2322 = vmatpush.bf16.msra.mxu0 0
        %2323 = vmatpush.bf16.msra.mxu0 0
        %2324 = vmatpush.bf16.msra.mxu0 %v2315
        %2325 = vmatmul.bf16.gmra.mxu0 %v2312
        %v2326 = vpop.f32.mrf.mxu0
        %v2327 = vadd.f32 0.0, %v2326
        %v2328 = vpop.f32.mrf.mxu0
        %2329 = vdwg.mxu0
        %v2331 = vsel %vm604, %v2127, 0
        %v2334 = vsel %vm2161, %v2147, 0
        %2336 = vmatpush.bf16.msra.mxu0 0
        %2337 = vmatpush.bf16.msra.mxu0 0
        %2338 = vmatpush.bf16.msra.mxu0 0
        %2339 = vmatpush.bf16.msra.mxu0 0
        %2340 = vmatpush.bf16.msra.mxu0 0
        %2341 = vmatpush.bf16.msra.mxu0 0
        %2342 = vmatpush.bf16.msra.mxu0 0
        %2343 = vmatpush.bf16.msra.mxu0 %v2334
        %2344 = vmatmul.bf16.gmra.mxu0 %v2331
        %v2345 = vpop.f32.mrf.mxu0
        %v2346 = vadd.f32 0.0, %v2345
        %v2347 = vpop.f32.mrf.mxu0
        %2348 = vdwg.mxu0
        %v2350 = vsel %vm604, %v2128, 0
        %v2353 = vsel %vm2161, %v2148, 0
        %2355 = vmatpush.bf16.msra.mxu0 0
        %2356 = vmatpush.bf16.msra.mxu0 0
        %2357 = vmatpush.bf16.msra.mxu0 0
        %2358 = vmatpush.bf16.msra.mxu0 0
        %2359 = vmatpush.bf16.msra.mxu0 0
        %2360 = vmatpush.bf16.msra.mxu0 0
        %2361 = vmatpush.bf16.msra.mxu0 0
        %2362 = vmatpush.bf16.msra.mxu0 %v2353
        %2363 = vmatmul.bf16.gmra.mxu0 %v2350
        %v2364 = vpop.f32.mrf.mxu0
        %v2365 = vadd.f32 0.0, %v2364
        %v2366 = vpop.f32.mrf.mxu0
        %2367 = vdwg.mxu0
        %v2369 = vsel %vm604, %v2129, 0
        %v2372 = vsel %vm2161, %v2149, 0
        %2374 = vmatpush.bf16.msra.mxu0 0
        %2375 = vmatpush.bf16.msra.mxu0 0
        %2376 = vmatpush.bf16.msra.mxu0 0
        %2377 = vmatpush.bf16.msra.mxu0 0
        %2378 = vmatpush.bf16.msra.mxu0 0
        %2379 = vmatpush.bf16.msra.mxu0 0
        %2380 = vmatpush.bf16.msra.mxu0 0
        %2381 = vmatpush.bf16.msra.mxu0 %v2372
        %2382 = vmatmul.bf16.gmra.mxu0 %v2369
        %v2383 = vpop.f32.mrf.mxu0
        %v2384 = vadd.f32 0.0, %v2383
        %v2385 = vpop.f32.mrf.mxu0
        %2386 = vdwg.mxu0
        %v2388 = vsel %vm604, %v2130, 0
        %v2391 = vsel %vm2161, %v2150, 0
        %2393 = vmatpush.bf16.msra.mxu0 0
        %2394 = vmatpush.bf16.msra.mxu0 0
        %2395 = vmatpush.bf16.msra.mxu0 0
        %2396 = vmatpush.bf16.msra.mxu0 0
        %2397 = vmatpush.bf16.msra.mxu0 0
        %2398 = vmatpush.bf16.msra.mxu0 0
        %2399 = vmatpush.bf16.msra.mxu0 0
        %2400 = vmatpush.bf16.msra.mxu0 %v2391
        %2401 = vmatmul.bf16.gmra.mxu0 %v2388
        %v2402 = vpop.f32.mrf.mxu0
        %v2403 = vadd.f32 0.0, %v2402
        %v2404 = vpop.f32.mrf.mxu0
        %2405 = vdwg.mxu0
        %v2407 = vsel %vm604, %v2131, 0
        %v2410 = vsel %vm2161, %v2151, 0
        %2412 = vmatpush.bf16.msra.mxu0 0
        %2413 = vmatpush.bf16.msra.mxu0 0
        %2414 = vmatpush.bf16.msra.mxu0 0
        %2415 = vmatpush.bf16.msra.mxu0 0
        %2416 = vmatpush.bf16.msra.mxu0 0
        %2417 = vmatpush.bf16.msra.mxu0 0
        %2418 = vmatpush.bf16.msra.mxu0 0
        %2419 = vmatpush.bf16.msra.mxu0 %v2410
        %2420 = vmatmul.bf16.gmra.mxu0 %v2407
        %v2421 = vpop.f32.mrf.mxu0
        %v2422 = vadd.f32 0.0, %v2421
        %v2423 = vpop.f32.mrf.mxu0
        %2424 = vdwg.mxu0
        %v2426 = vsel %vm604, %v2132, 0
        %v2429 = vsel %vm2161, %v2152, 0
        %2431 = vmatpush.bf16.msra.mxu0 0
        %2432 = vmatpush.bf16.msra.mxu0 0
        %2433 = vmatpush.bf16.msra.mxu0 0
        %2434 = vmatpush.bf16.msra.mxu0 0
        %2435 = vmatpush.bf16.msra.mxu0 0
        %2436 = vmatpush.bf16.msra.mxu0 0
        %2437 = vmatpush.bf16.msra.mxu0 0
        %2438 = vmatpush.bf16.msra.mxu0 %v2429
        %2439 = vmatmul.bf16.gmra.mxu0 %v2426
        %v2440 = vpop.f32.mrf.mxu0
        %v2441 = vadd.f32 0.0, %v2440
        %v2442 = vpop.f32.mrf.mxu0
        %2443 = vdwg.mxu0
        %v2445 = vsel %vm604, %v2133, 0
        %v2448 = vsel %vm2161, %v2153, 0
        %2450 = vmatpush.bf16.msra.mxu0 0
        %2451 = vmatpush.bf16.msra.mxu0 0
        %2452 = vmatpush.bf16.msra.mxu0 0
        %2453 = vmatpush.bf16.msra.mxu0 0
        %2454 = vmatpush.bf16.msra.mxu0 0
        %2455 = vmatpush.bf16.msra.mxu0 0
        %2456 = vmatpush.bf16.msra.mxu0 0
        %2457 = vmatpush.bf16.msra.mxu0 %v2448
        %2458 = vmatmul.bf16.gmra.mxu0 %v2445
        %v2459 = vpop.f32.mrf.mxu0
        %v2460 = vadd.f32 0.0, %v2459
        %v2461 = vpop.f32.mrf.mxu0
        %2462 = vdwg.mxu0
        %v2464 = vsel %vm604, %v2134, 0
        %v2467 = vsel %vm2161, %v2154, 0
        %2469 = vmatpush.bf16.msra.mxu0 0
        %2470 = vmatpush.bf16.msra.mxu0 0
        %2471 = vmatpush.bf16.msra.mxu0 0
        %2472 = vmatpush.bf16.msra.mxu0 0
        %2473 = vmatpush.bf16.msra.mxu0 0
        %2474 = vmatpush.bf16.msra.mxu0 0
        %2475 = vmatpush.bf16.msra.mxu0 0
        %2476 = vmatpush.bf16.msra.mxu0 %v2467
        %2477 = vmatmul.bf16.gmra.mxu0 %v2464
        %v2478 = vpop.f32.mrf.mxu0
        %v2479 = vadd.f32 0.0, %v2478
        %v2480 = vpop.f32.mrf.mxu0
        %2481 = vdwg.mxu0
        %v2483 = vsel %vm604, %v2135, 0
        %v2486 = vsel %vm2161, %v2155, 0
        %2488 = vmatpush.bf16.msra.mxu0 0
        %2489 = vmatpush.bf16.msra.mxu0 0
        %2490 = vmatpush.bf16.msra.mxu0 0
        %2491 = vmatpush.bf16.msra.mxu0 0
        %2492 = vmatpush.bf16.msra.mxu0 0
        %2493 = vmatpush.bf16.msra.mxu0 0
        %2494 = vmatpush.bf16.msra.mxu0 0
        %2495 = vmatpush.bf16.msra.mxu0 %v2486
        %2496 = vmatmul.bf16.gmra.mxu0 %v2483
        %v2497 = vpop.f32.mrf.mxu0
        %v2498 = vadd.f32 0.0, %v2497
        %v2499 = vpop.f32.mrf.mxu0
        %2500 = vdwg.mxu0
        %v2502 = vsel %vm604, %v2136, 0
        %v2505 = vsel %vm2161, %v2156, 0
        %2507 = vmatpush.bf16.msra.mxu0 0
        %2508 = vmatpush.bf16.msra.mxu0 0
        %2509 = vmatpush.bf16.msra.mxu0 0
        %2510 = vmatpush.bf16.msra.mxu0 0
        %2511 = vmatpush.bf16.msra.mxu0 0
        %2512 = vmatpush.bf16.msra.mxu0 0
        %2513 = vmatpush.bf16.msra.mxu0 0
        %2514 = vmatpush.bf16.msra.mxu0 %v2505
        %2515 = vmatmul.bf16.gmra.mxu0 %v2502
        %v2516 = vpop.f32.mrf.mxu0
        %v2517 = vadd.f32 0.0, %v2516
        %v2518 = vpop.f32.mrf.mxu0
        %2519 = vdwg.mxu0
        %v2521 = vsel %vm604, %v2137, 0
        %v2524 = vsel %vm2161, %v2157, 0
        %2526 = vmatpush.bf16.msra.mxu0 0
        %2527 = vmatpush.bf16.msra.mxu0 0
        %2528 = vmatpush.bf16.msra.mxu0 0
        %2529 = vmatpush.bf16.msra.mxu0 0
        %2530 = vmatpush.bf16.msra.mxu0 0
        %2531 = vmatpush.bf16.msra.mxu0 0
        %2532 = vmatpush.bf16.msra.mxu0 0
        %2533 = vmatpush.bf16.msra.mxu0 %v2524
        %2534 = vmatmul.bf16.gmra.mxu0 %v2521
        %v2535 = vpop.f32.mrf.mxu0
        %v2536 = vadd.f32 0.0, %v2535
        %v2537 = vpop.f32.mrf.mxu0
        %2538 = vdwg.mxu0
        %2539 = vrot.lane.b32.xlu0 %v599, 32
        %v2540 = vpop.permute.xlu0 %2539
        %v2542 = vsel %vm604, %v1378, 0
        %v2545 = vsel %vm2161, %v2540, 0
        %2547 = vmatpush.bf16.msra.mxu0 0
        %2548 = vmatpush.bf16.msra.mxu0 0
        %2549 = vmatpush.bf16.msra.mxu0 0
        %2550 = vmatpush.bf16.msra.mxu0 0
        %2551 = vmatpush.bf16.msra.mxu0 0
        %2552 = vmatpush.bf16.msra.mxu0 0
        %2553 = vmatpush.bf16.msra.mxu0 0
        %2554 = vmatpush.bf16.msra.mxu0 %v2545
        %2555 = vmatmul.bf16.gmra.mxu0 %v2542
        %v2556 = vpop.f32.mrf.mxu0
        %v2557 = vadd.f32 %v2175, %v2556
        %v2558 = vpop.f32.mrf.mxu0
        %2559 = vdwg.mxu0
        %2560 = vrot.lane.b32.xlu0 %v626, 32
        %v2561 = vpop.permute.xlu0 %2560
        %v2563 = vsel %vm604, %v1379, 0
        %v2566 = vsel %vm2161, %v2561, 0
        %2568 = vmatpush.bf16.msra.mxu0 0
        %2569 = vmatpush.bf16.msra.mxu0 0
        %2570 = vmatpush.bf16.msra.mxu0 0
        %2571 = vmatpush.bf16.msra.mxu0 0
        %2572 = vmatpush.bf16.msra.mxu0 0
        %2573 = vmatpush.bf16.msra.mxu0 0
        %2574 = vmatpush.bf16.msra.mxu0 0
        %2575 = vmatpush.bf16.msra.mxu0 %v2566
        %2576 = vmatmul.bf16.gmra.mxu0 %v2563
        %v2577 = vpop.f32.mrf.mxu0
        %v2578 = vadd.f32 %v2194, %v2577
        %v2579 = vpop.f32.mrf.mxu0
        %2580 = vdwg.mxu0
        %2581 = vrot.lane.b32.xlu0 %v652, 32
        %v2582 = vpop.permute.xlu0 %2581
        %v2584 = vsel %vm604, %v1380, 0
        %v2587 = vsel %vm2161, %v2582, 0
        %2589 = vmatpush.bf16.msra.mxu0 0
        %2590 = vmatpush.bf16.msra.mxu0 0
        %2591 = vmatpush.bf16.msra.mxu0 0
        %2592 = vmatpush.bf16.msra.mxu0 0
        %2593 = vmatpush.bf16.msra.mxu0 0
        %2594 = vmatpush.bf16.msra.mxu0 0
        %2595 = vmatpush.bf16.msra.mxu0 0
        %2596 = vmatpush.bf16.msra.mxu0 %v2587
        %2597 = vmatmul.bf16.gmra.mxu0 %v2584
        %v2598 = vpop.f32.mrf.mxu0
        %v2599 = vadd.f32 %v2213, %v2598
        %v2600 = vpop.f32.mrf.mxu0
        %2601 = vdwg.mxu0
        %2602 = vrot.lane.b32.xlu0 %v678, 32
        %v2603 = vpop.permute.xlu0 %2602
        %v2605 = vsel %vm604, %v1381, 0
        %v2608 = vsel %vm2161, %v2603, 0
        %2610 = vmatpush.bf16.msra.mxu0 0
        %2611 = vmatpush.bf16.msra.mxu0 0
        %2612 = vmatpush.bf16.msra.mxu0 0
        %2613 = vmatpush.bf16.msra.mxu0 0
        %2614 = vmatpush.bf16.msra.mxu0 0
        %2615 = vmatpush.bf16.msra.mxu0 0
        %2616 = vmatpush.bf16.msra.mxu0 0
        %2617 = vmatpush.bf16.msra.mxu0 %v2608
        %2618 = vmatmul.bf16.gmra.mxu0 %v2605
        %v2619 = vpop.f32.mrf.mxu0
        %v2620 = vadd.f32 %v2232, %v2619
        %v2621 = vpop.f32.mrf.mxu0
        %2622 = vdwg.mxu0
        %2623 = vrot.lane.b32.xlu0 %v704, 32
        %v2624 = vpop.permute.xlu0 %2623
        %v2626 = vsel %vm604, %v1382, 0
        %v2629 = vsel %vm2161, %v2624, 0
        %2631 = vmatpush.bf16.msra.mxu0 0
        %2632 = vmatpush.bf16.msra.mxu0 0
        %2633 = vmatpush.bf16.msra.mxu0 0
        %2634 = vmatpush.bf16.msra.mxu0 0
        %2635 = vmatpush.bf16.msra.mxu0 0
        %2636 = vmatpush.bf16.msra.mxu0 0
        %2637 = vmatpush.bf16.msra.mxu0 0
        %2638 = vmatpush.bf16.msra.mxu0 %v2629
        %2639 = vmatmul.bf16.gmra.mxu0 %v2626
        %v2640 = vpop.f32.mrf.mxu0
        %v2641 = vadd.f32 %v2251, %v2640
        %v2642 = vpop.f32.mrf.mxu0
        %2643 = vdwg.mxu0
        %2644 = vrot.lane.b32.xlu0 %v730, 32
        %v2645 = vpop.permute.xlu0 %2644
        %v2647 = vsel %vm604, %v1383, 0
        %v2650 = vsel %vm2161, %v2645, 0
        %2652 = vmatpush.bf16.msra.mxu0 0
        %2653 = vmatpush.bf16.msra.mxu0 0
        %2654 = vmatpush.bf16.msra.mxu0 0
        %2655 = vmatpush.bf16.msra.mxu0 0
        %2656 = vmatpush.bf16.msra.mxu0 0
        %2657 = vmatpush.bf16.msra.mxu0 0
        %2658 = vmatpush.bf16.msra.mxu0 0
        %2659 = vmatpush.bf16.msra.mxu0 %v2650
        %2660 = vmatmul.bf16.gmra.mxu0 %v2647
        %v2661 = vpop.f32.mrf.mxu0
        %v2662 = vadd.f32 %v2270, %v2661
        %v2663 = vpop.f32.mrf.mxu0
        %2664 = vdwg.mxu0
        %2665 = vrot.lane.b32.xlu0 %v756, 32
        %v2666 = vpop.permute.xlu0 %2665
        %v2668 = vsel %vm604, %v1384, 0
        %v2671 = vsel %vm2161, %v2666, 0
        %2673 = vmatpush.bf16.msra.mxu0 0
        %2674 = vmatpush.bf16.msra.mxu0 0
        %2675 = vmatpush.bf16.msra.mxu0 0
        %2676 = vmatpush.bf16.msra.mxu0 0
        %2677 = vmatpush.bf16.msra.mxu0 0
        %2678 = vmatpush.bf16.msra.mxu0 0
        %2679 = vmatpush.bf16.msra.mxu0 0
        %2680 = vmatpush.bf16.msra.mxu0 %v2671
        %2681 = vmatmul.bf16.gmra.mxu0 %v2668
        %v2682 = vpop.f32.mrf.mxu0
        %v2683 = vadd.f32 %v2289, %v2682
        %v2684 = vpop.f32.mrf.mxu0
        %2685 = vdwg.mxu0
        %2686 = vrot.lane.b32.xlu0 %v782, 32
        %v2687 = vpop.permute.xlu0 %2686
        %v2689 = vsel %vm604, %v1385, 0
        %v2692 = vsel %vm2161, %v2687, 0
        %2694 = vmatpush.bf16.msra.mxu0 0
        %2695 = vmatpush.bf16.msra.mxu0 0
        %2696 = vmatpush.bf16.msra.mxu0 0
        %2697 = vmatpush.bf16.msra.mxu0 0
        %2698 = vmatpush.bf16.msra.mxu0 0
        %2699 = vmatpush.bf16.msra.mxu0 0
        %2700 = vmatpush.bf16.msra.mxu0 0
        %2701 = vmatpush.bf16.msra.mxu0 %v2692
        %2702 = vmatmul.bf16.gmra.mxu0 %v2689
        %v2703 = vpop.f32.mrf.mxu0
        %v2704 = vadd.f32 %v2308, %v2703
        %v2705 = vpop.f32.mrf.mxu0
        %2706 = vdwg.mxu0
        %2707 = vrot.lane.b32.xlu0 %v808, 32
        %v2708 = vpop.permute.xlu0 %2707
        %v2710 = vsel %vm604, %v1386, 0
        %v2713 = vsel %vm2161, %v2708, 0
        %2715 = vmatpush.bf16.msra.mxu0 0
        %2716 = vmatpush.bf16.msra.mxu0 0
        %2717 = vmatpush.bf16.msra.mxu0 0
        %2718 = vmatpush.bf16.msra.mxu0 0
        %2719 = vmatpush.bf16.msra.mxu0 0
        %2720 = vmatpush.bf16.msra.mxu0 0
        %2721 = vmatpush.bf16.msra.mxu0 0
        %2722 = vmatpush.bf16.msra.mxu0 %v2713
        %2723 = vmatmul.bf16.gmra.mxu0 %v2710
        %v2724 = vpop.f32.mrf.mxu0
        %v2725 = vadd.f32 %v2327, %v2724
        %v2726 = vpop.f32.mrf.mxu0
        %2727 = vdwg.mxu0
        %2728 = vrot.lane.b32.xlu0 %v834, 32
        %v2729 = vpop.permute.xlu0 %2728
        %v2731 = vsel %vm604, %v1387, 0
        %v2734 = vsel %vm2161, %v2729, 0
        %2736 = vmatpush.bf16.msra.mxu0 0
        %2737 = vmatpush.bf16.msra.mxu0 0
        %2738 = vmatpush.bf16.msra.mxu0 0
        %2739 = vmatpush.bf16.msra.mxu0 0
        %2740 = vmatpush.bf16.msra.mxu0 0
        %2741 = vmatpush.bf16.msra.mxu0 0
        %2742 = vmatpush.bf16.msra.mxu0 0
        %2743 = vmatpush.bf16.msra.mxu0 %v2734
        %2744 = vmatmul.bf16.gmra.mxu0 %v2731
        %v2745 = vpop.f32.mrf.mxu0
        %v2746 = vadd.f32 %v2346, %v2745
        %v2747 = vpop.f32.mrf.mxu0
        %2748 = vdwg.mxu0
        %2749 = vrot.lane.b32.xlu0 %v860, 32
        %v2750 = vpop.permute.xlu0 %2749
        %v2752 = vsel %vm604, %v1388, 0
        %v2755 = vsel %vm2161, %v2750, 0
        %2757 = vmatpush.bf16.msra.mxu0 0
        %2758 = vmatpush.bf16.msra.mxu0 0
        %2759 = vmatpush.bf16.msra.mxu0 0
        %2760 = vmatpush.bf16.msra.mxu0 0
        %2761 = vmatpush.bf16.msra.mxu0 0
        %2762 = vmatpush.bf16.msra.mxu0 0
        %2763 = vmatpush.bf16.msra.mxu0 0
        %2764 = vmatpush.bf16.msra.mxu0 %v2755
        %2765 = vmatmul.bf16.gmra.mxu0 %v2752
        %v2766 = vpop.f32.mrf.mxu0
        %v2767 = vadd.f32 %v2365, %v2766
        %v2768 = vpop.f32.mrf.mxu0
        %2769 = vdwg.mxu0
        %2770 = vrot.lane.b32.xlu0 %v886, 32
        %v2771 = vpop.permute.xlu0 %2770
        %v2773 = vsel %vm604, %v1389, 0
        %v2776 = vsel %vm2161, %v2771, 0
        %2778 = vmatpush.bf16.msra.mxu0 0
        %2779 = vmatpush.bf16.msra.mxu0 0
        %2780 = vmatpush.bf16.msra.mxu0 0
        %2781 = vmatpush.bf16.msra.mxu0 0
        %2782 = vmatpush.bf16.msra.mxu0 0
        %2783 = vmatpush.bf16.msra.mxu0 0
        %2784 = vmatpush.bf16.msra.mxu0 0
        %2785 = vmatpush.bf16.msra.mxu0 %v2776
        %2786 = vmatmul.bf16.gmra.mxu0 %v2773
        %v2787 = vpop.f32.mrf.mxu0
        %v2788 = vadd.f32 %v2384, %v2787
        %v2789 = vpop.f32.mrf.mxu0
        %2790 = vdwg.mxu0
        %2791 = vrot.lane.b32.xlu0 %v912, 32
        %v2792 = vpop.permute.xlu0 %2791
        %v2794 = vsel %vm604, %v1390, 0
        %v2797 = vsel %vm2161, %v2792, 0
        %2799 = vmatpush.bf16.msra.mxu0 0
        %2800 = vmatpush.bf16.msra.mxu0 0
        %2801 = vmatpush.bf16.msra.mxu0 0
        %2802 = vmatpush.bf16.msra.mxu0 0
        %2803 = vmatpush.bf16.msra.mxu0 0
        %2804 = vmatpush.bf16.msra.mxu0 0
        %2805 = vmatpush.bf16.msra.mxu0 0
        %2806 = vmatpush.bf16.msra.mxu0 %v2797
        %2807 = vmatmul.bf16.gmra.mxu0 %v2794
        %v2808 = vpop.f32.mrf.mxu0
        %v2809 = vadd.f32 %v2403, %v2808
        %v2810 = vpop.f32.mrf.mxu0
        %2811 = vdwg.mxu0
        %2812 = vrot.lane.b32.xlu0 %v938, 32
        %v2813 = vpop.permute.xlu0 %2812
        %v2815 = vsel %vm604, %v1391, 0
        %v2818 = vsel %vm2161, %v2813, 0
        %2820 = vmatpush.bf16.msra.mxu0 0
        %2821 = vmatpush.bf16.msra.mxu0 0
        %2822 = vmatpush.bf16.msra.mxu0 0
        %2823 = vmatpush.bf16.msra.mxu0 0
        %2824 = vmatpush.bf16.msra.mxu0 0
        %2825 = vmatpush.bf16.msra.mxu0 0
        %2826 = vmatpush.bf16.msra.mxu0 0
        %2827 = vmatpush.bf16.msra.mxu0 %v2818
        %2828 = vmatmul.bf16.gmra.mxu0 %v2815
        %v2829 = vpop.f32.mrf.mxu0
        %v2830 = vadd.f32 %v2422, %v2829
        %v2831 = vpop.f32.mrf.mxu0
        %2832 = vdwg.mxu0
        %2833 = vrot.lane.b32.xlu0 %v964, 32
        %v2834 = vpop.permute.xlu0 %2833
        %v2836 = vsel %vm604, %v1392, 0
        %v2839 = vsel %vm2161, %v2834, 0
        %2841 = vmatpush.bf16.msra.mxu0 0
        %2842 = vmatpush.bf16.msra.mxu0 0
        %2843 = vmatpush.bf16.msra.mxu0 0
        %2844 = vmatpush.bf16.msra.mxu0 0
        %2845 = vmatpush.bf16.msra.mxu0 0
        %2846 = vmatpush.bf16.msra.mxu0 0
        %2847 = vmatpush.bf16.msra.mxu0 0
        %2848 = vmatpush.bf16.msra.mxu0 %v2839
        %2849 = vmatmul.bf16.gmra.mxu0 %v2836
        %v2850 = vpop.f32.mrf.mxu0
        %v2851 = vadd.f32 %v2441, %v2850
        %v2852 = vpop.f32.mrf.mxu0
        %2853 = vdwg.mxu0
        %2854 = vrot.lane.b32.xlu0 %v990, 32
        %v2855 = vpop.permute.xlu0 %2854
        %v2857 = vsel %vm604, %v1393, 0
        %v2860 = vsel %vm2161, %v2855, 0
        %2862 = vmatpush.bf16.msra.mxu0 0
        %2863 = vmatpush.bf16.msra.mxu0 0
        %2864 = vmatpush.bf16.msra.mxu0 0
        %2865 = vmatpush.bf16.msra.mxu0 0
        %2866 = vmatpush.bf16.msra.mxu0 0
        %2867 = vmatpush.bf16.msra.mxu0 0
        %2868 = vmatpush.bf16.msra.mxu0 0
        %2869 = vmatpush.bf16.msra.mxu0 %v2860
        %2870 = vmatmul.bf16.gmra.mxu0 %v2857
        %v2871 = vpop.f32.mrf.mxu0
        %v2872 = vadd.f32 %v2460, %v2871
        %v2873 = vpop.f32.mrf.mxu0
        %2874 = vdwg.mxu0
        %2875 = vrot.lane.b32.xlu0 %v1016, 32
        %v2876 = vpop.permute.xlu0 %2875
        %v2878 = vsel %vm604, %v1394, 0
        %v2881 = vsel %vm2161, %v2876, 0
        %2883 = vmatpush.bf16.msra.mxu0 0
        %2884 = vmatpush.bf16.msra.mxu0 0
        %2885 = vmatpush.bf16.msra.mxu0 0
        %2886 = vmatpush.bf16.msra.mxu0 0
        %2887 = vmatpush.bf16.msra.mxu0 0
        %2888 = vmatpush.bf16.msra.mxu0 0
        %2889 = vmatpush.bf16.msra.mxu0 0
        %2890 = vmatpush.bf16.msra.mxu0 %v2881
        %2891 = vmatmul.bf16.gmra.mxu0 %v2878
        %v2892 = vpop.f32.mrf.mxu0
        %v2893 = vadd.f32 %v2479, %v2892
        %v2894 = vpop.f32.mrf.mxu0
        %2895 = vdwg.mxu0
        %2896 = vrot.lane.b32.xlu0 %v1042, 32
        %v2897 = vpop.permute.xlu0 %2896
        %v2899 = vsel %vm604, %v1395, 0
        %v2902 = vsel %vm2161, %v2897, 0
        %2904 = vmatpush.bf16.msra.mxu0 0
        %2905 = vmatpush.bf16.msra.mxu0 0
        %2906 = vmatpush.bf16.msra.mxu0 0
        %2907 = vmatpush.bf16.msra.mxu0 0
        %2908 = vmatpush.bf16.msra.mxu0 0
        %2909 = vmatpush.bf16.msra.mxu0 0
        %2910 = vmatpush.bf16.msra.mxu0 0
        %2911 = vmatpush.bf16.msra.mxu0 %v2902
        %2912 = vmatmul.bf16.gmra.mxu0 %v2899
        %v2913 = vpop.f32.mrf.mxu0
        %v2914 = vadd.f32 %v2498, %v2913
        %v2915 = vpop.f32.mrf.mxu0
        %2916 = vdwg.mxu0
        %2917 = vrot.lane.b32.xlu0 %v1068, 32
        %v2918 = vpop.permute.xlu0 %2917
        %v2920 = vsel %vm604, %v1396, 0
        %v2923 = vsel %vm2161, %v2918, 0
        %2925 = vmatpush.bf16.msra.mxu0 0
        %2926 = vmatpush.bf16.msra.mxu0 0
        %2927 = vmatpush.bf16.msra.mxu0 0
        %2928 = vmatpush.bf16.msra.mxu0 0
        %2929 = vmatpush.bf16.msra.mxu0 0
        %2930 = vmatpush.bf16.msra.mxu0 0
        %2931 = vmatpush.bf16.msra.mxu0 0
        %2932 = vmatpush.bf16.msra.mxu0 %v2923
        %2933 = vmatmul.bf16.gmra.mxu0 %v2920
        %v2934 = vpop.f32.mrf.mxu0
        %v2935 = vadd.f32 %v2517, %v2934
        %v2936 = vpop.f32.mrf.mxu0
        %2937 = vdwg.mxu0
        %2938 = vrot.lane.b32.xlu0 %v1094, 32
        %v2939 = vpop.permute.xlu0 %2938
        %v2941 = vsel %vm604, %v1397, 0
        %v2944 = vsel %vm2161, %v2939, 0
        %2946 = vmatpush.bf16.msra.mxu0 0
        %2947 = vmatpush.bf16.msra.mxu0 0
        %2948 = vmatpush.bf16.msra.mxu0 0
        %2949 = vmatpush.bf16.msra.mxu0 0
        %2950 = vmatpush.bf16.msra.mxu0 0
        %2951 = vmatpush.bf16.msra.mxu0 0
        %2952 = vmatpush.bf16.msra.mxu0 0
        %2953 = vmatpush.bf16.msra.mxu0 %v2944
        %2954 = vmatmul.bf16.gmra.mxu0 %v2941
        %v2955 = vpop.f32.mrf.mxu0
        %v2956 = vadd.f32 %v2536, %v2955
        %v2957 = vpop.f32.mrf.mxu0
        %2958 = vdwg.mxu0
        %2959 = vrot.lane.b32.xlu0 %v599, 80
        %v2960 = vpop.permute.xlu0 %2959
        %2961 = vrot.lane.b32.xlu0 %v599, 48
        %v2962 = vpop.permute.xlu0 %2961
        %v2964 = vsel %vm604, %v2960, 0
        %v2967 = vsel %vm604, %v2962, 0
        %2969 = vmatpush.bf16.xpose.msra.mxu0 0
        %2970 = vmatpush.bf16.xpose.msra.mxu0 0
        %2971 = vmatpush.bf16.xpose.msra.mxu0 0
        %2972 = vmatpush.bf16.xpose.msra.mxu0 0
        %2973 = vmatpush.bf16.xpose.msra.mxu0 0
        %2974 = vmatpush.bf16.xpose.msra.mxu0 0
        %2975 = vmatpush.bf16.xpose.msra.mxu0 0
        %2976 = vmatpush.bf16.xpose.msra.mxu0 %v2967
        %2977 = vmatmul.bf16.gmra.mxu0 %v2964
        %v2978 = vpop.f32.mrf.mxu0
        %v2979 = vadd.f32 0.0, %v2978
        %v2980 = vpop.f32.mrf.mxu0
        %2981 = vdwg.mxu0
        %2982 = vrot.lane.b32.xlu0 %v626, 80
        %v2983 = vpop.permute.xlu0 %2982
        %2984 = vrot.lane.b32.xlu0 %v626, 48
        %v2985 = vpop.permute.xlu0 %2984
        %v2987 = vsel %vm604, %v2983, 0
        %v2990 = vsel %vm604, %v2985, 0
        %2992 = vmatpush.bf16.xpose.msra.mxu0 0
        %2993 = vmatpush.bf16.xpose.msra.mxu0 0
        %2994 = vmatpush.bf16.xpose.msra.mxu0 0
        %2995 = vmatpush.bf16.xpose.msra.mxu0 0
        %2996 = vmatpush.bf16.xpose.msra.mxu0 0
        %2997 = vmatpush.bf16.xpose.msra.mxu0 0
        %2998 = vmatpush.bf16.xpose.msra.mxu0 0
        %2999 = vmatpush.bf16.xpose.msra.mxu0 %v2990
        %3000 = vmatmul.bf16.gmra.mxu0 %v2987
        %v3001 = vpop.f32.mrf.mxu0
        %v3002 = vadd.f32 0.0, %v3001
        %v3003 = vpop.f32.mrf.mxu0
        %3004 = vdwg.mxu0
        %3005 = vrot.lane.b32.xlu0 %v652, 80
        %v3006 = vpop.permute.xlu0 %3005
        %3007 = vrot.lane.b32.xlu0 %v652, 48
        %v3008 = vpop.permute.xlu0 %3007
        %v3010 = vsel %vm604, %v3006, 0
        %v3013 = vsel %vm604, %v3008, 0
        %3015 = vmatpush.bf16.xpose.msra.mxu0 0
        %3016 = vmatpush.bf16.xpose.msra.mxu0 0
        %3017 = vmatpush.bf16.xpose.msra.mxu0 0
        %3018 = vmatpush.bf16.xpose.msra.mxu0 0
        %3019 = vmatpush.bf16.xpose.msra.mxu0 0
        %3020 = vmatpush.bf16.xpose.msra.mxu0 0
        %3021 = vmatpush.bf16.xpose.msra.mxu0 0
        %3022 = vmatpush.bf16.xpose.msra.mxu0 %v3013
        %3023 = vmatmul.bf16.gmra.mxu0 %v3010
        %v3024 = vpop.f32.mrf.mxu0
        %v3025 = vadd.f32 0.0, %v3024
        %v3026 = vpop.f32.mrf.mxu0
        %3027 = vdwg.mxu0
        %3028 = vrot.lane.b32.xlu0 %v678, 80
        %v3029 = vpop.permute.xlu0 %3028
        %3030 = vrot.lane.b32.xlu0 %v678, 48
        %v3031 = vpop.permute.xlu0 %3030
        %v3033 = vsel %vm604, %v3029, 0
        %v3036 = vsel %vm604, %v3031, 0
        %3038 = vmatpush.bf16.xpose.msra.mxu0 0
        %3039 = vmatpush.bf16.xpose.msra.mxu0 0
        %3040 = vmatpush.bf16.xpose.msra.mxu0 0
        %3041 = vmatpush.bf16.xpose.msra.mxu0 0
        %3042 = vmatpush.bf16.xpose.msra.mxu0 0
        %3043 = vmatpush.bf16.xpose.msra.mxu0 0
        %3044 = vmatpush.bf16.xpose.msra.mxu0 0
        %3045 = vmatpush.bf16.xpose.msra.mxu0 %v3036
        %3046 = vmatmul.bf16.gmra.mxu0 %v3033
        %v3047 = vpop.f32.mrf.mxu0
        %v3048 = vadd.f32 0.0, %v3047
        %v3049 = vpop.f32.mrf.mxu0
        %3050 = vdwg.mxu0
        %3051 = vrot.lane.b32.xlu0 %v704, 80
        %v3052 = vpop.permute.xlu0 %3051
        %3053 = vrot.lane.b32.xlu0 %v704, 48
        %v3054 = vpop.permute.xlu0 %3053
        %v3056 = vsel %vm604, %v3052, 0
        %v3059 = vsel %vm604, %v3054, 0
        %3061 = vmatpush.bf16.xpose.msra.mxu0 0
        %3062 = vmatpush.bf16.xpose.msra.mxu0 0
        %3063 = vmatpush.bf16.xpose.msra.mxu0 0
        %3064 = vmatpush.bf16.xpose.msra.mxu0 0
        %3065 = vmatpush.bf16.xpose.msra.mxu0 0
        %3066 = vmatpush.bf16.xpose.msra.mxu0 0
        %3067 = vmatpush.bf16.xpose.msra.mxu0 0
        %3068 = vmatpush.bf16.xpose.msra.mxu0 %v3059
        %3069 = vmatmul.bf16.gmra.mxu0 %v3056
        %v3070 = vpop.f32.mrf.mxu0
        %v3071 = vadd.f32 0.0, %v3070
        %v3072 = vpop.f32.mrf.mxu0
        %3073 = vdwg.mxu0
        %3074 = vrot.lane.b32.xlu0 %v730, 80
        %v3075 = vpop.permute.xlu0 %3074
        %3076 = vrot.lane.b32.xlu0 %v730, 48
        %v3077 = vpop.permute.xlu0 %3076
        %v3079 = vsel %vm604, %v3075, 0
        %v3082 = vsel %vm604, %v3077, 0
        %3084 = vmatpush.bf16.xpose.msra.mxu0 0
        %3085 = vmatpush.bf16.xpose.msra.mxu0 0
        %3086 = vmatpush.bf16.xpose.msra.mxu0 0
        %3087 = vmatpush.bf16.xpose.msra.mxu0 0
        %3088 = vmatpush.bf16.xpose.msra.mxu0 0
        %3089 = vmatpush.bf16.xpose.msra.mxu0 0
        %3090 = vmatpush.bf16.xpose.msra.mxu0 0
        %3091 = vmatpush.bf16.xpose.msra.mxu0 %v3082
        %3092 = vmatmul.bf16.gmra.mxu0 %v3079
        %v3093 = vpop.f32.mrf.mxu0
        %v3094 = vadd.f32 0.0, %v3093
        %v3095 = vpop.f32.mrf.mxu0
        %3096 = vdwg.mxu0
        %3097 = vrot.lane.b32.xlu0 %v756, 80
        %v3098 = vpop.permute.xlu0 %3097
        %3099 = vrot.lane.b32.xlu0 %v756, 48
        %v3100 = vpop.permute.xlu0 %3099
        %v3102 = vsel %vm604, %v3098, 0
        %v3105 = vsel %vm604, %v3100, 0
        %3107 = vmatpush.bf16.xpose.msra.mxu0 0
        %3108 = vmatpush.bf16.xpose.msra.mxu0 0
        %3109 = vmatpush.bf16.xpose.msra.mxu0 0
        %3110 = vmatpush.bf16.xpose.msra.mxu0 0
        %3111 = vmatpush.bf16.xpose.msra.mxu0 0
        %3112 = vmatpush.bf16.xpose.msra.mxu0 0
        %3113 = vmatpush.bf16.xpose.msra.mxu0 0
        %3114 = vmatpush.bf16.xpose.msra.mxu0 %v3105
        %3115 = vmatmul.bf16.gmra.mxu0 %v3102
        %v3116 = vpop.f32.mrf.mxu0
        %v3117 = vadd.f32 0.0, %v3116
        %v3118 = vpop.f32.mrf.mxu0
        %3119 = vdwg.mxu0
        %3120 = vrot.lane.b32.xlu0 %v782, 80
        %v3121 = vpop.permute.xlu0 %3120
        %3122 = vrot.lane.b32.xlu0 %v782, 48
        %v3123 = vpop.permute.xlu0 %3122
        %v3125 = vsel %vm604, %v3121, 0
        %v3128 = vsel %vm604, %v3123, 0
        %3130 = vmatpush.bf16.xpose.msra.mxu0 0
        %3131 = vmatpush.bf16.xpose.msra.mxu0 0
        %3132 = vmatpush.bf16.xpose.msra.mxu0 0
        %3133 = vmatpush.bf16.xpose.msra.mxu0 0
        %3134 = vmatpush.bf16.xpose.msra.mxu0 0
        %3135 = vmatpush.bf16.xpose.msra.mxu0 0
        %3136 = vmatpush.bf16.xpose.msra.mxu0 0
        %3137 = vmatpush.bf16.xpose.msra.mxu0 %v3128
        %3138 = vmatmul.bf16.gmra.mxu0 %v3125
        %v3139 = vpop.f32.mrf.mxu0
        %v3140 = vadd.f32 0.0, %v3139
        %v3141 = vpop.f32.mrf.mxu0
        %3142 = vdwg.mxu0
        %3143 = vrot.lane.b32.xlu0 %v808, 80
        %v3144 = vpop.permute.xlu0 %3143
        %3145 = vrot.lane.b32.xlu0 %v808, 48
        %v3146 = vpop.permute.xlu0 %3145
        %v3148 = vsel %vm604, %v3144, 0
        %v3151 = vsel %vm604, %v3146, 0
        %3153 = vmatpush.bf16.xpose.msra.mxu0 0
        %3154 = vmatpush.bf16.xpose.msra.mxu0 0
        %3155 = vmatpush.bf16.xpose.msra.mxu0 0
        %3156 = vmatpush.bf16.xpose.msra.mxu0 0
        %3157 = vmatpush.bf16.xpose.msra.mxu0 0
        %3158 = vmatpush.bf16.xpose.msra.mxu0 0
        %3159 = vmatpush.bf16.xpose.msra.mxu0 0
        %3160 = vmatpush.bf16.xpose.msra.mxu0 %v3151
        %3161 = vmatmul.bf16.gmra.mxu0 %v3148
        %v3162 = vpop.f32.mrf.mxu0
        %v3163 = vadd.f32 0.0, %v3162
        %v3164 = vpop.f32.mrf.mxu0
        %3165 = vdwg.mxu0
        %3166 = vrot.lane.b32.xlu0 %v834, 80
        %v3167 = vpop.permute.xlu0 %3166
        %3168 = vrot.lane.b32.xlu0 %v834, 48
        %v3169 = vpop.permute.xlu0 %3168
        %v3171 = vsel %vm604, %v3167, 0
        %v3174 = vsel %vm604, %v3169, 0
        %3176 = vmatpush.bf16.xpose.msra.mxu0 0
        %3177 = vmatpush.bf16.xpose.msra.mxu0 0
        %3178 = vmatpush.bf16.xpose.msra.mxu0 0
        %3179 = vmatpush.bf16.xpose.msra.mxu0 0
        %3180 = vmatpush.bf16.xpose.msra.mxu0 0
        %3181 = vmatpush.bf16.xpose.msra.mxu0 0
        %3182 = vmatpush.bf16.xpose.msra.mxu0 0
        %3183 = vmatpush.bf16.xpose.msra.mxu0 %v3174
        %3184 = vmatmul.bf16.gmra.mxu0 %v3171
        %v3185 = vpop.f32.mrf.mxu0
        %v3186 = vadd.f32 0.0, %v3185
        %v3187 = vpop.f32.mrf.mxu0
        %3188 = vdwg.mxu0
        %3189 = vrot.lane.b32.xlu0 %v860, 80
        %v3190 = vpop.permute.xlu0 %3189
        %3191 = vrot.lane.b32.xlu0 %v860, 48
        %v3192 = vpop.permute.xlu0 %3191
        %v3194 = vsel %vm604, %v3190, 0
        %v3197 = vsel %vm604, %v3192, 0
        %3199 = vmatpush.bf16.xpose.msra.mxu0 0
        %3200 = vmatpush.bf16.xpose.msra.mxu0 0
        %3201 = vmatpush.bf16.xpose.msra.mxu0 0
        %3202 = vmatpush.bf16.xpose.msra.mxu0 0
        %3203 = vmatpush.bf16.xpose.msra.mxu0 0
        %3204 = vmatpush.bf16.xpose.msra.mxu0 0
        %3205 = vmatpush.bf16.xpose.msra.mxu0 0
        %3206 = vmatpush.bf16.xpose.msra.mxu0 %v3197
        %3207 = vmatmul.bf16.gmra.mxu0 %v3194
        %v3208 = vpop.f32.mrf.mxu0
        %v3209 = vadd.f32 0.0, %v3208
        %v3210 = vpop.f32.mrf.mxu0
        %3211 = vdwg.mxu0
        %3212 = vrot.lane.b32.xlu0 %v886, 80
        %v3213 = vpop.permute.xlu0 %3212
        %3214 = vrot.lane.b32.xlu0 %v886, 48
        %v3215 = vpop.permute.xlu0 %3214
        %v3217 = vsel %vm604, %v3213, 0
        %v3220 = vsel %vm604, %v3215, 0
        %3222 = vmatpush.bf16.xpose.msra.mxu0 0
        %3223 = vmatpush.bf16.xpose.msra.mxu0 0
        %3224 = vmatpush.bf16.xpose.msra.mxu0 0
        %3225 = vmatpush.bf16.xpose.msra.mxu0 0
        %3226 = vmatpush.bf16.xpose.msra.mxu0 0
        %3227 = vmatpush.bf16.xpose.msra.mxu0 0
        %3228 = vmatpush.bf16.xpose.msra.mxu0 0
        %3229 = vmatpush.bf16.xpose.msra.mxu0 %v3220
        %3230 = vmatmul.bf16.gmra.mxu0 %v3217
        %v3231 = vpop.f32.mrf.mxu0
        %v3232 = vadd.f32 0.0, %v3231
        %v3233 = vpop.f32.mrf.mxu0
        %3234 = vdwg.mxu0
        %3235 = vrot.lane.b32.xlu0 %v912, 80
        %v3236 = vpop.permute.xlu0 %3235
        %3237 = vrot.lane.b32.xlu0 %v912, 48
        %v3238 = vpop.permute.xlu0 %3237
        %v3240 = vsel %vm604, %v3236, 0
        %v3243 = vsel %vm604, %v3238, 0
        %3245 = vmatpush.bf16.xpose.msra.mxu0 0
        %3246 = vmatpush.bf16.xpose.msra.mxu0 0
        %3247 = vmatpush.bf16.xpose.msra.mxu0 0
        %3248 = vmatpush.bf16.xpose.msra.mxu0 0
        %3249 = vmatpush.bf16.xpose.msra.mxu0 0
        %3250 = vmatpush.bf16.xpose.msra.mxu0 0
        %3251 = vmatpush.bf16.xpose.msra.mxu0 0
        %3252 = vmatpush.bf16.xpose.msra.mxu0 %v3243
        %3253 = vmatmul.bf16.gmra.mxu0 %v3240
        %v3254 = vpop.f32.mrf.mxu0
        %v3255 = vadd.f32 0.0, %v3254
        %v3256 = vpop.f32.mrf.mxu0
        %3257 = vdwg.mxu0
        %3258 = vrot.lane.b32.xlu0 %v938, 80
        %v3259 = vpop.permute.xlu0 %3258
        %3260 = vrot.lane.b32.xlu0 %v938, 48
        %v3261 = vpop.permute.xlu0 %3260
        %v3263 = vsel %vm604, %v3259, 0
        %v3266 = vsel %vm604, %v3261, 0
        %3268 = vmatpush.bf16.xpose.msra.mxu0 0
        %3269 = vmatpush.bf16.xpose.msra.mxu0 0
        %3270 = vmatpush.bf16.xpose.msra.mxu0 0
        %3271 = vmatpush.bf16.xpose.msra.mxu0 0
        %3272 = vmatpush.bf16.xpose.msra.mxu0 0
        %3273 = vmatpush.bf16.xpose.msra.mxu0 0
        %3274 = vmatpush.bf16.xpose.msra.mxu0 0
        %3275 = vmatpush.bf16.xpose.msra.mxu0 %v3266
        %3276 = vmatmul.bf16.gmra.mxu0 %v3263
        %v3277 = vpop.f32.mrf.mxu0
        %v3278 = vadd.f32 0.0, %v3277
        %v3279 = vpop.f32.mrf.mxu0
        %3280 = vdwg.mxu0
        %3281 = vrot.lane.b32.xlu0 %v964, 80
        %v3282 = vpop.permute.xlu0 %3281
        %3283 = vrot.lane.b32.xlu0 %v964, 48
        %v3284 = vpop.permute.xlu0 %3283
        %v3286 = vsel %vm604, %v3282, 0
        %v3289 = vsel %vm604, %v3284, 0
        %3291 = vmatpush.bf16.xpose.msra.mxu0 0
        %3292 = vmatpush.bf16.xpose.msra.mxu0 0
        %3293 = vmatpush.bf16.xpose.msra.mxu0 0
        %3294 = vmatpush.bf16.xpose.msra.mxu0 0
        %3295 = vmatpush.bf16.xpose.msra.mxu0 0
        %3296 = vmatpush.bf16.xpose.msra.mxu0 0
        %3297 = vmatpush.bf16.xpose.msra.mxu0 0
        %3298 = vmatpush.bf16.xpose.msra.mxu0 %v3289
        %3299 = vmatmul.bf16.gmra.mxu0 %v3286
        %v3300 = vpop.f32.mrf.mxu0
        %v3301 = vadd.f32 0.0, %v3300
        %v3302 = vpop.f32.mrf.mxu0
        %3303 = vdwg.mxu0
        %3304 = vrot.lane.b32.xlu0 %v990, 80
        %v3305 = vpop.permute.xlu0 %3304
        %3306 = vrot.lane.b32.xlu0 %v990, 48
        %v3307 = vpop.permute.xlu0 %3306
        %v3309 = vsel %vm604, %v3305, 0
        %v3312 = vsel %vm604, %v3307, 0
        %3314 = vmatpush.bf16.xpose.msra.mxu0 0
        %3315 = vmatpush.bf16.xpose.msra.mxu0 0
        %3316 = vmatpush.bf16.xpose.msra.mxu0 0
        %3317 = vmatpush.bf16.xpose.msra.mxu0 0
        %3318 = vmatpush.bf16.xpose.msra.mxu0 0
        %3319 = vmatpush.bf16.xpose.msra.mxu0 0
        %3320 = vmatpush.bf16.xpose.msra.mxu0 0
        %3321 = vmatpush.bf16.xpose.msra.mxu0 %v3312
        %3322 = vmatmul.bf16.gmra.mxu0 %v3309
        %v3323 = vpop.f32.mrf.mxu0
        %v3324 = vadd.f32 0.0, %v3323
        %v3325 = vpop.f32.mrf.mxu0
        %3326 = vdwg.mxu0
        %3327 = vrot.lane.b32.xlu0 %v1016, 80
        %v3328 = vpop.permute.xlu0 %3327
        %3329 = vrot.lane.b32.xlu0 %v1016, 48
        %v3330 = vpop.permute.xlu0 %3329
        %v3332 = vsel %vm604, %v3328, 0
        %v3335 = vsel %vm604, %v3330, 0
        %3337 = vmatpush.bf16.xpose.msra.mxu0 0
        %3338 = vmatpush.bf16.xpose.msra.mxu0 0
        %3339 = vmatpush.bf16.xpose.msra.mxu0 0
        %3340 = vmatpush.bf16.xpose.msra.mxu0 0
        %3341 = vmatpush.bf16.xpose.msra.mxu0 0
        %3342 = vmatpush.bf16.xpose.msra.mxu0 0
        %3343 = vmatpush.bf16.xpose.msra.mxu0 0
        %3344 = vmatpush.bf16.xpose.msra.mxu0 %v3335
        %3345 = vmatmul.bf16.gmra.mxu0 %v3332
        %v3346 = vpop.f32.mrf.mxu0
        %v3347 = vadd.f32 0.0, %v3346
        %v3348 = vpop.f32.mrf.mxu0
        %3349 = vdwg.mxu0
        %3350 = vrot.lane.b32.xlu0 %v1042, 80
        %v3351 = vpop.permute.xlu0 %3350
        %3352 = vrot.lane.b32.xlu0 %v1042, 48
        %v3353 = vpop.permute.xlu0 %3352
        %v3355 = vsel %vm604, %v3351, 0
        %v3358 = vsel %vm604, %v3353, 0
        %3360 = vmatpush.bf16.xpose.msra.mxu0 0
        %3361 = vmatpush.bf16.xpose.msra.mxu0 0
        %3362 = vmatpush.bf16.xpose.msra.mxu0 0
        %3363 = vmatpush.bf16.xpose.msra.mxu0 0
        %3364 = vmatpush.bf16.xpose.msra.mxu0 0
        %3365 = vmatpush.bf16.xpose.msra.mxu0 0
        %3366 = vmatpush.bf16.xpose.msra.mxu0 0
        %3367 = vmatpush.bf16.xpose.msra.mxu0 %v3358
        %3368 = vmatmul.bf16.gmra.mxu0 %v3355
        %v3369 = vpop.f32.mrf.mxu0
        %v3370 = vadd.f32 0.0, %v3369
        %v3371 = vpop.f32.mrf.mxu0
        %3372 = vdwg.mxu0
        %3373 = vrot.lane.b32.xlu0 %v1068, 80
        %v3374 = vpop.permute.xlu0 %3373
        %3375 = vrot.lane.b32.xlu0 %v1068, 48
        %v3376 = vpop.permute.xlu0 %3375
        %v3378 = vsel %vm604, %v3374, 0
        %v3381 = vsel %vm604, %v3376, 0
        %3383 = vmatpush.bf16.xpose.msra.mxu0 0
        %3384 = vmatpush.bf16.xpose.msra.mxu0 0
        %3385 = vmatpush.bf16.xpose.msra.mxu0 0
        %3386 = vmatpush.bf16.xpose.msra.mxu0 0
        %3387 = vmatpush.bf16.xpose.msra.mxu0 0
        %3388 = vmatpush.bf16.xpose.msra.mxu0 0
        %3389 = vmatpush.bf16.xpose.msra.mxu0 0
        %3390 = vmatpush.bf16.xpose.msra.mxu0 %v3381
        %3391 = vmatmul.bf16.gmra.mxu0 %v3378
        %v3392 = vpop.f32.mrf.mxu0
        %v3393 = vadd.f32 0.0, %v3392
        %v3394 = vpop.f32.mrf.mxu0
        %3395 = vdwg.mxu0
        %3396 = vrot.lane.b32.xlu0 %v1094, 80
        %v3397 = vpop.permute.xlu0 %3396
        %3398 = vrot.lane.b32.xlu0 %v1094, 48
        %v3399 = vpop.permute.xlu0 %3398
        %v3401 = vsel %vm604, %v3397, 0
        %v3404 = vsel %vm604, %v3399, 0
        %3406 = vmatpush.bf16.xpose.msra.mxu0 0
        %3407 = vmatpush.bf16.xpose.msra.mxu0 0
        %3408 = vmatpush.bf16.xpose.msra.mxu0 0
        %3409 = vmatpush.bf16.xpose.msra.mxu0 0
        %3410 = vmatpush.bf16.xpose.msra.mxu0 0
        %3411 = vmatpush.bf16.xpose.msra.mxu0 0
        %3412 = vmatpush.bf16.xpose.msra.mxu0 0
        %3413 = vmatpush.bf16.xpose.msra.mxu0 %v3404
        %3414 = vmatmul.bf16.gmra.mxu0 %v3401
        %v3415 = vpop.f32.mrf.mxu0
        %v3416 = vadd.f32 0.0, %v3415
        %v3417 = vpop.f32.mrf.mxu0
        %3418 = vdwg.mxu0
        %v3419 = vmul.f32 %v2979, 0.35355338
        %v3420 = vmul.f32 %v3002, 0.35355338
        %v3421 = vmul.f32 %v3025, 0.35355338
        %v3422 = vmul.f32 %v3048, 0.35355338
        %v3423 = vmul.f32 %v3071, 0.35355338
        %v3424 = vmul.f32 %v3094, 0.35355338
        %v3425 = vmul.f32 %v3117, 0.35355338
        %v3426 = vmul.f32 %v3140, 0.35355338
        %v3427 = vmul.f32 %v3163, 0.35355338
        %v3428 = vmul.f32 %v3186, 0.35355338
        %v3429 = vmul.f32 %v3209, 0.35355338
        %v3430 = vmul.f32 %v3232, 0.35355338
        %v3431 = vmul.f32 %v3255, 0.35355338
        %v3432 = vmul.f32 %v3278, 0.35355338
        %v3433 = vmul.f32 %v3301, 0.35355338
        %v3434 = vmul.f32 %v3324, 0.35355338
        %v3435 = vmul.f32 %v3347, 0.35355338
        %v3436 = vmul.f32 %v3370, 0.35355338
        %v3437 = vmul.f32 %v3393, 0.35355338
        %v3438 = vmul.f32 %v3416, 0.35355338
        %v3439 = vadd.f32 %v3419, %v367
        %v3440 = vadd.f32 %v3420, %v367
        %v3441 = vadd.f32 %v3421, %v367
        %v3442 = vadd.f32 %v3422, %v367
        %v3443 = vadd.f32 %v3423, %v367
        %v3444 = vadd.f32 %v3424, %v367
        %v3445 = vadd.f32 %v3425, %v367
        %v3446 = vadd.f32 %v3426, %v367
        %v3447 = vadd.f32 %v3427, %v367
        %v3448 = vadd.f32 %v3428, %v367
        %v3449 = vadd.f32 %v3429, %v367
        %v3450 = vadd.f32 %v3430, %v367
        %v3451 = vadd.f32 %v3431, %v367
        %v3452 = vadd.f32 %v3432, %v367
        %v3453 = vadd.f32 %v3433, %v367
        %v3454 = vadd.f32 %v3434, %v367
        %v3455 = vadd.f32 %v3435, %v367
        %v3456 = vadd.f32 %v3436, %v367
        %v3457 = vadd.f32 %v3437, %v367
        %v3458 = vadd.f32 %v3438, %v367
        %v3459 = vsel %vm604, %v3439, -inf
        %3460 = vmax.xlane.f32.xlu0 %v3459
        %v3461 = vpop.xlane.xlu0 %3460
        %v3462 = vsel %vm604, %v3440, -inf
        %3463 = vmax.xlane.f32.xlu0 %v3462
        %v3464 = vpop.xlane.xlu0 %3463
        %v3465 = vsel %vm604, %v3441, -inf
        %3466 = vmax.xlane.f32.xlu0 %v3465
        %v3467 = vpop.xlane.xlu0 %3466
        %v3468 = vsel %vm604, %v3442, -inf
        %3469 = vmax.xlane.f32.xlu0 %v3468
        %v3470 = vpop.xlane.xlu0 %3469
        %v3471 = vsel %vm604, %v3443, -inf
        %3472 = vmax.xlane.f32.xlu0 %v3471
        %v3473 = vpop.xlane.xlu0 %3472
        %v3474 = vsel %vm604, %v3444, -inf
        %3475 = vmax.xlane.f32.xlu0 %v3474
        %v3476 = vpop.xlane.xlu0 %3475
        %v3477 = vsel %vm604, %v3445, -inf
        %3478 = vmax.xlane.f32.xlu0 %v3477
        %v3479 = vpop.xlane.xlu0 %3478
        %v3480 = vsel %vm604, %v3446, -inf
        %3481 = vmax.xlane.f32.xlu0 %v3480
        %v3482 = vpop.xlane.xlu0 %3481
        %v3483 = vsel %vm604, %v3447, -inf
        %3484 = vmax.xlane.f32.xlu0 %v3483
        %v3485 = vpop.xlane.xlu0 %3484
        %v3486 = vsel %vm604, %v3448, -inf
        %3487 = vmax.xlane.f32.xlu0 %v3486
        %v3488 = vpop.xlane.xlu0 %3487
        %v3489 = vsel %vm604, %v3449, -inf
        %3490 = vmax.xlane.f32.xlu0 %v3489
        %v3491 = vpop.xlane.xlu0 %3490
        %v3492 = vsel %vm604, %v3450, -inf
        %3493 = vmax.xlane.f32.xlu0 %v3492
        %v3494 = vpop.xlane.xlu0 %3493
        %v3495 = vsel %vm604, %v3451, -inf
        %3496 = vmax.xlane.f32.xlu0 %v3495
        %v3497 = vpop.xlane.xlu0 %3496
        %v3498 = vsel %vm604, %v3452, -inf
        %3499 = vmax.xlane.f32.xlu0 %v3498
        %v3500 = vpop.xlane.xlu0 %3499
        %v3501 = vsel %vm604, %v3453, -inf
        %3502 = vmax.xlane.f32.xlu0 %v3501
        %v3503 = vpop.xlane.xlu0 %3502
        %v3504 = vsel %vm604, %v3454, -inf
        %3505 = vmax.xlane.f32.xlu0 %v3504
        %v3506 = vpop.xlane.xlu0 %3505
        %v3507 = vsel %vm604, %v3455, -inf
        %3508 = vmax.xlane.f32.xlu0 %v3507
        %v3509 = vpop.xlane.xlu0 %3508
        %v3510 = vsel %vm604, %v3456, -inf
        %3511 = vmax.xlane.f32.xlu0 %v3510
        %v3512 = vpop.xlane.xlu0 %3511
        %v3513 = vsel %vm604, %v3457, -inf
        %3514 = vmax.xlane.f32.xlu0 %v3513
        %v3515 = vpop.xlane.xlu0 %3514
        %v3516 = vsel %vm604, %v3458, -inf
        %3517 = vmax.xlane.f32.xlu0 %v3516
        %v3518 = vpop.xlane.xlu0 %3517
        %v3519 = vsub.f32 %v3439, %v3461
        %v3520 = vsub.f32 %v3440, %v3464
        %v3521 = vsub.f32 %v3441, %v3467
        %v3522 = vsub.f32 %v3442, %v3470
        %v3523 = vsub.f32 %v3443, %v3473
        %v3524 = vsub.f32 %v3444, %v3476
        %v3525 = vsub.f32 %v3445, %v3479
        %v3526 = vsub.f32 %v3446, %v3482
        %v3527 = vsub.f32 %v3447, %v3485
        %v3528 = vsub.f32 %v3448, %v3488
        %v3529 = vsub.f32 %v3449, %v3491
        %v3530 = vsub.f32 %v3450, %v3494
        %v3531 = vsub.f32 %v3451, %v3497
        %v3532 = vsub.f32 %v3452, %v3500
        %v3533 = vsub.f32 %v3453, %v3503
        %v3534 = vsub.f32 %v3454, %v3506
        %v3535 = vsub.f32 %v3455, %v3509
        %v3536 = vsub.f32 %v3456, %v3512
        %v3537 = vsub.f32 %v3457, %v3515
        %v3538 = vsub.f32 %v3458, %v3518
        %v3539 = vmul.f32 %v3519, 1.442695
        %v3540 = vpow.pop %v3539
        %v3541 = vmul.f32 %v3520, 1.442695
        %v3542 = vpow.pop %v3541
        %v3543 = vmul.f32 %v3521, 1.442695
        %v3544 = vpow.pop %v3543
        %v3545 = vmul.f32 %v3522, 1.442695
        %v3546 = vpow.pop %v3545
        %v3547 = vmul.f32 %v3523, 1.442695
        %v3548 = vpow.pop %v3547
        %v3549 = vmul.f32 %v3524, 1.442695
        %v3550 = vpow.pop %v3549
        %v3551 = vmul.f32 %v3525, 1.442695
        %v3552 = vpow.pop %v3551
        %v3553 = vmul.f32 %v3526, 1.442695
        %v3554 = vpow.pop %v3553
        %v3555 = vmul.f32 %v3527, 1.442695
        %v3556 = vpow.pop %v3555
        %v3557 = vmul.f32 %v3528, 1.442695
        %v3558 = vpow.pop %v3557
        %v3559 = vmul.f32 %v3529, 1.442695
        %v3560 = vpow.pop %v3559
        %v3561 = vmul.f32 %v3530, 1.442695
        %v3562 = vpow.pop %v3561
        %v3563 = vmul.f32 %v3531, 1.442695
        %v3564 = vpow.pop %v3563
        %v3565 = vmul.f32 %v3532, 1.442695
        %v3566 = vpow.pop %v3565
        %v3567 = vmul.f32 %v3533, 1.442695
        %v3568 = vpow.pop %v3567
        %v3569 = vmul.f32 %v3534, 1.442695
        %v3570 = vpow.pop %v3569
        %v3571 = vmul.f32 %v3535, 1.442695
        %v3572 = vpow.pop %v3571
        %v3573 = vmul.f32 %v3536, 1.442695
        %v3574 = vpow.pop %v3573
        %v3575 = vmul.f32 %v3537, 1.442695
        %v3576 = vpow.pop %v3575
        %v3577 = vmul.f32 %v3538, 1.442695
        %v3578 = vpow.pop %v3577
        %v3579 = vsel %vm604, %v3540, 0.0
        %3580 = vadd.xlane.f32.xlu0 %v3579
        %v3581 = vpop.xlane.xlu0 %3580
        %v3582 = vsel %vm604, %v3542, 0.0
        %3583 = vadd.xlane.f32.xlu0 %v3582
        %v3584 = vpop.xlane.xlu0 %3583
        %v3585 = vsel %vm604, %v3544, 0.0
        %3586 = vadd.xlane.f32.xlu0 %v3585
        %v3587 = vpop.xlane.xlu0 %3586
        %v3588 = vsel %vm604, %v3546, 0.0
        %3589 = vadd.xlane.f32.xlu0 %v3588
        %v3590 = vpop.xlane.xlu0 %3589
        %v3591 = vsel %vm604, %v3548, 0.0
        %3592 = vadd.xlane.f32.xlu0 %v3591
        %v3593 = vpop.xlane.xlu0 %3592
        %v3594 = vsel %vm604, %v3550, 0.0
        %3595 = vadd.xlane.f32.xlu0 %v3594
        %v3596 = vpop.xlane.xlu0 %3595
        %v3597 = vsel %vm604, %v3552, 0.0
        %3598 = vadd.xlane.f32.xlu0 %v3597
        %v3599 = vpop.xlane.xlu0 %3598
        %v3600 = vsel %vm604, %v3554, 0.0
        %3601 = vadd.xlane.f32.xlu0 %v3600
        %v3602 = vpop.xlane.xlu0 %3601
        %v3603 = vsel %vm604, %v3556, 0.0
        %3604 = vadd.xlane.f32.xlu0 %v3603
        %v3605 = vpop.xlane.xlu0 %3604
        %v3606 = vsel %vm604, %v3558, 0.0
        %3607 = vadd.xlane.f32.xlu0 %v3606
        %v3608 = vpop.xlane.xlu0 %3607
        %v3609 = vsel %vm604, %v3560, 0.0
        %3610 = vadd.xlane.f32.xlu0 %v3609
        %v3611 = vpop.xlane.xlu0 %3610
        %v3612 = vsel %vm604, %v3562, 0.0
        %3613 = vadd.xlane.f32.xlu0 %v3612
        %v3614 = vpop.xlane.xlu0 %3613
        %v3615 = vsel %vm604, %v3564, 0.0
        %3616 = vadd.xlane.f32.xlu0 %v3615
        %v3617 = vpop.xlane.xlu0 %3616
        %v3618 = vsel %vm604, %v3566, 0.0
        %3619 = vadd.xlane.f32.xlu0 %v3618
        %v3620 = vpop.xlane.xlu0 %3619
        %v3621 = vsel %vm604, %v3568, 0.0
        %3622 = vadd.xlane.f32.xlu0 %v3621
        %v3623 = vpop.xlane.xlu0 %3622
        %v3624 = vsel %vm604, %v3570, 0.0
        %3625 = vadd.xlane.f32.xlu0 %v3624
        %v3626 = vpop.xlane.xlu0 %3625
        %v3627 = vsel %vm604, %v3572, 0.0
        %3628 = vadd.xlane.f32.xlu0 %v3627
        %v3629 = vpop.xlane.xlu0 %3628
        %v3630 = vsel %vm604, %v3574, 0.0
        %3631 = vadd.xlane.f32.xlu0 %v3630
        %v3632 = vpop.xlane.xlu0 %3631
        %v3633 = vsel %vm604, %v3576, 0.0
        %3634 = vadd.xlane.f32.xlu0 %v3633
        %v3635 = vpop.xlane.xlu0 %3634
        %v3636 = vsel %vm604, %v3578, 0.0
        %3637 = vadd.xlane.f32.xlu0 %v3636
        %v3638 = vpop.xlane.xlu0 %3637
        %v3639 = vrcp.pop %v3581
        %v3640 = vrcp.pop %v3584
        %v3641 = vrcp.pop %v3587
        %v3642 = vrcp.pop %v3590
        %v3643 = vrcp.pop %v3593
        %v3644 = vrcp.pop %v3596
        %v3645 = vrcp.pop %v3599
        %v3646 = vrcp.pop %v3602
        %v3647 = vrcp.pop %v3605
        %v3648 = vrcp.pop %v3608
        %v3649 = vrcp.pop %v3611
        %v3650 = vrcp.pop %v3614
        %v3651 = vrcp.pop %v3617
        %v3652 = vrcp.pop %v3620
        %v3653 = vrcp.pop %v3623
        %v3654 = vrcp.pop %v3626
        %v3655 = vrcp.pop %v3629
        %v3656 = vrcp.pop %v3632
        %v3657 = vrcp.pop %v3635
        %v3658 = vrcp.pop %v3638
        %v3659 = vmul.f32 %v3540, %v3639
        %v3660 = vmul.f32 %v3542, %v3640
        %v3661 = vmul.f32 %v3544, %v3641
        %v3662 = vmul.f32 %v3546, %v3642
        %v3663 = vmul.f32 %v3548, %v3643
        %v3664 = vmul.f32 %v3550, %v3644
        %v3665 = vmul.f32 %v3552, %v3645
        %v3666 = vmul.f32 %v3554, %v3646
        %v3667 = vmul.f32 %v3556, %v3647
        %v3668 = vmul.f32 %v3558, %v3648
        %v3669 = vmul.f32 %v3560, %v3649
        %v3670 = vmul.f32 %v3562, %v3650
        %v3671 = vmul.f32 %v3564, %v3651
        %v3672 = vmul.f32 %v3566, %v3652
        %v3673 = vmul.f32 %v3568, %v3653
        %v3674 = vmul.f32 %v3570, %v3654
        %v3675 = vmul.f32 %v3572, %v3655
        %v3676 = vmul.f32 %v3574, %v3656
        %v3677 = vmul.f32 %v3576, %v3657
        %v3678 = vmul.f32 %v3578, %v3658
        %v3679 = vpack.c.bf16 %v3659, %v3659
        %v3680 = vpack.c.bf16 %v3660, %v3660
        %v3681 = vpack.c.bf16 %v3661, %v3661
        %v3682 = vpack.c.bf16 %v3662, %v3662
        %v3683 = vpack.c.bf16 %v3663, %v3663
        %v3684 = vpack.c.bf16 %v3664, %v3664
        %v3685 = vpack.c.bf16 %v3665, %v3665
        %v3686 = vpack.c.bf16 %v3666, %v3666
        %v3687 = vpack.c.bf16 %v3667, %v3667
        %v3688 = vpack.c.bf16 %v3668, %v3668
        %v3689 = vpack.c.bf16 %v3669, %v3669
        %v3690 = vpack.c.bf16 %v3670, %v3670
        %v3691 = vpack.c.bf16 %v3671, %v3671
        %v3692 = vpack.c.bf16 %v3672, %v3672
        %v3693 = vpack.c.bf16 %v3673, %v3673
        %v3694 = vpack.c.bf16 %v3674, %v3674
        %v3695 = vpack.c.bf16 %v3675, %v3675
        %v3696 = vpack.c.bf16 %v3676, %v3676
        %v3697 = vpack.c.bf16 %v3677, %v3677
        %v3698 = vpack.c.bf16 %v3678, %v3678
        %v3700 = vunpack.c.l.b16 %v2138
        %v3701 = vpack.c.b16 %v3700, %v3700
        %3702 = vrot.lane.b32.xlu0 %v3701, 96
        %v3703 = vpop.permute.xlu0 %3702
        %v3705 = vsel %vm604, %v3679, 0
        %v3708 = vsel %vm2161, %v3703, 0
        %3710 = vmatpush.bf16.msra.mxu0 0
        %3711 = vmatpush.bf16.msra.mxu0 0
        %3712 = vmatpush.bf16.msra.mxu0 0
        %3713 = vmatpush.bf16.msra.mxu0 0
        %3714 = vmatpush.bf16.msra.mxu0 0
        %3715 = vmatpush.bf16.msra.mxu0 0
        %3716 = vmatpush.bf16.msra.mxu0 0
        %3717 = vmatpush.bf16.msra.mxu0 %v3708
        %3718 = vmatmul.bf16.gmra.mxu0 %v3705
        %v3719 = vpop.f32.mrf.mxu0
        %v3720 = vadd.f32 0.0, %v3719
        %v3721 = vpop.f32.mrf.mxu0
        %3722 = vdwg.mxu0
        %v3724 = vunpack.c.l.b16 %v2139
        %v3725 = vpack.c.b16 %v3724, %v3724
        %3726 = vrot.lane.b32.xlu0 %v3725, 96
        %v3727 = vpop.permute.xlu0 %3726
        %v3729 = vsel %vm604, %v3680, 0
        %v3732 = vsel %vm2161, %v3727, 0
        %3734 = vmatpush.bf16.msra.mxu0 0
        %3735 = vmatpush.bf16.msra.mxu0 0
        %3736 = vmatpush.bf16.msra.mxu0 0
        %3737 = vmatpush.bf16.msra.mxu0 0
        %3738 = vmatpush.bf16.msra.mxu0 0
        %3739 = vmatpush.bf16.msra.mxu0 0
        %3740 = vmatpush.bf16.msra.mxu0 0
        %3741 = vmatpush.bf16.msra.mxu0 %v3732
        %3742 = vmatmul.bf16.gmra.mxu0 %v3729
        %v3743 = vpop.f32.mrf.mxu0
        %v3744 = vadd.f32 0.0, %v3743
        %v3745 = vpop.f32.mrf.mxu0
        %3746 = vdwg.mxu0
        %v3748 = vunpack.c.l.b16 %v2140
        %v3749 = vpack.c.b16 %v3748, %v3748
        %3750 = vrot.lane.b32.xlu0 %v3749, 96
        %v3751 = vpop.permute.xlu0 %3750
        %v3753 = vsel %vm604, %v3681, 0
        %v3756 = vsel %vm2161, %v3751, 0
        %3758 = vmatpush.bf16.msra.mxu0 0
        %3759 = vmatpush.bf16.msra.mxu0 0
        %3760 = vmatpush.bf16.msra.mxu0 0
        %3761 = vmatpush.bf16.msra.mxu0 0
        %3762 = vmatpush.bf16.msra.mxu0 0
        %3763 = vmatpush.bf16.msra.mxu0 0
        %3764 = vmatpush.bf16.msra.mxu0 0
        %3765 = vmatpush.bf16.msra.mxu0 %v3756
        %3766 = vmatmul.bf16.gmra.mxu0 %v3753
        %v3767 = vpop.f32.mrf.mxu0
        %v3768 = vadd.f32 0.0, %v3767
        %v3769 = vpop.f32.mrf.mxu0
        %3770 = vdwg.mxu0
        %v3772 = vunpack.c.l.b16 %v2141
        %v3773 = vpack.c.b16 %v3772, %v3772
        %3774 = vrot.lane.b32.xlu0 %v3773, 96
        %v3775 = vpop.permute.xlu0 %3774
        %v3777 = vsel %vm604, %v3682, 0
        %v3780 = vsel %vm2161, %v3775, 0
        %3782 = vmatpush.bf16.msra.mxu0 0
        %3783 = vmatpush.bf16.msra.mxu0 0
        %3784 = vmatpush.bf16.msra.mxu0 0
        %3785 = vmatpush.bf16.msra.mxu0 0
        %3786 = vmatpush.bf16.msra.mxu0 0
        %3787 = vmatpush.bf16.msra.mxu0 0
        %3788 = vmatpush.bf16.msra.mxu0 0
        %3789 = vmatpush.bf16.msra.mxu0 %v3780
        %3790 = vmatmul.bf16.gmra.mxu0 %v3777
        %v3791 = vpop.f32.mrf.mxu0
        %v3792 = vadd.f32 0.0, %v3791
        %v3793 = vpop.f32.mrf.mxu0
        %3794 = vdwg.mxu0
        %v3796 = vunpack.c.l.b16 %v2142
        %v3797 = vpack.c.b16 %v3796, %v3796
        %3798 = vrot.lane.b32.xlu0 %v3797, 96
        %v3799 = vpop.permute.xlu0 %3798
        %v3801 = vsel %vm604, %v3683, 0
        %v3804 = vsel %vm2161, %v3799, 0
        %3806 = vmatpush.bf16.msra.mxu0 0
        %3807 = vmatpush.bf16.msra.mxu0 0
        %3808 = vmatpush.bf16.msra.mxu0 0
        %3809 = vmatpush.bf16.msra.mxu0 0
        %3810 = vmatpush.bf16.msra.mxu0 0
        %3811 = vmatpush.bf16.msra.mxu0 0
        %3812 = vmatpush.bf16.msra.mxu0 0
        %3813 = vmatpush.bf16.msra.mxu0 %v3804
        %3814 = vmatmul.bf16.gmra.mxu0 %v3801
        %v3815 = vpop.f32.mrf.mxu0
        %v3816 = vadd.f32 0.0, %v3815
        %v3817 = vpop.f32.mrf.mxu0
        %3818 = vdwg.mxu0
        %v3820 = vunpack.c.l.b16 %v2143
        %v3821 = vpack.c.b16 %v3820, %v3820
        %3822 = vrot.lane.b32.xlu0 %v3821, 96
        %v3823 = vpop.permute.xlu0 %3822
        %v3825 = vsel %vm604, %v3684, 0
        %v3828 = vsel %vm2161, %v3823, 0
        %3830 = vmatpush.bf16.msra.mxu0 0
        %3831 = vmatpush.bf16.msra.mxu0 0
        %3832 = vmatpush.bf16.msra.mxu0 0
        %3833 = vmatpush.bf16.msra.mxu0 0
        %3834 = vmatpush.bf16.msra.mxu0 0
        %3835 = vmatpush.bf16.msra.mxu0 0
        %3836 = vmatpush.bf16.msra.mxu0 0
        %3837 = vmatpush.bf16.msra.mxu0 %v3828
        %3838 = vmatmul.bf16.gmra.mxu0 %v3825
        %v3839 = vpop.f32.mrf.mxu0
        %v3840 = vadd.f32 0.0, %v3839
        %v3841 = vpop.f32.mrf.mxu0
        %3842 = vdwg.mxu0
        %v3844 = vunpack.c.l.b16 %v2144
        %v3845 = vpack.c.b16 %v3844, %v3844
        %3846 = vrot.lane.b32.xlu0 %v3845, 96
        %v3847 = vpop.permute.xlu0 %3846
        %v3849 = vsel %vm604, %v3685, 0
        %v3852 = vsel %vm2161, %v3847, 0
        %3854 = vmatpush.bf16.msra.mxu0 0
        %3855 = vmatpush.bf16.msra.mxu0 0
        %3856 = vmatpush.bf16.msra.mxu0 0
        %3857 = vmatpush.bf16.msra.mxu0 0
        %3858 = vmatpush.bf16.msra.mxu0 0
        %3859 = vmatpush.bf16.msra.mxu0 0
        %3860 = vmatpush.bf16.msra.mxu0 0
        %3861 = vmatpush.bf16.msra.mxu0 %v3852
        %3862 = vmatmul.bf16.gmra.mxu0 %v3849
        %v3863 = vpop.f32.mrf.mxu0
        %v3864 = vadd.f32 0.0, %v3863
        %v3865 = vpop.f32.mrf.mxu0
        %3866 = vdwg.mxu0
        %v3868 = vunpack.c.l.b16 %v2145
        %v3869 = vpack.c.b16 %v3868, %v3868
        %3870 = vrot.lane.b32.xlu0 %v3869, 96
        %v3871 = vpop.permute.xlu0 %3870
        %v3873 = vsel %vm604, %v3686, 0
        %v3876 = vsel %vm2161, %v3871, 0
        %3878 = vmatpush.bf16.msra.mxu0 0
        %3879 = vmatpush.bf16.msra.mxu0 0
        %3880 = vmatpush.bf16.msra.mxu0 0
        %3881 = vmatpush.bf16.msra.mxu0 0
        %3882 = vmatpush.bf16.msra.mxu0 0
        %3883 = vmatpush.bf16.msra.mxu0 0
        %3884 = vmatpush.bf16.msra.mxu0 0
        %3885 = vmatpush.bf16.msra.mxu0 %v3876
        %3886 = vmatmul.bf16.gmra.mxu0 %v3873
        %v3887 = vpop.f32.mrf.mxu0
        %v3888 = vadd.f32 0.0, %v3887
        %v3889 = vpop.f32.mrf.mxu0
        %3890 = vdwg.mxu0
        %v3892 = vunpack.c.l.b16 %v2146
        %v3893 = vpack.c.b16 %v3892, %v3892
        %3894 = vrot.lane.b32.xlu0 %v3893, 96
        %v3895 = vpop.permute.xlu0 %3894
        %v3897 = vsel %vm604, %v3687, 0
        %v3900 = vsel %vm2161, %v3895, 0
        %3902 = vmatpush.bf16.msra.mxu0 0
        %3903 = vmatpush.bf16.msra.mxu0 0
        %3904 = vmatpush.bf16.msra.mxu0 0
        %3905 = vmatpush.bf16.msra.mxu0 0
        %3906 = vmatpush.bf16.msra.mxu0 0
        %3907 = vmatpush.bf16.msra.mxu0 0
        %3908 = vmatpush.bf16.msra.mxu0 0
        %3909 = vmatpush.bf16.msra.mxu0 %v3900
        %3910 = vmatmul.bf16.gmra.mxu0 %v3897
        %v3911 = vpop.f32.mrf.mxu0
        %v3912 = vadd.f32 0.0, %v3911
        %v3913 = vpop.f32.mrf.mxu0
        %3914 = vdwg.mxu0
        %v3916 = vunpack.c.l.b16 %v2147
        %v3917 = vpack.c.b16 %v3916, %v3916
        %3918 = vrot.lane.b32.xlu0 %v3917, 96
        %v3919 = vpop.permute.xlu0 %3918
        %v3921 = vsel %vm604, %v3688, 0
        %v3924 = vsel %vm2161, %v3919, 0
        %3926 = vmatpush.bf16.msra.mxu0 0
        %3927 = vmatpush.bf16.msra.mxu0 0
        %3928 = vmatpush.bf16.msra.mxu0 0
        %3929 = vmatpush.bf16.msra.mxu0 0
        %3930 = vmatpush.bf16.msra.mxu0 0
        %3931 = vmatpush.bf16.msra.mxu0 0
        %3932 = vmatpush.bf16.msra.mxu0 0
        %3933 = vmatpush.bf16.msra.mxu0 %v3924
        %3934 = vmatmul.bf16.gmra.mxu0 %v3921
        %v3935 = vpop.f32.mrf.mxu0
        %v3936 = vadd.f32 0.0, %v3935
        %v3937 = vpop.f32.mrf.mxu0
        %3938 = vdwg.mxu0
        %v3940 = vunpack.c.l.b16 %v2148
        %v3941 = vpack.c.b16 %v3940, %v3940
        %3942 = vrot.lane.b32.xlu0 %v3941, 96
        %v3943 = vpop.permute.xlu0 %3942
        %v3945 = vsel %vm604, %v3689, 0
        %v3948 = vsel %vm2161, %v3943, 0
        %3950 = vmatpush.bf16.msra.mxu0 0
        %3951 = vmatpush.bf16.msra.mxu0 0
        %3952 = vmatpush.bf16.msra.mxu0 0
        %3953 = vmatpush.bf16.msra.mxu0 0
        %3954 = vmatpush.bf16.msra.mxu0 0
        %3955 = vmatpush.bf16.msra.mxu0 0
        %3956 = vmatpush.bf16.msra.mxu0 0
        %3957 = vmatpush.bf16.msra.mxu0 %v3948
        %3958 = vmatmul.bf16.gmra.mxu0 %v3945
        %v3959 = vpop.f32.mrf.mxu0
        %v3960 = vadd.f32 0.0, %v3959
        %v3961 = vpop.f32.mrf.mxu0
        %3962 = vdwg.mxu0
        %v3964 = vunpack.c.l.b16 %v2149
        %v3965 = vpack.c.b16 %v3964, %v3964
        %3966 = vrot.lane.b32.xlu0 %v3965, 96
        %v3967 = vpop.permute.xlu0 %3966
        %v3969 = vsel %vm604, %v3690, 0
        %v3972 = vsel %vm2161, %v3967, 0
        %3974 = vmatpush.bf16.msra.mxu0 0
        %3975 = vmatpush.bf16.msra.mxu0 0
        %3976 = vmatpush.bf16.msra.mxu0 0
        %3977 = vmatpush.bf16.msra.mxu0 0
        %3978 = vmatpush.bf16.msra.mxu0 0
        %3979 = vmatpush.bf16.msra.mxu0 0
        %3980 = vmatpush.bf16.msra.mxu0 0
        %3981 = vmatpush.bf16.msra.mxu0 %v3972
        %3982 = vmatmul.bf16.gmra.mxu0 %v3969
        %v3983 = vpop.f32.mrf.mxu0
        %v3984 = vadd.f32 0.0, %v3983
        %v3985 = vpop.f32.mrf.mxu0
        %3986 = vdwg.mxu0
        %v3988 = vunpack.c.l.b16 %v2150
        %v3989 = vpack.c.b16 %v3988, %v3988
        %3990 = vrot.lane.b32.xlu0 %v3989, 96
        %v3991 = vpop.permute.xlu0 %3990
        %v3993 = vsel %vm604, %v3691, 0
        %v3996 = vsel %vm2161, %v3991, 0
        %3998 = vmatpush.bf16.msra.mxu0 0
        %3999 = vmatpush.bf16.msra.mxu0 0
        %4000 = vmatpush.bf16.msra.mxu0 0
        %4001 = vmatpush.bf16.msra.mxu0 0
        %4002 = vmatpush.bf16.msra.mxu0 0
        %4003 = vmatpush.bf16.msra.mxu0 0
        %4004 = vmatpush.bf16.msra.mxu0 0
        %4005 = vmatpush.bf16.msra.mxu0 %v3996
        %4006 = vmatmul.bf16.gmra.mxu0 %v3993
        %v4007 = vpop.f32.mrf.mxu0
        %v4008 = vadd.f32 0.0, %v4007
        %v4009 = vpop.f32.mrf.mxu0
        %4010 = vdwg.mxu0
        %v4012 = vunpack.c.l.b16 %v2151
        %v4013 = vpack.c.b16 %v4012, %v4012
        %4014 = vrot.lane.b32.xlu0 %v4013, 96
        %v4015 = vpop.permute.xlu0 %4014
        %v4017 = vsel %vm604, %v3692, 0
        %v4020 = vsel %vm2161, %v4015, 0
        %4022 = vmatpush.bf16.msra.mxu0 0
        %4023 = vmatpush.bf16.msra.mxu0 0
        %4024 = vmatpush.bf16.msra.mxu0 0
        %4025 = vmatpush.bf16.msra.mxu0 0
        %4026 = vmatpush.bf16.msra.mxu0 0
        %4027 = vmatpush.bf16.msra.mxu0 0
        %4028 = vmatpush.bf16.msra.mxu0 0
        %4029 = vmatpush.bf16.msra.mxu0 %v4020
        %4030 = vmatmul.bf16.gmra.mxu0 %v4017
        %v4031 = vpop.f32.mrf.mxu0
        %v4032 = vadd.f32 0.0, %v4031
        %v4033 = vpop.f32.mrf.mxu0
        %4034 = vdwg.mxu0
        %v4036 = vunpack.c.l.b16 %v2152
        %v4037 = vpack.c.b16 %v4036, %v4036
        %4038 = vrot.lane.b32.xlu0 %v4037, 96
        %v4039 = vpop.permute.xlu0 %4038
        %v4041 = vsel %vm604, %v3693, 0
        %v4044 = vsel %vm2161, %v4039, 0
        %4046 = vmatpush.bf16.msra.mxu0 0
        %4047 = vmatpush.bf16.msra.mxu0 0
        %4048 = vmatpush.bf16.msra.mxu0 0
        %4049 = vmatpush.bf16.msra.mxu0 0
        %4050 = vmatpush.bf16.msra.mxu0 0
        %4051 = vmatpush.bf16.msra.mxu0 0
        %4052 = vmatpush.bf16.msra.mxu0 0
        %4053 = vmatpush.bf16.msra.mxu0 %v4044
        %4054 = vmatmul.bf16.gmra.mxu0 %v4041
        %v4055 = vpop.f32.mrf.mxu0
        %v4056 = vadd.f32 0.0, %v4055
        %v4057 = vpop.f32.mrf.mxu0
        %4058 = vdwg.mxu0
        %v4060 = vunpack.c.l.b16 %v2153
        %v4061 = vpack.c.b16 %v4060, %v4060
        %4062 = vrot.lane.b32.xlu0 %v4061, 96
        %v4063 = vpop.permute.xlu0 %4062
        %v4065 = vsel %vm604, %v3694, 0
        %v4068 = vsel %vm2161, %v4063, 0
        %4070 = vmatpush.bf16.msra.mxu0 0
        %4071 = vmatpush.bf16.msra.mxu0 0
        %4072 = vmatpush.bf16.msra.mxu0 0
        %4073 = vmatpush.bf16.msra.mxu0 0
        %4074 = vmatpush.bf16.msra.mxu0 0
        %4075 = vmatpush.bf16.msra.mxu0 0
        %4076 = vmatpush.bf16.msra.mxu0 0
        %4077 = vmatpush.bf16.msra.mxu0 %v4068
        %4078 = vmatmul.bf16.gmra.mxu0 %v4065
        %v4079 = vpop.f32.mrf.mxu0
        %v4080 = vadd.f32 0.0, %v4079
        %v4081 = vpop.f32.mrf.mxu0
        %4082 = vdwg.mxu0
        %v4084 = vunpack.c.l.b16 %v2154
        %v4085 = vpack.c.b16 %v4084, %v4084
        %4086 = vrot.lane.b32.xlu0 %v4085, 96
        %v4087 = vpop.permute.xlu0 %4086
        %v4089 = vsel %vm604, %v3695, 0
        %v4092 = vsel %vm2161, %v4087, 0
        %4094 = vmatpush.bf16.msra.mxu0 0
        %4095 = vmatpush.bf16.msra.mxu0 0
        %4096 = vmatpush.bf16.msra.mxu0 0
        %4097 = vmatpush.bf16.msra.mxu0 0
        %4098 = vmatpush.bf16.msra.mxu0 0
        %4099 = vmatpush.bf16.msra.mxu0 0
        %4100 = vmatpush.bf16.msra.mxu0 0
        %4101 = vmatpush.bf16.msra.mxu0 %v4092
        %4102 = vmatmul.bf16.gmra.mxu0 %v4089
        %v4103 = vpop.f32.mrf.mxu0
        %v4104 = vadd.f32 0.0, %v4103
        %v4105 = vpop.f32.mrf.mxu0
        %4106 = vdwg.mxu0
        %v4108 = vunpack.c.l.b16 %v2155
        %v4109 = vpack.c.b16 %v4108, %v4108
        %4110 = vrot.lane.b32.xlu0 %v4109, 96
        %v4111 = vpop.permute.xlu0 %4110
        %v4113 = vsel %vm604, %v3696, 0
        %v4116 = vsel %vm2161, %v4111, 0
        %4118 = vmatpush.bf16.msra.mxu0 0
        %4119 = vmatpush.bf16.msra.mxu0 0
        %4120 = vmatpush.bf16.msra.mxu0 0
        %4121 = vmatpush.bf16.msra.mxu0 0
        %4122 = vmatpush.bf16.msra.mxu0 0
        %4123 = vmatpush.bf16.msra.mxu0 0
        %4124 = vmatpush.bf16.msra.mxu0 0
        %4125 = vmatpush.bf16.msra.mxu0 %v4116
        %4126 = vmatmul.bf16.gmra.mxu0 %v4113
        %v4127 = vpop.f32.mrf.mxu0
        %v4128 = vadd.f32 0.0, %v4127
        %v4129 = vpop.f32.mrf.mxu0
        %4130 = vdwg.mxu0
        %v4132 = vunpack.c.l.b16 %v2156
        %v4133 = vpack.c.b16 %v4132, %v4132
        %4134 = vrot.lane.b32.xlu0 %v4133, 96
        %v4135 = vpop.permute.xlu0 %4134
        %v4137 = vsel %vm604, %v3697, 0
        %v4140 = vsel %vm2161, %v4135, 0
        %4142 = vmatpush.bf16.msra.mxu0 0
        %4143 = vmatpush.bf16.msra.mxu0 0
        %4144 = vmatpush.bf16.msra.mxu0 0
        %4145 = vmatpush.bf16.msra.mxu0 0
        %4146 = vmatpush.bf16.msra.mxu0 0
        %4147 = vmatpush.bf16.msra.mxu0 0
        %4148 = vmatpush.bf16.msra.mxu0 0
        %4149 = vmatpush.bf16.msra.mxu0 %v4140
        %4150 = vmatmul.bf16.gmra.mxu0 %v4137
        %v4151 = vpop.f32.mrf.mxu0
        %v4152 = vadd.f32 0.0, %v4151
        %v4153 = vpop.f32.mrf.mxu0
        %4154 = vdwg.mxu0
        %v4156 = vunpack.c.l.b16 %v2157
        %v4157 = vpack.c.b16 %v4156, %v4156
        %4158 = vrot.lane.b32.xlu0 %v4157, 96
        %v4159 = vpop.permute.xlu0 %4158
        %v4161 = vsel %vm604, %v3698, 0
        %v4164 = vsel %vm2161, %v4159, 0
        %4166 = vmatpush.bf16.msra.mxu0 0
        %4167 = vmatpush.bf16.msra.mxu0 0
        %4168 = vmatpush.bf16.msra.mxu0 0
        %4169 = vmatpush.bf16.msra.mxu0 0
        %4170 = vmatpush.bf16.msra.mxu0 0
        %4171 = vmatpush.bf16.msra.mxu0 0
        %4172 = vmatpush.bf16.msra.mxu0 0
        %4173 = vmatpush.bf16.msra.mxu0 %v4164
        %4174 = vmatmul.bf16.gmra.mxu0 %v4161
        %v4175 = vpop.f32.mrf.mxu0
        %v4176 = vadd.f32 0.0, %v4175
        %v4177 = vpop.f32.mrf.mxu0
        %4178 = vdwg.mxu0
        %v4179 = vadd.f32 %v2557, %v3720
        %v4180 = vadd.f32 %v2578, %v3744
        %v4181 = vadd.f32 %v2599, %v3768
        %v4182 = vadd.f32 %v2620, %v3792
        %v4183 = vadd.f32 %v2641, %v3816
        %v4184 = vadd.f32 %v2662, %v3840
        %v4185 = vadd.f32 %v2683, %v3864
        %v4186 = vadd.f32 %v2704, %v3888
        %v4187 = vadd.f32 %v2725, %v3912
        %v4188 = vadd.f32 %v2746, %v3936
        %v4189 = vadd.f32 %v2767, %v3960
        %v4190 = vadd.f32 %v2788, %v3984
        %v4191 = vadd.f32 %v2809, %v4008
        %v4192 = vadd.f32 %v2830, %v4032
        %v4193 = vadd.f32 %v2851, %v4056
        %v4194 = vadd.f32 %v2872, %v4080
        %v4195 = vadd.f32 %v2893, %v4104
        %v4196 = vadd.f32 %v2914, %v4128
        %v4197 = vadd.f32 %v2935, %v4152
        %v4198 = vadd.f32 %v2956, %v4176
        %4199 = vrot.lane.b32.xlu0 %v599, 72
        %v4200 = vpop.permute.xlu0 %4199
        %4201 = vrot.lane.b32.xlu0 %v599, 40
        %v4202 = vpop.permute.xlu0 %4201
        %v4204 = vsel %vm604, %v4200, 0
        %v4207 = vsel %vm604, %v4202, 0
        %4209 = vmatpush.bf16.xpose.msra.mxu0 0
        %4210 = vmatpush.bf16.xpose.msra.mxu0 0
        %4211 = vmatpush.bf16.xpose.msra.mxu0 0
        %4212 = vmatpush.bf16.xpose.msra.mxu0 0
        %4213 = vmatpush.bf16.xpose.msra.mxu0 0
        %4214 = vmatpush.bf16.xpose.msra.mxu0 0
        %4215 = vmatpush.bf16.xpose.msra.mxu0 0
        %4216 = vmatpush.bf16.xpose.msra.mxu0 %v4207
        %4217 = vmatmul.bf16.gmra.mxu0 %v4204
        %v4218 = vpop.f32.mrf.mxu0
        %v4219 = vadd.f32 0.0, %v4218
        %v4220 = vpop.f32.mrf.mxu0
        %4221 = vdwg.mxu0
        %4222 = vrot.lane.b32.xlu0 %v626, 72
        %v4223 = vpop.permute.xlu0 %4222
        %4224 = vrot.lane.b32.xlu0 %v626, 40
        %v4225 = vpop.permute.xlu0 %4224
        %v4227 = vsel %vm604, %v4223, 0
        %v4230 = vsel %vm604, %v4225, 0
        %4232 = vmatpush.bf16.xpose.msra.mxu0 0
        %4233 = vmatpush.bf16.xpose.msra.mxu0 0
        %4234 = vmatpush.bf16.xpose.msra.mxu0 0
        %4235 = vmatpush.bf16.xpose.msra.mxu0 0
        %4236 = vmatpush.bf16.xpose.msra.mxu0 0
        %4237 = vmatpush.bf16.xpose.msra.mxu0 0
        %4238 = vmatpush.bf16.xpose.msra.mxu0 0
        %4239 = vmatpush.bf16.xpose.msra.mxu0 %v4230
        %4240 = vmatmul.bf16.gmra.mxu0 %v4227
        %v4241 = vpop.f32.mrf.mxu0
        %v4242 = vadd.f32 0.0, %v4241
        %v4243 = vpop.f32.mrf.mxu0
        %4244 = vdwg.mxu0
        %4245 = vrot.lane.b32.xlu0 %v652, 72
        %v4246 = vpop.permute.xlu0 %4245
        %4247 = vrot.lane.b32.xlu0 %v652, 40
        %v4248 = vpop.permute.xlu0 %4247
        %v4250 = vsel %vm604, %v4246, 0
        %v4253 = vsel %vm604, %v4248, 0
        %4255 = vmatpush.bf16.xpose.msra.mxu0 0
        %4256 = vmatpush.bf16.xpose.msra.mxu0 0
        %4257 = vmatpush.bf16.xpose.msra.mxu0 0
        %4258 = vmatpush.bf16.xpose.msra.mxu0 0
        %4259 = vmatpush.bf16.xpose.msra.mxu0 0
        %4260 = vmatpush.bf16.xpose.msra.mxu0 0
        %4261 = vmatpush.bf16.xpose.msra.mxu0 0
        %4262 = vmatpush.bf16.xpose.msra.mxu0 %v4253
        %4263 = vmatmul.bf16.gmra.mxu0 %v4250
        %v4264 = vpop.f32.mrf.mxu0
        %v4265 = vadd.f32 0.0, %v4264
        %v4266 = vpop.f32.mrf.mxu0
        %4267 = vdwg.mxu0
        %4268 = vrot.lane.b32.xlu0 %v678, 72
        %v4269 = vpop.permute.xlu0 %4268
        %4270 = vrot.lane.b32.xlu0 %v678, 40
        %v4271 = vpop.permute.xlu0 %4270
        %v4273 = vsel %vm604, %v4269, 0
        %v4276 = vsel %vm604, %v4271, 0
        %4278 = vmatpush.bf16.xpose.msra.mxu0 0
        %4279 = vmatpush.bf16.xpose.msra.mxu0 0
        %4280 = vmatpush.bf16.xpose.msra.mxu0 0
        %4281 = vmatpush.bf16.xpose.msra.mxu0 0
        %4282 = vmatpush.bf16.xpose.msra.mxu0 0
        %4283 = vmatpush.bf16.xpose.msra.mxu0 0
        %4284 = vmatpush.bf16.xpose.msra.mxu0 0
        %4285 = vmatpush.bf16.xpose.msra.mxu0 %v4276
        %4286 = vmatmul.bf16.gmra.mxu0 %v4273
        %v4287 = vpop.f32.mrf.mxu0
        %v4288 = vadd.f32 0.0, %v4287
        %v4289 = vpop.f32.mrf.mxu0
        %4290 = vdwg.mxu0
        %4291 = vrot.lane.b32.xlu0 %v704, 72
        %v4292 = vpop.permute.xlu0 %4291
        %4293 = vrot.lane.b32.xlu0 %v704, 40
        %v4294 = vpop.permute.xlu0 %4293
        %v4296 = vsel %vm604, %v4292, 0
        %v4299 = vsel %vm604, %v4294, 0
        %4301 = vmatpush.bf16.xpose.msra.mxu0 0
        %4302 = vmatpush.bf16.xpose.msra.mxu0 0
        %4303 = vmatpush.bf16.xpose.msra.mxu0 0
        %4304 = vmatpush.bf16.xpose.msra.mxu0 0
        %4305 = vmatpush.bf16.xpose.msra.mxu0 0
        %4306 = vmatpush.bf16.xpose.msra.mxu0 0
        %4307 = vmatpush.bf16.xpose.msra.mxu0 0
        %4308 = vmatpush.bf16.xpose.msra.mxu0 %v4299
        %4309 = vmatmul.bf16.gmra.mxu0 %v4296
        %v4310 = vpop.f32.mrf.mxu0
        %v4311 = vadd.f32 0.0, %v4310
        %v4312 = vpop.f32.mrf.mxu0
        %4313 = vdwg.mxu0
        %4314 = vrot.lane.b32.xlu0 %v730, 72
        %v4315 = vpop.permute.xlu0 %4314
        %4316 = vrot.lane.b32.xlu0 %v730, 40
        %v4317 = vpop.permute.xlu0 %4316
        %v4319 = vsel %vm604, %v4315, 0
        %v4322 = vsel %vm604, %v4317, 0
        %4324 = vmatpush.bf16.xpose.msra.mxu0 0
        %4325 = vmatpush.bf16.xpose.msra.mxu0 0
        %4326 = vmatpush.bf16.xpose.msra.mxu0 0
        %4327 = vmatpush.bf16.xpose.msra.mxu0 0
        %4328 = vmatpush.bf16.xpose.msra.mxu0 0
        %4329 = vmatpush.bf16.xpose.msra.mxu0 0
        %4330 = vmatpush.bf16.xpose.msra.mxu0 0
        %4331 = vmatpush.bf16.xpose.msra.mxu0 %v4322
        %4332 = vmatmul.bf16.gmra.mxu0 %v4319
        %v4333 = vpop.f32.mrf.mxu0
        %v4334 = vadd.f32 0.0, %v4333
        %v4335 = vpop.f32.mrf.mxu0
        %4336 = vdwg.mxu0
        %4337 = vrot.lane.b32.xlu0 %v756, 72
        %v4338 = vpop.permute.xlu0 %4337
        %4339 = vrot.lane.b32.xlu0 %v756, 40
        %v4340 = vpop.permute.xlu0 %4339
        %v4342 = vsel %vm604, %v4338, 0
        %v4345 = vsel %vm604, %v4340, 0
        %4347 = vmatpush.bf16.xpose.msra.mxu0 0
        %4348 = vmatpush.bf16.xpose.msra.mxu0 0
        %4349 = vmatpush.bf16.xpose.msra.mxu0 0
        %4350 = vmatpush.bf16.xpose.msra.mxu0 0
        %4351 = vmatpush.bf16.xpose.msra.mxu0 0
        %4352 = vmatpush.bf16.xpose.msra.mxu0 0
        %4353 = vmatpush.bf16.xpose.msra.mxu0 0
        %4354 = vmatpush.bf16.xpose.msra.mxu0 %v4345
        %4355 = vmatmul.bf16.gmra.mxu0 %v4342
        %v4356 = vpop.f32.mrf.mxu0
        %v4357 = vadd.f32 0.0, %v4356
        %v4358 = vpop.f32.mrf.mxu0
        %4359 = vdwg.mxu0
        %4360 = vrot.lane.b32.xlu0 %v782, 72
        %v4361 = vpop.permute.xlu0 %4360
        %4362 = vrot.lane.b32.xlu0 %v782, 40
        %v4363 = vpop.permute.xlu0 %4362
        %v4365 = vsel %vm604, %v4361, 0
        %v4368 = vsel %vm604, %v4363, 0
        %4370 = vmatpush.bf16.xpose.msra.mxu0 0
        %4371 = vmatpush.bf16.xpose.msra.mxu0 0
        %4372 = vmatpush.bf16.xpose.msra.mxu0 0
        %4373 = vmatpush.bf16.xpose.msra.mxu0 0
        %4374 = vmatpush.bf16.xpose.msra.mxu0 0
        %4375 = vmatpush.bf16.xpose.msra.mxu0 0
        %4376 = vmatpush.bf16.xpose.msra.mxu0 0
        %4377 = vmatpush.bf16.xpose.msra.mxu0 %v4368
        %4378 = vmatmul.bf16.gmra.mxu0 %v4365
        %v4379 = vpop.f32.mrf.mxu0
        %v4380 = vadd.f32 0.0, %v4379
        %v4381 = vpop.f32.mrf.mxu0
        %4382 = vdwg.mxu0
        %4383 = vrot.lane.b32.xlu0 %v808, 72
        %v4384 = vpop.permute.xlu0 %4383
        %4385 = vrot.lane.b32.xlu0 %v808, 40
        %v4386 = vpop.permute.xlu0 %4385
        %v4388 = vsel %vm604, %v4384, 0
        %v4391 = vsel %vm604, %v4386, 0
        %4393 = vmatpush.bf16.xpose.msra.mxu0 0
        %4394 = vmatpush.bf16.xpose.msra.mxu0 0
        %4395 = vmatpush.bf16.xpose.msra.mxu0 0
        %4396 = vmatpush.bf16.xpose.msra.mxu0 0
        %4397 = vmatpush.bf16.xpose.msra.mxu0 0
        %4398 = vmatpush.bf16.xpose.msra.mxu0 0
        %4399 = vmatpush.bf16.xpose.msra.mxu0 0
        %4400 = vmatpush.bf16.xpose.msra.mxu0 %v4391
        %4401 = vmatmul.bf16.gmra.mxu0 %v4388
        %v4402 = vpop.f32.mrf.mxu0
        %v4403 = vadd.f32 0.0, %v4402
        %v4404 = vpop.f32.mrf.mxu0
        %4405 = vdwg.mxu0
        %4406 = vrot.lane.b32.xlu0 %v834, 72
        %v4407 = vpop.permute.xlu0 %4406
        %4408 = vrot.lane.b32.xlu0 %v834, 40
        %v4409 = vpop.permute.xlu0 %4408
        %v4411 = vsel %vm604, %v4407, 0
        %v4414 = vsel %vm604, %v4409, 0
        %4416 = vmatpush.bf16.xpose.msra.mxu0 0
        %4417 = vmatpush.bf16.xpose.msra.mxu0 0
        %4418 = vmatpush.bf16.xpose.msra.mxu0 0
        %4419 = vmatpush.bf16.xpose.msra.mxu0 0
        %4420 = vmatpush.bf16.xpose.msra.mxu0 0
        %4421 = vmatpush.bf16.xpose.msra.mxu0 0
        %4422 = vmatpush.bf16.xpose.msra.mxu0 0
        %4423 = vmatpush.bf16.xpose.msra.mxu0 %v4414
        %4424 = vmatmul.bf16.gmra.mxu0 %v4411
        %v4425 = vpop.f32.mrf.mxu0
        %v4426 = vadd.f32 0.0, %v4425
        %v4427 = vpop.f32.mrf.mxu0
        %4428 = vdwg.mxu0
        %4429 = vrot.lane.b32.xlu0 %v860, 72
        %v4430 = vpop.permute.xlu0 %4429
        %4431 = vrot.lane.b32.xlu0 %v860, 40
        %v4432 = vpop.permute.xlu0 %4431
        %v4434 = vsel %vm604, %v4430, 0
        %v4437 = vsel %vm604, %v4432, 0
        %4439 = vmatpush.bf16.xpose.msra.mxu0 0
        %4440 = vmatpush.bf16.xpose.msra.mxu0 0
        %4441 = vmatpush.bf16.xpose.msra.mxu0 0
        %4442 = vmatpush.bf16.xpose.msra.mxu0 0
        %4443 = vmatpush.bf16.xpose.msra.mxu0 0
        %4444 = vmatpush.bf16.xpose.msra.mxu0 0
        %4445 = vmatpush.bf16.xpose.msra.mxu0 0
        %4446 = vmatpush.bf16.xpose.msra.mxu0 %v4437
        %4447 = vmatmul.bf16.gmra.mxu0 %v4434
        %v4448 = vpop.f32.mrf.mxu0
        %v4449 = vadd.f32 0.0, %v4448
        %v4450 = vpop.f32.mrf.mxu0
        %4451 = vdwg.mxu0
        %4452 = vrot.lane.b32.xlu0 %v886, 72
        %v4453 = vpop.permute.xlu0 %4452
        %4454 = vrot.lane.b32.xlu0 %v886, 40
        %v4455 = vpop.permute.xlu0 %4454
        %v4457 = vsel %vm604, %v4453, 0
        %v4460 = vsel %vm604, %v4455, 0
        %4462 = vmatpush.bf16.xpose.msra.mxu0 0
        %4463 = vmatpush.bf16.xpose.msra.mxu0 0
        %4464 = vmatpush.bf16.xpose.msra.mxu0 0
        %4465 = vmatpush.bf16.xpose.msra.mxu0 0
        %4466 = vmatpush.bf16.xpose.msra.mxu0 0
        %4467 = vmatpush.bf16.xpose.msra.mxu0 0
        %4468 = vmatpush.bf16.xpose.msra.mxu0 0
        %4469 = vmatpush.bf16.xpose.msra.mxu0 %v4460
        %4470 = vmatmul.bf16.gmra.mxu0 %v4457
        %v4471 = vpop.f32.mrf.mxu0
        %v4472 = vadd.f32 0.0, %v4471
        %v4473 = vpop.f32.mrf.mxu0
        %4474 = vdwg.mxu0
        %4475 = vrot.lane.b32.xlu0 %v912, 72
        %v4476 = vpop.permute.xlu0 %4475
        %4477 = vrot.lane.b32.xlu0 %v912, 40
        %v4478 = vpop.permute.xlu0 %4477
        %v4480 = vsel %vm604, %v4476, 0
        %v4483 = vsel %vm604, %v4478, 0
        %4485 = vmatpush.bf16.xpose.msra.mxu0 0
        %4486 = vmatpush.bf16.xpose.msra.mxu0 0
        %4487 = vmatpush.bf16.xpose.msra.mxu0 0
        %4488 = vmatpush.bf16.xpose.msra.mxu0 0
        %4489 = vmatpush.bf16.xpose.msra.mxu0 0
        %4490 = vmatpush.bf16.xpose.msra.mxu0 0
        %4491 = vmatpush.bf16.xpose.msra.mxu0 0
        %4492 = vmatpush.bf16.xpose.msra.mxu0 %v4483
        %4493 = vmatmul.bf16.gmra.mxu0 %v4480
        %v4494 = vpop.f32.mrf.mxu0
        %v4495 = vadd.f32 0.0, %v4494
        %v4496 = vpop.f32.mrf.mxu0
        %4497 = vdwg.mxu0
        %4498 = vrot.lane.b32.xlu0 %v938, 72
        %v4499 = vpop.permute.xlu0 %4498
        %4500 = vrot.lane.b32.xlu0 %v938, 40
        %v4501 = vpop.permute.xlu0 %4500
        %v4503 = vsel %vm604, %v4499, 0
        %v4506 = vsel %vm604, %v4501, 0
        %4508 = vmatpush.bf16.xpose.msra.mxu0 0
        %4509 = vmatpush.bf16.xpose.msra.mxu0 0
        %4510 = vmatpush.bf16.xpose.msra.mxu0 0
        %4511 = vmatpush.bf16.xpose.msra.mxu0 0
        %4512 = vmatpush.bf16.xpose.msra.mxu0 0
        %4513 = vmatpush.bf16.xpose.msra.mxu0 0
        %4514 = vmatpush.bf16.xpose.msra.mxu0 0
        %4515 = vmatpush.bf16.xpose.msra.mxu0 %v4506
        %4516 = vmatmul.bf16.gmra.mxu0 %v4503
        %v4517 = vpop.f32.mrf.mxu0
        %v4518 = vadd.f32 0.0, %v4517
        %v4519 = vpop.f32.mrf.mxu0
        %4520 = vdwg.mxu0
        %4521 = vrot.lane.b32.xlu0 %v964, 72
        %v4522 = vpop.permute.xlu0 %4521
        %4523 = vrot.lane.b32.xlu0 %v964, 40
        %v4524 = vpop.permute.xlu0 %4523
        %v4526 = vsel %vm604, %v4522, 0
        %v4529 = vsel %vm604, %v4524, 0
        %4531 = vmatpush.bf16.xpose.msra.mxu0 0
        %4532 = vmatpush.bf16.xpose.msra.mxu0 0
        %4533 = vmatpush.bf16.xpose.msra.mxu0 0
        %4534 = vmatpush.bf16.xpose.msra.mxu0 0
        %4535 = vmatpush.bf16.xpose.msra.mxu0 0
        %4536 = vmatpush.bf16.xpose.msra.mxu0 0
        %4537 = vmatpush.bf16.xpose.msra.mxu0 0
        %4538 = vmatpush.bf16.xpose.msra.mxu0 %v4529
        %4539 = vmatmul.bf16.gmra.mxu0 %v4526
        %v4540 = vpop.f32.mrf.mxu0
        %v4541 = vadd.f32 0.0, %v4540
        %v4542 = vpop.f32.mrf.mxu0
        %4543 = vdwg.mxu0
        %4544 = vrot.lane.b32.xlu0 %v990, 72
        %v4545 = vpop.permute.xlu0 %4544
        %4546 = vrot.lane.b32.xlu0 %v990, 40
        %v4547 = vpop.permute.xlu0 %4546
        %v4549 = vsel %vm604, %v4545, 0
        %v4552 = vsel %vm604, %v4547, 0
        %4554 = vmatpush.bf16.xpose.msra.mxu0 0
        %4555 = vmatpush.bf16.xpose.msra.mxu0 0
        %4556 = vmatpush.bf16.xpose.msra.mxu0 0
        %4557 = vmatpush.bf16.xpose.msra.mxu0 0
        %4558 = vmatpush.bf16.xpose.msra.mxu0 0
        %4559 = vmatpush.bf16.xpose.msra.mxu0 0
        %4560 = vmatpush.bf16.xpose.msra.mxu0 0
        %4561 = vmatpush.bf16.xpose.msra.mxu0 %v4552
        %4562 = vmatmul.bf16.gmra.mxu0 %v4549
        %v4563 = vpop.f32.mrf.mxu0
        %v4564 = vadd.f32 0.0, %v4563
        %v4565 = vpop.f32.mrf.mxu0
        %4566 = vdwg.mxu0
        %4567 = vrot.lane.b32.xlu0 %v1016, 72
        %v4568 = vpop.permute.xlu0 %4567
        %4569 = vrot.lane.b32.xlu0 %v1016, 40
        %v4570 = vpop.permute.xlu0 %4569
        %v4572 = vsel %vm604, %v4568, 0
        %v4575 = vsel %vm604, %v4570, 0
        %4577 = vmatpush.bf16.xpose.msra.mxu0 0
        %4578 = vmatpush.bf16.xpose.msra.mxu0 0
        %4579 = vmatpush.bf16.xpose.msra.mxu0 0
        %4580 = vmatpush.bf16.xpose.msra.mxu0 0
        %4581 = vmatpush.bf16.xpose.msra.mxu0 0
        %4582 = vmatpush.bf16.xpose.msra.mxu0 0
        %4583 = vmatpush.bf16.xpose.msra.mxu0 0
        %4584 = vmatpush.bf16.xpose.msra.mxu0 %v4575
        %4585 = vmatmul.bf16.gmra.mxu0 %v4572
        %v4586 = vpop.f32.mrf.mxu0
        %v4587 = vadd.f32 0.0, %v4586
        %v4588 = vpop.f32.mrf.mxu0
        %4589 = vdwg.mxu0
        %4590 = vrot.lane.b32.xlu0 %v1042, 72
        %v4591 = vpop.permute.xlu0 %4590
        %4592 = vrot.lane.b32.xlu0 %v1042, 40
        %v4593 = vpop.permute.xlu0 %4592
        %v4595 = vsel %vm604, %v4591, 0
        %v4598 = vsel %vm604, %v4593, 0
        %4600 = vmatpush.bf16.xpose.msra.mxu0 0
        %4601 = vmatpush.bf16.xpose.msra.mxu0 0
        %4602 = vmatpush.bf16.xpose.msra.mxu0 0
        %4603 = vmatpush.bf16.xpose.msra.mxu0 0
        %4604 = vmatpush.bf16.xpose.msra.mxu0 0
        %4605 = vmatpush.bf16.xpose.msra.mxu0 0
        %4606 = vmatpush.bf16.xpose.msra.mxu0 0
        %4607 = vmatpush.bf16.xpose.msra.mxu0 %v4598
        %4608 = vmatmul.bf16.gmra.mxu0 %v4595
        %v4609 = vpop.f32.mrf.mxu0
        %v4610 = vadd.f32 0.0, %v4609
        %v4611 = vpop.f32.mrf.mxu0
        %4612 = vdwg.mxu0
        %4613 = vrot.lane.b32.xlu0 %v1068, 72
        %v4614 = vpop.permute.xlu0 %4613
        %4615 = vrot.lane.b32.xlu0 %v1068, 40
        %v4616 = vpop.permute.xlu0 %4615
        %v4618 = vsel %vm604, %v4614, 0
        %v4621 = vsel %vm604, %v4616, 0
        %4623 = vmatpush.bf16.xpose.msra.mxu0 0
        %4624 = vmatpush.bf16.xpose.msra.mxu0 0
        %4625 = vmatpush.bf16.xpose.msra.mxu0 0
        %4626 = vmatpush.bf16.xpose.msra.mxu0 0
        %4627 = vmatpush.bf16.xpose.msra.mxu0 0
        %4628 = vmatpush.bf16.xpose.msra.mxu0 0
        %4629 = vmatpush.bf16.xpose.msra.mxu0 0
        %4630 = vmatpush.bf16.xpose.msra.mxu0 %v4621
        %4631 = vmatmul.bf16.gmra.mxu0 %v4618
        %v4632 = vpop.f32.mrf.mxu0
        %v4633 = vadd.f32 0.0, %v4632
        %v4634 = vpop.f32.mrf.mxu0
        %4635 = vdwg.mxu0
        %4636 = vrot.lane.b32.xlu0 %v1094, 72
        %v4637 = vpop.permute.xlu0 %4636
        %4638 = vrot.lane.b32.xlu0 %v1094, 40
        %v4639 = vpop.permute.xlu0 %4638
        %v4641 = vsel %vm604, %v4637, 0
        %v4644 = vsel %vm604, %v4639, 0
        %4646 = vmatpush.bf16.xpose.msra.mxu0 0
        %4647 = vmatpush.bf16.xpose.msra.mxu0 0
        %4648 = vmatpush.bf16.xpose.msra.mxu0 0
        %4649 = vmatpush.bf16.xpose.msra.mxu0 0
        %4650 = vmatpush.bf16.xpose.msra.mxu0 0
        %4651 = vmatpush.bf16.xpose.msra.mxu0 0
        %4652 = vmatpush.bf16.xpose.msra.mxu0 0
        %4653 = vmatpush.bf16.xpose.msra.mxu0 %v4644
        %4654 = vmatmul.bf16.gmra.mxu0 %v4641
        %v4655 = vpop.f32.mrf.mxu0
        %v4656 = vadd.f32 0.0, %v4655
        %v4657 = vpop.f32.mrf.mxu0
        %4658 = vdwg.mxu0
        %v4659 = vmul.f32 %v4219, 0.35355338
        %v4660 = vmul.f32 %v4242, 0.35355338
        %v4661 = vmul.f32 %v4265, 0.35355338
        %v4662 = vmul.f32 %v4288, 0.35355338
        %v4663 = vmul.f32 %v4311, 0.35355338
        %v4664 = vmul.f32 %v4334, 0.35355338
        %v4665 = vmul.f32 %v4357, 0.35355338
        %v4666 = vmul.f32 %v4380, 0.35355338
        %v4667 = vmul.f32 %v4403, 0.35355338
        %v4668 = vmul.f32 %v4426, 0.35355338
        %v4669 = vmul.f32 %v4449, 0.35355338
        %v4670 = vmul.f32 %v4472, 0.35355338
        %v4671 = vmul.f32 %v4495, 0.35355338
        %v4672 = vmul.f32 %v4518, 0.35355338
        %v4673 = vmul.f32 %v4541, 0.35355338
        %v4674 = vmul.f32 %v4564, 0.35355338
        %v4675 = vmul.f32 %v4587, 0.35355338
        %v4676 = vmul.f32 %v4610, 0.35355338
        %v4677 = vmul.f32 %v4633, 0.35355338
        %v4678 = vmul.f32 %v4656, 0.35355338
        %v4679 = vadd.f32 %v4659, %v367
        %v4680 = vadd.f32 %v4660, %v367
        %v4681 = vadd.f32 %v4661, %v367
        %v4682 = vadd.f32 %v4662, %v367
        %v4683 = vadd.f32 %v4663, %v367
        %v4684 = vadd.f32 %v4664, %v367
        %v4685 = vadd.f32 %v4665, %v367
        %v4686 = vadd.f32 %v4666, %v367
        %v4687 = vadd.f32 %v4667, %v367
        %v4688 = vadd.f32 %v4668, %v367
        %v4689 = vadd.f32 %v4669, %v367
        %v4690 = vadd.f32 %v4670, %v367
        %v4691 = vadd.f32 %v4671, %v367
        %v4692 = vadd.f32 %v4672, %v367
        %v4693 = vadd.f32 %v4673, %v367
        %v4694 = vadd.f32 %v4674, %v367
        %v4695 = vadd.f32 %v4675, %v367
        %v4696 = vadd.f32 %v4676, %v367
        %v4697 = vadd.f32 %v4677, %v367
        %v4698 = vadd.f32 %v4678, %v367
        %v4699 = vsel %vm604, %v4679, -inf
        %4700 = vmax.xlane.f32.xlu0 %v4699
        %v4701 = vpop.xlane.xlu0 %4700
        %v4702 = vsel %vm604, %v4680, -inf
        %4703 = vmax.xlane.f32.xlu0 %v4702
        %v4704 = vpop.xlane.xlu0 %4703
        %v4705 = vsel %vm604, %v4681, -inf
        %4706 = vmax.xlane.f32.xlu0 %v4705
        %v4707 = vpop.xlane.xlu0 %4706
        %v4708 = vsel %vm604, %v4682, -inf
        %4709 = vmax.xlane.f32.xlu0 %v4708
        %v4710 = vpop.xlane.xlu0 %4709
        %v4711 = vsel %vm604, %v4683, -inf
        %4712 = vmax.xlane.f32.xlu0 %v4711
        %v4713 = vpop.xlane.xlu0 %4712
        %v4714 = vsel %vm604, %v4684, -inf
        %4715 = vmax.xlane.f32.xlu0 %v4714
        %v4716 = vpop.xlane.xlu0 %4715
        %v4717 = vsel %vm604, %v4685, -inf
        %4718 = vmax.xlane.f32.xlu0 %v4717
        %v4719 = vpop.xlane.xlu0 %4718
        %v4720 = vsel %vm604, %v4686, -inf
        %4721 = vmax.xlane.f32.xlu0 %v4720
        %v4722 = vpop.xlane.xlu0 %4721
        %v4723 = vsel %vm604, %v4687, -inf
        %4724 = vmax.xlane.f32.xlu0 %v4723
        %v4725 = vpop.xlane.xlu0 %4724
        %v4726 = vsel %vm604, %v4688, -inf
        %4727 = vmax.xlane.f32.xlu0 %v4726
        %v4728 = vpop.xlane.xlu0 %4727
        %v4729 = vsel %vm604, %v4689, -inf
        %4730 = vmax.xlane.f32.xlu0 %v4729
        %v4731 = vpop.xlane.xlu0 %4730
        %v4732 = vsel %vm604, %v4690, -inf
        %4733 = vmax.xlane.f32.xlu0 %v4732
        %v4734 = vpop.xlane.xlu0 %4733
        %v4735 = vsel %vm604, %v4691, -inf
        %4736 = vmax.xlane.f32.xlu0 %v4735
        %v4737 = vpop.xlane.xlu0 %4736
        %v4738 = vsel %vm604, %v4692, -inf
        %4739 = vmax.xlane.f32.xlu0 %v4738
        %v4740 = vpop.xlane.xlu0 %4739
        %v4741 = vsel %vm604, %v4693, -inf
        %4742 = vmax.xlane.f32.xlu0 %v4741
        %v4743 = vpop.xlane.xlu0 %4742
        %v4744 = vsel %vm604, %v4694, -inf
        %4745 = vmax.xlane.f32.xlu0 %v4744
        %v4746 = vpop.xlane.xlu0 %4745
        %v4747 = vsel %vm604, %v4695, -inf
        %4748 = vmax.xlane.f32.xlu0 %v4747
        %v4749 = vpop.xlane.xlu0 %4748
        %v4750 = vsel %vm604, %v4696, -inf
        %4751 = vmax.xlane.f32.xlu0 %v4750
        %v4752 = vpop.xlane.xlu0 %4751
        %v4753 = vsel %vm604, %v4697, -inf
        %4754 = vmax.xlane.f32.xlu0 %v4753
        %v4755 = vpop.xlane.xlu0 %4754
        %v4756 = vsel %vm604, %v4698, -inf
        %4757 = vmax.xlane.f32.xlu0 %v4756
        %v4758 = vpop.xlane.xlu0 %4757
        %v4759 = vsub.f32 %v4679, %v4701
        %v4760 = vsub.f32 %v4680, %v4704
        %v4761 = vsub.f32 %v4681, %v4707
        %v4762 = vsub.f32 %v4682, %v4710
        %v4763 = vsub.f32 %v4683, %v4713
        %v4764 = vsub.f32 %v4684, %v4716
        %v4765 = vsub.f32 %v4685, %v4719
        %v4766 = vsub.f32 %v4686, %v4722
        %v4767 = vsub.f32 %v4687, %v4725
        %v4768 = vsub.f32 %v4688, %v4728
        %v4769 = vsub.f32 %v4689, %v4731
        %v4770 = vsub.f32 %v4690, %v4734
        %v4771 = vsub.f32 %v4691, %v4737
        %v4772 = vsub.f32 %v4692, %v4740
        %v4773 = vsub.f32 %v4693, %v4743
        %v4774 = vsub.f32 %v4694, %v4746
        %v4775 = vsub.f32 %v4695, %v4749
        %v4776 = vsub.f32 %v4696, %v4752
        %v4777 = vsub.f32 %v4697, %v4755
        %v4778 = vsub.f32 %v4698, %v4758
        %v4779 = vmul.f32 %v4759, 1.442695
        %v4780 = vpow.pop %v4779
        %v4781 = vmul.f32 %v4760, 1.442695
        %v4782 = vpow.pop %v4781
        %v4783 = vmul.f32 %v4761, 1.442695
        %v4784 = vpow.pop %v4783
        %v4785 = vmul.f32 %v4762, 1.442695
        %v4786 = vpow.pop %v4785
        %v4787 = vmul.f32 %v4763, 1.442695
        %v4788 = vpow.pop %v4787
        %v4789 = vmul.f32 %v4764, 1.442695
        %v4790 = vpow.pop %v4789
        %v4791 = vmul.f32 %v4765, 1.442695
        %v4792 = vpow.pop %v4791
        %v4793 = vmul.f32 %v4766, 1.442695
        %v4794 = vpow.pop %v4793
        %v4795 = vmul.f32 %v4767, 1.442695
        %v4796 = vpow.pop %v4795
        %v4797 = vmul.f32 %v4768, 1.442695
        %v4798 = vpow.pop %v4797
        %v4799 = vmul.f32 %v4769, 1.442695
        %v4800 = vpow.pop %v4799
        %v4801 = vmul.f32 %v4770, 1.442695
        %v4802 = vpow.pop %v4801
        %v4803 = vmul.f32 %v4771, 1.442695
        %v4804 = vpow.pop %v4803
        %v4805 = vmul.f32 %v4772, 1.442695
        %v4806 = vpow.pop %v4805
        %v4807 = vmul.f32 %v4773, 1.442695
        %v4808 = vpow.pop %v4807
        %v4809 = vmul.f32 %v4774, 1.442695
        %v4810 = vpow.pop %v4809
        %v4811 = vmul.f32 %v4775, 1.442695
        %v4812 = vpow.pop %v4811
        %v4813 = vmul.f32 %v4776, 1.442695
        %v4814 = vpow.pop %v4813
        %v4815 = vmul.f32 %v4777, 1.442695
        %v4816 = vpow.pop %v4815
        %v4817 = vmul.f32 %v4778, 1.442695
        %v4818 = vpow.pop %v4817
        %v4819 = vsel %vm604, %v4780, 0.0
        %4820 = vadd.xlane.f32.xlu0 %v4819
        %v4821 = vpop.xlane.xlu0 %4820
        %v4822 = vsel %vm604, %v4782, 0.0
        %4823 = vadd.xlane.f32.xlu0 %v4822
        %v4824 = vpop.xlane.xlu0 %4823
        %v4825 = vsel %vm604, %v4784, 0.0
        %4826 = vadd.xlane.f32.xlu0 %v4825
        %v4827 = vpop.xlane.xlu0 %4826
        %v4828 = vsel %vm604, %v4786, 0.0
        %4829 = vadd.xlane.f32.xlu0 %v4828
        %v4830 = vpop.xlane.xlu0 %4829
        %v4831 = vsel %vm604, %v4788, 0.0
        %4832 = vadd.xlane.f32.xlu0 %v4831
        %v4833 = vpop.xlane.xlu0 %4832
        %v4834 = vsel %vm604, %v4790, 0.0
        %4835 = vadd.xlane.f32.xlu0 %v4834
        %v4836 = vpop.xlane.xlu0 %4835
        %v4837 = vsel %vm604, %v4792, 0.0
        %4838 = vadd.xlane.f32.xlu0 %v4837
        %v4839 = vpop.xlane.xlu0 %4838
        %v4840 = vsel %vm604, %v4794, 0.0
        %4841 = vadd.xlane.f32.xlu0 %v4840
        %v4842 = vpop.xlane.xlu0 %4841
        %v4843 = vsel %vm604, %v4796, 0.0
        %4844 = vadd.xlane.f32.xlu0 %v4843
        %v4845 = vpop.xlane.xlu0 %4844
        %v4846 = vsel %vm604, %v4798, 0.0
        %4847 = vadd.xlane.f32.xlu0 %v4846
        %v4848 = vpop.xlane.xlu0 %4847
        %v4849 = vsel %vm604, %v4800, 0.0
        %4850 = vadd.xlane.f32.xlu0 %v4849
        %v4851 = vpop.xlane.xlu0 %4850
        %v4852 = vsel %vm604, %v4802, 0.0
        %4853 = vadd.xlane.f32.xlu0 %v4852
        %v4854 = vpop.xlane.xlu0 %4853
        %v4855 = vsel %vm604, %v4804, 0.0
        %4856 = vadd.xlane.f32.xlu0 %v4855
        %v4857 = vpop.xlane.xlu0 %4856
        %v4858 = vsel %vm604, %v4806, 0.0
        %4859 = vadd.xlane.f32.xlu0 %v4858
        %v4860 = vpop.xlane.xlu0 %4859
        %v4861 = vsel %vm604, %v4808, 0.0
        %4862 = vadd.xlane.f32.xlu0 %v4861
        %v4863 = vpop.xlane.xlu0 %4862
        %v4864 = vsel %vm604, %v4810, 0.0
        %4865 = vadd.xlane.f32.xlu0 %v4864
        %v4866 = vpop.xlane.xlu0 %4865
        %v4867 = vsel %vm604, %v4812, 0.0
        %4868 = vadd.xlane.f32.xlu0 %v4867
        %v4869 = vpop.xlane.xlu0 %4868
        %v4870 = vsel %vm604, %v4814, 0.0
        %4871 = vadd.xlane.f32.xlu0 %v4870
        %v4872 = vpop.xlane.xlu0 %4871
        %v4873 = vsel %vm604, %v4816, 0.0
        %4874 = vadd.xlane.f32.xlu0 %v4873
        %v4875 = vpop.xlane.xlu0 %4874
        %v4876 = vsel %vm604, %v4818, 0.0
        %4877 = vadd.xlane.f32.xlu0 %v4876
        %v4878 = vpop.xlane.xlu0 %4877
        %v4879 = vrcp.pop %v4821
        %v4880 = vrcp.pop %v4824
        %v4881 = vrcp.pop %v4827
        %v4882 = vrcp.pop %v4830
        %v4883 = vrcp.pop %v4833
        %v4884 = vrcp.pop %v4836
        %v4885 = vrcp.pop %v4839
        %v4886 = vrcp.pop %v4842
        %v4887 = vrcp.pop %v4845
        %v4888 = vrcp.pop %v4848
        %v4889 = vrcp.pop %v4851
        %v4890 = vrcp.pop %v4854
        %v4891 = vrcp.pop %v4857
        %v4892 = vrcp.pop %v4860
        %v4893 = vrcp.pop %v4863
        %v4894 = vrcp.pop %v4866
        %v4895 = vrcp.pop %v4869
        %v4896 = vrcp.pop %v4872
        %v4897 = vrcp.pop %v4875
        %v4898 = vrcp.pop %v4878
        %v4899 = vmul.f32 %v4780, %v4879
        %v4900 = vmul.f32 %v4782, %v4880
        %v4901 = vmul.f32 %v4784, %v4881
        %v4902 = vmul.f32 %v4786, %v4882
        %v4903 = vmul.f32 %v4788, %v4883
        %v4904 = vmul.f32 %v4790, %v4884
        %v4905 = vmul.f32 %v4792, %v4885
        %v4906 = vmul.f32 %v4794, %v4886
        %v4907 = vmul.f32 %v4796, %v4887
        %v4908 = vmul.f32 %v4798, %v4888
        %v4909 = vmul.f32 %v4800, %v4889
        %v4910 = vmul.f32 %v4802, %v4890
        %v4911 = vmul.f32 %v4804, %v4891
        %v4912 = vmul.f32 %v4806, %v4892
        %v4913 = vmul.f32 %v4808, %v4893
        %v4914 = vmul.f32 %v4810, %v4894
        %v4915 = vmul.f32 %v4812, %v4895
        %v4916 = vmul.f32 %v4814, %v4896
        %v4917 = vmul.f32 %v4816, %v4897
        %v4918 = vmul.f32 %v4818, %v4898
        %v4919 = vpack.c.bf16 %v4899, %v4899
        %v4920 = vpack.c.bf16 %v4900, %v4900
        %v4921 = vpack.c.bf16 %v4901, %v4901
        %v4922 = vpack.c.bf16 %v4902, %v4902
        %v4923 = vpack.c.bf16 %v4903, %v4903
        %v4924 = vpack.c.bf16 %v4904, %v4904
        %v4925 = vpack.c.bf16 %v4905, %v4905
        %v4926 = vpack.c.bf16 %v4906, %v4906
        %v4927 = vpack.c.bf16 %v4907, %v4907
        %v4928 = vpack.c.bf16 %v4908, %v4908
        %v4929 = vpack.c.bf16 %v4909, %v4909
        %v4930 = vpack.c.bf16 %v4910, %v4910
        %v4931 = vpack.c.bf16 %v4911, %v4911
        %v4932 = vpack.c.bf16 %v4912, %v4912
        %v4933 = vpack.c.bf16 %v4913, %v4913
        %v4934 = vpack.c.bf16 %v4914, %v4914
        %v4935 = vpack.c.bf16 %v4915, %v4915
        %v4936 = vpack.c.bf16 %v4916, %v4916
        %v4937 = vpack.c.bf16 %v4917, %v4917
        %v4938 = vpack.c.bf16 %v4918, %v4918
        %4939 = vrot.lane.b32.xlu0 %v3701, 64
        %v4940 = vpop.permute.xlu0 %4939
        %v4942 = vsel %vm604, %v4919, 0
        %v4945 = vsel %vm2161, %v4940, 0
        %4947 = vmatpush.bf16.msra.mxu0 0
        %4948 = vmatpush.bf16.msra.mxu0 0
        %4949 = vmatpush.bf16.msra.mxu0 0
        %4950 = vmatpush.bf16.msra.mxu0 0
        %4951 = vmatpush.bf16.msra.mxu0 0
        %4952 = vmatpush.bf16.msra.mxu0 0
        %4953 = vmatpush.bf16.msra.mxu0 0
        %4954 = vmatpush.bf16.msra.mxu0 %v4945
        %4955 = vmatmul.bf16.gmra.mxu0 %v4942
        %v4956 = vpop.f32.mrf.mxu0
        %v4957 = vadd.f32 0.0, %v4956
        %v4958 = vpop.f32.mrf.mxu0
        %4959 = vdwg.mxu0
        %4960 = vrot.lane.b32.xlu0 %v3725, 64
        %v4961 = vpop.permute.xlu0 %4960
        %v4963 = vsel %vm604, %v4920, 0
        %v4966 = vsel %vm2161, %v4961, 0
        %4968 = vmatpush.bf16.msra.mxu0 0
        %4969 = vmatpush.bf16.msra.mxu0 0
        %4970 = vmatpush.bf16.msra.mxu0 0
        %4971 = vmatpush.bf16.msra.mxu0 0
        %4972 = vmatpush.bf16.msra.mxu0 0
        %4973 = vmatpush.bf16.msra.mxu0 0
        %4974 = vmatpush.bf16.msra.mxu0 0
        %4975 = vmatpush.bf16.msra.mxu0 %v4966
        %4976 = vmatmul.bf16.gmra.mxu0 %v4963
        %v4977 = vpop.f32.mrf.mxu0
        %v4978 = vadd.f32 0.0, %v4977
        %v4979 = vpop.f32.mrf.mxu0
        %4980 = vdwg.mxu0
        %4981 = vrot.lane.b32.xlu0 %v3749, 64
        %v4982 = vpop.permute.xlu0 %4981
        %v4984 = vsel %vm604, %v4921, 0
        %v4987 = vsel %vm2161, %v4982, 0
        %4989 = vmatpush.bf16.msra.mxu0 0
        %4990 = vmatpush.bf16.msra.mxu0 0
        %4991 = vmatpush.bf16.msra.mxu0 0
        %4992 = vmatpush.bf16.msra.mxu0 0
        %4993 = vmatpush.bf16.msra.mxu0 0
        %4994 = vmatpush.bf16.msra.mxu0 0
        %4995 = vmatpush.bf16.msra.mxu0 0
        %4996 = vmatpush.bf16.msra.mxu0 %v4987
        %4997 = vmatmul.bf16.gmra.mxu0 %v4984
        %v4998 = vpop.f32.mrf.mxu0
        %v4999 = vadd.f32 0.0, %v4998
        %v5000 = vpop.f32.mrf.mxu0
        %5001 = vdwg.mxu0
        %5002 = vrot.lane.b32.xlu0 %v3773, 64
        %v5003 = vpop.permute.xlu0 %5002
        %v5005 = vsel %vm604, %v4922, 0
        %v5008 = vsel %vm2161, %v5003, 0
        %5010 = vmatpush.bf16.msra.mxu0 0
        %5011 = vmatpush.bf16.msra.mxu0 0
        %5012 = vmatpush.bf16.msra.mxu0 0
        %5013 = vmatpush.bf16.msra.mxu0 0
        %5014 = vmatpush.bf16.msra.mxu0 0
        %5015 = vmatpush.bf16.msra.mxu0 0
        %5016 = vmatpush.bf16.msra.mxu0 0
        %5017 = vmatpush.bf16.msra.mxu0 %v5008
        %5018 = vmatmul.bf16.gmra.mxu0 %v5005
        %v5019 = vpop.f32.mrf.mxu0
        %v5020 = vadd.f32 0.0, %v5019
        %v5021 = vpop.f32.mrf.mxu0
        %5022 = vdwg.mxu0
        %5023 = vrot.lane.b32.xlu0 %v3797, 64
        %v5024 = vpop.permute.xlu0 %5023
        %v5026 = vsel %vm604, %v4923, 0
        %v5029 = vsel %vm2161, %v5024, 0
        %5031 = vmatpush.bf16.msra.mxu0 0
        %5032 = vmatpush.bf16.msra.mxu0 0
        %5033 = vmatpush.bf16.msra.mxu0 0
        %5034 = vmatpush.bf16.msra.mxu0 0
        %5035 = vmatpush.bf16.msra.mxu0 0
        %5036 = vmatpush.bf16.msra.mxu0 0
        %5037 = vmatpush.bf16.msra.mxu0 0
        %5038 = vmatpush.bf16.msra.mxu0 %v5029
        %5039 = vmatmul.bf16.gmra.mxu0 %v5026
        %v5040 = vpop.f32.mrf.mxu0
        %v5041 = vadd.f32 0.0, %v5040
        %v5042 = vpop.f32.mrf.mxu0
        %5043 = vdwg.mxu0
        %5044 = vrot.lane.b32.xlu0 %v3821, 64
        %v5045 = vpop.permute.xlu0 %5044
        %v5047 = vsel %vm604, %v4924, 0
        %v5050 = vsel %vm2161, %v5045, 0
        %5052 = vmatpush.bf16.msra.mxu0 0
        %5053 = vmatpush.bf16.msra.mxu0 0
        %5054 = vmatpush.bf16.msra.mxu0 0
        %5055 = vmatpush.bf16.msra.mxu0 0
        %5056 = vmatpush.bf16.msra.mxu0 0
        %5057 = vmatpush.bf16.msra.mxu0 0
        %5058 = vmatpush.bf16.msra.mxu0 0
        %5059 = vmatpush.bf16.msra.mxu0 %v5050
        %5060 = vmatmul.bf16.gmra.mxu0 %v5047
        %v5061 = vpop.f32.mrf.mxu0
        %v5062 = vadd.f32 0.0, %v5061
        %v5063 = vpop.f32.mrf.mxu0
        %5064 = vdwg.mxu0
        %5065 = vrot.lane.b32.xlu0 %v3845, 64
        %v5066 = vpop.permute.xlu0 %5065
        %v5068 = vsel %vm604, %v4925, 0
        %v5071 = vsel %vm2161, %v5066, 0
        %5073 = vmatpush.bf16.msra.mxu0 0
        %5074 = vmatpush.bf16.msra.mxu0 0
        %5075 = vmatpush.bf16.msra.mxu0 0
        %5076 = vmatpush.bf16.msra.mxu0 0
        %5077 = vmatpush.bf16.msra.mxu0 0
        %5078 = vmatpush.bf16.msra.mxu0 0
        %5079 = vmatpush.bf16.msra.mxu0 0
        %5080 = vmatpush.bf16.msra.mxu0 %v5071
        %5081 = vmatmul.bf16.gmra.mxu0 %v5068
        %v5082 = vpop.f32.mrf.mxu0
        %v5083 = vadd.f32 0.0, %v5082
        %v5084 = vpop.f32.mrf.mxu0
        %5085 = vdwg.mxu0
        %5086 = vrot.lane.b32.xlu0 %v3869, 64
        %v5087 = vpop.permute.xlu0 %5086
        %v5089 = vsel %vm604, %v4926, 0
        %v5092 = vsel %vm2161, %v5087, 0
        %5094 = vmatpush.bf16.msra.mxu0 0
        %5095 = vmatpush.bf16.msra.mxu0 0
        %5096 = vmatpush.bf16.msra.mxu0 0
        %5097 = vmatpush.bf16.msra.mxu0 0
        %5098 = vmatpush.bf16.msra.mxu0 0
        %5099 = vmatpush.bf16.msra.mxu0 0
        %5100 = vmatpush.bf16.msra.mxu0 0
        %5101 = vmatpush.bf16.msra.mxu0 %v5092
        %5102 = vmatmul.bf16.gmra.mxu0 %v5089
        %v5103 = vpop.f32.mrf.mxu0
        %v5104 = vadd.f32 0.0, %v5103
        %v5105 = vpop.f32.mrf.mxu0
        %5106 = vdwg.mxu0
        %5107 = vrot.lane.b32.xlu0 %v3893, 64
        %v5108 = vpop.permute.xlu0 %5107
        %v5110 = vsel %vm604, %v4927, 0
        %v5113 = vsel %vm2161, %v5108, 0
        %5115 = vmatpush.bf16.msra.mxu0 0
        %5116 = vmatpush.bf16.msra.mxu0 0
        %5117 = vmatpush.bf16.msra.mxu0 0
        %5118 = vmatpush.bf16.msra.mxu0 0
        %5119 = vmatpush.bf16.msra.mxu0 0
        %5120 = vmatpush.bf16.msra.mxu0 0
        %5121 = vmatpush.bf16.msra.mxu0 0
        %5122 = vmatpush.bf16.msra.mxu0 %v5113
        %5123 = vmatmul.bf16.gmra.mxu0 %v5110
        %v5124 = vpop.f32.mrf.mxu0
        %v5125 = vadd.f32 0.0, %v5124
        %v5126 = vpop.f32.mrf.mxu0
        %5127 = vdwg.mxu0
        %5128 = vrot.lane.b32.xlu0 %v3917, 64
        %v5129 = vpop.permute.xlu0 %5128
        %v5131 = vsel %vm604, %v4928, 0
        %v5134 = vsel %vm2161, %v5129, 0
        %5136 = vmatpush.bf16.msra.mxu0 0
        %5137 = vmatpush.bf16.msra.mxu0 0
        %5138 = vmatpush.bf16.msra.mxu0 0
        %5139 = vmatpush.bf16.msra.mxu0 0
        %5140 = vmatpush.bf16.msra.mxu0 0
        %5141 = vmatpush.bf16.msra.mxu0 0
        %5142 = vmatpush.bf16.msra.mxu0 0
        %5143 = vmatpush.bf16.msra.mxu0 %v5134
        %5144 = vmatmul.bf16.gmra.mxu0 %v5131
        %v5145 = vpop.f32.mrf.mxu0
        %v5146 = vadd.f32 0.0, %v5145
        %v5147 = vpop.f32.mrf.mxu0
        %5148 = vdwg.mxu0
        %5149 = vrot.lane.b32.xlu0 %v3941, 64
        %v5150 = vpop.permute.xlu0 %5149
        %v5152 = vsel %vm604, %v4929, 0
        %v5155 = vsel %vm2161, %v5150, 0
        %5157 = vmatpush.bf16.msra.mxu0 0
        %5158 = vmatpush.bf16.msra.mxu0 0
        %5159 = vmatpush.bf16.msra.mxu0 0
        %5160 = vmatpush.bf16.msra.mxu0 0
        %5161 = vmatpush.bf16.msra.mxu0 0
        %5162 = vmatpush.bf16.msra.mxu0 0
        %5163 = vmatpush.bf16.msra.mxu0 0
        %5164 = vmatpush.bf16.msra.mxu0 %v5155
        %5165 = vmatmul.bf16.gmra.mxu0 %v5152
        %v5166 = vpop.f32.mrf.mxu0
        %v5167 = vadd.f32 0.0, %v5166
        %v5168 = vpop.f32.mrf.mxu0
        %5169 = vdwg.mxu0
        %5170 = vrot.lane.b32.xlu0 %v3965, 64
        %v5171 = vpop.permute.xlu0 %5170
        %v5173 = vsel %vm604, %v4930, 0
        %v5176 = vsel %vm2161, %v5171, 0
        %5178 = vmatpush.bf16.msra.mxu0 0
        %5179 = vmatpush.bf16.msra.mxu0 0
        %5180 = vmatpush.bf16.msra.mxu0 0
        %5181 = vmatpush.bf16.msra.mxu0 0
        %5182 = vmatpush.bf16.msra.mxu0 0
        %5183 = vmatpush.bf16.msra.mxu0 0
        %5184 = vmatpush.bf16.msra.mxu0 0
        %5185 = vmatpush.bf16.msra.mxu0 %v5176
        %5186 = vmatmul.bf16.gmra.mxu0 %v5173
        %v5187 = vpop.f32.mrf.mxu0
        %v5188 = vadd.f32 0.0, %v5187
        %v5189 = vpop.f32.mrf.mxu0
        %5190 = vdwg.mxu0
        %5191 = vrot.lane.b32.xlu0 %v3989, 64
        %v5192 = vpop.permute.xlu0 %5191
        %v5194 = vsel %vm604, %v4931, 0
        %v5197 = vsel %vm2161, %v5192, 0
        %5199 = vmatpush.bf16.msra.mxu0 0
        %5200 = vmatpush.bf16.msra.mxu0 0
        %5201 = vmatpush.bf16.msra.mxu0 0
        %5202 = vmatpush.bf16.msra.mxu0 0
        %5203 = vmatpush.bf16.msra.mxu0 0
        %5204 = vmatpush.bf16.msra.mxu0 0
        %5205 = vmatpush.bf16.msra.mxu0 0
        %5206 = vmatpush.bf16.msra.mxu0 %v5197
        %5207 = vmatmul.bf16.gmra.mxu0 %v5194
        %v5208 = vpop.f32.mrf.mxu0
        %v5209 = vadd.f32 0.0, %v5208
        %v5210 = vpop.f32.mrf.mxu0
        %5211 = vdwg.mxu0
        %5212 = vrot.lane.b32.xlu0 %v4013, 64
        %v5213 = vpop.permute.xlu0 %5212
        %v5215 = vsel %vm604, %v4932, 0
        %v5218 = vsel %vm2161, %v5213, 0
        %5220 = vmatpush.bf16.msra.mxu0 0
        %5221 = vmatpush.bf16.msra.mxu0 0
        %5222 = vmatpush.bf16.msra.mxu0 0
        %5223 = vmatpush.bf16.msra.mxu0 0
        %5224 = vmatpush.bf16.msra.mxu0 0
        %5225 = vmatpush.bf16.msra.mxu0 0
        %5226 = vmatpush.bf16.msra.mxu0 0
        %5227 = vmatpush.bf16.msra.mxu0 %v5218
        %5228 = vmatmul.bf16.gmra.mxu0 %v5215
        %v5229 = vpop.f32.mrf.mxu0
        %v5230 = vadd.f32 0.0, %v5229
        %v5231 = vpop.f32.mrf.mxu0
        %5232 = vdwg.mxu0
        %5233 = vrot.lane.b32.xlu0 %v4037, 64
        %v5234 = vpop.permute.xlu0 %5233
        %v5236 = vsel %vm604, %v4933, 0
        %v5239 = vsel %vm2161, %v5234, 0
        %5241 = vmatpush.bf16.msra.mxu0 0
        %5242 = vmatpush.bf16.msra.mxu0 0
        %5243 = vmatpush.bf16.msra.mxu0 0
        %5244 = vmatpush.bf16.msra.mxu0 0
        %5245 = vmatpush.bf16.msra.mxu0 0
        %5246 = vmatpush.bf16.msra.mxu0 0
        %5247 = vmatpush.bf16.msra.mxu0 0
        %5248 = vmatpush.bf16.msra.mxu0 %v5239
        %5249 = vmatmul.bf16.gmra.mxu0 %v5236
        %v5250 = vpop.f32.mrf.mxu0
        %v5251 = vadd.f32 0.0, %v5250
        %v5252 = vpop.f32.mrf.mxu0
        %5253 = vdwg.mxu0
        %5254 = vrot.lane.b32.xlu0 %v4061, 64
        %v5255 = vpop.permute.xlu0 %5254
        %v5257 = vsel %vm604, %v4934, 0
        %v5260 = vsel %vm2161, %v5255, 0
        %5262 = vmatpush.bf16.msra.mxu0 0
        %5263 = vmatpush.bf16.msra.mxu0 0
        %5264 = vmatpush.bf16.msra.mxu0 0
        %5265 = vmatpush.bf16.msra.mxu0 0
        %5266 = vmatpush.bf16.msra.mxu0 0
        %5267 = vmatpush.bf16.msra.mxu0 0
        %5268 = vmatpush.bf16.msra.mxu0 0
        %5269 = vmatpush.bf16.msra.mxu0 %v5260
        %5270 = vmatmul.bf16.gmra.mxu0 %v5257
        %v5271 = vpop.f32.mrf.mxu0
        %v5272 = vadd.f32 0.0, %v5271
        %v5273 = vpop.f32.mrf.mxu0
        %5274 = vdwg.mxu0
        %5275 = vrot.lane.b32.xlu0 %v4085, 64
        %v5276 = vpop.permute.xlu0 %5275
        %v5278 = vsel %vm604, %v4935, 0
        %v5281 = vsel %vm2161, %v5276, 0
        %5283 = vmatpush.bf16.msra.mxu0 0
        %5284 = vmatpush.bf16.msra.mxu0 0
        %5285 = vmatpush.bf16.msra.mxu0 0
        %5286 = vmatpush.bf16.msra.mxu0 0
        %5287 = vmatpush.bf16.msra.mxu0 0
        %5288 = vmatpush.bf16.msra.mxu0 0
        %5289 = vmatpush.bf16.msra.mxu0 0
        %5290 = vmatpush.bf16.msra.mxu0 %v5281
        %5291 = vmatmul.bf16.gmra.mxu0 %v5278
        %v5292 = vpop.f32.mrf.mxu0
        %v5293 = vadd.f32 0.0, %v5292
        %v5294 = vpop.f32.mrf.mxu0
        %5295 = vdwg.mxu0
        %5296 = vrot.lane.b32.xlu0 %v4109, 64
        %v5297 = vpop.permute.xlu0 %5296
        %v5299 = vsel %vm604, %v4936, 0
        %v5302 = vsel %vm2161, %v5297, 0
        %5304 = vmatpush.bf16.msra.mxu0 0
        %5305 = vmatpush.bf16.msra.mxu0 0
        %5306 = vmatpush.bf16.msra.mxu0 0
        %5307 = vmatpush.bf16.msra.mxu0 0
        %5308 = vmatpush.bf16.msra.mxu0 0
        %5309 = vmatpush.bf16.msra.mxu0 0
        %5310 = vmatpush.bf16.msra.mxu0 0
        %5311 = vmatpush.bf16.msra.mxu0 %v5302
        %5312 = vmatmul.bf16.gmra.mxu0 %v5299
        %v5313 = vpop.f32.mrf.mxu0
        %v5314 = vadd.f32 0.0, %v5313
        %v5315 = vpop.f32.mrf.mxu0
        %5316 = vdwg.mxu0
        %5317 = vrot.lane.b32.xlu0 %v4133, 64
        %v5318 = vpop.permute.xlu0 %5317
        %v5320 = vsel %vm604, %v4937, 0
        %v5323 = vsel %vm2161, %v5318, 0
        %5325 = vmatpush.bf16.msra.mxu0 0
        %5326 = vmatpush.bf16.msra.mxu0 0
        %5327 = vmatpush.bf16.msra.mxu0 0
        %5328 = vmatpush.bf16.msra.mxu0 0
        %5329 = vmatpush.bf16.msra.mxu0 0
        %5330 = vmatpush.bf16.msra.mxu0 0
        %5331 = vmatpush.bf16.msra.mxu0 0
        %5332 = vmatpush.bf16.msra.mxu0 %v5323
        %5333 = vmatmul.bf16.gmra.mxu0 %v5320
        %v5334 = vpop.f32.mrf.mxu0
        %v5335 = vadd.f32 0.0, %v5334
        %v5336 = vpop.f32.mrf.mxu0
        %5337 = vdwg.mxu0
        %5338 = vrot.lane.b32.xlu0 %v4157, 64
        %v5339 = vpop.permute.xlu0 %5338
        %v5341 = vsel %vm604, %v4938, 0
        %v5344 = vsel %vm2161, %v5339, 0
        %5346 = vmatpush.bf16.msra.mxu0 0
        %5347 = vmatpush.bf16.msra.mxu0 0
        %5348 = vmatpush.bf16.msra.mxu0 0
        %5349 = vmatpush.bf16.msra.mxu0 0
        %5350 = vmatpush.bf16.msra.mxu0 0
        %5351 = vmatpush.bf16.msra.mxu0 0
        %5352 = vmatpush.bf16.msra.mxu0 0
        %5353 = vmatpush.bf16.msra.mxu0 %v5344
        %5354 = vmatmul.bf16.gmra.mxu0 %v5341
        %v5355 = vpop.f32.mrf.mxu0
        %v5356 = vadd.f32 0.0, %v5355
        %v5357 = vpop.f32.mrf.mxu0
        %5358 = vdwg.mxu0
        %v5359 = vadd.f32 %v4179, %v4957
        %v5360 = vadd.f32 %v4180, %v4978
        %v5361 = vadd.f32 %v4181, %v4999
        %v5362 = vadd.f32 %v4182, %v5020
        %v5363 = vadd.f32 %v4183, %v5041
        %v5364 = vadd.f32 %v4184, %v5062
        %v5365 = vadd.f32 %v4185, %v5083
        %v5366 = vadd.f32 %v4186, %v5104
        %v5367 = vadd.f32 %v4187, %v5125
        %v5368 = vadd.f32 %v4188, %v5146
        %v5369 = vadd.f32 %v4189, %v5167
        %v5370 = vadd.f32 %v4190, %v5188
        %v5371 = vadd.f32 %v4191, %v5209
        %v5372 = vadd.f32 %v4192, %v5230
        %v5373 = vadd.f32 %v4193, %v5251
        %v5374 = vadd.f32 %v4194, %v5272
        %v5375 = vadd.f32 %v4195, %v5293
        %v5376 = vadd.f32 %v4196, %v5314
        %v5377 = vadd.f32 %v4197, %v5335
        %v5378 = vadd.f32 %v4198, %v5356
        %s5379 = sld [smem:[#allocation3]]
        %v5380 = vld [vmem:[%s3] sm:$0x1]
        %v5382 = vperm.slane %v5380, 0
        %v5384 = vadd.f32 %v5359, %v5382
        %v5385 = vadd.f32 %v5360, %v5382
        %v5386 = vadd.f32 %v5361, %v5382
        %v5387 = vadd.f32 %v5362, %v5382
        %v5388 = vadd.f32 %v5363, %v5382
        %v5389 = vadd.f32 %v5364, %v5382
        %v5390 = vadd.f32 %v5365, %v5382
        %v5391 = vadd.f32 %v5366, %v5382
        %v5392 = vadd.f32 %v5367, %v5382
        %v5393 = vadd.f32 %v5368, %v5382
        %v5394 = vadd.f32 %v5369, %v5382
        %v5395 = vadd.f32 %v5370, %v5382
        %v5396 = vadd.f32 %v5371, %v5382
        %v5397 = vadd.f32 %v5372, %v5382
        %v5398 = vadd.f32 %v5373, %v5382
        %v5399 = vadd.f32 %v5374, %v5382
        %v5400 = vadd.f32 %v5375, %v5382
        %v5401 = vadd.f32 %v5376, %v5382
        %v5402 = vadd.f32 %v5377, %v5382
        %v5403 = vadd.f32 %v5378, %v5382
        %v5404 = vstv %s5379
        %v5405 = vmul.f32 %v5404, %v5384
        %v5406 = vmul.f32 %v5404, %v5385
        %v5407 = vmul.f32 %v5404, %v5386
        %v5408 = vmul.f32 %v5404, %v5387
        %v5409 = vmul.f32 %v5404, %v5388
        %v5410 = vmul.f32 %v5404, %v5389
        %v5411 = vmul.f32 %v5404, %v5390
        %v5412 = vmul.f32 %v5404, %v5391
        %v5413 = vmul.f32 %v5404, %v5392
        %v5414 = vmul.f32 %v5404, %v5393
        %v5415 = vmul.f32 %v5404, %v5394
        %v5416 = vmul.f32 %v5404, %v5395
        %v5417 = vmul.f32 %v5404, %v5396
        %v5418 = vmul.f32 %v5404, %v5397
        %v5419 = vmul.f32 %v5404, %v5398
        %v5420 = vmul.f32 %v5404, %v5399
        %v5421 = vmul.f32 %v5404, %v5400
        %v5422 = vmul.f32 %v5404, %v5401
        %v5423 = vmul.f32 %v5404, %v5402
        %v5424 = vmul.f32 %v5404, %v5403
        %v5425 = vadd.f32 %v347, %v5405
        %v5426 = vadd.f32 %v348, %v5406
        %v5427 = vadd.f32 %v349, %v5407
        %v5428 = vadd.f32 %v350, %v5408
        %v5429 = vadd.f32 %v351, %v5409
        %v5430 = vadd.f32 %v352, %v5410
        %v5431 = vadd.f32 %v353, %v5411
        %v5432 = vadd.f32 %v354, %v5412
        %v5433 = vadd.f32 %v355, %v5413
        %v5434 = vadd.f32 %v356, %v5414
        %v5435 = vadd.f32 %v357, %v5415
        %v5436 = vadd.f32 %v358, %v5416
        %v5437 = vadd.f32 %v359, %v5417
        %v5438 = vadd.f32 %v360, %v5418
        %v5439 = vadd.f32 %v361, %v5419
        %v5440 = vadd.f32 %v362, %v5420
        %v5441 = vadd.f32 %v363, %v5421
        %v5442 = vadd.f32 %v364, %v5422
        %v5443 = vadd.f32 %v365, %v5423
        %v5444 = vadd.f32 %v366, %v5424
        %v5445 = vpack.c.bf16 %v5426, %v5425
        %v5446 = vpack.c.bf16 %v5428, %v5427
        %v5447 = vpack.c.bf16 %v5430, %v5429
        %v5448 = vpack.c.bf16 %v5432, %v5431
        %v5449 = vpack.c.bf16 %v5434, %v5433
        %v5450 = vpack.c.bf16 %v5436, %v5435
        %v5451 = vpack.c.bf16 %v5438, %v5437
        %v5452 = vpack.c.bf16 %v5440, %v5439
        %v5453 = vpack.c.bf16 %v5442, %v5441
        %v5454 = vpack.c.bf16 %v5444, %v5443
        %s5455 = scalar_lea.vmem %s1, 32
        %v5456 = vld [vmem:[%s5455] sm:$0xff]
        %v5457 = vld [vmem:[%s5455 + $0x8] sm:$0xff]
        %v5458 = vld [vmem:[%s5455 + $0x10] sm:$0xff]
        %v5459 = vld [vmem:[%s5455 + $0x18] sm:$0xff]
        %s5460 = scalar_lea.vmem %s2, 2
        %v5461 = vld [vmem:[%s5460] sm:$0x3]
        %v5463 = vperm.slane %v5461, 0
        %v5464 = vperm.slane %v5461, 1
        %v5471 = vunpack.c.l.b16 %v5456
        %v5472 = vunpack.c.h.b16 %v5456
        %v5473 = vunpack.c.l.b16 %v5457
        %v5474 = vunpack.c.h.b16 %v5457
        %v5475 = vunpack.c.l.b16 %v5458
        %v5476 = vunpack.c.h.b16 %v5458
        %v5477 = vunpack.c.l.b16 %v5459
        %v5478 = vunpack.c.h.b16 %v5459
        %v5479 = vpack.c.b16 %v5473, %v5471
        %v5480 = vpack.c.b16 %v5474, %v5472
        %v5481 = vpack.c.b16 %v5477, %v5475
        %v5482 = vpack.c.b16 %v5478, %v5476
        %v5488 = vsel %vm408, %v5445, 0
        %v5491 = vsel %vm408, %v5446, 0
        %v5494 = vsel %vm408, %v5447, 0
        %v5497 = vsel %vm408, %v5448, 0
        %v5500 = vsel %vm408, %v5449, 0
        %v5503 = vsel %vm408, %v5450, 0
        %v5506 = vsel %vm408, %v5451, 0
        %v5509 = vsel %vm408, %v5452, 0
        %v5512 = vsel %vm408, %v5453, 0
        %v5515 = vsel %vm408, %v5454, 0
        %5517 = vmatpush.bf16.msra.mxu0 0
        %5518 = vmatpush.bf16.msra.mxu0 0
        %5519 = vmatpush.bf16.msra.mxu0 0
        %5520 = vmatpush.bf16.msra.mxu0 0
        %5521 = vmatpush.bf16.msra.mxu0 0
        %5522 = vmatpush.bf16.msra.mxu0 0
        %5523 = vmatpush.bf16.msra.mxu0 %v5481
        %5524 = vmatpush.bf16.msra.mxu0 %v5479
        %5525 = vmatmul.bf16.gmra.mxu0 %v5488
        %v5526 = vpop.f32.mrf.mxu0
        %v5527 = vadd.f32 %v5463, %v5526
        %v5528 = vpop.f32.mrf.mxu0
        %v5529 = vadd.f32 %v5463, %v5528
        %5530 = vmatmul.bf16.gmra.mxu0 %v5491
        %v5531 = vpop.f32.mrf.mxu0
        %v5532 = vadd.f32 %v5463, %v5531
        %v5533 = vpop.f32.mrf.mxu0
        %v5534 = vadd.f32 %v5463, %v5533
        %5535 = vmatmul.bf16.gmra.mxu0 %v5494
        %v5536 = vpop.f32.mrf.mxu0
        %v5537 = vadd.f32 %v5463, %v5536
        %v5538 = vpop.f32.mrf.mxu0
        %v5539 = vadd.f32 %v5463, %v5538
        %5540 = vmatmul.bf16.gmra.mxu0 %v5497
        %v5541 = vpop.f32.mrf.mxu0
        %v5542 = vadd.f32 %v5463, %v5541
        %v5543 = vpop.f32.mrf.mxu0
        %v5544 = vadd.f32 %v5463, %v5543
        %5545 = vmatmul.bf16.gmra.mxu0 %v5500
        %v5546 = vpop.f32.mrf.mxu0
        %v5547 = vadd.f32 %v5463, %v5546
        %v5548 = vpop.f32.mrf.mxu0
        %v5549 = vadd.f32 %v5463, %v5548
        %5550 = vmatmul.bf16.gmra.mxu0 %v5503
        %v5551 = vpop.f32.mrf.mxu0
        %v5552 = vadd.f32 %v5463, %v5551
        %v5553 = vpop.f32.mrf.mxu0
        %v5554 = vadd.f32 %v5463, %v5553
        %5555 = vmatmul.bf16.gmra.mxu0 %v5506
        %v5556 = vpop.f32.mrf.mxu0
        %v5557 = vadd.f32 %v5463, %v5556
        %v5558 = vpop.f32.mrf.mxu0
        %v5559 = vadd.f32 %v5463, %v5558
        %5560 = vmatmul.bf16.gmra.mxu0 %v5509
        %v5561 = vpop.f32.mrf.mxu0
        %v5562 = vadd.f32 %v5463, %v5561
        %v5563 = vpop.f32.mrf.mxu0
        %v5564 = vadd.f32 %v5463, %v5563
        %5565 = vmatmul.bf16.gmra.mxu0 %v5512
        %v5566 = vpop.f32.mrf.mxu0
        %v5567 = vadd.f32 %v5463, %v5566
        %v5568 = vpop.f32.mrf.mxu0
        %v5569 = vadd.f32 %v5463, %v5568
        %5570 = vmatmul.bf16.gmra.mxu0 %v5515
        %v5571 = vpop.f32.mrf.mxu0
        %v5572 = vadd.f32 %v5463, %v5571
        %v5573 = vpop.f32.mrf.mxu0
        %v5574 = vadd.f32 %v5463, %v5573
        %5575 = vdwg.mxu0
        %5576 = vmatpush.bf16.msra.mxu0 0
        %5577 = vmatpush.bf16.msra.mxu0 0
        %5578 = vmatpush.bf16.msra.mxu0 0
        %5579 = vmatpush.bf16.msra.mxu0 0
        %5580 = vmatpush.bf16.msra.mxu0 0
        %5581 = vmatpush.bf16.msra.mxu0 0
        %5582 = vmatpush.bf16.msra.mxu0 %v5482
        %5583 = vmatpush.bf16.msra.mxu0 %v5480
        %5584 = vmatmul.bf16.gmra.mxu0 %v5488
        %v5585 = vpop.f32.mrf.mxu0
        %v5586 = vadd.f32 %v5464, %v5585
        %v5587 = vpop.f32.mrf.mxu0
        %v5588 = vadd.f32 %v5464, %v5587
        %5589 = vmatmul.bf16.gmra.mxu0 %v5491
        %v5590 = vpop.f32.mrf.mxu0
        %v5591 = vadd.f32 %v5464, %v5590
        %v5592 = vpop.f32.mrf.mxu0
        %v5593 = vadd.f32 %v5464, %v5592
        %5594 = vmatmul.bf16.gmra.mxu0 %v5494
        %v5595 = vpop.f32.mrf.mxu0
        %v5596 = vadd.f32 %v5464, %v5595
        %v5597 = vpop.f32.mrf.mxu0
        %v5598 = vadd.f32 %v5464, %v5597
        %5599 = vmatmul.bf16.gmra.mxu0 %v5497
        %v5600 = vpop.f32.mrf.mxu0
        %v5601 = vadd.f32 %v5464, %v5600
        %v5602 = vpop.f32.mrf.mxu0
        %v5603 = vadd.f32 %v5464, %v5602
        %5604 = vmatmul.bf16.gmra.mxu0 %v5500
        %v5605 = vpop.f32.mrf.mxu0
        %v5606 = vadd.f32 %v5464, %v5605
        %v5607 = vpop.f32.mrf.mxu0
        %v5608 = vadd.f32 %v5464, %v5607
        %5609 = vmatmul.bf16.gmra.mxu0 %v5503
        %v5610 = vpop.f32.mrf.mxu0
        %v5611 = vadd.f32 %v5464, %v5610
        %v5612 = vpop.f32.mrf.mxu0
        %v5613 = vadd.f32 %v5464, %v5612
        %5614 = vmatmul.bf16.gmra.mxu0 %v5506
        %v5615 = vpop.f32.mrf.mxu0
        %v5616 = vadd.f32 %v5464, %v5615
        %v5617 = vpop.f32.mrf.mxu0
        %v5618 = vadd.f32 %v5464, %v5617
        %5619 = vmatmul.bf16.gmra.mxu0 %v5509
        %v5620 = vpop.f32.mrf.mxu0
        %v5621 = vadd.f32 %v5464, %v5620
        %v5622 = vpop.f32.mrf.mxu0
        %v5623 = vadd.f32 %v5464, %v5622
        %5624 = vmatmul.bf16.gmra.mxu0 %v5512
        %v5625 = vpop.f32.mrf.mxu0
        %v5626 = vadd.f32 %v5464, %v5625
        %v5627 = vpop.f32.mrf.mxu0
        %v5628 = vadd.f32 %v5464, %v5627
        %5629 = vmatmul.bf16.gmra.mxu0 %v5515
        %v5630 = vpop.f32.mrf.mxu0
        %v5631 = vadd.f32 %v5464, %v5630
        %v5632 = vpop.f32.mrf.mxu0
        %v5633 = vadd.f32 %v5464, %v5632
        %5634 = vdwg.mxu0
        %v5635 = vpack.c.bf16 %v5527, %v5527
        %v5636 = vpack.c.bf16 %v5529, %v5529
        %v5637 = vpack.c.bf16 %v5532, %v5532
        %v5638 = vpack.c.bf16 %v5534, %v5534
        %v5639 = vpack.c.bf16 %v5537, %v5537
        %v5640 = vpack.c.bf16 %v5539, %v5539
        %v5641 = vpack.c.bf16 %v5542, %v5542
        %v5642 = vpack.c.bf16 %v5544, %v5544
        %v5643 = vpack.c.bf16 %v5547, %v5547
        %v5644 = vpack.c.bf16 %v5549, %v5549
        %v5645 = vpack.c.bf16 %v5552, %v5552
        %v5646 = vpack.c.bf16 %v5554, %v5554
        %v5647 = vpack.c.bf16 %v5557, %v5557
        %v5648 = vpack.c.bf16 %v5559, %v5559
        %v5649 = vpack.c.bf16 %v5562, %v5562
        %v5650 = vpack.c.bf16 %v5564, %v5564
        %v5651 = vpack.c.bf16 %v5567, %v5567
        %v5652 = vpack.c.bf16 %v5569, %v5569
        %v5653 = vpack.c.bf16 %v5572, %v5572
        %v5654 = vpack.c.bf16 %v5574, %v5574
        %v5656 = vunpack.c.l.b16 %v5635
        %v5657 = vpack.c.b16 %v5656, %v5656
        %5658 = vrot.lane.b32.xlu0 %v5657, 96
        %v5659 = vpop.permute.xlu0 %5658
        %5660 = vrot.lane.b32.xlu0 %v5657, 64
        %v5661 = vpop.permute.xlu0 %5660
        %v5663 = vsel %vm604, %v5659, 0
        %v5666 = vsel %vm604, %v5661, 0
        %5668 = vmatpush.bf16.xpose.msra.mxu0 0
        %5669 = vmatpush.bf16.xpose.msra.mxu0 0
        %5670 = vmatpush.bf16.xpose.msra.mxu0 0
        %5671 = vmatpush.bf16.xpose.msra.mxu0 0
        %5672 = vmatpush.bf16.xpose.msra.mxu0 0
        %5673 = vmatpush.bf16.xpose.msra.mxu0 0
        %5674 = vmatpush.bf16.xpose.msra.mxu0 0
        %5675 = vmatpush.bf16.xpose.msra.mxu0 %v5666
        %5676 = vmatmul.bf16.gmra.mxu0 %v5663
        %v5677 = vpop.f32.mrf.mxu0
        %v5678 = vadd.f32 0.0, %v5677
        %v5679 = vpop.f32.mrf.mxu0
        %5680 = vdwg.mxu0
        %v5682 = vunpack.c.l.b16 %v5636
        %v5683 = vpack.c.b16 %v5682, %v5682
        %5684 = vrot.lane.b32.xlu0 %v5683, 96
        %v5685 = vpop.permute.xlu0 %5684
        %5686 = vrot.lane.b32.xlu0 %v5683, 64
        %v5687 = vpop.permute.xlu0 %5686
        %v5689 = vsel %vm604, %v5685, 0
        %v5692 = vsel %vm604, %v5687, 0
        %5694 = vmatpush.bf16.xpose.msra.mxu0 0
        %5695 = vmatpush.bf16.xpose.msra.mxu0 0
        %5696 = vmatpush.bf16.xpose.msra.mxu0 0
        %5697 = vmatpush.bf16.xpose.msra.mxu0 0
        %5698 = vmatpush.bf16.xpose.msra.mxu0 0
        %5699 = vmatpush.bf16.xpose.msra.mxu0 0
        %5700 = vmatpush.bf16.xpose.msra.mxu0 0
        %5701 = vmatpush.bf16.xpose.msra.mxu0 %v5692
        %5702 = vmatmul.bf16.gmra.mxu0 %v5689
        %v5703 = vpop.f32.mrf.mxu0
        %v5704 = vadd.f32 0.0, %v5703
        %v5705 = vpop.f32.mrf.mxu0
        %5706 = vdwg.mxu0
        %v5708 = vunpack.c.l.b16 %v5637
        %v5709 = vpack.c.b16 %v5708, %v5708
        %5710 = vrot.lane.b32.xlu0 %v5709, 96
        %v5711 = vpop.permute.xlu0 %5710
        %5712 = vrot.lane.b32.xlu0 %v5709, 64
        %v5713 = vpop.permute.xlu0 %5712
        %v5715 = vsel %vm604, %v5711, 0
        %v5718 = vsel %vm604, %v5713, 0
        %5720 = vmatpush.bf16.xpose.msra.mxu0 0
        %5721 = vmatpush.bf16.xpose.msra.mxu0 0
        %5722 = vmatpush.bf16.xpose.msra.mxu0 0
        %5723 = vmatpush.bf16.xpose.msra.mxu0 0
        %5724 = vmatpush.bf16.xpose.msra.mxu0 0
        %5725 = vmatpush.bf16.xpose.msra.mxu0 0
        %5726 = vmatpush.bf16.xpose.msra.mxu0 0
        %5727 = vmatpush.bf16.xpose.msra.mxu0 %v5718
        %5728 = vmatmul.bf16.gmra.mxu0 %v5715
        %v5729 = vpop.f32.mrf.mxu0
        %v5730 = vadd.f32 0.0, %v5729
        %v5731 = vpop.f32.mrf.mxu0
        %5732 = vdwg.mxu0
        %v5734 = vunpack.c.l.b16 %v5638
        %v5735 = vpack.c.b16 %v5734, %v5734
        %5736 = vrot.lane.b32.xlu0 %v5735, 96
        %v5737 = vpop.permute.xlu0 %5736
        %5738 = vrot.lane.b32.xlu0 %v5735, 64
        %v5739 = vpop.permute.xlu0 %5738
        %v5741 = vsel %vm604, %v5737, 0
        %v5744 = vsel %vm604, %v5739, 0
        %5746 = vmatpush.bf16.xpose.msra.mxu0 0
        %5747 = vmatpush.bf16.xpose.msra.mxu0 0
        %5748 = vmatpush.bf16.xpose.msra.mxu0 0
        %5749 = vmatpush.bf16.xpose.msra.mxu0 0
        %5750 = vmatpush.bf16.xpose.msra.mxu0 0
        %5751 = vmatpush.bf16.xpose.msra.mxu0 0
        %5752 = vmatpush.bf16.xpose.msra.mxu0 0
        %5753 = vmatpush.bf16.xpose.msra.mxu0 %v5744
        %5754 = vmatmul.bf16.gmra.mxu0 %v5741
        %v5755 = vpop.f32.mrf.mxu0
        %v5756 = vadd.f32 0.0, %v5755
        %v5757 = vpop.f32.mrf.mxu0
        %5758 = vdwg.mxu0
        %v5760 = vunpack.c.l.b16 %v5639
        %v5761 = vpack.c.b16 %v5760, %v5760
        %5762 = vrot.lane.b32.xlu0 %v5761, 96
        %v5763 = vpop.permute.xlu0 %5762
        %5764 = vrot.lane.b32.xlu0 %v5761, 64
        %v5765 = vpop.permute.xlu0 %5764
        %v5767 = vsel %vm604, %v5763, 0
        %v5770 = vsel %vm604, %v5765, 0
        %5772 = vmatpush.bf16.xpose.msra.mxu0 0
        %5773 = vmatpush.bf16.xpose.msra.mxu0 0
        %5774 = vmatpush.bf16.xpose.msra.mxu0 0
        %5775 = vmatpush.bf16.xpose.msra.mxu0 0
        %5776 = vmatpush.bf16.xpose.msra.mxu0 0
        %5777 = vmatpush.bf16.xpose.msra.mxu0 0
        %5778 = vmatpush.bf16.xpose.msra.mxu0 0
        %5779 = vmatpush.bf16.xpose.msra.mxu0 %v5770
        %5780 = vmatmul.bf16.gmra.mxu0 %v5767
        %v5781 = vpop.f32.mrf.mxu0
        %v5782 = vadd.f32 0.0, %v5781
        %v5783 = vpop.f32.mrf.mxu0
        %5784 = vdwg.mxu0
        %v5786 = vunpack.c.l.b16 %v5640
        %v5787 = vpack.c.b16 %v5786, %v5786
        %5788 = vrot.lane.b32.xlu0 %v5787, 96
        %v5789 = vpop.permute.xlu0 %5788
        %5790 = vrot.lane.b32.xlu0 %v5787, 64
        %v5791 = vpop.permute.xlu0 %5790
        %v5793 = vsel %vm604, %v5789, 0
        %v5796 = vsel %vm604, %v5791, 0
        %5798 = vmatpush.bf16.xpose.msra.mxu0 0
        %5799 = vmatpush.bf16.xpose.msra.mxu0 0
        %5800 = vmatpush.bf16.xpose.msra.mxu0 0
        %5801 = vmatpush.bf16.xpose.msra.mxu0 0
        %5802 = vmatpush.bf16.xpose.msra.mxu0 0
        %5803 = vmatpush.bf16.xpose.msra.mxu0 0
        %5804 = vmatpush.bf16.xpose.msra.mxu0 0
        %5805 = vmatpush.bf16.xpose.msra.mxu0 %v5796
        %5806 = vmatmul.bf16.gmra.mxu0 %v5793
        %v5807 = vpop.f32.mrf.mxu0
        %v5808 = vadd.f32 0.0, %v5807
        %v5809 = vpop.f32.mrf.mxu0
        %5810 = vdwg.mxu0
        %v5812 = vunpack.c.l.b16 %v5641
        %v5813 = vpack.c.b16 %v5812, %v5812
        %5814 = vrot.lane.b32.xlu0 %v5813, 96
        %v5815 = vpop.permute.xlu0 %5814
        %5816 = vrot.lane.b32.xlu0 %v5813, 64
        %v5817 = vpop.permute.xlu0 %5816
        %v5819 = vsel %vm604, %v5815, 0
        %v5822 = vsel %vm604, %v5817, 0
        %5824 = vmatpush.bf16.xpose.msra.mxu0 0
        %5825 = vmatpush.bf16.xpose.msra.mxu0 0
        %5826 = vmatpush.bf16.xpose.msra.mxu0 0
        %5827 = vmatpush.bf16.xpose.msra.mxu0 0
        %5828 = vmatpush.bf16.xpose.msra.mxu0 0
        %5829 = vmatpush.bf16.xpose.msra.mxu0 0
        %5830 = vmatpush.bf16.xpose.msra.mxu0 0
        %5831 = vmatpush.bf16.xpose.msra.mxu0 %v5822
        %5832 = vmatmul.bf16.gmra.mxu0 %v5819
        %v5833 = vpop.f32.mrf.mxu0
        %v5834 = vadd.f32 0.0, %v5833
        %v5835 = vpop.f32.mrf.mxu0
        %5836 = vdwg.mxu0
        %v5838 = vunpack.c.l.b16 %v5642
        %v5839 = vpack.c.b16 %v5838, %v5838
        %5840 = vrot.lane.b32.xlu0 %v5839, 96
        %v5841 = vpop.permute.xlu0 %5840
        %5842 = vrot.lane.b32.xlu0 %v5839, 64
        %v5843 = vpop.permute.xlu0 %5842
        %v5845 = vsel %vm604, %v5841, 0
        %v5848 = vsel %vm604, %v5843, 0
        %5850 = vmatpush.bf16.xpose.msra.mxu0 0
        %5851 = vmatpush.bf16.xpose.msra.mxu0 0
        %5852 = vmatpush.bf16.xpose.msra.mxu0 0
        %5853 = vmatpush.bf16.xpose.msra.mxu0 0
        %5854 = vmatpush.bf16.xpose.msra.mxu0 0
        %5855 = vmatpush.bf16.xpose.msra.mxu0 0
        %5856 = vmatpush.bf16.xpose.msra.mxu0 0
        %5857 = vmatpush.bf16.xpose.msra.mxu0 %v5848
        %5858 = vmatmul.bf16.gmra.mxu0 %v5845
        %v5859 = vpop.f32.mrf.mxu0
        %v5860 = vadd.f32 0.0, %v5859
        %v5861 = vpop.f32.mrf.mxu0
        %5862 = vdwg.mxu0
        %v5864 = vunpack.c.l.b16 %v5643
        %v5865 = vpack.c.b16 %v5864, %v5864
        %5866 = vrot.lane.b32.xlu0 %v5865, 96
        %v5867 = vpop.permute.xlu0 %5866
        %5868 = vrot.lane.b32.xlu0 %v5865, 64
        %v5869 = vpop.permute.xlu0 %5868
        %v5871 = vsel %vm604, %v5867, 0
        %v5874 = vsel %vm604, %v5869, 0
        %5876 = vmatpush.bf16.xpose.msra.mxu0 0
        %5877 = vmatpush.bf16.xpose.msra.mxu0 0
        %5878 = vmatpush.bf16.xpose.msra.mxu0 0
        %5879 = vmatpush.bf16.xpose.msra.mxu0 0
        %5880 = vmatpush.bf16.xpose.msra.mxu0 0
        %5881 = vmatpush.bf16.xpose.msra.mxu0 0
        %5882 = vmatpush.bf16.xpose.msra.mxu0 0
        %5883 = vmatpush.bf16.xpose.msra.mxu0 %v5874
        %5884 = vmatmul.bf16.gmra.mxu0 %v5871
        %v5885 = vpop.f32.mrf.mxu0
        %v5886 = vadd.f32 0.0, %v5885
        %v5887 = vpop.f32.mrf.mxu0
        %5888 = vdwg.mxu0
        %v5890 = vunpack.c.l.b16 %v5644
        %v5891 = vpack.c.b16 %v5890, %v5890
        %5892 = vrot.lane.b32.xlu0 %v5891, 96
        %v5893 = vpop.permute.xlu0 %5892
        %5894 = vrot.lane.b32.xlu0 %v5891, 64
        %v5895 = vpop.permute.xlu0 %5894
        %v5897 = vsel %vm604, %v5893, 0
        %v5900 = vsel %vm604, %v5895, 0
        %5902 = vmatpush.bf16.xpose.msra.mxu0 0
        %5903 = vmatpush.bf16.xpose.msra.mxu0 0
        %5904 = vmatpush.bf16.xpose.msra.mxu0 0
        %5905 = vmatpush.bf16.xpose.msra.mxu0 0
        %5906 = vmatpush.bf16.xpose.msra.mxu0 0
        %5907 = vmatpush.bf16.xpose.msra.mxu0 0
        %5908 = vmatpush.bf16.xpose.msra.mxu0 0
        %5909 = vmatpush.bf16.xpose.msra.mxu0 %v5900
        %5910 = vmatmul.bf16.gmra.mxu0 %v5897
        %v5911 = vpop.f32.mrf.mxu0
        %v5912 = vadd.f32 0.0, %v5911
        %v5913 = vpop.f32.mrf.mxu0
        %5914 = vdwg.mxu0
        %v5916 = vunpack.c.l.b16 %v5645
        %v5917 = vpack.c.b16 %v5916, %v5916
        %5918 = vrot.lane.b32.xlu0 %v5917, 96
        %v5919 = vpop.permute.xlu0 %5918
        %5920 = vrot.lane.b32.xlu0 %v5917, 64
        %v5921 = vpop.permute.xlu0 %5920
        %v5923 = vsel %vm604, %v5919, 0
        %v5926 = vsel %vm604, %v5921, 0
        %5928 = vmatpush.bf16.xpose.msra.mxu0 0
        %5929 = vmatpush.bf16.xpose.msra.mxu0 0
        %5930 = vmatpush.bf16.xpose.msra.mxu0 0
        %5931 = vmatpush.bf16.xpose.msra.mxu0 0
        %5932 = vmatpush.bf16.xpose.msra.mxu0 0
        %5933 = vmatpush.bf16.xpose.msra.mxu0 0
        %5934 = vmatpush.bf16.xpose.msra.mxu0 0
        %5935 = vmatpush.bf16.xpose.msra.mxu0 %v5926
        %5936 = vmatmul.bf16.gmra.mxu0 %v5923
        %v5937 = vpop.f32.mrf.mxu0
        %v5938 = vadd.f32 0.0, %v5937
        %v5939 = vpop.f32.mrf.mxu0
        %5940 = vdwg.mxu0
        %v5942 = vunpack.c.l.b16 %v5646
        %v5943 = vpack.c.b16 %v5942, %v5942
        %5944 = vrot.lane.b32.xlu0 %v5943, 96
        %v5945 = vpop.permute.xlu0 %5944
        %5946 = vrot.lane.b32.xlu0 %v5943, 64
        %v5947 = vpop.permute.xlu0 %5946
        %v5949 = vsel %vm604, %v5945, 0
        %v5952 = vsel %vm604, %v5947, 0
        %5954 = vmatpush.bf16.xpose.msra.mxu0 0
        %5955 = vmatpush.bf16.xpose.msra.mxu0 0
        %5956 = vmatpush.bf16.xpose.msra.mxu0 0
        %5957 = vmatpush.bf16.xpose.msra.mxu0 0
        %5958 = vmatpush.bf16.xpose.msra.mxu0 0
        %5959 = vmatpush.bf16.xpose.msra.mxu0 0
        %5960 = vmatpush.bf16.xpose.msra.mxu0 0
        %5961 = vmatpush.bf16.xpose.msra.mxu0 %v5952
        %5962 = vmatmul.bf16.gmra.mxu0 %v5949
        %v5963 = vpop.f32.mrf.mxu0
        %v5964 = vadd.f32 0.0, %v5963
        %v5965 = vpop.f32.mrf.mxu0
        %5966 = vdwg.mxu0
        %v5968 = vunpack.c.l.b16 %v5647
        %v5969 = vpack.c.b16 %v5968, %v5968
        %5970 = vrot.lane.b32.xlu0 %v5969, 96
        %v5971 = vpop.permute.xlu0 %5970
        %5972 = vrot.lane.b32.xlu0 %v5969, 64
        %v5973 = vpop.permute.xlu0 %5972
        %v5975 = vsel %vm604, %v5971, 0
        %v5978 = vsel %vm604, %v5973, 0
        %5980 = vmatpush.bf16.xpose.msra.mxu0 0
        %5981 = vmatpush.bf16.xpose.msra.mxu0 0
        %5982 = vmatpush.bf16.xpose.msra.mxu0 0
        %5983 = vmatpush.bf16.xpose.msra.mxu0 0
        %5984 = vmatpush.bf16.xpose.msra.mxu0 0
        %5985 = vmatpush.bf16.xpose.msra.mxu0 0
        %5986 = vmatpush.bf16.xpose.msra.mxu0 0
        %5987 = vmatpush.bf16.xpose.msra.mxu0 %v5978
        %5988 = vmatmul.bf16.gmra.mxu0 %v5975
        %v5989 = vpop.f32.mrf.mxu0
        %v5990 = vadd.f32 0.0, %v5989
        %v5991 = vpop.f32.mrf.mxu0
        %5992 = vdwg.mxu0
        %v5994 = vunpack.c.l.b16 %v5648
        %v5995 = vpack.c.b16 %v5994, %v5994
        %5996 = vrot.lane.b32.xlu0 %v5995, 96
        %v5997 = vpop.permute.xlu0 %5996
        %5998 = vrot.lane.b32.xlu0 %v5995, 64
        %v5999 = vpop.permute.xlu0 %5998
        %v6001 = vsel %vm604, %v5997, 0
        %v6004 = vsel %vm604, %v5999, 0
        %6006 = vmatpush.bf16.xpose.msra.mxu0 0
        %6007 = vmatpush.bf16.xpose.msra.mxu0 0
        %6008 = vmatpush.bf16.xpose.msra.mxu0 0
        %6009 = vmatpush.bf16.xpose.msra.mxu0 0
        %6010 = vmatpush.bf16.xpose.msra.mxu0 0
        %6011 = vmatpush.bf16.xpose.msra.mxu0 0
        %6012 = vmatpush.bf16.xpose.msra.mxu0 0
        %6013 = vmatpush.bf16.xpose.msra.mxu0 %v6004
        %6014 = vmatmul.bf16.gmra.mxu0 %v6001
        %v6015 = vpop.f32.mrf.mxu0
        %v6016 = vadd.f32 0.0, %v6015
        %v6017 = vpop.f32.mrf.mxu0
        %6018 = vdwg.mxu0
        %v6020 = vunpack.c.l.b16 %v5649
        %v6021 = vpack.c.b16 %v6020, %v6020
        %6022 = vrot.lane.b32.xlu0 %v6021, 96
        %v6023 = vpop.permute.xlu0 %6022
        %6024 = vrot.lane.b32.xlu0 %v6021, 64
        %v6025 = vpop.permute.xlu0 %6024
        %v6027 = vsel %vm604, %v6023, 0
        %v6030 = vsel %vm604, %v6025, 0
        %6032 = vmatpush.bf16.xpose.msra.mxu0 0
        %6033 = vmatpush.bf16.xpose.msra.mxu0 0
        %6034 = vmatpush.bf16.xpose.msra.mxu0 0
        %6035 = vmatpush.bf16.xpose.msra.mxu0 0
        %6036 = vmatpush.bf16.xpose.msra.mxu0 0
        %6037 = vmatpush.bf16.xpose.msra.mxu0 0
        %6038 = vmatpush.bf16.xpose.msra.mxu0 0
        %6039 = vmatpush.bf16.xpose.msra.mxu0 %v6030
        %6040 = vmatmul.bf16.gmra.mxu0 %v6027
        %v6041 = vpop.f32.mrf.mxu0
        %v6042 = vadd.f32 0.0, %v6041
        %v6043 = vpop.f32.mrf.mxu0
        %6044 = vdwg.mxu0
        %v6046 = vunpack.c.l.b16 %v5650
        %v6047 = vpack.c.b16 %v6046, %v6046
        %6048 = vrot.lane.b32.xlu0 %v6047, 96
        %v6049 = vpop.permute.xlu0 %6048
        %6050 = vrot.lane.b32.xlu0 %v6047, 64
        %v6051 = vpop.permute.xlu0 %6050
        %v6053 = vsel %vm604, %v6049, 0
        %v6056 = vsel %vm604, %v6051, 0
        %6058 = vmatpush.bf16.xpose.msra.mxu0 0
        %6059 = vmatpush.bf16.xpose.msra.mxu0 0
        %6060 = vmatpush.bf16.xpose.msra.mxu0 0
        %6061 = vmatpush.bf16.xpose.msra.mxu0 0
        %6062 = vmatpush.bf16.xpose.msra.mxu0 0
        %6063 = vmatpush.bf16.xpose.msra.mxu0 0
        %6064 = vmatpush.bf16.xpose.msra.mxu0 0
        %6065 = vmatpush.bf16.xpose.msra.mxu0 %v6056
        %6066 = vmatmul.bf16.gmra.mxu0 %v6053
        %v6067 = vpop.f32.mrf.mxu0
        %v6068 = vadd.f32 0.0, %v6067
        %v6069 = vpop.f32.mrf.mxu0
        %6070 = vdwg.mxu0
        %v6072 = vunpack.c.l.b16 %v5651
        %v6073 = vpack.c.b16 %v6072, %v6072
        %6074 = vrot.lane.b32.xlu0 %v6073, 96
        %v6075 = vpop.permute.xlu0 %6074
        %6076 = vrot.lane.b32.xlu0 %v6073, 64
        %v6077 = vpop.permute.xlu0 %6076
        %v6079 = vsel %vm604, %v6075, 0
        %v6082 = vsel %vm604, %v6077, 0
        %6084 = vmatpush.bf16.xpose.msra.mxu0 0
        %6085 = vmatpush.bf16.xpose.msra.mxu0 0
        %6086 = vmatpush.bf16.xpose.msra.mxu0 0
        %6087 = vmatpush.bf16.xpose.msra.mxu0 0
        %6088 = vmatpush.bf16.xpose.msra.mxu0 0
        %6089 = vmatpush.bf16.xpose.msra.mxu0 0
        %6090 = vmatpush.bf16.xpose.msra.mxu0 0
        %6091 = vmatpush.bf16.xpose.msra.mxu0 %v6082
        %6092 = vmatmul.bf16.gmra.mxu0 %v6079
        %v6093 = vpop.f32.mrf.mxu0
        %v6094 = vadd.f32 0.0, %v6093
        %v6095 = vpop.f32.mrf.mxu0
        %6096 = vdwg.mxu0
        %v6098 = vunpack.c.l.b16 %v5652
        %v6099 = vpack.c.b16 %v6098, %v6098
        %6100 = vrot.lane.b32.xlu0 %v6099, 96
        %v6101 = vpop.permute.xlu0 %6100
        %6102 = vrot.lane.b32.xlu0 %v6099, 64
        %v6103 = vpop.permute.xlu0 %6102
        %v6105 = vsel %vm604, %v6101, 0
        %v6108 = vsel %vm604, %v6103, 0
        %6110 = vmatpush.bf16.xpose.msra.mxu0 0
        %6111 = vmatpush.bf16.xpose.msra.mxu0 0
        %6112 = vmatpush.bf16.xpose.msra.mxu0 0
        %6113 = vmatpush.bf16.xpose.msra.mxu0 0
        %6114 = vmatpush.bf16.xpose.msra.mxu0 0
        %6115 = vmatpush.bf16.xpose.msra.mxu0 0
        %6116 = vmatpush.bf16.xpose.msra.mxu0 0
        %6117 = vmatpush.bf16.xpose.msra.mxu0 %v6108
        %6118 = vmatmul.bf16.gmra.mxu0 %v6105
        %v6119 = vpop.f32.mrf.mxu0
        %v6120 = vadd.f32 0.0, %v6119
        %v6121 = vpop.f32.mrf.mxu0
        %6122 = vdwg.mxu0
        %v6124 = vunpack.c.l.b16 %v5653
        %v6125 = vpack.c.b16 %v6124, %v6124
        %6126 = vrot.lane.b32.xlu0 %v6125, 96
        %v6127 = vpop.permute.xlu0 %6126
        %6128 = vrot.lane.b32.xlu0 %v6125, 64
        %v6129 = vpop.permute.xlu0 %6128
        %v6131 = vsel %vm604, %v6127, 0
        %v6134 = vsel %vm604, %v6129, 0
        %6136 = vmatpush.bf16.xpose.msra.mxu0 0
        %6137 = vmatpush.bf16.xpose.msra.mxu0 0
        %6138 = vmatpush.bf16.xpose.msra.mxu0 0
        %6139 = vmatpush.bf16.xpose.msra.mxu0 0
        %6140 = vmatpush.bf16.xpose.msra.mxu0 0
        %6141 = vmatpush.bf16.xpose.msra.mxu0 0
        %6142 = vmatpush.bf16.xpose.msra.mxu0 0
        %6143 = vmatpush.bf16.xpose.msra.mxu0 %v6134
        %6144 = vmatmul.bf16.gmra.mxu0 %v6131
        %v6145 = vpop.f32.mrf.mxu0
        %v6146 = vadd.f32 0.0, %v6145
        %v6147 = vpop.f32.mrf.mxu0
        %6148 = vdwg.mxu0
        %v6150 = vunpack.c.l.b16 %v5654
        %v6151 = vpack.c.b16 %v6150, %v6150
        %6152 = vrot.lane.b32.xlu0 %v6151, 96
        %v6153 = vpop.permute.xlu0 %6152
        %6154 = vrot.lane.b32.xlu0 %v6151, 64
        %v6155 = vpop.permute.xlu0 %6154
        %v6157 = vsel %vm604, %v6153, 0
        %v6160 = vsel %vm604, %v6155, 0
        %6162 = vmatpush.bf16.xpose.msra.mxu0 0
        %6163 = vmatpush.bf16.xpose.msra.mxu0 0
        %6164 = vmatpush.bf16.xpose.msra.mxu0 0
        %6165 = vmatpush.bf16.xpose.msra.mxu0 0
        %6166 = vmatpush.bf16.xpose.msra.mxu0 0
        %6167 = vmatpush.bf16.xpose.msra.mxu0 0
        %6168 = vmatpush.bf16.xpose.msra.mxu0 0
        %6169 = vmatpush.bf16.xpose.msra.mxu0 %v6160
        %6170 = vmatmul.bf16.gmra.mxu0 %v6157
        %v6171 = vpop.f32.mrf.mxu0
        %v6172 = vadd.f32 0.0, %v6171
        %v6173 = vpop.f32.mrf.mxu0
        %6174 = vdwg.mxu0
        %v6175 = vmul.f32 %v5678, 0.35355338
        %v6176 = vmul.f32 %v5704, 0.35355338
        %v6177 = vmul.f32 %v5730, 0.35355338
        %v6178 = vmul.f32 %v5756, 0.35355338
        %v6179 = vmul.f32 %v5782, 0.35355338
        %v6180 = vmul.f32 %v5808, 0.35355338
        %v6181 = vmul.f32 %v5834, 0.35355338
        %v6182 = vmul.f32 %v5860, 0.35355338
        %v6183 = vmul.f32 %v5886, 0.35355338
        %v6184 = vmul.f32 %v5912, 0.35355338
        %v6185 = vmul.f32 %v5938, 0.35355338
        %v6186 = vmul.f32 %v5964, 0.35355338
        %v6187 = vmul.f32 %v5990, 0.35355338
        %v6188 = vmul.f32 %v6016, 0.35355338
        %v6189 = vmul.f32 %v6042, 0.35355338
        %v6190 = vmul.f32 %v6068, 0.35355338
        %v6191 = vmul.f32 %v6094, 0.35355338
        %v6192 = vmul.f32 %v6120, 0.35355338
        %v6193 = vmul.f32 %v6146, 0.35355338
        %v6194 = vmul.f32 %v6172, 0.35355338
        %v6195 = vadd.f32 %v6175, %v367
        %v6196 = vadd.f32 %v6176, %v367
        %v6197 = vadd.f32 %v6177, %v367
        %v6198 = vadd.f32 %v6178, %v367
        %v6199 = vadd.f32 %v6179, %v367
        %v6200 = vadd.f32 %v6180, %v367
        %v6201 = vadd.f32 %v6181, %v367
        %v6202 = vadd.f32 %v6182, %v367
        %v6203 = vadd.f32 %v6183, %v367
        %v6204 = vadd.f32 %v6184, %v367
        %v6205 = vadd.f32 %v6185, %v367
        %v6206 = vadd.f32 %v6186, %v367
        %v6207 = vadd.f32 %v6187, %v367
        %v6208 = vadd.f32 %v6188, %v367
        %v6209 = vadd.f32 %v6189, %v367
        %v6210 = vadd.f32 %v6190, %v367
        %v6211 = vadd.f32 %v6191, %v367
        %v6212 = vadd.f32 %v6192, %v367
        %v6213 = vadd.f32 %v6193, %v367
        %v6214 = vadd.f32 %v6194, %v367
        %v6215 = vsel %vm604, %v6195, -inf
        %6216 = vmax.xlane.f32.xlu0 %v6215
        %v6217 = vpop.xlane.xlu0 %6216
        %v6218 = vsel %vm604, %v6196, -inf
        %6219 = vmax.xlane.f32.xlu0 %v6218
        %v6220 = vpop.xlane.xlu0 %6219
        %v6221 = vsel %vm604, %v6197, -inf
        %6222 = vmax.xlane.f32.xlu0 %v6221
        %v6223 = vpop.xlane.xlu0 %6222
        %v6224 = vsel %vm604, %v6198, -inf
        %6225 = vmax.xlane.f32.xlu0 %v6224
        %v6226 = vpop.xlane.xlu0 %6225
        %v6227 = vsel %vm604, %v6199, -inf
        %6228 = vmax.xlane.f32.xlu0 %v6227
        %v6229 = vpop.xlane.xlu0 %6228
        %v6230 = vsel %vm604, %v6200, -inf
        %6231 = vmax.xlane.f32.xlu0 %v6230
        %v6232 = vpop.xlane.xlu0 %6231
        %v6233 = vsel %vm604, %v6201, -inf
        %6234 = vmax.xlane.f32.xlu0 %v6233
        %v6235 = vpop.xlane.xlu0 %6234
        %v6236 = vsel %vm604, %v6202, -inf
        %6237 = vmax.xlane.f32.xlu0 %v6236
        %v6238 = vpop.xlane.xlu0 %6237
        %v6239 = vsel %vm604, %v6203, -inf
        %6240 = vmax.xlane.f32.xlu0 %v6239
        %v6241 = vpop.xlane.xlu0 %6240
        %v6242 = vsel %vm604, %v6204, -inf
        %6243 = vmax.xlane.f32.xlu0 %v6242
        %v6244 = vpop.xlane.xlu0 %6243
        %v6245 = vsel %vm604, %v6205, -inf
        %6246 = vmax.xlane.f32.xlu0 %v6245
        %v6247 = vpop.xlane.xlu0 %6246
        %v6248 = vsel %vm604, %v6206, -inf
        %6249 = vmax.xlane.f32.xlu0 %v6248
        %v6250 = vpop.xlane.xlu0 %6249
        %v6251 = vsel %vm604, %v6207, -inf
        %6252 = vmax.xlane.f32.xlu0 %v6251
        %v6253 = vpop.xlane.xlu0 %6252
        %v6254 = vsel %vm604, %v6208, -inf
        %6255 = vmax.xlane.f32.xlu0 %v6254
        %v6256 = vpop.xlane.xlu0 %6255
        %v6257 = vsel %vm604, %v6209, -inf
        %6258 = vmax.xlane.f32.xlu0 %v6257
        %v6259 = vpop.xlane.xlu0 %6258
        %v6260 = vsel %vm604, %v6210, -inf
        %6261 = vmax.xlane.f32.xlu0 %v6260
        %v6262 = vpop.xlane.xlu0 %6261
        %v6263 = vsel %vm604, %v6211, -inf
        %6264 = vmax.xlane.f32.xlu0 %v6263
        %v6265 = vpop.xlane.xlu0 %6264
        %v6266 = vsel %vm604, %v6212, -inf
        %6267 = vmax.xlane.f32.xlu0 %v6266
        %v6268 = vpop.xlane.xlu0 %6267
        %v6269 = vsel %vm604, %v6213, -inf
        %6270 = vmax.xlane.f32.xlu0 %v6269
        %v6271 = vpop.xlane.xlu0 %6270
        %v6272 = vsel %vm604, %v6214, -inf
        %6273 = vmax.xlane.f32.xlu0 %v6272
        %v6274 = vpop.xlane.xlu0 %6273
        %v6275 = vsub.f32 %v6195, %v6217
        %v6276 = vsub.f32 %v6196, %v6220
        %v6277 = vsub.f32 %v6197, %v6223
        %v6278 = vsub.f32 %v6198, %v6226
        %v6279 = vsub.f32 %v6199, %v6229
        %v6280 = vsub.f32 %v6200, %v6232
        %v6281 = vsub.f32 %v6201, %v6235
        %v6282 = vsub.f32 %v6202, %v6238
        %v6283 = vsub.f32 %v6203, %v6241
        %v6284 = vsub.f32 %v6204, %v6244
        %v6285 = vsub.f32 %v6205, %v6247
        %v6286 = vsub.f32 %v6206, %v6250
        %v6287 = vsub.f32 %v6207, %v6253
        %v6288 = vsub.f32 %v6208, %v6256
        %v6289 = vsub.f32 %v6209, %v6259
        %v6290 = vsub.f32 %v6210, %v6262
        %v6291 = vsub.f32 %v6211, %v6265
        %v6292 = vsub.f32 %v6212, %v6268
        %v6293 = vsub.f32 %v6213, %v6271
        %v6294 = vsub.f32 %v6214, %v6274
        %v6295 = vmul.f32 %v6275, 1.442695
        %v6296 = vpow.pop %v6295
        %v6297 = vmul.f32 %v6276, 1.442695
        %v6298 = vpow.pop %v6297
        %v6299 = vmul.f32 %v6277, 1.442695
        %v6300 = vpow.pop %v6299
        %v6301 = vmul.f32 %v6278, 1.442695
        %v6302 = vpow.pop %v6301
        %v6303 = vmul.f32 %v6279, 1.442695
        %v6304 = vpow.pop %v6303
        %v6305 = vmul.f32 %v6280, 1.442695
        %v6306 = vpow.pop %v6305
        %v6307 = vmul.f32 %v6281, 1.442695
        %v6308 = vpow.pop %v6307
        %v6309 = vmul.f32 %v6282, 1.442695
        %v6310 = vpow.pop %v6309
        %v6311 = vmul.f32 %v6283, 1.442695
        %v6312 = vpow.pop %v6311
        %v6313 = vmul.f32 %v6284, 1.442695
        %v6314 = vpow.pop %v6313
        %v6315 = vmul.f32 %v6285, 1.442695
        %v6316 = vpow.pop %v6315
        %v6317 = vmul.f32 %v6286, 1.442695
        %v6318 = vpow.pop %v6317
        %v6319 = vmul.f32 %v6287, 1.442695
        %v6320 = vpow.pop %v6319
        %v6321 = vmul.f32 %v6288, 1.442695
        %v6322 = vpow.pop %v6321
        %v6323 = vmul.f32 %v6289, 1.442695
        %v6324 = vpow.pop %v6323
        %v6325 = vmul.f32 %v6290, 1.442695
        %v6326 = vpow.pop %v6325
        %v6327 = vmul.f32 %v6291, 1.442695
        %v6328 = vpow.pop %v6327
        %v6329 = vmul.f32 %v6292, 1.442695
        %v6330 = vpow.pop %v6329
        %v6331 = vmul.f32 %v6293, 1.442695
        %v6332 = vpow.pop %v6331
        %v6333 = vmul.f32 %v6294, 1.442695
        %v6334 = vpow.pop %v6333
        %v6335 = vsel %vm604, %v6296, 0.0
        %6336 = vadd.xlane.f32.xlu0 %v6335
        %v6337 = vpop.xlane.xlu0 %6336
        %v6338 = vsel %vm604, %v6298, 0.0
        %6339 = vadd.xlane.f32.xlu0 %v6338
        %v6340 = vpop.xlane.xlu0 %6339
        %v6341 = vsel %vm604, %v6300, 0.0
        %6342 = vadd.xlane.f32.xlu0 %v6341
        %v6343 = vpop.xlane.xlu0 %6342
        %v6344 = vsel %vm604, %v6302, 0.0
        %6345 = vadd.xlane.f32.xlu0 %v6344
        %v6346 = vpop.xlane.xlu0 %6345
        %v6347 = vsel %vm604, %v6304, 0.0
        %6348 = vadd.xlane.f32.xlu0 %v6347
        %v6349 = vpop.xlane.xlu0 %6348
        %v6350 = vsel %vm604, %v6306, 0.0
        %6351 = vadd.xlane.f32.xlu0 %v6350
        %v6352 = vpop.xlane.xlu0 %6351
        %v6353 = vsel %vm604, %v6308, 0.0
        %6354 = vadd.xlane.f32.xlu0 %v6353
        %v6355 = vpop.xlane.xlu0 %6354
        %v6356 = vsel %vm604, %v6310, 0.0
        %6357 = vadd.xlane.f32.xlu0 %v6356
        %v6358 = vpop.xlane.xlu0 %6357
        %v6359 = vsel %vm604, %v6312, 0.0
        %6360 = vadd.xlane.f32.xlu0 %v6359
        %v6361 = vpop.xlane.xlu0 %6360
        %v6362 = vsel %vm604, %v6314, 0.0
        %6363 = vadd.xlane.f32.xlu0 %v6362
        %v6364 = vpop.xlane.xlu0 %6363
        %v6365 = vsel %vm604, %v6316, 0.0
        %6366 = vadd.xlane.f32.xlu0 %v6365
        %v6367 = vpop.xlane.xlu0 %6366
        %v6368 = vsel %vm604, %v6318, 0.0
        %6369 = vadd.xlane.f32.xlu0 %v6368
        %v6370 = vpop.xlane.xlu0 %6369
        %v6371 = vsel %vm604, %v6320, 0.0
        %6372 = vadd.xlane.f32.xlu0 %v6371
        %v6373 = vpop.xlane.xlu0 %6372
        %v6374 = vsel %vm604, %v6322, 0.0
        %6375 = vadd.xlane.f32.xlu0 %v6374
        %v6376 = vpop.xlane.xlu0 %6375
        %v6377 = vsel %vm604, %v6324, 0.0
        %6378 = vadd.xlane.f32.xlu0 %v6377
        %v6379 = vpop.xlane.xlu0 %6378
        %v6380 = vsel %vm604, %v6326, 0.0
        %6381 = vadd.xlane.f32.xlu0 %v6380
        %v6382 = vpop.xlane.xlu0 %6381
        %v6383 = vsel %vm604, %v6328, 0.0
        %6384 = vadd.xlane.f32.xlu0 %v6383
        %v6385 = vpop.xlane.xlu0 %6384
        %v6386 = vsel %vm604, %v6330, 0.0
        %6387 = vadd.xlane.f32.xlu0 %v6386
        %v6388 = vpop.xlane.xlu0 %6387
        %v6389 = vsel %vm604, %v6332, 0.0
        %6390 = vadd.xlane.f32.xlu0 %v6389
        %v6391 = vpop.xlane.xlu0 %6390
        %v6392 = vsel %vm604, %v6334, 0.0
        %6393 = vadd.xlane.f32.xlu0 %v6392
        %v6394 = vpop.xlane.xlu0 %6393
        %v6395 = vrcp.pop %v6337
        %v6396 = vrcp.pop %v6340
        %v6397 = vrcp.pop %v6343
        %v6398 = vrcp.pop %v6346
        %v6399 = vrcp.pop %v6349
        %v6400 = vrcp.pop %v6352
        %v6401 = vrcp.pop %v6355
        %v6402 = vrcp.pop %v6358
        %v6403 = vrcp.pop %v6361
        %v6404 = vrcp.pop %v6364
        %v6405 = vrcp.pop %v6367
        %v6406 = vrcp.pop %v6370
        %v6407 = vrcp.pop %v6373
        %v6408 = vrcp.pop %v6376
        %v6409 = vrcp.pop %v6379
        %v6410 = vrcp.pop %v6382
        %v6411 = vrcp.pop %v6385
        %v6412 = vrcp.pop %v6388
        %v6413 = vrcp.pop %v6391
        %v6414 = vrcp.pop %v6394
        %v6415 = vmul.f32 %v6296, %v6395
        %v6416 = vmul.f32 %v6298, %v6396
        %v6417 = vmul.f32 %v6300, %v6397
        %v6418 = vmul.f32 %v6302, %v6398
        %v6419 = vmul.f32 %v6304, %v6399
        %v6420 = vmul.f32 %v6306, %v6400
        %v6421 = vmul.f32 %v6308, %v6401
        %v6422 = vmul.f32 %v6310, %v6402
        %v6423 = vmul.f32 %v6312, %v6403
        %v6424 = vmul.f32 %v6314, %v6404
        %v6425 = vmul.f32 %v6316, %v6405
        %v6426 = vmul.f32 %v6318, %v6406
        %v6427 = vmul.f32 %v6320, %v6407
        %v6428 = vmul.f32 %v6322, %v6408
        %v6429 = vmul.f32 %v6324, %v6409
        %v6430 = vmul.f32 %v6326, %v6410
        %v6431 = vmul.f32 %v6328, %v6411
        %v6432 = vmul.f32 %v6330, %v6412
        %v6433 = vmul.f32 %v6332, %v6413
        %v6434 = vmul.f32 %v6334, %v6414
        %v6435 = vpack.c.bf16 %v6415, %v6415
        %v6436 = vpack.c.bf16 %v6416, %v6416
        %v6437 = vpack.c.bf16 %v6417, %v6417
        %v6438 = vpack.c.bf16 %v6418, %v6418
        %v6439 = vpack.c.bf16 %v6419, %v6419
        %v6440 = vpack.c.bf16 %v6420, %v6420
        %v6441 = vpack.c.bf16 %v6421, %v6421
        %v6442 = vpack.c.bf16 %v6422, %v6422
        %v6443 = vpack.c.bf16 %v6423, %v6423
        %v6444 = vpack.c.bf16 %v6424, %v6424
        %v6445 = vpack.c.bf16 %v6425, %v6425
        %v6446 = vpack.c.bf16 %v6426, %v6426
        %v6447 = vpack.c.bf16 %v6427, %v6427
        %v6448 = vpack.c.bf16 %v6428, %v6428
        %v6449 = vpack.c.bf16 %v6429, %v6429
        %v6450 = vpack.c.bf16 %v6430, %v6430
        %v6451 = vpack.c.bf16 %v6431, %v6431
        %v6452 = vpack.c.bf16 %v6432, %v6432
        %v6453 = vpack.c.bf16 %v6433, %v6433
        %v6454 = vpack.c.bf16 %v6434, %v6434
        %6455 = vrot.lane.b32.xlu0 %v5657, 88
        %v6456 = vpop.permute.xlu0 %6455
        %6457 = vrot.lane.b32.xlu0 %v5657, 56
        %v6458 = vpop.permute.xlu0 %6457
        %v6460 = vsel %vm604, %v6456, 0
        %v6463 = vsel %vm604, %v6458, 0
        %6465 = vmatpush.bf16.xpose.msra.mxu0 0
        %6466 = vmatpush.bf16.xpose.msra.mxu0 0
        %6467 = vmatpush.bf16.xpose.msra.mxu0 0
        %6468 = vmatpush.bf16.xpose.msra.mxu0 0
        %6469 = vmatpush.bf16.xpose.msra.mxu0 0
        %6470 = vmatpush.bf16.xpose.msra.mxu0 0
        %6471 = vmatpush.bf16.xpose.msra.mxu0 0
        %6472 = vmatpush.bf16.xpose.msra.mxu0 %v6463
        %6473 = vmatmul.bf16.gmra.mxu0 %v6460
        %v6474 = vpop.f32.mrf.mxu0
        %v6475 = vadd.f32 0.0, %v6474
        %v6476 = vpop.f32.mrf.mxu0
        %6477 = vdwg.mxu0
        %6478 = vrot.lane.b32.xlu0 %v5683, 88
        %v6479 = vpop.permute.xlu0 %6478
        %6480 = vrot.lane.b32.xlu0 %v5683, 56
        %v6481 = vpop.permute.xlu0 %6480
        %v6483 = vsel %vm604, %v6479, 0
        %v6486 = vsel %vm604, %v6481, 0
        %6488 = vmatpush.bf16.xpose.msra.mxu0 0
        %6489 = vmatpush.bf16.xpose.msra.mxu0 0
        %6490 = vmatpush.bf16.xpose.msra.mxu0 0
        %6491 = vmatpush.bf16.xpose.msra.mxu0 0
        %6492 = vmatpush.bf16.xpose.msra.mxu0 0
        %6493 = vmatpush.bf16.xpose.msra.mxu0 0
        %6494 = vmatpush.bf16.xpose.msra.mxu0 0
        %6495 = vmatpush.bf16.xpose.msra.mxu0 %v6486
        %6496 = vmatmul.bf16.gmra.mxu0 %v6483
        %v6497 = vpop.f32.mrf.mxu0
        %v6498 = vadd.f32 0.0, %v6497
        %v6499 = vpop.f32.mrf.mxu0
        %6500 = vdwg.mxu0
        %6501 = vrot.lane.b32.xlu0 %v5709, 88
        %v6502 = vpop.permute.xlu0 %6501
        %6503 = vrot.lane.b32.xlu0 %v5709, 56
        %v6504 = vpop.permute.xlu0 %6503
        %v6506 = vsel %vm604, %v6502, 0
        %v6509 = vsel %vm604, %v6504, 0
        %6511 = vmatpush.bf16.xpose.msra.mxu0 0
        %6512 = vmatpush.bf16.xpose.msra.mxu0 0
        %6513 = vmatpush.bf16.xpose.msra.mxu0 0
        %6514 = vmatpush.bf16.xpose.msra.mxu0 0
        %6515 = vmatpush.bf16.xpose.msra.mxu0 0
        %6516 = vmatpush.bf16.xpose.msra.mxu0 0
        %6517 = vmatpush.bf16.xpose.msra.mxu0 0
        %6518 = vmatpush.bf16.xpose.msra.mxu0 %v6509
        %6519 = vmatmul.bf16.gmra.mxu0 %v6506
        %v6520 = vpop.f32.mrf.mxu0
        %v6521 = vadd.f32 0.0, %v6520
        %v6522 = vpop.f32.mrf.mxu0
        %6523 = vdwg.mxu0
        %6524 = vrot.lane.b32.xlu0 %v5735, 88
        %v6525 = vpop.permute.xlu0 %6524
        %6526 = vrot.lane.b32.xlu0 %v5735, 56
        %v6527 = vpop.permute.xlu0 %6526
        %v6529 = vsel %vm604, %v6525, 0
        %v6532 = vsel %vm604, %v6527, 0
        %6534 = vmatpush.bf16.xpose.msra.mxu0 0
        %6535 = vmatpush.bf16.xpose.msra.mxu0 0
        %6536 = vmatpush.bf16.xpose.msra.mxu0 0
        %6537 = vmatpush.bf16.xpose.msra.mxu0 0
        %6538 = vmatpush.bf16.xpose.msra.mxu0 0
        %6539 = vmatpush.bf16.xpose.msra.mxu0 0
        %6540 = vmatpush.bf16.xpose.msra.mxu0 0
        %6541 = vmatpush.bf16.xpose.msra.mxu0 %v6532
        %6542 = vmatmul.bf16.gmra.mxu0 %v6529
        %v6543 = vpop.f32.mrf.mxu0
        %v6544 = vadd.f32 0.0, %v6543
        %v6545 = vpop.f32.mrf.mxu0
        %6546 = vdwg.mxu0
        %6547 = vrot.lane.b32.xlu0 %v5761, 88
        %v6548 = vpop.permute.xlu0 %6547
        %6549 = vrot.lane.b32.xlu0 %v5761, 56
        %v6550 = vpop.permute.xlu0 %6549
        %v6552 = vsel %vm604, %v6548, 0
        %v6555 = vsel %vm604, %v6550, 0
        %6557 = vmatpush.bf16.xpose.msra.mxu0 0
        %6558 = vmatpush.bf16.xpose.msra.mxu0 0
        %6559 = vmatpush.bf16.xpose.msra.mxu0 0
        %6560 = vmatpush.bf16.xpose.msra.mxu0 0
        %6561 = vmatpush.bf16.xpose.msra.mxu0 0
        %6562 = vmatpush.bf16.xpose.msra.mxu0 0
        %6563 = vmatpush.bf16.xpose.msra.mxu0 0
        %6564 = vmatpush.bf16.xpose.msra.mxu0 %v6555
        %6565 = vmatmul.bf16.gmra.mxu0 %v6552
        %v6566 = vpop.f32.mrf.mxu0
        %v6567 = vadd.f32 0.0, %v6566
        %v6568 = vpop.f32.mrf.mxu0
        %6569 = vdwg.mxu0
        %6570 = vrot.lane.b32.xlu0 %v5787, 88
        %v6571 = vpop.permute.xlu0 %6570
        %6572 = vrot.lane.b32.xlu0 %v5787, 56
        %v6573 = vpop.permute.xlu0 %6572
        %v6575 = vsel %vm604, %v6571, 0
        %v6578 = vsel %vm604, %v6573, 0
        %6580 = vmatpush.bf16.xpose.msra.mxu0 0
        %6581 = vmatpush.bf16.xpose.msra.mxu0 0
        %6582 = vmatpush.bf16.xpose.msra.mxu0 0
        %6583 = vmatpush.bf16.xpose.msra.mxu0 0
        %6584 = vmatpush.bf16.xpose.msra.mxu0 0
        %6585 = vmatpush.bf16.xpose.msra.mxu0 0
        %6586 = vmatpush.bf16.xpose.msra.mxu0 0
        %6587 = vmatpush.bf16.xpose.msra.mxu0 %v6578
        %6588 = vmatmul.bf16.gmra.mxu0 %v6575
        %v6589 = vpop.f32.mrf.mxu0
        %v6590 = vadd.f32 0.0, %v6589
        %v6591 = vpop.f32.mrf.mxu0
        %6592 = vdwg.mxu0
        %6593 = vrot.lane.b32.xlu0 %v5813, 88
        %v6594 = vpop.permute.xlu0 %6593
        %6595 = vrot.lane.b32.xlu0 %v5813, 56
        %v6596 = vpop.permute.xlu0 %6595
        %v6598 = vsel %vm604, %v6594, 0
        %v6601 = vsel %vm604, %v6596, 0
        %6603 = vmatpush.bf16.xpose.msra.mxu0 0
        %6604 = vmatpush.bf16.xpose.msra.mxu0 0
        %6605 = vmatpush.bf16.xpose.msra.mxu0 0
        %6606 = vmatpush.bf16.xpose.msra.mxu0 0
        %6607 = vmatpush.bf16.xpose.msra.mxu0 0
        %6608 = vmatpush.bf16.xpose.msra.mxu0 0
        %6609 = vmatpush.bf16.xpose.msra.mxu0 0
        %6610 = vmatpush.bf16.xpose.msra.mxu0 %v6601
        %6611 = vmatmul.bf16.gmra.mxu0 %v6598
        %v6612 = vpop.f32.mrf.mxu0
        %v6613 = vadd.f32 0.0, %v6612
        %v6614 = vpop.f32.mrf.mxu0
        %6615 = vdwg.mxu0
        %6616 = vrot.lane.b32.xlu0 %v5839, 88
        %v6617 = vpop.permute.xlu0 %6616
        %6618 = vrot.lane.b32.xlu0 %v5839, 56
        %v6619 = vpop.permute.xlu0 %6618
        %v6621 = vsel %vm604, %v6617, 0
        %v6624 = vsel %vm604, %v6619, 0
        %6626 = vmatpush.bf16.xpose.msra.mxu0 0
        %6627 = vmatpush.bf16.xpose.msra.mxu0 0
        %6628 = vmatpush.bf16.xpose.msra.mxu0 0
        %6629 = vmatpush.bf16.xpose.msra.mxu0 0
        %6630 = vmatpush.bf16.xpose.msra.mxu0 0
        %6631 = vmatpush.bf16.xpose.msra.mxu0 0
        %6632 = vmatpush.bf16.xpose.msra.mxu0 0
        %6633 = vmatpush.bf16.xpose.msra.mxu0 %v6624
        %6634 = vmatmul.bf16.gmra.mxu0 %v6621
        %v6635 = vpop.f32.mrf.mxu0
        %v6636 = vadd.f32 0.0, %v6635
        %v6637 = vpop.f32.mrf.mxu0
        %6638 = vdwg.mxu0
        %6639 = vrot.lane.b32.xlu0 %v5865, 88
        %v6640 = vpop.permute.xlu0 %6639
        %6641 = vrot.lane.b32.xlu0 %v5865, 56
        %v6642 = vpop.permute.xlu0 %6641
        %v6644 = vsel %vm604, %v6640, 0
        %v6647 = vsel %vm604, %v6642, 0
        %6649 = vmatpush.bf16.xpose.msra.mxu0 0
        %6650 = vmatpush.bf16.xpose.msra.mxu0 0
        %6651 = vmatpush.bf16.xpose.msra.mxu0 0
        %6652 = vmatpush.bf16.xpose.msra.mxu0 0
        %6653 = vmatpush.bf16.xpose.msra.mxu0 0
        %6654 = vmatpush.bf16.xpose.msra.mxu0 0
        %6655 = vmatpush.bf16.xpose.msra.mxu0 0
        %6656 = vmatpush.bf16.xpose.msra.mxu0 %v6647
        %6657 = vmatmul.bf16.gmra.mxu0 %v6644
        %v6658 = vpop.f32.mrf.mxu0
        %v6659 = vadd.f32 0.0, %v6658
        %v6660 = vpop.f32.mrf.mxu0
        %6661 = vdwg.mxu0
        %6662 = vrot.lane.b32.xlu0 %v5891, 88
        %v6663 = vpop.permute.xlu0 %6662
        %6664 = vrot.lane.b32.xlu0 %v5891, 56
        %v6665 = vpop.permute.xlu0 %6664
        %v6667 = vsel %vm604, %v6663, 0
        %v6670 = vsel %vm604, %v6665, 0
        %6672 = vmatpush.bf16.xpose.msra.mxu0 0
        %6673 = vmatpush.bf16.xpose.msra.mxu0 0
        %6674 = vmatpush.bf16.xpose.msra.mxu0 0
        %6675 = vmatpush.bf16.xpose.msra.mxu0 0
        %6676 = vmatpush.bf16.xpose.msra.mxu0 0
        %6677 = vmatpush.bf16.xpose.msra.mxu0 0
        %6678 = vmatpush.bf16.xpose.msra.mxu0 0
        %6679 = vmatpush.bf16.xpose.msra.mxu0 %v6670
        %6680 = vmatmul.bf16.gmra.mxu0 %v6667
        %v6681 = vpop.f32.mrf.mxu0
        %v6682 = vadd.f32 0.0, %v6681
        %v6683 = vpop.f32.mrf.mxu0
        %6684 = vdwg.mxu0
        %6685 = vrot.lane.b32.xlu0 %v5917, 88
        %v6686 = vpop.permute.xlu0 %6685
        %6687 = vrot.lane.b32.xlu0 %v5917, 56
        %v6688 = vpop.permute.xlu0 %6687
        %v6690 = vsel %vm604, %v6686, 0
        %v6693 = vsel %vm604, %v6688, 0
        %6695 = vmatpush.bf16.xpose.msra.mxu0 0
        %6696 = vmatpush.bf16.xpose.msra.mxu0 0
        %6697 = vmatpush.bf16.xpose.msra.mxu0 0
        %6698 = vmatpush.bf16.xpose.msra.mxu0 0
        %6699 = vmatpush.bf16.xpose.msra.mxu0 0
        %6700 = vmatpush.bf16.xpose.msra.mxu0 0
        %6701 = vmatpush.bf16.xpose.msra.mxu0 0
        %6702 = vmatpush.bf16.xpose.msra.mxu0 %v6693
        %6703 = vmatmul.bf16.gmra.mxu0 %v6690
        %v6704 = vpop.f32.mrf.mxu0
        %v6705 = vadd.f32 0.0, %v6704
        %v6706 = vpop.f32.mrf.mxu0
        %6707 = vdwg.mxu0
        %6708 = vrot.lane.b32.xlu0 %v5943, 88
        %v6709 = vpop.permute.xlu0 %6708
        %6710 = vrot.lane.b32.xlu0 %v5943, 56
        %v6711 = vpop.permute.xlu0 %6710
        %v6713 = vsel %vm604, %v6709, 0
        %v6716 = vsel %vm604, %v6711, 0
        %6718 = vmatpush.bf16.xpose.msra.mxu0 0
        %6719 = vmatpush.bf16.xpose.msra.mxu0 0
        %6720 = vmatpush.bf16.xpose.msra.mxu0 0
        %6721 = vmatpush.bf16.xpose.msra.mxu0 0
        %6722 = vmatpush.bf16.xpose.msra.mxu0 0
        %6723 = vmatpush.bf16.xpose.msra.mxu0 0
        %6724 = vmatpush.bf16.xpose.msra.mxu0 0
        %6725 = vmatpush.bf16.xpose.msra.mxu0 %v6716
        %6726 = vmatmul.bf16.gmra.mxu0 %v6713
        %v6727 = vpop.f32.mrf.mxu0
        %v6728 = vadd.f32 0.0, %v6727
        %v6729 = vpop.f32.mrf.mxu0
        %6730 = vdwg.mxu0
        %6731 = vrot.lane.b32.xlu0 %v5969, 88
        %v6732 = vpop.permute.xlu0 %6731
        %6733 = vrot.lane.b32.xlu0 %v5969, 56
        %v6734 = vpop.permute.xlu0 %6733
        %v6736 = vsel %vm604, %v6732, 0
        %v6739 = vsel %vm604, %v6734, 0
        %6741 = vmatpush.bf16.xpose.msra.mxu0 0
        %6742 = vmatpush.bf16.xpose.msra.mxu0 0
        %6743 = vmatpush.bf16.xpose.msra.mxu0 0
        %6744 = vmatpush.bf16.xpose.msra.mxu0 0
        %6745 = vmatpush.bf16.xpose.msra.mxu0 0
        %6746 = vmatpush.bf16.xpose.msra.mxu0 0
        %6747 = vmatpush.bf16.xpose.msra.mxu0 0
        %6748 = vmatpush.bf16.xpose.msra.mxu0 %v6739
        %6749 = vmatmul.bf16.gmra.mxu0 %v6736
        %v6750 = vpop.f32.mrf.mxu0
        %v6751 = vadd.f32 0.0, %v6750
        %v6752 = vpop.f32.mrf.mxu0
        %6753 = vdwg.mxu0
        %6754 = vrot.lane.b32.xlu0 %v5995, 88
        %v6755 = vpop.permute.xlu0 %6754
        %6756 = vrot.lane.b32.xlu0 %v5995, 56
        %v6757 = vpop.permute.xlu0 %6756
        %v6759 = vsel %vm604, %v6755, 0
        %v6762 = vsel %vm604, %v6757, 0
        %6764 = vmatpush.bf16.xpose.msra.mxu0 0
        %6765 = vmatpush.bf16.xpose.msra.mxu0 0
        %6766 = vmatpush.bf16.xpose.msra.mxu0 0
        %6767 = vmatpush.bf16.xpose.msra.mxu0 0
        %6768 = vmatpush.bf16.xpose.msra.mxu0 0
        %6769 = vmatpush.bf16.xpose.msra.mxu0 0
        %6770 = vmatpush.bf16.xpose.msra.mxu0 0
        %6771 = vmatpush.bf16.xpose.msra.mxu0 %v6762
        %6772 = vmatmul.bf16.gmra.mxu0 %v6759
        %v6773 = vpop.f32.mrf.mxu0
        %v6774 = vadd.f32 0.0, %v6773
        %v6775 = vpop.f32.mrf.mxu0
        %6776 = vdwg.mxu0
        %6777 = vrot.lane.b32.xlu0 %v6021, 88
        %v6778 = vpop.permute.xlu0 %6777
        %6779 = vrot.lane.b32.xlu0 %v6021, 56
        %v6780 = vpop.permute.xlu0 %6779
        %v6782 = vsel %vm604, %v6778, 0
        %v6785 = vsel %vm604, %v6780, 0
        %6787 = vmatpush.bf16.xpose.msra.mxu0 0
        %6788 = vmatpush.bf16.xpose.msra.mxu0 0
        %6789 = vmatpush.bf16.xpose.msra.mxu0 0
        %6790 = vmatpush.bf16.xpose.msra.mxu0 0
        %6791 = vmatpush.bf16.xpose.msra.mxu0 0
        %6792 = vmatpush.bf16.xpose.msra.mxu0 0
        %6793 = vmatpush.bf16.xpose.msra.mxu0 0
        %6794 = vmatpush.bf16.xpose.msra.mxu0 %v6785
        %6795 = vmatmul.bf16.gmra.mxu0 %v6782
        %v6796 = vpop.f32.mrf.mxu0
        %v6797 = vadd.f32 0.0, %v6796
        %v6798 = vpop.f32.mrf.mxu0
        %6799 = vdwg.mxu0
        %6800 = vrot.lane.b32.xlu0 %v6047, 88
        %v6801 = vpop.permute.xlu0 %6800
        %6802 = vrot.lane.b32.xlu0 %v6047, 56
        %v6803 = vpop.permute.xlu0 %6802
        %v6805 = vsel %vm604, %v6801, 0
        %v6808 = vsel %vm604, %v6803, 0
        %6810 = vmatpush.bf16.xpose.msra.mxu0 0
        %6811 = vmatpush.bf16.xpose.msra.mxu0 0
        %6812 = vmatpush.bf16.xpose.msra.mxu0 0
        %6813 = vmatpush.bf16.xpose.msra.mxu0 0
        %6814 = vmatpush.bf16.xpose.msra.mxu0 0
        %6815 = vmatpush.bf16.xpose.msra.mxu0 0
        %6816 = vmatpush.bf16.xpose.msra.mxu0 0
        %6817 = vmatpush.bf16.xpose.msra.mxu0 %v6808
        %6818 = vmatmul.bf16.gmra.mxu0 %v6805
        %v6819 = vpop.f32.mrf.mxu0
        %v6820 = vadd.f32 0.0, %v6819
        %v6821 = vpop.f32.mrf.mxu0
        %6822 = vdwg.mxu0
        %6823 = vrot.lane.b32.xlu0 %v6073, 88
        %v6824 = vpop.permute.xlu0 %6823
        %6825 = vrot.lane.b32.xlu0 %v6073, 56
        %v6826 = vpop.permute.xlu0 %6825
        %v6828 = vsel %vm604, %v6824, 0
        %v6831 = vsel %vm604, %v6826, 0
        %6833 = vmatpush.bf16.xpose.msra.mxu0 0
        %6834 = vmatpush.bf16.xpose.msra.mxu0 0
        %6835 = vmatpush.bf16.xpose.msra.mxu0 0
        %6836 = vmatpush.bf16.xpose.msra.mxu0 0
        %6837 = vmatpush.bf16.xpose.msra.mxu0 0
        %6838 = vmatpush.bf16.xpose.msra.mxu0 0
        %6839 = vmatpush.bf16.xpose.msra.mxu0 0
        %6840 = vmatpush.bf16.xpose.msra.mxu0 %v6831
        %6841 = vmatmul.bf16.gmra.mxu0 %v6828
        %v6842 = vpop.f32.mrf.mxu0
        %v6843 = vadd.f32 0.0, %v6842
        %v6844 = vpop.f32.mrf.mxu0
        %6845 = vdwg.mxu0
        %6846 = vrot.lane.b32.xlu0 %v6099, 88
        %v6847 = vpop.permute.xlu0 %6846
        %6848 = vrot.lane.b32.xlu0 %v6099, 56
        %v6849 = vpop.permute.xlu0 %6848
        %v6851 = vsel %vm604, %v6847, 0
        %v6854 = vsel %vm604, %v6849, 0
        %6856 = vmatpush.bf16.xpose.msra.mxu0 0
        %6857 = vmatpush.bf16.xpose.msra.mxu0 0
        %6858 = vmatpush.bf16.xpose.msra.mxu0 0
        %6859 = vmatpush.bf16.xpose.msra.mxu0 0
        %6860 = vmatpush.bf16.xpose.msra.mxu0 0
        %6861 = vmatpush.bf16.xpose.msra.mxu0 0
        %6862 = vmatpush.bf16.xpose.msra.mxu0 0
        %6863 = vmatpush.bf16.xpose.msra.mxu0 %v6854
        %6864 = vmatmul.bf16.gmra.mxu0 %v6851
        %v6865 = vpop.f32.mrf.mxu0
        %v6866 = vadd.f32 0.0, %v6865
        %v6867 = vpop.f32.mrf.mxu0
        %6868 = vdwg.mxu0
        %6869 = vrot.lane.b32.xlu0 %v6125, 88
        %v6870 = vpop.permute.xlu0 %6869
        %6871 = vrot.lane.b32.xlu0 %v6125, 56
        %v6872 = vpop.permute.xlu0 %6871
        %v6874 = vsel %vm604, %v6870, 0
        %v6877 = vsel %vm604, %v6872, 0
        %6879 = vmatpush.bf16.xpose.msra.mxu0 0
        %6880 = vmatpush.bf16.xpose.msra.mxu0 0
        %6881 = vmatpush.bf16.xpose.msra.mxu0 0
        %6882 = vmatpush.bf16.xpose.msra.mxu0 0
        %6883 = vmatpush.bf16.xpose.msra.mxu0 0
        %6884 = vmatpush.bf16.xpose.msra.mxu0 0
        %6885 = vmatpush.bf16.xpose.msra.mxu0 0
        %6886 = vmatpush.bf16.xpose.msra.mxu0 %v6877
        %6887 = vmatmul.bf16.gmra.mxu0 %v6874
        %v6888 = vpop.f32.mrf.mxu0
        %v6889 = vadd.f32 0.0, %v6888
        %v6890 = vpop.f32.mrf.mxu0
        %6891 = vdwg.mxu0
        %6892 = vrot.lane.b32.xlu0 %v6151, 88
        %v6893 = vpop.permute.xlu0 %6892
        %6894 = vrot.lane.b32.xlu0 %v6151, 56
        %v6895 = vpop.permute.xlu0 %6894
        %v6897 = vsel %vm604, %v6893, 0
        %v6900 = vsel %vm604, %v6895, 0
        %6902 = vmatpush.bf16.xpose.msra.mxu0 0
        %6903 = vmatpush.bf16.xpose.msra.mxu0 0
        %6904 = vmatpush.bf16.xpose.msra.mxu0 0
        %6905 = vmatpush.bf16.xpose.msra.mxu0 0
        %6906 = vmatpush.bf16.xpose.msra.mxu0 0
        %6907 = vmatpush.bf16.xpose.msra.mxu0 0
        %6908 = vmatpush.bf16.xpose.msra.mxu0 0
        %6909 = vmatpush.bf16.xpose.msra.mxu0 %v6900
        %6910 = vmatmul.bf16.gmra.mxu0 %v6897
        %v6911 = vpop.f32.mrf.mxu0
        %v6912 = vadd.f32 0.0, %v6911
        %v6913 = vpop.f32.mrf.mxu0
        %6914 = vdwg.mxu0
        %v6915 = vmul.f32 %v6475, 0.35355338
        %v6916 = vmul.f32 %v6498, 0.35355338
        %v6917 = vmul.f32 %v6521, 0.35355338
        %v6918 = vmul.f32 %v6544, 0.35355338
        %v6919 = vmul.f32 %v6567, 0.35355338
        %v6920 = vmul.f32 %v6590, 0.35355338
        %v6921 = vmul.f32 %v6613, 0.35355338
        %v6922 = vmul.f32 %v6636, 0.35355338
        %v6923 = vmul.f32 %v6659, 0.35355338
        %v6924 = vmul.f32 %v6682, 0.35355338
        %v6925 = vmul.f32 %v6705, 0.35355338
        %v6926 = vmul.f32 %v6728, 0.35355338
        %v6927 = vmul.f32 %v6751, 0.35355338
        %v6928 = vmul.f32 %v6774, 0.35355338
        %v6929 = vmul.f32 %v6797, 0.35355338
        %v6930 = vmul.f32 %v6820, 0.35355338
        %v6931 = vmul.f32 %v6843, 0.35355338
        %v6932 = vmul.f32 %v6866, 0.35355338
        %v6933 = vmul.f32 %v6889, 0.35355338
        %v6934 = vmul.f32 %v6912, 0.35355338
        %v6935 = vadd.f32 %v6915, %v367
        %v6936 = vadd.f32 %v6916, %v367
        %v6937 = vadd.f32 %v6917, %v367
        %v6938 = vadd.f32 %v6918, %v367
        %v6939 = vadd.f32 %v6919, %v367
        %v6940 = vadd.f32 %v6920, %v367
        %v6941 = vadd.f32 %v6921, %v367
        %v6942 = vadd.f32 %v6922, %v367
        %v6943 = vadd.f32 %v6923, %v367
        %v6944 = vadd.f32 %v6924, %v367
        %v6945 = vadd.f32 %v6925, %v367
        %v6946 = vadd.f32 %v6926, %v367
        %v6947 = vadd.f32 %v6927, %v367
        %v6948 = vadd.f32 %v6928, %v367
        %v6949 = vadd.f32 %v6929, %v367
        %v6950 = vadd.f32 %v6930, %v367
        %v6951 = vadd.f32 %v6931, %v367
        %v6952 = vadd.f32 %v6932, %v367
        %v6953 = vadd.f32 %v6933, %v367
        %v6954 = vadd.f32 %v6934, %v367
        %v6955 = vsel %vm604, %v6935, -inf
        %6956 = vmax.xlane.f32.xlu0 %v6955
        %v6957 = vpop.xlane.xlu0 %6956
        %v6958 = vsel %vm604, %v6936, -inf
        %6959 = vmax.xlane.f32.xlu0 %v6958
        %v6960 = vpop.xlane.xlu0 %6959
        %v6961 = vsel %vm604, %v6937, -inf
        %6962 = vmax.xlane.f32.xlu0 %v6961
        %v6963 = vpop.xlane.xlu0 %6962
        %v6964 = vsel %vm604, %v6938, -inf
        %6965 = vmax.xlane.f32.xlu0 %v6964
        %v6966 = vpop.xlane.xlu0 %6965
        %v6967 = vsel %vm604, %v6939, -inf
        %6968 = vmax.xlane.f32.xlu0 %v6967
        %v6969 = vpop.xlane.xlu0 %6968
        %v6970 = vsel %vm604, %v6940, -inf
        %6971 = vmax.xlane.f32.xlu0 %v6970
        %v6972 = vpop.xlane.xlu0 %6971
        %v6973 = vsel %vm604, %v6941, -inf
        %6974 = vmax.xlane.f32.xlu0 %v6973
        %v6975 = vpop.xlane.xlu0 %6974
        %v6976 = vsel %vm604, %v6942, -inf
        %6977 = vmax.xlane.f32.xlu0 %v6976
        %v6978 = vpop.xlane.xlu0 %6977
        %v6979 = vsel %vm604, %v6943, -inf
        %6980 = vmax.xlane.f32.xlu0 %v6979
        %v6981 = vpop.xlane.xlu0 %6980
        %v6982 = vsel %vm604, %v6944, -inf
        %6983 = vmax.xlane.f32.xlu0 %v6982
        %v6984 = vpop.xlane.xlu0 %6983
        %v6985 = vsel %vm604, %v6945, -inf
        %6986 = vmax.xlane.f32.xlu0 %v6985
        %v6987 = vpop.xlane.xlu0 %6986
        %v6988 = vsel %vm604, %v6946, -inf
        %6989 = vmax.xlane.f32.xlu0 %v6988
        %v6990 = vpop.xlane.xlu0 %6989
        %v6991 = vsel %vm604, %v6947, -inf
        %6992 = vmax.xlane.f32.xlu0 %v6991
        %v6993 = vpop.xlane.xlu0 %6992
        %v6994 = vsel %vm604, %v6948, -inf
        %6995 = vmax.xlane.f32.xlu0 %v6994
        %v6996 = vpop.xlane.xlu0 %6995
        %v6997 = vsel %vm604, %v6949, -inf
        %6998 = vmax.xlane.f32.xlu0 %v6997
        %v6999 = vpop.xlane.xlu0 %6998
        %v7000 = vsel %vm604, %v6950, -inf
        %7001 = vmax.xlane.f32.xlu0 %v7000
        %v7002 = vpop.xlane.xlu0 %7001
        %v7003 = vsel %vm604, %v6951, -inf
        %7004 = vmax.xlane.f32.xlu0 %v7003
        %v7005 = vpop.xlane.xlu0 %7004
        %v7006 = vsel %vm604, %v6952, -inf
        %7007 = vmax.xlane.f32.xlu0 %v7006
        %v7008 = vpop.xlane.xlu0 %7007
        %v7009 = vsel %vm604, %v6953, -inf
        %7010 = vmax.xlane.f32.xlu0 %v7009
        %v7011 = vpop.xlane.xlu0 %7010
        %v7012 = vsel %vm604, %v6954, -inf
        %7013 = vmax.xlane.f32.xlu0 %v7012
        %v7014 = vpop.xlane.xlu0 %7013
        %v7015 = vsub.f32 %v6935, %v6957
        %v7016 = vsub.f32 %v6936, %v6960
        %v7017 = vsub.f32 %v6937, %v6963
        %v7018 = vsub.f32 %v6938, %v6966
        %v7019 = vsub.f32 %v6939, %v6969
        %v7020 = vsub.f32 %v6940, %v6972
        %v7021 = vsub.f32 %v6941, %v6975
        %v7022 = vsub.f32 %v6942, %v6978
        %v7023 = vsub.f32 %v6943, %v6981
        %v7024 = vsub.f32 %v6944, %v6984
        %v7025 = vsub.f32 %v6945, %v6987
        %v7026 = vsub.f32 %v6946, %v6990
        %v7027 = vsub.f32 %v6947, %v6993
        %v7028 = vsub.f32 %v6948, %v6996
        %v7029 = vsub.f32 %v6949, %v6999
        %v7030 = vsub.f32 %v6950, %v7002
        %v7031 = vsub.f32 %v6951, %v7005
        %v7032 = vsub.f32 %v6952, %v7008
        %v7033 = vsub.f32 %v6953, %v7011
        %v7034 = vsub.f32 %v6954, %v7014
        %v7035 = vmul.f32 %v7015, 1.442695
        %v7036 = vpow.pop %v7035
        %v7037 = vmul.f32 %v7016, 1.442695
        %v7038 = vpow.pop %v7037
        %v7039 = vmul.f32 %v7017, 1.442695
        %v7040 = vpow.pop %v7039
        %v7041 = vmul.f32 %v7018, 1.442695
        %v7042 = vpow.pop %v7041
        %v7043 = vmul.f32 %v7019, 1.442695
        %v7044 = vpow.pop %v7043
        %v7045 = vmul.f32 %v7020, 1.442695
        %v7046 = vpow.pop %v7045
        %v7047 = vmul.f32 %v7021, 1.442695
        %v7048 = vpow.pop %v7047
        %v7049 = vmul.f32 %v7022, 1.442695
        %v7050 = vpow.pop %v7049
        %v7051 = vmul.f32 %v7023, 1.442695
        %v7052 = vpow.pop %v7051
        %v7053 = vmul.f32 %v7024, 1.442695
        %v7054 = vpow.pop %v7053
        %v7055 = vmul.f32 %v7025, 1.442695
        %v7056 = vpow.pop %v7055
        %v7057 = vmul.f32 %v7026, 1.442695
        %v7058 = vpow.pop %v7057
        %v7059 = vmul.f32 %v7027, 1.442695
        %v7060 = vpow.pop %v7059
        %v7061 = vmul.f32 %v7028, 1.442695
        %v7062 = vpow.pop %v7061
        %v7063 = vmul.f32 %v7029, 1.442695
        %v7064 = vpow.pop %v7063
        %v7065 = vmul.f32 %v7030, 1.442695
        %v7066 = vpow.pop %v7065
        %v7067 = vmul.f32 %v7031, 1.442695
        %v7068 = vpow.pop %v7067
        %v7069 = vmul.f32 %v7032, 1.442695
        %v7070 = vpow.pop %v7069
        %v7071 = vmul.f32 %v7033, 1.442695
        %v7072 = vpow.pop %v7071
        %v7073 = vmul.f32 %v7034, 1.442695
        %v7074 = vpow.pop %v7073
        %v7075 = vsel %vm604, %v7036, 0.0
        %7076 = vadd.xlane.f32.xlu0 %v7075
        %v7077 = vpop.xlane.xlu0 %7076
        %v7078 = vsel %vm604, %v7038, 0.0
        %7079 = vadd.xlane.f32.xlu0 %v7078
        %v7080 = vpop.xlane.xlu0 %7079
        %v7081 = vsel %vm604, %v7040, 0.0
        %7082 = vadd.xlane.f32.xlu0 %v7081
        %v7083 = vpop.xlane.xlu0 %7082
        %v7084 = vsel %vm604, %v7042, 0.0
        %7085 = vadd.xlane.f32.xlu0 %v7084
        %v7086 = vpop.xlane.xlu0 %7085
        %v7087 = vsel %vm604, %v7044, 0.0
        %7088 = vadd.xlane.f32.xlu0 %v7087
        %v7089 = vpop.xlane.xlu0 %7088
        %v7090 = vsel %vm604, %v7046, 0.0
        %7091 = vadd.xlane.f32.xlu0 %v7090
        %v7092 = vpop.xlane.xlu0 %7091
        %v7093 = vsel %vm604, %v7048, 0.0
        %7094 = vadd.xlane.f32.xlu0 %v7093
        %v7095 = vpop.xlane.xlu0 %7094
        %v7096 = vsel %vm604, %v7050, 0.0
        %7097 = vadd.xlane.f32.xlu0 %v7096
        %v7098 = vpop.xlane.xlu0 %7097
        %v7099 = vsel %vm604, %v7052, 0.0
        %7100 = vadd.xlane.f32.xlu0 %v7099
        %v7101 = vpop.xlane.xlu0 %7100
        %v7102 = vsel %vm604, %v7054, 0.0
        %7103 = vadd.xlane.f32.xlu0 %v7102
        %v7104 = vpop.xlane.xlu0 %7103
        %v7105 = vsel %vm604, %v7056, 0.0
        %7106 = vadd.xlane.f32.xlu0 %v7105
        %v7107 = vpop.xlane.xlu0 %7106
        %v7108 = vsel %vm604, %v7058, 0.0
        %7109 = vadd.xlane.f32.xlu0 %v7108
        %v7110 = vpop.xlane.xlu0 %7109
        %v7111 = vsel %vm604, %v7060, 0.0
        %7112 = vadd.xlane.f32.xlu0 %v7111
        %v7113 = vpop.xlane.xlu0 %7112
        %v7114 = vsel %vm604, %v7062, 0.0
        %7115 = vadd.xlane.f32.xlu0 %v7114
        %v7116 = vpop.xlane.xlu0 %7115
        %v7117 = vsel %vm604, %v7064, 0.0
        %7118 = vadd.xlane.f32.xlu0 %v7117
        %v7119 = vpop.xlane.xlu0 %7118
        %v7120 = vsel %vm604, %v7066, 0.0
        %7121 = vadd.xlane.f32.xlu0 %v7120
        %v7122 = vpop.xlane.xlu0 %7121
        %v7123 = vsel %vm604, %v7068, 0.0
        %7124 = vadd.xlane.f32.xlu0 %v7123
        %v7125 = vpop.xlane.xlu0 %7124
        %v7126 = vsel %vm604, %v7070, 0.0
        %7127 = vadd.xlane.f32.xlu0 %v7126
        %v7128 = vpop.xlane.xlu0 %7127
        %v7129 = vsel %vm604, %v7072, 0.0
        %7130 = vadd.xlane.f32.xlu0 %v7129
        %v7131 = vpop.xlane.xlu0 %7130
        %v7132 = vsel %vm604, %v7074, 0.0
        %7133 = vadd.xlane.f32.xlu0 %v7132
        %v7134 = vpop.xlane.xlu0 %7133
        %v7135 = vrcp.pop %v7077
        %v7136 = vrcp.pop %v7080
        %v7137 = vrcp.pop %v7083
        %v7138 = vrcp.pop %v7086
        %v7139 = vrcp.pop %v7089
        %v7140 = vrcp.pop %v7092
        %v7141 = vrcp.pop %v7095
        %v7142 = vrcp.pop %v7098
        %v7143 = vrcp.pop %v7101
        %v7144 = vrcp.pop %v7104
        %v7145 = vrcp.pop %v7107
        %v7146 = vrcp.pop %v7110
        %v7147 = vrcp.pop %v7113
        %v7148 = vrcp.pop %v7116
        %v7149 = vrcp.pop %v7119
        %v7150 = vrcp.pop %v7122
        %v7151 = vrcp.pop %v7125
        %v7152 = vrcp.pop %v7128
        %v7153 = vrcp.pop %v7131
        %v7154 = vrcp.pop %v7134
        %v7155 = vmul.f32 %v7036, %v7135
        %v7156 = vmul.f32 %v7038, %v7136
        %v7157 = vmul.f32 %v7040, %v7137
        %v7158 = vmul.f32 %v7042, %v7138
        %v7159 = vmul.f32 %v7044, %v7139
        %v7160 = vmul.f32 %v7046, %v7140
        %v7161 = vmul.f32 %v7048, %v7141
        %v7162 = vmul.f32 %v7050, %v7142
        %v7163 = vmul.f32 %v7052, %v7143
        %v7164 = vmul.f32 %v7054, %v7144
        %v7165 = vmul.f32 %v7056, %v7145
        %v7166 = vmul.f32 %v7058, %v7146
        %v7167 = vmul.f32 %v7060, %v7147
        %v7168 = vmul.f32 %v7062, %v7148
        %v7169 = vmul.f32 %v7064, %v7149
        %v7170 = vmul.f32 %v7066, %v7150
        %v7171 = vmul.f32 %v7068, %v7151
        %v7172 = vmul.f32 %v7070, %v7152
        %v7173 = vmul.f32 %v7072, %v7153
        %v7174 = vmul.f32 %v7074, %v7154
        %v7175 = vpack.c.bf16 %v7155, %v7155
        %v7176 = vpack.c.bf16 %v7156, %v7156
        %v7177 = vpack.c.bf16 %v7157, %v7157
        %v7178 = vpack.c.bf16 %v7158, %v7158
        %v7179 = vpack.c.bf16 %v7159, %v7159
        %v7180 = vpack.c.bf16 %v7160, %v7160
        %v7181 = vpack.c.bf16 %v7161, %v7161
        %v7182 = vpack.c.bf16 %v7162, %v7162
        %v7183 = vpack.c.bf16 %v7163, %v7163
        %v7184 = vpack.c.bf16 %v7164, %v7164
        %v7185 = vpack.c.bf16 %v7165, %v7165
        %v7186 = vpack.c.bf16 %v7166, %v7166
        %v7187 = vpack.c.bf16 %v7167, %v7167
        %v7188 = vpack.c.bf16 %v7168, %v7168
        %v7189 = vpack.c.bf16 %v7169, %v7169
        %v7190 = vpack.c.bf16 %v7170, %v7170
        %v7191 = vpack.c.bf16 %v7171, %v7171
        %v7192 = vpack.c.bf16 %v7172, %v7172
        %v7193 = vpack.c.bf16 %v7173, %v7173
        %v7194 = vpack.c.bf16 %v7174, %v7174
        %v7195 = vpack.c.bf16 %v5586, %v5586
        %v7196 = vpack.c.bf16 %v5588, %v5588
        %v7197 = vpack.c.bf16 %v5591, %v5591
        %v7198 = vpack.c.bf16 %v5593, %v5593
        %v7199 = vpack.c.bf16 %v5596, %v5596
        %v7200 = vpack.c.bf16 %v5598, %v5598
        %v7201 = vpack.c.bf16 %v5601, %v5601
        %v7202 = vpack.c.bf16 %v5603, %v5603
        %v7203 = vpack.c.bf16 %v5606, %v5606
        %v7204 = vpack.c.bf16 %v5608, %v5608
        %v7205 = vpack.c.bf16 %v5611, %v5611
        %v7206 = vpack.c.bf16 %v5613, %v5613
        %v7207 = vpack.c.bf16 %v5616, %v5616
        %v7208 = vpack.c.bf16 %v5618, %v5618
        %v7209 = vpack.c.bf16 %v5621, %v5621
        %v7210 = vpack.c.bf16 %v5623, %v5623
        %v7211 = vpack.c.bf16 %v5626, %v5626
        %v7212 = vpack.c.bf16 %v5628, %v5628
        %v7213 = vpack.c.bf16 %v5631, %v5631
        %v7214 = vpack.c.bf16 %v5633, %v5633
        %v7216 = vsel %vm604, %v7175, 0
        %v7219 = vsel %vm2161, %v7195, 0
        %7221 = vmatpush.bf16.msra.mxu0 0
        %7222 = vmatpush.bf16.msra.mxu0 0
        %7223 = vmatpush.bf16.msra.mxu0 0
        %7224 = vmatpush.bf16.msra.mxu0 0
        %7225 = vmatpush.bf16.msra.mxu0 0
        %7226 = vmatpush.bf16.msra.mxu0 0
        %7227 = vmatpush.bf16.msra.mxu0 0
        %7228 = vmatpush.bf16.msra.mxu0 %v7219
        %7229 = vmatmul.bf16.gmra.mxu0 %v7216
        %v7230 = vpop.f32.mrf.mxu0
        %v7231 = vadd.f32 0.0, %v7230
        %v7232 = vpop.f32.mrf.mxu0
        %7233 = vdwg.mxu0
        %v7235 = vsel %vm604, %v7176, 0
        %v7238 = vsel %vm2161, %v7196, 0
        %7240 = vmatpush.bf16.msra.mxu0 0
        %7241 = vmatpush.bf16.msra.mxu0 0
        %7242 = vmatpush.bf16.msra.mxu0 0
        %7243 = vmatpush.bf16.msra.mxu0 0
        %7244 = vmatpush.bf16.msra.mxu0 0
        %7245 = vmatpush.bf16.msra.mxu0 0
        %7246 = vmatpush.bf16.msra.mxu0 0
        %7247 = vmatpush.bf16.msra.mxu0 %v7238
        %7248 = vmatmul.bf16.gmra.mxu0 %v7235
        %v7249 = vpop.f32.mrf.mxu0
        %v7250 = vadd.f32 0.0, %v7249
        %v7251 = vpop.f32.mrf.mxu0
        %7252 = vdwg.mxu0
        %v7254 = vsel %vm604, %v7177, 0
        %v7257 = vsel %vm2161, %v7197, 0
        %7259 = vmatpush.bf16.msra.mxu0 0
        %7260 = vmatpush.bf16.msra.mxu0 0
        %7261 = vmatpush.bf16.msra.mxu0 0
        %7262 = vmatpush.bf16.msra.mxu0 0
        %7263 = vmatpush.bf16.msra.mxu0 0
        %7264 = vmatpush.bf16.msra.mxu0 0
        %7265 = vmatpush.bf16.msra.mxu0 0
        %7266 = vmatpush.bf16.msra.mxu0 %v7257
        %7267 = vmatmul.bf16.gmra.mxu0 %v7254
        %v7268 = vpop.f32.mrf.mxu0
        %v7269 = vadd.f32 0.0, %v7268
        %v7270 = vpop.f32.mrf.mxu0
        %7271 = vdwg.mxu0
        %v7273 = vsel %vm604, %v7178, 0
        %v7276 = vsel %vm2161, %v7198, 0
        %7278 = vmatpush.bf16.msra.mxu0 0
        %7279 = vmatpush.bf16.msra.mxu0 0
        %7280 = vmatpush.bf16.msra.mxu0 0
        %7281 = vmatpush.bf16.msra.mxu0 0
        %7282 = vmatpush.bf16.msra.mxu0 0
        %7283 = vmatpush.bf16.msra.mxu0 0
        %7284 = vmatpush.bf16.msra.mxu0 0
        %7285 = vmatpush.bf16.msra.mxu0 %v7276
        %7286 = vmatmul.bf16.gmra.mxu0 %v7273
        %v7287 = vpop.f32.mrf.mxu0
        %v7288 = vadd.f32 0.0, %v7287
        %v7289 = vpop.f32.mrf.mxu0
        %7290 = vdwg.mxu0
        %v7292 = vsel %vm604, %v7179, 0
        %v7295 = vsel %vm2161, %v7199, 0
        %7297 = vmatpush.bf16.msra.mxu0 0
        %7298 = vmatpush.bf16.msra.mxu0 0
        %7299 = vmatpush.bf16.msra.mxu0 0
        %7300 = vmatpush.bf16.msra.mxu0 0
        %7301 = vmatpush.bf16.msra.mxu0 0
        %7302 = vmatpush.bf16.msra.mxu0 0
        %7303 = vmatpush.bf16.msra.mxu0 0
        %7304 = vmatpush.bf16.msra.mxu0 %v7295
        %7305 = vmatmul.bf16.gmra.mxu0 %v7292
        %v7306 = vpop.f32.mrf.mxu0
        %v7307 = vadd.f32 0.0, %v7306
        %v7308 = vpop.f32.mrf.mxu0
        %7309 = vdwg.mxu0
        %v7311 = vsel %vm604, %v7180, 0
        %v7314 = vsel %vm2161, %v7200, 0
        %7316 = vmatpush.bf16.msra.mxu0 0
        %7317 = vmatpush.bf16.msra.mxu0 0
        %7318 = vmatpush.bf16.msra.mxu0 0
        %7319 = vmatpush.bf16.msra.mxu0 0
        %7320 = vmatpush.bf16.msra.mxu0 0
        %7321 = vmatpush.bf16.msra.mxu0 0
        %7322 = vmatpush.bf16.msra.mxu0 0
        %7323 = vmatpush.bf16.msra.mxu0 %v7314
        %7324 = vmatmul.bf16.gmra.mxu0 %v7311
        %v7325 = vpop.f32.mrf.mxu0
        %v7326 = vadd.f32 0.0, %v7325
        %v7327 = vpop.f32.mrf.mxu0
        %7328 = vdwg.mxu0
        %v7330 = vsel %vm604, %v7181, 0
        %v7333 = vsel %vm2161, %v7201, 0
        %7335 = vmatpush.bf16.msra.mxu0 0
        %7336 = vmatpush.bf16.msra.mxu0 0
        %7337 = vmatpush.bf16.msra.mxu0 0
        %7338 = vmatpush.bf16.msra.mxu0 0
        %7339 = vmatpush.bf16.msra.mxu0 0
        %7340 = vmatpush.bf16.msra.mxu0 0
        %7341 = vmatpush.bf16.msra.mxu0 0
        %7342 = vmatpush.bf16.msra.mxu0 %v7333
        %7343 = vmatmul.bf16.gmra.mxu0 %v7330
        %v7344 = vpop.f32.mrf.mxu0
        %v7345 = vadd.f32 0.0, %v7344
        %v7346 = vpop.f32.mrf.mxu0
        %7347 = vdwg.mxu0
        %v7349 = vsel %vm604, %v7182, 0
        %v7352 = vsel %vm2161, %v7202, 0
        %7354 = vmatpush.bf16.msra.mxu0 0
        %7355 = vmatpush.bf16.msra.mxu0 0
        %7356 = vmatpush.bf16.msra.mxu0 0
        %7357 = vmatpush.bf16.msra.mxu0 0
        %7358 = vmatpush.bf16.msra.mxu0 0
        %7359 = vmatpush.bf16.msra.mxu0 0
        %7360 = vmatpush.bf16.msra.mxu0 0
        %7361 = vmatpush.bf16.msra.mxu0 %v7352
        %7362 = vmatmul.bf16.gmra.mxu0 %v7349
        %v7363 = vpop.f32.mrf.mxu0
        %v7364 = vadd.f32 0.0, %v7363
        %v7365 = vpop.f32.mrf.mxu0
        %7366 = vdwg.mxu0
        %v7368 = vsel %vm604, %v7183, 0
        %v7371 = vsel %vm2161, %v7203, 0
        %7373 = vmatpush.bf16.msra.mxu0 0
        %7374 = vmatpush.bf16.msra.mxu0 0
        %7375 = vmatpush.bf16.msra.mxu0 0
        %7376 = vmatpush.bf16.msra.mxu0 0
        %7377 = vmatpush.bf16.msra.mxu0 0
        %7378 = vmatpush.bf16.msra.mxu0 0
        %7379 = vmatpush.bf16.msra.mxu0 0
        %7380 = vmatpush.bf16.msra.mxu0 %v7371
        %7381 = vmatmul.bf16.gmra.mxu0 %v7368
        %v7382 = vpop.f32.mrf.mxu0
        %v7383 = vadd.f32 0.0, %v7382
        %v7384 = vpop.f32.mrf.mxu0
        %7385 = vdwg.mxu0
        %v7387 = vsel %vm604, %v7184, 0
        %v7390 = vsel %vm2161, %v7204, 0
        %7392 = vmatpush.bf16.msra.mxu0 0
        %7393 = vmatpush.bf16.msra.mxu0 0
        %7394 = vmatpush.bf16.msra.mxu0 0
        %7395 = vmatpush.bf16.msra.mxu0 0
        %7396 = vmatpush.bf16.msra.mxu0 0
        %7397 = vmatpush.bf16.msra.mxu0 0
        %7398 = vmatpush.bf16.msra.mxu0 0
        %7399 = vmatpush.bf16.msra.mxu0 %v7390
        %7400 = vmatmul.bf16.gmra.mxu0 %v7387
        %v7401 = vpop.f32.mrf.mxu0
        %v7402 = vadd.f32 0.0, %v7401
        %v7403 = vpop.f32.mrf.mxu0
        %7404 = vdwg.mxu0
        %v7406 = vsel %vm604, %v7185, 0
        %v7409 = vsel %vm2161, %v7205, 0
        %7411 = vmatpush.bf16.msra.mxu0 0
        %7412 = vmatpush.bf16.msra.mxu0 0
        %7413 = vmatpush.bf16.msra.mxu0 0
        %7414 = vmatpush.bf16.msra.mxu0 0
        %7415 = vmatpush.bf16.msra.mxu0 0
        %7416 = vmatpush.bf16.msra.mxu0 0
        %7417 = vmatpush.bf16.msra.mxu0 0
        %7418 = vmatpush.bf16.msra.mxu0 %v7409
        %7419 = vmatmul.bf16.gmra.mxu0 %v7406
        %v7420 = vpop.f32.mrf.mxu0
        %v7421 = vadd.f32 0.0, %v7420
        %v7422 = vpop.f32.mrf.mxu0
        %7423 = vdwg.mxu0
        %v7425 = vsel %vm604, %v7186, 0
        %v7428 = vsel %vm2161, %v7206, 0
        %7430 = vmatpush.bf16.msra.mxu0 0
        %7431 = vmatpush.bf16.msra.mxu0 0
        %7432 = vmatpush.bf16.msra.mxu0 0
        %7433 = vmatpush.bf16.msra.mxu0 0
        %7434 = vmatpush.bf16.msra.mxu0 0
        %7435 = vmatpush.bf16.msra.mxu0 0
        %7436 = vmatpush.bf16.msra.mxu0 0
        %7437 = vmatpush.bf16.msra.mxu0 %v7428
        %7438 = vmatmul.bf16.gmra.mxu0 %v7425
        %v7439 = vpop.f32.mrf.mxu0
        %v7440 = vadd.f32 0.0, %v7439
        %v7441 = vpop.f32.mrf.mxu0
        %7442 = vdwg.mxu0
        %v7444 = vsel %vm604, %v7187, 0
        %v7447 = vsel %vm2161, %v7207, 0
        %7449 = vmatpush.bf16.msra.mxu0 0
        %7450 = vmatpush.bf16.msra.mxu0 0
        %7451 = vmatpush.bf16.msra.mxu0 0
        %7452 = vmatpush.bf16.msra.mxu0 0
        %7453 = vmatpush.bf16.msra.mxu0 0
        %7454 = vmatpush.bf16.msra.mxu0 0
        %7455 = vmatpush.bf16.msra.mxu0 0
        %7456 = vmatpush.bf16.msra.mxu0 %v7447
        %7457 = vmatmul.bf16.gmra.mxu0 %v7444
        %v7458 = vpop.f32.mrf.mxu0
        %v7459 = vadd.f32 0.0, %v7458
        %v7460 = vpop.f32.mrf.mxu0
        %7461 = vdwg.mxu0
        %v7463 = vsel %vm604, %v7188, 0
        %v7466 = vsel %vm2161, %v7208, 0
        %7468 = vmatpush.bf16.msra.mxu0 0
        %7469 = vmatpush.bf16.msra.mxu0 0
        %7470 = vmatpush.bf16.msra.mxu0 0
        %7471 = vmatpush.bf16.msra.mxu0 0
        %7472 = vmatpush.bf16.msra.mxu0 0
        %7473 = vmatpush.bf16.msra.mxu0 0
        %7474 = vmatpush.bf16.msra.mxu0 0
        %7475 = vmatpush.bf16.msra.mxu0 %v7466
        %7476 = vmatmul.bf16.gmra.mxu0 %v7463
        %v7477 = vpop.f32.mrf.mxu0
        %v7478 = vadd.f32 0.0, %v7477
        %v7479 = vpop.f32.mrf.mxu0
        %7480 = vdwg.mxu0
        %v7482 = vsel %vm604, %v7189, 0
        %v7485 = vsel %vm2161, %v7209, 0
        %7487 = vmatpush.bf16.msra.mxu0 0
        %7488 = vmatpush.bf16.msra.mxu0 0
        %7489 = vmatpush.bf16.msra.mxu0 0
        %7490 = vmatpush.bf16.msra.mxu0 0
        %7491 = vmatpush.bf16.msra.mxu0 0
        %7492 = vmatpush.bf16.msra.mxu0 0
        %7493 = vmatpush.bf16.msra.mxu0 0
        %7494 = vmatpush.bf16.msra.mxu0 %v7485
        %7495 = vmatmul.bf16.gmra.mxu0 %v7482
        %v7496 = vpop.f32.mrf.mxu0
        %v7497 = vadd.f32 0.0, %v7496
        %v7498 = vpop.f32.mrf.mxu0
        %7499 = vdwg.mxu0
        %v7501 = vsel %vm604, %v7190, 0
        %v7504 = vsel %vm2161, %v7210, 0
        %7506 = vmatpush.bf16.msra.mxu0 0
        %7507 = vmatpush.bf16.msra.mxu0 0
        %7508 = vmatpush.bf16.msra.mxu0 0
        %7509 = vmatpush.bf16.msra.mxu0 0
        %7510 = vmatpush.bf16.msra.mxu0 0
        %7511 = vmatpush.bf16.msra.mxu0 0
        %7512 = vmatpush.bf16.msra.mxu0 0
        %7513 = vmatpush.bf16.msra.mxu0 %v7504
        %7514 = vmatmul.bf16.gmra.mxu0 %v7501
        %v7515 = vpop.f32.mrf.mxu0
        %v7516 = vadd.f32 0.0, %v7515
        %v7517 = vpop.f32.mrf.mxu0
        %7518 = vdwg.mxu0
        %v7520 = vsel %vm604, %v7191, 0
        %v7523 = vsel %vm2161, %v7211, 0
        %7525 = vmatpush.bf16.msra.mxu0 0
        %7526 = vmatpush.bf16.msra.mxu0 0
        %7527 = vmatpush.bf16.msra.mxu0 0
        %7528 = vmatpush.bf16.msra.mxu0 0
        %7529 = vmatpush.bf16.msra.mxu0 0
        %7530 = vmatpush.bf16.msra.mxu0 0
        %7531 = vmatpush.bf16.msra.mxu0 0
        %7532 = vmatpush.bf16.msra.mxu0 %v7523
        %7533 = vmatmul.bf16.gmra.mxu0 %v7520
        %v7534 = vpop.f32.mrf.mxu0
        %v7535 = vadd.f32 0.0, %v7534
        %v7536 = vpop.f32.mrf.mxu0
        %7537 = vdwg.mxu0
        %v7539 = vsel %vm604, %v7192, 0
        %v7542 = vsel %vm2161, %v7212, 0
        %7544 = vmatpush.bf16.msra.mxu0 0
        %7545 = vmatpush.bf16.msra.mxu0 0
        %7546 = vmatpush.bf16.msra.mxu0 0
        %7547 = vmatpush.bf16.msra.mxu0 0
        %7548 = vmatpush.bf16.msra.mxu0 0
        %7549 = vmatpush.bf16.msra.mxu0 0
        %7550 = vmatpush.bf16.msra.mxu0 0
        %7551 = vmatpush.bf16.msra.mxu0 %v7542
        %7552 = vmatmul.bf16.gmra.mxu0 %v7539
        %v7553 = vpop.f32.mrf.mxu0
        %v7554 = vadd.f32 0.0, %v7553
        %v7555 = vpop.f32.mrf.mxu0
        %7556 = vdwg.mxu0
        %v7558 = vsel %vm604, %v7193, 0
        %v7561 = vsel %vm2161, %v7213, 0
        %7563 = vmatpush.bf16.msra.mxu0 0
        %7564 = vmatpush.bf16.msra.mxu0 0
        %7565 = vmatpush.bf16.msra.mxu0 0
        %7566 = vmatpush.bf16.msra.mxu0 0
        %7567 = vmatpush.bf16.msra.mxu0 0
        %7568 = vmatpush.bf16.msra.mxu0 0
        %7569 = vmatpush.bf16.msra.mxu0 0
        %7570 = vmatpush.bf16.msra.mxu0 %v7561
        %7571 = vmatmul.bf16.gmra.mxu0 %v7558
        %v7572 = vpop.f32.mrf.mxu0
        %v7573 = vadd.f32 0.0, %v7572
        %v7574 = vpop.f32.mrf.mxu0
        %7575 = vdwg.mxu0
        %v7577 = vsel %vm604, %v7194, 0
        %v7580 = vsel %vm2161, %v7214, 0
        %7582 = vmatpush.bf16.msra.mxu0 0
        %7583 = vmatpush.bf16.msra.mxu0 0
        %7584 = vmatpush.bf16.msra.mxu0 0
        %7585 = vmatpush.bf16.msra.mxu0 0
        %7586 = vmatpush.bf16.msra.mxu0 0
        %7587 = vmatpush.bf16.msra.mxu0 0
        %7588 = vmatpush.bf16.msra.mxu0 0
        %7589 = vmatpush.bf16.msra.mxu0 %v7580
        %7590 = vmatmul.bf16.gmra.mxu0 %v7577
        %v7591 = vpop.f32.mrf.mxu0
        %v7592 = vadd.f32 0.0, %v7591
        %v7593 = vpop.f32.mrf.mxu0
        %7594 = vdwg.mxu0
        %7595 = vrot.lane.b32.xlu0 %v5657, 32
        %v7596 = vpop.permute.xlu0 %7595
        %v7598 = vsel %vm604, %v6435, 0
        %v7601 = vsel %vm2161, %v7596, 0
        %7603 = vmatpush.bf16.msra.mxu0 0
        %7604 = vmatpush.bf16.msra.mxu0 0
        %7605 = vmatpush.bf16.msra.mxu0 0
        %7606 = vmatpush.bf16.msra.mxu0 0
        %7607 = vmatpush.bf16.msra.mxu0 0
        %7608 = vmatpush.bf16.msra.mxu0 0
        %7609 = vmatpush.bf16.msra.mxu0 0
        %7610 = vmatpush.bf16.msra.mxu0 %v7601
        %7611 = vmatmul.bf16.gmra.mxu0 %v7598
        %v7612 = vpop.f32.mrf.mxu0
        %v7613 = vadd.f32 %v7231, %v7612
        %v7614 = vpop.f32.mrf.mxu0
        %7615 = vdwg.mxu0
        %7616 = vrot.lane.b32.xlu0 %v5683, 32
        %v7617 = vpop.permute.xlu0 %7616
        %v7619 = vsel %vm604, %v6436, 0
        %v7622 = vsel %vm2161, %v7617, 0
        %7624 = vmatpush.bf16.msra.mxu0 0
        %7625 = vmatpush.bf16.msra.mxu0 0
        %7626 = vmatpush.bf16.msra.mxu0 0
        %7627 = vmatpush.bf16.msra.mxu0 0
        %7628 = vmatpush.bf16.msra.mxu0 0
        %7629 = vmatpush.bf16.msra.mxu0 0
        %7630 = vmatpush.bf16.msra.mxu0 0
        %7631 = vmatpush.bf16.msra.mxu0 %v7622
        %7632 = vmatmul.bf16.gmra.mxu0 %v7619
        %v7633 = vpop.f32.mrf.mxu0
        %v7634 = vadd.f32 %v7250, %v7633
        %v7635 = vpop.f32.mrf.mxu0
        %7636 = vdwg.mxu0
        %7637 = vrot.lane.b32.xlu0 %v5709, 32
        %v7638 = vpop.permute.xlu0 %7637
        %v7640 = vsel %vm604, %v6437, 0
        %v7643 = vsel %vm2161, %v7638, 0
        %7645 = vmatpush.bf16.msra.mxu0 0
        %7646 = vmatpush.bf16.msra.mxu0 0
        %7647 = vmatpush.bf16.msra.mxu0 0
        %7648 = vmatpush.bf16.msra.mxu0 0
        %7649 = vmatpush.bf16.msra.mxu0 0
        %7650 = vmatpush.bf16.msra.mxu0 0
        %7651 = vmatpush.bf16.msra.mxu0 0
        %7652 = vmatpush.bf16.msra.mxu0 %v7643
        %7653 = vmatmul.bf16.gmra.mxu0 %v7640
        %v7654 = vpop.f32.mrf.mxu0
        %v7655 = vadd.f32 %v7269, %v7654
        %v7656 = vpop.f32.mrf.mxu0
        %7657 = vdwg.mxu0
        %7658 = vrot.lane.b32.xlu0 %v5735, 32
        %v7659 = vpop.permute.xlu0 %7658
        %v7661 = vsel %vm604, %v6438, 0
        %v7664 = vsel %vm2161, %v7659, 0
        %7666 = vmatpush.bf16.msra.mxu0 0
        %7667 = vmatpush.bf16.msra.mxu0 0
        %7668 = vmatpush.bf16.msra.mxu0 0
        %7669 = vmatpush.bf16.msra.mxu0 0
        %7670 = vmatpush.bf16.msra.mxu0 0
        %7671 = vmatpush.bf16.msra.mxu0 0
        %7672 = vmatpush.bf16.msra.mxu0 0
        %7673 = vmatpush.bf16.msra.mxu0 %v7664
        %7674 = vmatmul.bf16.gmra.mxu0 %v7661
        %v7675 = vpop.f32.mrf.mxu0
        %v7676 = vadd.f32 %v7288, %v7675
        %v7677 = vpop.f32.mrf.mxu0
        %7678 = vdwg.mxu0
        %7679 = vrot.lane.b32.xlu0 %v5761, 32
        %v7680 = vpop.permute.xlu0 %7679
        %v7682 = vsel %vm604, %v6439, 0
        %v7685 = vsel %vm2161, %v7680, 0
        %7687 = vmatpush.bf16.msra.mxu0 0
        %7688 = vmatpush.bf16.msra.mxu0 0
        %7689 = vmatpush.bf16.msra.mxu0 0
        %7690 = vmatpush.bf16.msra.mxu0 0
        %7691 = vmatpush.bf16.msra.mxu0 0
        %7692 = vmatpush.bf16.msra.mxu0 0
        %7693 = vmatpush.bf16.msra.mxu0 0
        %7694 = vmatpush.bf16.msra.mxu0 %v7685
        %7695 = vmatmul.bf16.gmra.mxu0 %v7682
        %v7696 = vpop.f32.mrf.mxu0
        %v7697 = vadd.f32 %v7307, %v7696
        %v7698 = vpop.f32.mrf.mxu0
        %7699 = vdwg.mxu0
        %7700 = vrot.lane.b32.xlu0 %v5787, 32
        %v7701 = vpop.permute.xlu0 %7700
        %v7703 = vsel %vm604, %v6440, 0
        %v7706 = vsel %vm2161, %v7701, 0
        %7708 = vmatpush.bf16.msra.mxu0 0
        %7709 = vmatpush.bf16.msra.mxu0 0
        %7710 = vmatpush.bf16.msra.mxu0 0
        %7711 = vmatpush.bf16.msra.mxu0 0
        %7712 = vmatpush.bf16.msra.mxu0 0
        %7713 = vmatpush.bf16.msra.mxu0 0
        %7714 = vmatpush.bf16.msra.mxu0 0
        %7715 = vmatpush.bf16.msra.mxu0 %v7706
        %7716 = vmatmul.bf16.gmra.mxu0 %v7703
        %v7717 = vpop.f32.mrf.mxu0
        %v7718 = vadd.f32 %v7326, %v7717
        %v7719 = vpop.f32.mrf.mxu0
        %7720 = vdwg.mxu0
        %7721 = vrot.lane.b32.xlu0 %v5813, 32
        %v7722 = vpop.permute.xlu0 %7721
        %v7724 = vsel %vm604, %v6441, 0
        %v7727 = vsel %vm2161, %v7722, 0
        %7729 = vmatpush.bf16.msra.mxu0 0
        %7730 = vmatpush.bf16.msra.mxu0 0
        %7731 = vmatpush.bf16.msra.mxu0 0
        %7732 = vmatpush.bf16.msra.mxu0 0
        %7733 = vmatpush.bf16.msra.mxu0 0
        %7734 = vmatpush.bf16.msra.mxu0 0
        %7735 = vmatpush.bf16.msra.mxu0 0
        %7736 = vmatpush.bf16.msra.mxu0 %v7727
        %7737 = vmatmul.bf16.gmra.mxu0 %v7724
        %v7738 = vpop.f32.mrf.mxu0
        %v7739 = vadd.f32 %v7345, %v7738
        %v7740 = vpop.f32.mrf.mxu0
        %7741 = vdwg.mxu0
        %7742 = vrot.lane.b32.xlu0 %v5839, 32
        %v7743 = vpop.permute.xlu0 %7742
        %v7745 = vsel %vm604, %v6442, 0
        %v7748 = vsel %vm2161, %v7743, 0
        %7750 = vmatpush.bf16.msra.mxu0 0
        %7751 = vmatpush.bf16.msra.mxu0 0
        %7752 = vmatpush.bf16.msra.mxu0 0
        %7753 = vmatpush.bf16.msra.mxu0 0
        %7754 = vmatpush.bf16.msra.mxu0 0
        %7755 = vmatpush.bf16.msra.mxu0 0
        %7756 = vmatpush.bf16.msra.mxu0 0
        %7757 = vmatpush.bf16.msra.mxu0 %v7748
        %7758 = vmatmul.bf16.gmra.mxu0 %v7745
        %v7759 = vpop.f32.mrf.mxu0
        %v7760 = vadd.f32 %v7364, %v7759
        %v7761 = vpop.f32.mrf.mxu0
        %7762 = vdwg.mxu0
        %7763 = vrot.lane.b32.xlu0 %v5865, 32
        %v7764 = vpop.permute.xlu0 %7763
        %v7766 = vsel %vm604, %v6443, 0
        %v7769 = vsel %vm2161, %v7764, 0
        %7771 = vmatpush.bf16.msra.mxu0 0
        %7772 = vmatpush.bf16.msra.mxu0 0
        %7773 = vmatpush.bf16.msra.mxu0 0
        %7774 = vmatpush.bf16.msra.mxu0 0
        %7775 = vmatpush.bf16.msra.mxu0 0
        %7776 = vmatpush.bf16.msra.mxu0 0
        %7777 = vmatpush.bf16.msra.mxu0 0
        %7778 = vmatpush.bf16.msra.mxu0 %v7769
        %7779 = vmatmul.bf16.gmra.mxu0 %v7766
        %v7780 = vpop.f32.mrf.mxu0
        %v7781 = vadd.f32 %v7383, %v7780
        %v7782 = vpop.f32.mrf.mxu0
        %7783 = vdwg.mxu0
        %7784 = vrot.lane.b32.xlu0 %v5891, 32
        %v7785 = vpop.permute.xlu0 %7784
        %v7787 = vsel %vm604, %v6444, 0
        %v7790 = vsel %vm2161, %v7785, 0
        %7792 = vmatpush.bf16.msra.mxu0 0
        %7793 = vmatpush.bf16.msra.mxu0 0
        %7794 = vmatpush.bf16.msra.mxu0 0
        %7795 = vmatpush.bf16.msra.mxu0 0
        %7796 = vmatpush.bf16.msra.mxu0 0
        %7797 = vmatpush.bf16.msra.mxu0 0
        %7798 = vmatpush.bf16.msra.mxu0 0
        %7799 = vmatpush.bf16.msra.mxu0 %v7790
        %7800 = vmatmul.bf16.gmra.mxu0 %v7787
        %v7801 = vpop.f32.mrf.mxu0
        %v7802 = vadd.f32 %v7402, %v7801
        %v7803 = vpop.f32.mrf.mxu0
        %7804 = vdwg.mxu0
        %7805 = vrot.lane.b32.xlu0 %v5917, 32
        %v7806 = vpop.permute.xlu0 %7805
        %v7808 = vsel %vm604, %v6445, 0
        %v7811 = vsel %vm2161, %v7806, 0
        %7813 = vmatpush.bf16.msra.mxu0 0
        %7814 = vmatpush.bf16.msra.mxu0 0
        %7815 = vmatpush.bf16.msra.mxu0 0
        %7816 = vmatpush.bf16.msra.mxu0 0
        %7817 = vmatpush.bf16.msra.mxu0 0
        %7818 = vmatpush.bf16.msra.mxu0 0
        %7819 = vmatpush.bf16.msra.mxu0 0
        %7820 = vmatpush.bf16.msra.mxu0 %v7811
        %7821 = vmatmul.bf16.gmra.mxu0 %v7808
        %v7822 = vpop.f32.mrf.mxu0
        %v7823 = vadd.f32 %v7421, %v7822
        %v7824 = vpop.f32.mrf.mxu0
        %7825 = vdwg.mxu0
        %7826 = vrot.lane.b32.xlu0 %v5943, 32
        %v7827 = vpop.permute.xlu0 %7826
        %v7829 = vsel %vm604, %v6446, 0
        %v7832 = vsel %vm2161, %v7827, 0
        %7834 = vmatpush.bf16.msra.mxu0 0
        %7835 = vmatpush.bf16.msra.mxu0 0
        %7836 = vmatpush.bf16.msra.mxu0 0
        %7837 = vmatpush.bf16.msra.mxu0 0
        %7838 = vmatpush.bf16.msra.mxu0 0
        %7839 = vmatpush.bf16.msra.mxu0 0
        %7840 = vmatpush.bf16.msra.mxu0 0
        %7841 = vmatpush.bf16.msra.mxu0 %v7832
        %7842 = vmatmul.bf16.gmra.mxu0 %v7829
        %v7843 = vpop.f32.mrf.mxu0
        %v7844 = vadd.f32 %v7440, %v7843
        %v7845 = vpop.f32.mrf.mxu0
        %7846 = vdwg.mxu0
        %7847 = vrot.lane.b32.xlu0 %v5969, 32
        %v7848 = vpop.permute.xlu0 %7847
        %v7850 = vsel %vm604, %v6447, 0
        %v7853 = vsel %vm2161, %v7848, 0
        %7855 = vmatpush.bf16.msra.mxu0 0
        %7856 = vmatpush.bf16.msra.mxu0 0
        %7857 = vmatpush.bf16.msra.mxu0 0
        %7858 = vmatpush.bf16.msra.mxu0 0
        %7859 = vmatpush.bf16.msra.mxu0 0
        %7860 = vmatpush.bf16.msra.mxu0 0
        %7861 = vmatpush.bf16.msra.mxu0 0
        %7862 = vmatpush.bf16.msra.mxu0 %v7853
        %7863 = vmatmul.bf16.gmra.mxu0 %v7850
        %v7864 = vpop.f32.mrf.mxu0
        %v7865 = vadd.f32 %v7459, %v7864
        %v7866 = vpop.f32.mrf.mxu0
        %7867 = vdwg.mxu0
        %7868 = vrot.lane.b32.xlu0 %v5995, 32
        %v7869 = vpop.permute.xlu0 %7868
        %v7871 = vsel %vm604, %v6448, 0
        %v7874 = vsel %vm2161, %v7869, 0
        %7876 = vmatpush.bf16.msra.mxu0 0
        %7877 = vmatpush.bf16.msra.mxu0 0
        %7878 = vmatpush.bf16.msra.mxu0 0
        %7879 = vmatpush.bf16.msra.mxu0 0
        %7880 = vmatpush.bf16.msra.mxu0 0
        %7881 = vmatpush.bf16.msra.mxu0 0
        %7882 = vmatpush.bf16.msra.mxu0 0
        %7883 = vmatpush.bf16.msra.mxu0 %v7874
        %7884 = vmatmul.bf16.gmra.mxu0 %v7871
        %v7885 = vpop.f32.mrf.mxu0
        %v7886 = vadd.f32 %v7478, %v7885
        %v7887 = vpop.f32.mrf.mxu0
        %7888 = vdwg.mxu0
        %7889 = vrot.lane.b32.xlu0 %v6021, 32
        %v7890 = vpop.permute.xlu0 %7889
        %v7892 = vsel %vm604, %v6449, 0
        %v7895 = vsel %vm2161, %v7890, 0
        %7897 = vmatpush.bf16.msra.mxu0 0
        %7898 = vmatpush.bf16.msra.mxu0 0
        %7899 = vmatpush.bf16.msra.mxu0 0
        %7900 = vmatpush.bf16.msra.mxu0 0
        %7901 = vmatpush.bf16.msra.mxu0 0
        %7902 = vmatpush.bf16.msra.mxu0 0
        %7903 = vmatpush.bf16.msra.mxu0 0
        %7904 = vmatpush.bf16.msra.mxu0 %v7895
        %7905 = vmatmul.bf16.gmra.mxu0 %v7892
        %v7906 = vpop.f32.mrf.mxu0
        %v7907 = vadd.f32 %v7497, %v7906
        %v7908 = vpop.f32.mrf.mxu0
        %7909 = vdwg.mxu0
        %7910 = vrot.lane.b32.xlu0 %v6047, 32
        %v7911 = vpop.permute.xlu0 %7910
        %v7913 = vsel %vm604, %v6450, 0
        %v7916 = vsel %vm2161, %v7911, 0
        %7918 = vmatpush.bf16.msra.mxu0 0
        %7919 = vmatpush.bf16.msra.mxu0 0
        %7920 = vmatpush.bf16.msra.mxu0 0
        %7921 = vmatpush.bf16.msra.mxu0 0
        %7922 = vmatpush.bf16.msra.mxu0 0
        %7923 = vmatpush.bf16.msra.mxu0 0
        %7924 = vmatpush.bf16.msra.mxu0 0
        %7925 = vmatpush.bf16.msra.mxu0 %v7916
        %7926 = vmatmul.bf16.gmra.mxu0 %v7913
        %v7927 = vpop.f32.mrf.mxu0
        %v7928 = vadd.f32 %v7516, %v7927
        %v7929 = vpop.f32.mrf.mxu0
        %7930 = vdwg.mxu0
        %7931 = vrot.lane.b32.xlu0 %v6073, 32
        %v7932 = vpop.permute.xlu0 %7931
        %v7934 = vsel %vm604, %v6451, 0
        %v7937 = vsel %vm2161, %v7932, 0
        %7939 = vmatpush.bf16.msra.mxu0 0
        %7940 = vmatpush.bf16.msra.mxu0 0
        %7941 = vmatpush.bf16.msra.mxu0 0
        %7942 = vmatpush.bf16.msra.mxu0 0
        %7943 = vmatpush.bf16.msra.mxu0 0
        %7944 = vmatpush.bf16.msra.mxu0 0
        %7945 = vmatpush.bf16.msra.mxu0 0
        %7946 = vmatpush.bf16.msra.mxu0 %v7937
        %7947 = vmatmul.bf16.gmra.mxu0 %v7934
        %v7948 = vpop.f32.mrf.mxu0
        %v7949 = vadd.f32 %v7535, %v7948
        %v7950 = vpop.f32.mrf.mxu0
        %7951 = vdwg.mxu0
        %7952 = vrot.lane.b32.xlu0 %v6099, 32
        %v7953 = vpop.permute.xlu0 %7952
        %v7955 = vsel %vm604, %v6452, 0
        %v7958 = vsel %vm2161, %v7953, 0
        %7960 = vmatpush.bf16.msra.mxu0 0
        %7961 = vmatpush.bf16.msra.mxu0 0
        %7962 = vmatpush.bf16.msra.mxu0 0
        %7963 = vmatpush.bf16.msra.mxu0 0
        %7964 = vmatpush.bf16.msra.mxu0 0
        %7965 = vmatpush.bf16.msra.mxu0 0
        %7966 = vmatpush.bf16.msra.mxu0 0
        %7967 = vmatpush.bf16.msra.mxu0 %v7958
        %7968 = vmatmul.bf16.gmra.mxu0 %v7955
        %v7969 = vpop.f32.mrf.mxu0
        %v7970 = vadd.f32 %v7554, %v7969
        %v7971 = vpop.f32.mrf.mxu0
        %7972 = vdwg.mxu0
        %7973 = vrot.lane.b32.xlu0 %v6125, 32
        %v7974 = vpop.permute.xlu0 %7973
        %v7976 = vsel %vm604, %v6453, 0
        %v7979 = vsel %vm2161, %v7974, 0
        %7981 = vmatpush.bf16.msra.mxu0 0
        %7982 = vmatpush.bf16.msra.mxu0 0
        %7983 = vmatpush.bf16.msra.mxu0 0
        %7984 = vmatpush.bf16.msra.mxu0 0
        %7985 = vmatpush.bf16.msra.mxu0 0
        %7986 = vmatpush.bf16.msra.mxu0 0
        %7987 = vmatpush.bf16.msra.mxu0 0
        %7988 = vmatpush.bf16.msra.mxu0 %v7979
        %7989 = vmatmul.bf16.gmra.mxu0 %v7976
        %v7990 = vpop.f32.mrf.mxu0
        %v7991 = vadd.f32 %v7573, %v7990
        %v7992 = vpop.f32.mrf.mxu0
        %7993 = vdwg.mxu0
        %7994 = vrot.lane.b32.xlu0 %v6151, 32
        %v7995 = vpop.permute.xlu0 %7994
        %v7997 = vsel %vm604, %v6454, 0
        %v8000 = vsel %vm2161, %v7995, 0
        %8002 = vmatpush.bf16.msra.mxu0 0
        %8003 = vmatpush.bf16.msra.mxu0 0
        %8004 = vmatpush.bf16.msra.mxu0 0
        %8005 = vmatpush.bf16.msra.mxu0 0
        %8006 = vmatpush.bf16.msra.mxu0 0
        %8007 = vmatpush.bf16.msra.mxu0 0
        %8008 = vmatpush.bf16.msra.mxu0 0
        %8009 = vmatpush.bf16.msra.mxu0 %v8000
        %8010 = vmatmul.bf16.gmra.mxu0 %v7997
        %v8011 = vpop.f32.mrf.mxu0
        %v8012 = vadd.f32 %v7592, %v8011
        %v8013 = vpop.f32.mrf.mxu0
        %8014 = vdwg.mxu0
        %8015 = vrot.lane.b32.xlu0 %v5657, 80
        %v8016 = vpop.permute.xlu0 %8015
        %8017 = vrot.lane.b32.xlu0 %v5657, 48
        %v8018 = vpop.permute.xlu0 %8017
        %v8020 = vsel %vm604, %v8016, 0
        %v8023 = vsel %vm604, %v8018, 0
        %8025 = vmatpush.bf16.xpose.msra.mxu0 0
        %8026 = vmatpush.bf16.xpose.msra.mxu0 0
        %8027 = vmatpush.bf16.xpose.msra.mxu0 0
        %8028 = vmatpush.bf16.xpose.msra.mxu0 0
        %8029 = vmatpush.bf16.xpose.msra.mxu0 0
        %8030 = vmatpush.bf16.xpose.msra.mxu0 0
        %8031 = vmatpush.bf16.xpose.msra.mxu0 0
        %8032 = vmatpush.bf16.xpose.msra.mxu0 %v8023
        %8033 = vmatmul.bf16.gmra.mxu0 %v8020
        %v8034 = vpop.f32.mrf.mxu0
        %v8035 = vadd.f32 0.0, %v8034
        %v8036 = vpop.f32.mrf.mxu0
        %8037 = vdwg.mxu0
        %8038 = vrot.lane.b32.xlu0 %v5683, 80
        %v8039 = vpop.permute.xlu0 %8038
        %8040 = vrot.lane.b32.xlu0 %v5683, 48
        %v8041 = vpop.permute.xlu0 %8040
        %v8043 = vsel %vm604, %v8039, 0
        %v8046 = vsel %vm604, %v8041, 0
        %8048 = vmatpush.bf16.xpose.msra.mxu0 0
        %8049 = vmatpush.bf16.xpose.msra.mxu0 0
        %8050 = vmatpush.bf16.xpose.msra.mxu0 0
        %8051 = vmatpush.bf16.xpose.msra.mxu0 0
        %8052 = vmatpush.bf16.xpose.msra.mxu0 0
        %8053 = vmatpush.bf16.xpose.msra.mxu0 0
        %8054 = vmatpush.bf16.xpose.msra.mxu0 0
        %8055 = vmatpush.bf16.xpose.msra.mxu0 %v8046
        %8056 = vmatmul.bf16.gmra.mxu0 %v8043
        %v8057 = vpop.f32.mrf.mxu0
        %v8058 = vadd.f32 0.0, %v8057
        %v8059 = vpop.f32.mrf.mxu0
        %8060 = vdwg.mxu0
        %8061 = vrot.lane.b32.xlu0 %v5709, 80
        %v8062 = vpop.permute.xlu0 %8061
        %8063 = vrot.lane.b32.xlu0 %v5709, 48
        %v8064 = vpop.permute.xlu0 %8063
        %v8066 = vsel %vm604, %v8062, 0
        %v8069 = vsel %vm604, %v8064, 0
        %8071 = vmatpush.bf16.xpose.msra.mxu0 0
        %8072 = vmatpush.bf16.xpose.msra.mxu0 0
        %8073 = vmatpush.bf16.xpose.msra.mxu0 0
        %8074 = vmatpush.bf16.xpose.msra.mxu0 0
        %8075 = vmatpush.bf16.xpose.msra.mxu0 0
        %8076 = vmatpush.bf16.xpose.msra.mxu0 0
        %8077 = vmatpush.bf16.xpose.msra.mxu0 0
        %8078 = vmatpush.bf16.xpose.msra.mxu0 %v8069
        %8079 = vmatmul.bf16.gmra.mxu0 %v8066
        %v8080 = vpop.f32.mrf.mxu0
        %v8081 = vadd.f32 0.0, %v8080
        %v8082 = vpop.f32.mrf.mxu0
        %8083 = vdwg.mxu0
        %8084 = vrot.lane.b32.xlu0 %v5735, 80
        %v8085 = vpop.permute.xlu0 %8084
        %8086 = vrot.lane.b32.xlu0 %v5735, 48
        %v8087 = vpop.permute.xlu0 %8086
        %v8089 = vsel %vm604, %v8085, 0
        %v8092 = vsel %vm604, %v8087, 0
        %8094 = vmatpush.bf16.xpose.msra.mxu0 0
        %8095 = vmatpush.bf16.xpose.msra.mxu0 0
        %8096 = vmatpush.bf16.xpose.msra.mxu0 0
        %8097 = vmatpush.bf16.xpose.msra.mxu0 0
        %8098 = vmatpush.bf16.xpose.msra.mxu0 0
        %8099 = vmatpush.bf16.xpose.msra.mxu0 0
        %8100 = vmatpush.bf16.xpose.msra.mxu0 0
        %8101 = vmatpush.bf16.xpose.msra.mxu0 %v8092
        %8102 = vmatmul.bf16.gmra.mxu0 %v8089
        %v8103 = vpop.f32.mrf.mxu0
        %v8104 = vadd.f32 0.0, %v8103
        %v8105 = vpop.f32.mrf.mxu0
        %8106 = vdwg.mxu0
        %8107 = vrot.lane.b32.xlu0 %v5761, 80
        %v8108 = vpop.permute.xlu0 %8107
        %8109 = vrot.lane.b32.xlu0 %v5761, 48
        %v8110 = vpop.permute.xlu0 %8109
        %v8112 = vsel %vm604, %v8108, 0
        %v8115 = vsel %vm604, %v8110, 0
        %8117 = vmatpush.bf16.xpose.msra.mxu0 0
        %8118 = vmatpush.bf16.xpose.msra.mxu0 0
        %8119 = vmatpush.bf16.xpose.msra.mxu0 0
        %8120 = vmatpush.bf16.xpose.msra.mxu0 0
        %8121 = vmatpush.bf16.xpose.msra.mxu0 0
        %8122 = vmatpush.bf16.xpose.msra.mxu0 0
        %8123 = vmatpush.bf16.xpose.msra.mxu0 0
        %8124 = vmatpush.bf16.xpose.msra.mxu0 %v8115
        %8125 = vmatmul.bf16.gmra.mxu0 %v8112
        %v8126 = vpop.f32.mrf.mxu0
        %v8127 = vadd.f32 0.0, %v8126
        %v8128 = vpop.f32.mrf.mxu0
        %8129 = vdwg.mxu0
        %8130 = vrot.lane.b32.xlu0 %v5787, 80
        %v8131 = vpop.permute.xlu0 %8130
        %8132 = vrot.lane.b32.xlu0 %v5787, 48
        %v8133 = vpop.permute.xlu0 %8132
        %v8135 = vsel %vm604, %v8131, 0
        %v8138 = vsel %vm604, %v8133, 0
        %8140 = vmatpush.bf16.xpose.msra.mxu0 0
        %8141 = vmatpush.bf16.xpose.msra.mxu0 0
        %8142 = vmatpush.bf16.xpose.msra.mxu0 0
        %8143 = vmatpush.bf16.xpose.msra.mxu0 0
        %8144 = vmatpush.bf16.xpose.msra.mxu0 0
        %8145 = vmatpush.bf16.xpose.msra.mxu0 0
        %8146 = vmatpush.bf16.xpose.msra.mxu0 0
        %8147 = vmatpush.bf16.xpose.msra.mxu0 %v8138
        %8148 = vmatmul.bf16.gmra.mxu0 %v8135
        %v8149 = vpop.f32.mrf.mxu0
        %v8150 = vadd.f32 0.0, %v8149
        %v8151 = vpop.f32.mrf.mxu0
        %8152 = vdwg.mxu0
        %8153 = vrot.lane.b32.xlu0 %v5813, 80
        %v8154 = vpop.permute.xlu0 %8153
        %8155 = vrot.lane.b32.xlu0 %v5813, 48
        %v8156 = vpop.permute.xlu0 %8155
        %v8158 = vsel %vm604, %v8154, 0
        %v8161 = vsel %vm604, %v8156, 0
        %8163 = vmatpush.bf16.xpose.msra.mxu0 0
        %8164 = vmatpush.bf16.xpose.msra.mxu0 0
        %8165 = vmatpush.bf16.xpose.msra.mxu0 0
        %8166 = vmatpush.bf16.xpose.msra.mxu0 0
        %8167 = vmatpush.bf16.xpose.msra.mxu0 0
        %8168 = vmatpush.bf16.xpose.msra.mxu0 0
        %8169 = vmatpush.bf16.xpose.msra.mxu0 0
        %8170 = vmatpush.bf16.xpose.msra.mxu0 %v8161
        %8171 = vmatmul.bf16.gmra.mxu0 %v8158
        %v8172 = vpop.f32.mrf.mxu0
        %v8173 = vadd.f32 0.0, %v8172
        %v8174 = vpop.f32.mrf.mxu0
        %8175 = vdwg.mxu0
        %8176 = vrot.lane.b32.xlu0 %v5839, 80
        %v8177 = vpop.permute.xlu0 %8176
        %8178 = vrot.lane.b32.xlu0 %v5839, 48
        %v8179 = vpop.permute.xlu0 %8178
        %v8181 = vsel %vm604, %v8177, 0
        %v8184 = vsel %vm604, %v8179, 0
        %8186 = vmatpush.bf16.xpose.msra.mxu0 0
        %8187 = vmatpush.bf16.xpose.msra.mxu0 0
        %8188 = vmatpush.bf16.xpose.msra.mxu0 0
        %8189 = vmatpush.bf16.xpose.msra.mxu0 0
        %8190 = vmatpush.bf16.xpose.msra.mxu0 0
        %8191 = vmatpush.bf16.xpose.msra.mxu0 0
        %8192 = vmatpush.bf16.xpose.msra.mxu0 0
        %8193 = vmatpush.bf16.xpose.msra.mxu0 %v8184
        %8194 = vmatmul.bf16.gmra.mxu0 %v8181
        %v8195 = vpop.f32.mrf.mxu0
        %v8196 = vadd.f32 0.0, %v8195
        %v8197 = vpop.f32.mrf.mxu0
        %8198 = vdwg.mxu0
        %8199 = vrot.lane.b32.xlu0 %v5865, 80
        %v8200 = vpop.permute.xlu0 %8199
        %8201 = vrot.lane.b32.xlu0 %v5865, 48
        %v8202 = vpop.permute.xlu0 %8201
        %v8204 = vsel %vm604, %v8200, 0
        %v8207 = vsel %vm604, %v8202, 0
        %8209 = vmatpush.bf16.xpose.msra.mxu0 0
        %8210 = vmatpush.bf16.xpose.msra.mxu0 0
        %8211 = vmatpush.bf16.xpose.msra.mxu0 0
        %8212 = vmatpush.bf16.xpose.msra.mxu0 0
        %8213 = vmatpush.bf16.xpose.msra.mxu0 0
        %8214 = vmatpush.bf16.xpose.msra.mxu0 0
        %8215 = vmatpush.bf16.xpose.msra.mxu0 0
        %8216 = vmatpush.bf16.xpose.msra.mxu0 %v8207
        %8217 = vmatmul.bf16.gmra.mxu0 %v8204
        %v8218 = vpop.f32.mrf.mxu0
        %v8219 = vadd.f32 0.0, %v8218
        %v8220 = vpop.f32.mrf.mxu0
        %8221 = vdwg.mxu0
        %8222 = vrot.lane.b32.xlu0 %v5891, 80
        %v8223 = vpop.permute.xlu0 %8222
        %8224 = vrot.lane.b32.xlu0 %v5891, 48
        %v8225 = vpop.permute.xlu0 %8224
        %v8227 = vsel %vm604, %v8223, 0
        %v8230 = vsel %vm604, %v8225, 0
        %8232 = vmatpush.bf16.xpose.msra.mxu0 0
        %8233 = vmatpush.bf16.xpose.msra.mxu0 0
        %8234 = vmatpush.bf16.xpose.msra.mxu0 0
        %8235 = vmatpush.bf16.xpose.msra.mxu0 0
        %8236 = vmatpush.bf16.xpose.msra.mxu0 0
        %8237 = vmatpush.bf16.xpose.msra.mxu0 0
        %8238 = vmatpush.bf16.xpose.msra.mxu0 0
        %8239 = vmatpush.bf16.xpose.msra.mxu0 %v8230
        %8240 = vmatmul.bf16.gmra.mxu0 %v8227
        %v8241 = vpop.f32.mrf.mxu0
        %v8242 = vadd.f32 0.0, %v8241
        %v8243 = vpop.f32.mrf.mxu0
        %8244 = vdwg.mxu0
        %8245 = vrot.lane.b32.xlu0 %v5917, 80
        %v8246 = vpop.permute.xlu0 %8245
        %8247 = vrot.lane.b32.xlu0 %v5917, 48
        %v8248 = vpop.permute.xlu0 %8247
        %v8250 = vsel %vm604, %v8246, 0
        %v8253 = vsel %vm604, %v8248, 0
        %8255 = vmatpush.bf16.xpose.msra.mxu0 0
        %8256 = vmatpush.bf16.xpose.msra.mxu0 0
        %8257 = vmatpush.bf16.xpose.msra.mxu0 0
        %8258 = vmatpush.bf16.xpose.msra.mxu0 0
        %8259 = vmatpush.bf16.xpose.msra.mxu0 0
        %8260 = vmatpush.bf16.xpose.msra.mxu0 0
        %8261 = vmatpush.bf16.xpose.msra.mxu0 0
        %8262 = vmatpush.bf16.xpose.msra.mxu0 %v8253
        %8263 = vmatmul.bf16.gmra.mxu0 %v8250
        %v8264 = vpop.f32.mrf.mxu0
        %v8265 = vadd.f32 0.0, %v8264
        %v8266 = vpop.f32.mrf.mxu0
        %8267 = vdwg.mxu0
        %8268 = vrot.lane.b32.xlu0 %v5943, 80
        %v8269 = vpop.permute.xlu0 %8268
        %8270 = vrot.lane.b32.xlu0 %v5943, 48
        %v8271 = vpop.permute.xlu0 %8270
        %v8273 = vsel %vm604, %v8269, 0
        %v8276 = vsel %vm604, %v8271, 0
        %8278 = vmatpush.bf16.xpose.msra.mxu0 0
        %8279 = vmatpush.bf16.xpose.msra.mxu0 0
        %8280 = vmatpush.bf16.xpose.msra.mxu0 0
        %8281 = vmatpush.bf16.xpose.msra.mxu0 0
        %8282 = vmatpush.bf16.xpose.msra.mxu0 0
        %8283 = vmatpush.bf16.xpose.msra.mxu0 0
        %8284 = vmatpush.bf16.xpose.msra.mxu0 0
        %8285 = vmatpush.bf16.xpose.msra.mxu0 %v8276
        %8286 = vmatmul.bf16.gmra.mxu0 %v8273
        %v8287 = vpop.f32.mrf.mxu0
        %v8288 = vadd.f32 0.0, %v8287
        %v8289 = vpop.f32.mrf.mxu0
        %8290 = vdwg.mxu0
        %8291 = vrot.lane.b32.xlu0 %v5969, 80
        %v8292 = vpop.permute.xlu0 %8291
        %8293 = vrot.lane.b32.xlu0 %v5969, 48
        %v8294 = vpop.permute.xlu0 %8293
        %v8296 = vsel %vm604, %v8292, 0
        %v8299 = vsel %vm604, %v8294, 0
        %8301 = vmatpush.bf16.xpose.msra.mxu0 0
        %8302 = vmatpush.bf16.xpose.msra.mxu0 0
        %8303 = vmatpush.bf16.xpose.msra.mxu0 0
        %8304 = vmatpush.bf16.xpose.msra.mxu0 0
        %8305 = vmatpush.bf16.xpose.msra.mxu0 0
        %8306 = vmatpush.bf16.xpose.msra.mxu0 0
        %8307 = vmatpush.bf16.xpose.msra.mxu0 0
        %8308 = vmatpush.bf16.xpose.msra.mxu0 %v8299
        %8309 = vmatmul.bf16.gmra.mxu0 %v8296
        %v8310 = vpop.f32.mrf.mxu0
        %v8311 = vadd.f32 0.0, %v8310
        %v8312 = vpop.f32.mrf.mxu0
        %8313 = vdwg.mxu0
        %8314 = vrot.lane.b32.xlu0 %v5995, 80
        %v8315 = vpop.permute.xlu0 %8314
        %8316 = vrot.lane.b32.xlu0 %v5995, 48
        %v8317 = vpop.permute.xlu0 %8316
        %v8319 = vsel %vm604, %v8315, 0
        %v8322 = vsel %vm604, %v8317, 0
        %8324 = vmatpush.bf16.xpose.msra.mxu0 0
        %8325 = vmatpush.bf16.xpose.msra.mxu0 0
        %8326 = vmatpush.bf16.xpose.msra.mxu0 0
        %8327 = vmatpush.bf16.xpose.msra.mxu0 0
        %8328 = vmatpush.bf16.xpose.msra.mxu0 0
        %8329 = vmatpush.bf16.xpose.msra.mxu0 0
        %8330 = vmatpush.bf16.xpose.msra.mxu0 0
        %8331 = vmatpush.bf16.xpose.msra.mxu0 %v8322
        %8332 = vmatmul.bf16.gmra.mxu0 %v8319
        %v8333 = vpop.f32.mrf.mxu0
        %v8334 = vadd.f32 0.0, %v8333
        %v8335 = vpop.f32.mrf.mxu0
        %8336 = vdwg.mxu0
        %8337 = vrot.lane.b32.xlu0 %v6021, 80
        %v8338 = vpop.permute.xlu0 %8337
        %8339 = vrot.lane.b32.xlu0 %v6021, 48
        %v8340 = vpop.permute.xlu0 %8339
        %v8342 = vsel %vm604, %v8338, 0
        %v8345 = vsel %vm604, %v8340, 0
        %8347 = vmatpush.bf16.xpose.msra.mxu0 0
        %8348 = vmatpush.bf16.xpose.msra.mxu0 0
        %8349 = vmatpush.bf16.xpose.msra.mxu0 0
        %8350 = vmatpush.bf16.xpose.msra.mxu0 0
        %8351 = vmatpush.bf16.xpose.msra.mxu0 0
        %8352 = vmatpush.bf16.xpose.msra.mxu0 0
        %8353 = vmatpush.bf16.xpose.msra.mxu0 0
        %8354 = vmatpush.bf16.xpose.msra.mxu0 %v8345
        %8355 = vmatmul.bf16.gmra.mxu0 %v8342
        %v8356 = vpop.f32.mrf.mxu0
        %v8357 = vadd.f32 0.0, %v8356
        %v8358 = vpop.f32.mrf.mxu0
        %8359 = vdwg.mxu0
        %8360 = vrot.lane.b32.xlu0 %v6047, 80
        %v8361 = vpop.permute.xlu0 %8360
        %8362 = vrot.lane.b32.xlu0 %v6047, 48
        %v8363 = vpop.permute.xlu0 %8362
        %v8365 = vsel %vm604, %v8361, 0
        %v8368 = vsel %vm604, %v8363, 0
        %8370 = vmatpush.bf16.xpose.msra.mxu0 0
        %8371 = vmatpush.bf16.xpose.msra.mxu0 0
        %8372 = vmatpush.bf16.xpose.msra.mxu0 0
        %8373 = vmatpush.bf16.xpose.msra.mxu0 0
        %8374 = vmatpush.bf16.xpose.msra.mxu0 0
        %8375 = vmatpush.bf16.xpose.msra.mxu0 0
        %8376 = vmatpush.bf16.xpose.msra.mxu0 0
        %8377 = vmatpush.bf16.xpose.msra.mxu0 %v8368
        %8378 = vmatmul.bf16.gmra.mxu0 %v8365
        %v8379 = vpop.f32.mrf.mxu0
        %v8380 = vadd.f32 0.0, %v8379
        %v8381 = vpop.f32.mrf.mxu0
        %8382 = vdwg.mxu0
        %8383 = vrot.lane.b32.xlu0 %v6073, 80
        %v8384 = vpop.permute.xlu0 %8383
        %8385 = vrot.lane.b32.xlu0 %v6073, 48
        %v8386 = vpop.permute.xlu0 %8385
        %v8388 = vsel %vm604, %v8384, 0
        %v8391 = vsel %vm604, %v8386, 0
        %8393 = vmatpush.bf16.xpose.msra.mxu0 0
        %8394 = vmatpush.bf16.xpose.msra.mxu0 0
        %8395 = vmatpush.bf16.xpose.msra.mxu0 0
        %8396 = vmatpush.bf16.xpose.msra.mxu0 0
        %8397 = vmatpush.bf16.xpose.msra.mxu0 0
        %8398 = vmatpush.bf16.xpose.msra.mxu0 0
        %8399 = vmatpush.bf16.xpose.msra.mxu0 0
        %8400 = vmatpush.bf16.xpose.msra.mxu0 %v8391
        %8401 = vmatmul.bf16.gmra.mxu0 %v8388
        %v8402 = vpop.f32.mrf.mxu0
        %v8403 = vadd.f32 0.0, %v8402
        %v8404 = vpop.f32.mrf.mxu0
        %8405 = vdwg.mxu0
        %8406 = vrot.lane.b32.xlu0 %v6099, 80
        %v8407 = vpop.permute.xlu0 %8406
        %8408 = vrot.lane.b32.xlu0 %v6099, 48
        %v8409 = vpop.permute.xlu0 %8408
        %v8411 = vsel %vm604, %v8407, 0
        %v8414 = vsel %vm604, %v8409, 0
        %8416 = vmatpush.bf16.xpose.msra.mxu0 0
        %8417 = vmatpush.bf16.xpose.msra.mxu0 0
        %8418 = vmatpush.bf16.xpose.msra.mxu0 0
        %8419 = vmatpush.bf16.xpose.msra.mxu0 0
        %8420 = vmatpush.bf16.xpose.msra.mxu0 0
        %8421 = vmatpush.bf16.xpose.msra.mxu0 0
        %8422 = vmatpush.bf16.xpose.msra.mxu0 0
        %8423 = vmatpush.bf16.xpose.msra.mxu0 %v8414
        %8424 = vmatmul.bf16.gmra.mxu0 %v8411
        %v8425 = vpop.f32.mrf.mxu0
        %v8426 = vadd.f32 0.0, %v8425
        %v8427 = vpop.f32.mrf.mxu0
        %8428 = vdwg.mxu0
        %8429 = vrot.lane.b32.xlu0 %v6125, 80
        %v8430 = vpop.permute.xlu0 %8429
        %8431 = vrot.lane.b32.xlu0 %v6125, 48
        %v8432 = vpop.permute.xlu0 %8431
        %v8434 = vsel %vm604, %v8430, 0
        %v8437 = vsel %vm604, %v8432, 0
        %8439 = vmatpush.bf16.xpose.msra.mxu0 0
        %8440 = vmatpush.bf16.xpose.msra.mxu0 0
        %8441 = vmatpush.bf16.xpose.msra.mxu0 0
        %8442 = vmatpush.bf16.xpose.msra.mxu0 0
        %8443 = vmatpush.bf16.xpose.msra.mxu0 0
        %8444 = vmatpush.bf16.xpose.msra.mxu0 0
        %8445 = vmatpush.bf16.xpose.msra.mxu0 0
        %8446 = vmatpush.bf16.xpose.msra.mxu0 %v8437
        %8447 = vmatmul.bf16.gmra.mxu0 %v8434
        %v8448 = vpop.f32.mrf.mxu0
        %v8449 = vadd.f32 0.0, %v8448
        %v8450 = vpop.f32.mrf.mxu0
        %8451 = vdwg.mxu0
        %8452 = vrot.lane.b32.xlu0 %v6151, 80
        %v8453 = vpop.permute.xlu0 %8452
        %8454 = vrot.lane.b32.xlu0 %v6151, 48
        %v8455 = vpop.permute.xlu0 %8454
        %v8457 = vsel %vm604, %v8453, 0
        %v8460 = vsel %vm604, %v8455, 0
        %8462 = vmatpush.bf16.xpose.msra.mxu0 0
        %8463 = vmatpush.bf16.xpose.msra.mxu0 0
        %8464 = vmatpush.bf16.xpose.msra.mxu0 0
        %8465 = vmatpush.bf16.xpose.msra.mxu0 0
        %8466 = vmatpush.bf16.xpose.msra.mxu0 0
        %8467 = vmatpush.bf16.xpose.msra.mxu0 0
        %8468 = vmatpush.bf16.xpose.msra.mxu0 0
        %8469 = vmatpush.bf16.xpose.msra.mxu0 %v8460
        %8470 = vmatmul.bf16.gmra.mxu0 %v8457
        %v8471 = vpop.f32.mrf.mxu0
        %v8472 = vadd.f32 0.0, %v8471
        %v8473 = vpop.f32.mrf.mxu0
        %8474 = vdwg.mxu0
        %v8475 = vmul.f32 %v8035, 0.35355338
        %v8476 = vmul.f32 %v8058, 0.35355338
        %v8477 = vmul.f32 %v8081, 0.35355338
        %v8478 = vmul.f32 %v8104, 0.35355338
        %v8479 = vmul.f32 %v8127, 0.35355338
        %v8480 = vmul.f32 %v8150, 0.35355338
        %v8481 = vmul.f32 %v8173, 0.35355338
        %v8482 = vmul.f32 %v8196, 0.35355338
        %v8483 = vmul.f32 %v8219, 0.35355338
        %v8484 = vmul.f32 %v8242, 0.35355338
        %v8485 = vmul.f32 %v8265, 0.35355338
        %v8486 = vmul.f32 %v8288, 0.35355338
        %v8487 = vmul.f32 %v8311, 0.35355338
        %v8488 = vmul.f32 %v8334, 0.35355338
        %v8489 = vmul.f32 %v8357, 0.35355338
        %v8490 = vmul.f32 %v8380, 0.35355338
        %v8491 = vmul.f32 %v8403, 0.35355338
        %v8492 = vmul.f32 %v8426, 0.35355338
        %v8493 = vmul.f32 %v8449, 0.35355338
        %v8494 = vmul.f32 %v8472, 0.35355338
        %v8495 = vadd.f32 %v8475, %v367
        %v8496 = vadd.f32 %v8476, %v367
        %v8497 = vadd.f32 %v8477, %v367
        %v8498 = vadd.f32 %v8478, %v367
        %v8499 = vadd.f32 %v8479, %v367
        %v8500 = vadd.f32 %v8480, %v367
        %v8501 = vadd.f32 %v8481, %v367
        %v8502 = vadd.f32 %v8482, %v367
        %v8503 = vadd.f32 %v8483, %v367
        %v8504 = vadd.f32 %v8484, %v367
        %v8505 = vadd.f32 %v8485, %v367
        %v8506 = vadd.f32 %v8486, %v367
        %v8507 = vadd.f32 %v8487, %v367
        %v8508 = vadd.f32 %v8488, %v367
        %v8509 = vadd.f32 %v8489, %v367
        %v8510 = vadd.f32 %v8490, %v367
        %v8511 = vadd.f32 %v8491, %v367
        %v8512 = vadd.f32 %v8492, %v367
        %v8513 = vadd.f32 %v8493, %v367
        %v8514 = vadd.f32 %v8494, %v367
        %v8515 = vsel %vm604, %v8495, -inf
        %8516 = vmax.xlane.f32.xlu0 %v8515
        %v8517 = vpop.xlane.xlu0 %8516
        %v8518 = vsel %vm604, %v8496, -inf
        %8519 = vmax.xlane.f32.xlu0 %v8518
        %v8520 = vpop.xlane.xlu0 %8519
        %v8521 = vsel %vm604, %v8497, -inf
        %8522 = vmax.xlane.f32.xlu0 %v8521
        %v8523 = vpop.xlane.xlu0 %8522
        %v8524 = vsel %vm604, %v8498, -inf
        %8525 = vmax.xlane.f32.xlu0 %v8524
        %v8526 = vpop.xlane.xlu0 %8525
        %v8527 = vsel %vm604, %v8499, -inf
        %8528 = vmax.xlane.f32.xlu0 %v8527
        %v8529 = vpop.xlane.xlu0 %8528
        %v8530 = vsel %vm604, %v8500, -inf
        %8531 = vmax.xlane.f32.xlu0 %v8530
        %v8532 = vpop.xlane.xlu0 %8531
        %v8533 = vsel %vm604, %v8501, -inf
        %8534 = vmax.xlane.f32.xlu0 %v8533
        %v8535 = vpop.xlane.xlu0 %8534
        %v8536 = vsel %vm604, %v8502, -inf
        %8537 = vmax.xlane.f32.xlu0 %v8536
        %v8538 = vpop.xlane.xlu0 %8537
        %v8539 = vsel %vm604, %v8503, -inf
        %8540 = vmax.xlane.f32.xlu0 %v8539
        %v8541 = vpop.xlane.xlu0 %8540
        %v8542 = vsel %vm604, %v8504, -inf
        %8543 = vmax.xlane.f32.xlu0 %v8542
        %v8544 = vpop.xlane.xlu0 %8543
        %v8545 = vsel %vm604, %v8505, -inf
        %8546 = vmax.xlane.f32.xlu0 %v8545
        %v8547 = vpop.xlane.xlu0 %8546
        %v8548 = vsel %vm604, %v8506, -inf
        %8549 = vmax.xlane.f32.xlu0 %v8548
        %v8550 = vpop.xlane.xlu0 %8549
        %v8551 = vsel %vm604, %v8507, -inf
        %8552 = vmax.xlane.f32.xlu0 %v8551
        %v8553 = vpop.xlane.xlu0 %8552
        %v8554 = vsel %vm604, %v8508, -inf
        %8555 = vmax.xlane.f32.xlu0 %v8554
        %v8556 = vpop.xlane.xlu0 %8555
        %v8557 = vsel %vm604, %v8509, -inf
        %8558 = vmax.xlane.f32.xlu0 %v8557
        %v8559 = vpop.xlane.xlu0 %8558
        %v8560 = vsel %vm604, %v8510, -inf
        %8561 = vmax.xlane.f32.xlu0 %v8560
        %v8562 = vpop.xlane.xlu0 %8561
        %v8563 = vsel %vm604, %v8511, -inf
        %8564 = vmax.xlane.f32.xlu0 %v8563
        %v8565 = vpop.xlane.xlu0 %8564
        %v8566 = vsel %vm604, %v8512, -inf
        %8567 = vmax.xlane.f32.xlu0 %v8566
        %v8568 = vpop.xlane.xlu0 %8567
        %v8569 = vsel %vm604, %v8513, -inf
        %8570 = vmax.xlane.f32.xlu0 %v8569
        %v8571 = vpop.xlane.xlu0 %8570
        %v8572 = vsel %vm604, %v8514, -inf
        %8573 = vmax.xlane.f32.xlu0 %v8572
        %v8574 = vpop.xlane.xlu0 %8573
        %v8575 = vsub.f32 %v8495, %v8517
        %v8576 = vsub.f32 %v8496, %v8520
        %v8577 = vsub.f32 %v8497, %v8523
        %v8578 = vsub.f32 %v8498, %v8526
        %v8579 = vsub.f32 %v8499, %v8529
        %v8580 = vsub.f32 %v8500, %v8532
        %v8581 = vsub.f32 %v8501, %v8535
        %v8582 = vsub.f32 %v8502, %v8538
        %v8583 = vsub.f32 %v8503, %v8541
        %v8584 = vsub.f32 %v8504, %v8544
        %v8585 = vsub.f32 %v8505, %v8547
        %v8586 = vsub.f32 %v8506, %v8550
        %v8587 = vsub.f32 %v8507, %v8553
        %v8588 = vsub.f32 %v8508, %v8556
        %v8589 = vsub.f32 %v8509, %v8559
        %v8590 = vsub.f32 %v8510, %v8562
        %v8591 = vsub.f32 %v8511, %v8565
        %v8592 = vsub.f32 %v8512, %v8568
        %v8593 = vsub.f32 %v8513, %v8571
        %v8594 = vsub.f32 %v8514, %v8574
        %v8595 = vmul.f32 %v8575, 1.442695
        %v8596 = vpow.pop %v8595
        %v8597 = vmul.f32 %v8576, 1.442695
        %v8598 = vpow.pop %v8597
        %v8599 = vmul.f32 %v8577, 1.442695
        %v8600 = vpow.pop %v8599
        %v8601 = vmul.f32 %v8578, 1.442695
        %v8602 = vpow.pop %v8601
        %v8603 = vmul.f32 %v8579, 1.442695
        %v8604 = vpow.pop %v8603
        %v8605 = vmul.f32 %v8580, 1.442695
        %v8606 = vpow.pop %v8605
        %v8607 = vmul.f32 %v8581, 1.442695
        %v8608 = vpow.pop %v8607
        %v8609 = vmul.f32 %v8582, 1.442695
        %v8610 = vpow.pop %v8609
        %v8611 = vmul.f32 %v8583, 1.442695
        %v8612 = vpow.pop %v8611
        %v8613 = vmul.f32 %v8584, 1.442695
        %v8614 = vpow.pop %v8613
        %v8615 = vmul.f32 %v8585, 1.442695
        %v8616 = vpow.pop %v8615
        %v8617 = vmul.f32 %v8586, 1.442695
        %v8618 = vpow.pop %v8617
        %v8619 = vmul.f32 %v8587, 1.442695
        %v8620 = vpow.pop %v8619
        %v8621 = vmul.f32 %v8588, 1.442695
        %v8622 = vpow.pop %v8621
        %v8623 = vmul.f32 %v8589, 1.442695
        %v8624 = vpow.pop %v8623
        %v8625 = vmul.f32 %v8590, 1.442695
        %v8626 = vpow.pop %v8625
        %v8627 = vmul.f32 %v8591, 1.442695
        %v8628 = vpow.pop %v8627
        %v8629 = vmul.f32 %v8592, 1.442695
        %v8630 = vpow.pop %v8629
        %v8631 = vmul.f32 %v8593, 1.442695
        %v8632 = vpow.pop %v8631
        %v8633 = vmul.f32 %v8594, 1.442695
        %v8634 = vpow.pop %v8633
        %v8635 = vsel %vm604, %v8596, 0.0
        %8636 = vadd.xlane.f32.xlu0 %v8635
        %v8637 = vpop.xlane.xlu0 %8636
        %v8638 = vsel %vm604, %v8598, 0.0
        %8639 = vadd.xlane.f32.xlu0 %v8638
        %v8640 = vpop.xlane.xlu0 %8639
        %v8641 = vsel %vm604, %v8600, 0.0
        %8642 = vadd.xlane.f32.xlu0 %v8641
        %v8643 = vpop.xlane.xlu0 %8642
        %v8644 = vsel %vm604, %v8602, 0.0
        %8645 = vadd.xlane.f32.xlu0 %v8644
        %v8646 = vpop.xlane.xlu0 %8645
        %v8647 = vsel %vm604, %v8604, 0.0
        %8648 = vadd.xlane.f32.xlu0 %v8647
        %v8649 = vpop.xlane.xlu0 %8648
        %v8650 = vsel %vm604, %v8606, 0.0
        %8651 = vadd.xlane.f32.xlu0 %v8650
        %v8652 = vpop.xlane.xlu0 %8651
        %v8653 = vsel %vm604, %v8608, 0.0
        %8654 = vadd.xlane.f32.xlu0 %v8653
        %v8655 = vpop.xlane.xlu0 %8654
        %v8656 = vsel %vm604, %v8610, 0.0
        %8657 = vadd.xlane.f32.xlu0 %v8656
        %v8658 = vpop.xlane.xlu0 %8657
        %v8659 = vsel %vm604, %v8612, 0.0
        %8660 = vadd.xlane.f32.xlu0 %v8659
        %v8661 = vpop.xlane.xlu0 %8660
        %v8662 = vsel %vm604, %v8614, 0.0
        %8663 = vadd.xlane.f32.xlu0 %v8662
        %v8664 = vpop.xlane.xlu0 %8663
        %v8665 = vsel %vm604, %v8616, 0.0
        %8666 = vadd.xlane.f32.xlu0 %v8665
        %v8667 = vpop.xlane.xlu0 %8666
        %v8668 = vsel %vm604, %v8618, 0.0
        %8669 = vadd.xlane.f32.xlu0 %v8668
        %v8670 = vpop.xlane.xlu0 %8669
        %v8671 = vsel %vm604, %v8620, 0.0
        %8672 = vadd.xlane.f32.xlu0 %v8671
        %v8673 = vpop.xlane.xlu0 %8672
        %v8674 = vsel %vm604, %v8622, 0.0
        %8675 = vadd.xlane.f32.xlu0 %v8674
        %v8676 = vpop.xlane.xlu0 %8675
        %v8677 = vsel %vm604, %v8624, 0.0
        %8678 = vadd.xlane.f32.xlu0 %v8677
        %v8679 = vpop.xlane.xlu0 %8678
        %v8680 = vsel %vm604, %v8626, 0.0
        %8681 = vadd.xlane.f32.xlu0 %v8680
        %v8682 = vpop.xlane.xlu0 %8681
        %v8683 = vsel %vm604, %v8628, 0.0
        %8684 = vadd.xlane.f32.xlu0 %v8683
        %v8685 = vpop.xlane.xlu0 %8684
        %v8686 = vsel %vm604, %v8630, 0.0
        %8687 = vadd.xlane.f32.xlu0 %v8686
        %v8688 = vpop.xlane.xlu0 %8687
        %v8689 = vsel %vm604, %v8632, 0.0
        %8690 = vadd.xlane.f32.xlu0 %v8689
        %v8691 = vpop.xlane.xlu0 %8690
        %v8692 = vsel %vm604, %v8634, 0.0
        %8693 = vadd.xlane.f32.xlu0 %v8692
        %v8694 = vpop.xlane.xlu0 %8693
        %v8695 = vrcp.pop %v8637
        %v8696 = vrcp.pop %v8640
        %v8697 = vrcp.pop %v8643
        %v8698 = vrcp.pop %v8646
        %v8699 = vrcp.pop %v8649
        %v8700 = vrcp.pop %v8652
        %v8701 = vrcp.pop %v8655
        %v8702 = vrcp.pop %v8658
        %v8703 = vrcp.pop %v8661
        %v8704 = vrcp.pop %v8664
        %v8705 = vrcp.pop %v8667
        %v8706 = vrcp.pop %v8670
        %v8707 = vrcp.pop %v8673
        %v8708 = vrcp.pop %v8676
        %v8709 = vrcp.pop %v8679
        %v8710 = vrcp.pop %v8682
        %v8711 = vrcp.pop %v8685
        %v8712 = vrcp.pop %v8688
        %v8713 = vrcp.pop %v8691
        %v8714 = vrcp.pop %v8694
        %v8715 = vmul.f32 %v8596, %v8695
        %v8716 = vmul.f32 %v8598, %v8696
        %v8717 = vmul.f32 %v8600, %v8697
        %v8718 = vmul.f32 %v8602, %v8698
        %v8719 = vmul.f32 %v8604, %v8699
        %v8720 = vmul.f32 %v8606, %v8700
        %v8721 = vmul.f32 %v8608, %v8701
        %v8722 = vmul.f32 %v8610, %v8702
        %v8723 = vmul.f32 %v8612, %v8703
        %v8724 = vmul.f32 %v8614, %v8704
        %v8725 = vmul.f32 %v8616, %v8705
        %v8726 = vmul.f32 %v8618, %v8706
        %v8727 = vmul.f32 %v8620, %v8707
        %v8728 = vmul.f32 %v8622, %v8708
        %v8729 = vmul.f32 %v8624, %v8709
        %v8730 = vmul.f32 %v8626, %v8710
        %v8731 = vmul.f32 %v8628, %v8711
        %v8732 = vmul.f32 %v8630, %v8712
        %v8733 = vmul.f32 %v8632, %v8713
        %v8734 = vmul.f32 %v8634, %v8714
        %v8735 = vpack.c.bf16 %v8715, %v8715
        %v8736 = vpack.c.bf16 %v8716, %v8716
        %v8737 = vpack.c.bf16 %v8717, %v8717
        %v8738 = vpack.c.bf16 %v8718, %v8718
        %v8739 = vpack.c.bf16 %v8719, %v8719
        %v8740 = vpack.c.bf16 %v8720, %v8720
        %v8741 = vpack.c.bf16 %v8721, %v8721
        %v8742 = vpack.c.bf16 %v8722, %v8722
        %v8743 = vpack.c.bf16 %v8723, %v8723
        %v8744 = vpack.c.bf16 %v8724, %v8724
        %v8745 = vpack.c.bf16 %v8725, %v8725
        %v8746 = vpack.c.bf16 %v8726, %v8726
        %v8747 = vpack.c.bf16 %v8727, %v8727
        %v8748 = vpack.c.bf16 %v8728, %v8728
        %v8749 = vpack.c.bf16 %v8729, %v8729
        %v8750 = vpack.c.bf16 %v8730, %v8730
        %v8751 = vpack.c.bf16 %v8731, %v8731
        %v8752 = vpack.c.bf16 %v8732, %v8732
        %v8753 = vpack.c.bf16 %v8733, %v8733
        %v8754 = vpack.c.bf16 %v8734, %v8734
        %v8756 = vunpack.c.l.b16 %v7195
        %v8757 = vpack.c.b16 %v8756, %v8756
        %8758 = vrot.lane.b32.xlu0 %v8757, 96
        %v8759 = vpop.permute.xlu0 %8758
        %v8761 = vsel %vm604, %v8735, 0
        %v8764 = vsel %vm2161, %v8759, 0
        %8766 = vmatpush.bf16.msra.mxu0 0
        %8767 = vmatpush.bf16.msra.mxu0 0
        %8768 = vmatpush.bf16.msra.mxu0 0
        %8769 = vmatpush.bf16.msra.mxu0 0
        %8770 = vmatpush.bf16.msra.mxu0 0
        %8771 = vmatpush.bf16.msra.mxu0 0
        %8772 = vmatpush.bf16.msra.mxu0 0
        %8773 = vmatpush.bf16.msra.mxu0 %v8764
        %8774 = vmatmul.bf16.gmra.mxu0 %v8761
        %v8775 = vpop.f32.mrf.mxu0
        %v8776 = vadd.f32 0.0, %v8775
        %v8777 = vpop.f32.mrf.mxu0
        %8778 = vdwg.mxu0
        %v8780 = vunpack.c.l.b16 %v7196
        %v8781 = vpack.c.b16 %v8780, %v8780
        %8782 = vrot.lane.b32.xlu0 %v8781, 96
        %v8783 = vpop.permute.xlu0 %8782
        %v8785 = vsel %vm604, %v8736, 0
        %v8788 = vsel %vm2161, %v8783, 0
        %8790 = vmatpush.bf16.msra.mxu0 0
        %8791 = vmatpush.bf16.msra.mxu0 0
        %8792 = vmatpush.bf16.msra.mxu0 0
        %8793 = vmatpush.bf16.msra.mxu0 0
        %8794 = vmatpush.bf16.msra.mxu0 0
        %8795 = vmatpush.bf16.msra.mxu0 0
        %8796 = vmatpush.bf16.msra.mxu0 0
        %8797 = vmatpush.bf16.msra.mxu0 %v8788
        %8798 = vmatmul.bf16.gmra.mxu0 %v8785
        %v8799 = vpop.f32.mrf.mxu0
        %v8800 = vadd.f32 0.0, %v8799
        %v8801 = vpop.f32.mrf.mxu0
        %8802 = vdwg.mxu0
        %v8804 = vunpack.c.l.b16 %v7197
        %v8805 = vpack.c.b16 %v8804, %v8804
        %8806 = vrot.lane.b32.xlu0 %v8805, 96
        %v8807 = vpop.permute.xlu0 %8806
        %v8809 = vsel %vm604, %v8737, 0
        %v8812 = vsel %vm2161, %v8807, 0
        %8814 = vmatpush.bf16.msra.mxu0 0
        %8815 = vmatpush.bf16.msra.mxu0 0
        %8816 = vmatpush.bf16.msra.mxu0 0
        %8817 = vmatpush.bf16.msra.mxu0 0
        %8818 = vmatpush.bf16.msra.mxu0 0
        %8819 = vmatpush.bf16.msra.mxu0 0
        %8820 = vmatpush.bf16.msra.mxu0 0
        %8821 = vmatpush.bf16.msra.mxu0 %v8812
        %8822 = vmatmul.bf16.gmra.mxu0 %v8809
        %v8823 = vpop.f32.mrf.mxu0
        %v8824 = vadd.f32 0.0, %v8823
        %v8825 = vpop.f32.mrf.mxu0
        %8826 = vdwg.mxu0
        %v8828 = vunpack.c.l.b16 %v7198
        %v8829 = vpack.c.b16 %v8828, %v8828
        %8830 = vrot.lane.b32.xlu0 %v8829, 96
        %v8831 = vpop.permute.xlu0 %8830
        %v8833 = vsel %vm604, %v8738, 0
        %v8836 = vsel %vm2161, %v8831, 0
        %8838 = vmatpush.bf16.msra.mxu0 0
        %8839 = vmatpush.bf16.msra.mxu0 0
        %8840 = vmatpush.bf16.msra.mxu0 0
        %8841 = vmatpush.bf16.msra.mxu0 0
        %8842 = vmatpush.bf16.msra.mxu0 0
        %8843 = vmatpush.bf16.msra.mxu0 0
        %8844 = vmatpush.bf16.msra.mxu0 0
        %8845 = vmatpush.bf16.msra.mxu0 %v8836
        %8846 = vmatmul.bf16.gmra.mxu0 %v8833
        %v8847 = vpop.f32.mrf.mxu0
        %v8848 = vadd.f32 0.0, %v8847
        %v8849 = vpop.f32.mrf.mxu0
        %8850 = vdwg.mxu0
        %v8852 = vunpack.c.l.b16 %v7199
        %v8853 = vpack.c.b16 %v8852, %v8852
        %8854 = vrot.lane.b32.xlu0 %v8853, 96
        %v8855 = vpop.permute.xlu0 %8854
        %v8857 = vsel %vm604, %v8739, 0
        %v8860 = vsel %vm2161, %v8855, 0
        %8862 = vmatpush.bf16.msra.mxu0 0
        %8863 = vmatpush.bf16.msra.mxu0 0
        %8864 = vmatpush.bf16.msra.mxu0 0
        %8865 = vmatpush.bf16.msra.mxu0 0
        %8866 = vmatpush.bf16.msra.mxu0 0
        %8867 = vmatpush.bf16.msra.mxu0 0
        %8868 = vmatpush.bf16.msra.mxu0 0
        %8869 = vmatpush.bf16.msra.mxu0 %v8860
        %8870 = vmatmul.bf16.gmra.mxu0 %v8857
        %v8871 = vpop.f32.mrf.mxu0
        %v8872 = vadd.f32 0.0, %v8871
        %v8873 = vpop.f32.mrf.mxu0
        %8874 = vdwg.mxu0
        %v8876 = vunpack.c.l.b16 %v7200
        %v8877 = vpack.c.b16 %v8876, %v8876
        %8878 = vrot.lane.b32.xlu0 %v8877, 96
        %v8879 = vpop.permute.xlu0 %8878
        %v8881 = vsel %vm604, %v8740, 0
        %v8884 = vsel %vm2161, %v8879, 0
        %8886 = vmatpush.bf16.msra.mxu0 0
        %8887 = vmatpush.bf16.msra.mxu0 0
        %8888 = vmatpush.bf16.msra.mxu0 0
        %8889 = vmatpush.bf16.msra.mxu0 0
        %8890 = vmatpush.bf16.msra.mxu0 0
        %8891 = vmatpush.bf16.msra.mxu0 0
        %8892 = vmatpush.bf16.msra.mxu0 0
        %8893 = vmatpush.bf16.msra.mxu0 %v8884
        %8894 = vmatmul.bf16.gmra.mxu0 %v8881
        %v8895 = vpop.f32.mrf.mxu0
        %v8896 = vadd.f32 0.0, %v8895
        %v8897 = vpop.f32.mrf.mxu0
        %8898 = vdwg.mxu0
        %v8900 = vunpack.c.l.b16 %v7201
        %v8901 = vpack.c.b16 %v8900, %v8900
        %8902 = vrot.lane.b32.xlu0 %v8901, 96
        %v8903 = vpop.permute.xlu0 %8902
        %v8905 = vsel %vm604, %v8741, 0
        %v8908 = vsel %vm2161, %v8903, 0
        %8910 = vmatpush.bf16.msra.mxu0 0
        %8911 = vmatpush.bf16.msra.mxu0 0
        %8912 = vmatpush.bf16.msra.mxu0 0
        %8913 = vmatpush.bf16.msra.mxu0 0
        %8914 = vmatpush.bf16.msra.mxu0 0
        %8915 = vmatpush.bf16.msra.mxu0 0
        %8916 = vmatpush.bf16.msra.mxu0 0
        %8917 = vmatpush.bf16.msra.mxu0 %v8908
        %8918 = vmatmul.bf16.gmra.mxu0 %v8905
        %v8919 = vpop.f32.mrf.mxu0
        %v8920 = vadd.f32 0.0, %v8919
        %v8921 = vpop.f32.mrf.mxu0
        %8922 = vdwg.mxu0
        %v8924 = vunpack.c.l.b16 %v7202
        %v8925 = vpack.c.b16 %v8924, %v8924
        %8926 = vrot.lane.b32.xlu0 %v8925, 96
        %v8927 = vpop.permute.xlu0 %8926
        %v8929 = vsel %vm604, %v8742, 0
        %v8932 = vsel %vm2161, %v8927, 0
        %8934 = vmatpush.bf16.msra.mxu0 0
        %8935 = vmatpush.bf16.msra.mxu0 0
        %8936 = vmatpush.bf16.msra.mxu0 0
        %8937 = vmatpush.bf16.msra.mxu0 0
        %8938 = vmatpush.bf16.msra.mxu0 0
        %8939 = vmatpush.bf16.msra.mxu0 0
        %8940 = vmatpush.bf16.msra.mxu0 0
        %8941 = vmatpush.bf16.msra.mxu0 %v8932
        %8942 = vmatmul.bf16.gmra.mxu0 %v8929
        %v8943 = vpop.f32.mrf.mxu0
        %v8944 = vadd.f32 0.0, %v8943
        %v8945 = vpop.f32.mrf.mxu0
        %8946 = vdwg.mxu0
        %v8948 = vunpack.c.l.b16 %v7203
        %v8949 = vpack.c.b16 %v8948, %v8948
        %8950 = vrot.lane.b32.xlu0 %v8949, 96
        %v8951 = vpop.permute.xlu0 %8950
        %v8953 = vsel %vm604, %v8743, 0
        %v8956 = vsel %vm2161, %v8951, 0
        %8958 = vmatpush.bf16.msra.mxu0 0
        %8959 = vmatpush.bf16.msra.mxu0 0
        %8960 = vmatpush.bf16.msra.mxu0 0
        %8961 = vmatpush.bf16.msra.mxu0 0
        %8962 = vmatpush.bf16.msra.mxu0 0
        %8963 = vmatpush.bf16.msra.mxu0 0
        %8964 = vmatpush.bf16.msra.mxu0 0
        %8965 = vmatpush.bf16.msra.mxu0 %v8956
        %8966 = vmatmul.bf16.gmra.mxu0 %v8953
        %v8967 = vpop.f32.mrf.mxu0
        %v8968 = vadd.f32 0.0, %v8967
        %v8969 = vpop.f32.mrf.mxu0
        %8970 = vdwg.mxu0
        %v8972 = vunpack.c.l.b16 %v7204
        %v8973 = vpack.c.b16 %v8972, %v8972
        %8974 = vrot.lane.b32.xlu0 %v8973, 96
        %v8975 = vpop.permute.xlu0 %8974
        %v8977 = vsel %vm604, %v8744, 0
        %v8980 = vsel %vm2161, %v8975, 0
        %8982 = vmatpush.bf16.msra.mxu0 0
        %8983 = vmatpush.bf16.msra.mxu0 0
        %8984 = vmatpush.bf16.msra.mxu0 0
        %8985 = vmatpush.bf16.msra.mxu0 0
        %8986 = vmatpush.bf16.msra.mxu0 0
        %8987 = vmatpush.bf16.msra.mxu0 0
        %8988 = vmatpush.bf16.msra.mxu0 0
        %8989 = vmatpush.bf16.msra.mxu0 %v8980
        %8990 = vmatmul.bf16.gmra.mxu0 %v8977
        %v8991 = vpop.f32.mrf.mxu0
        %v8992 = vadd.f32 0.0, %v8991
        %v8993 = vpop.f32.mrf.mxu0
        %8994 = vdwg.mxu0
        %v8996 = vunpack.c.l.b16 %v7205
        %v8997 = vpack.c.b16 %v8996, %v8996
        %8998 = vrot.lane.b32.xlu0 %v8997, 96
        %v8999 = vpop.permute.xlu0 %8998
        %v9001 = vsel %vm604, %v8745, 0
        %v9004 = vsel %vm2161, %v8999, 0
        %9006 = vmatpush.bf16.msra.mxu0 0
        %9007 = vmatpush.bf16.msra.mxu0 0
        %9008 = vmatpush.bf16.msra.mxu0 0
        %9009 = vmatpush.bf16.msra.mxu0 0
        %9010 = vmatpush.bf16.msra.mxu0 0
        %9011 = vmatpush.bf16.msra.mxu0 0
        %9012 = vmatpush.bf16.msra.mxu0 0
        %9013 = vmatpush.bf16.msra.mxu0 %v9004
        %9014 = vmatmul.bf16.gmra.mxu0 %v9001
        %v9015 = vpop.f32.mrf.mxu0
        %v9016 = vadd.f32 0.0, %v9015
        %v9017 = vpop.f32.mrf.mxu0
        %9018 = vdwg.mxu0
        %v9020 = vunpack.c.l.b16 %v7206
        %v9021 = vpack.c.b16 %v9020, %v9020
        %9022 = vrot.lane.b32.xlu0 %v9021, 96
        %v9023 = vpop.permute.xlu0 %9022
        %v9025 = vsel %vm604, %v8746, 0
        %v9028 = vsel %vm2161, %v9023, 0
        %9030 = vmatpush.bf16.msra.mxu0 0
        %9031 = vmatpush.bf16.msra.mxu0 0
        %9032 = vmatpush.bf16.msra.mxu0 0
        %9033 = vmatpush.bf16.msra.mxu0 0
        %9034 = vmatpush.bf16.msra.mxu0 0
        %9035 = vmatpush.bf16.msra.mxu0 0
        %9036 = vmatpush.bf16.msra.mxu0 0
        %9037 = vmatpush.bf16.msra.mxu0 %v9028
        %9038 = vmatmul.bf16.gmra.mxu0 %v9025
        %v9039 = vpop.f32.mrf.mxu0
        %v9040 = vadd.f32 0.0, %v9039
        %v9041 = vpop.f32.mrf.mxu0
        %9042 = vdwg.mxu0
        %v9044 = vunpack.c.l.b16 %v7207
        %v9045 = vpack.c.b16 %v9044, %v9044
        %9046 = vrot.lane.b32.xlu0 %v9045, 96
        %v9047 = vpop.permute.xlu0 %9046
        %v9049 = vsel %vm604, %v8747, 0
        %v9052 = vsel %vm2161, %v9047, 0
        %9054 = vmatpush.bf16.msra.mxu0 0
        %9055 = vmatpush.bf16.msra.mxu0 0
        %9056 = vmatpush.bf16.msra.mxu0 0
        %9057 = vmatpush.bf16.msra.mxu0 0
        %9058 = vmatpush.bf16.msra.mxu0 0
        %9059 = vmatpush.bf16.msra.mxu0 0
        %9060 = vmatpush.bf16.msra.mxu0 0
        %9061 = vmatpush.bf16.msra.mxu0 %v9052
        %9062 = vmatmul.bf16.gmra.mxu0 %v9049
        %v9063 = vpop.f32.mrf.mxu0
        %v9064 = vadd.f32 0.0, %v9063
        %v9065 = vpop.f32.mrf.mxu0
        %9066 = vdwg.mxu0
        %v9068 = vunpack.c.l.b16 %v7208
        %v9069 = vpack.c.b16 %v9068, %v9068
        %9070 = vrot.lane.b32.xlu0 %v9069, 96
        %v9071 = vpop.permute.xlu0 %9070
        %v9073 = vsel %vm604, %v8748, 0
        %v9076 = vsel %vm2161, %v9071, 0
        %9078 = vmatpush.bf16.msra.mxu0 0
        %9079 = vmatpush.bf16.msra.mxu0 0
        %9080 = vmatpush.bf16.msra.mxu0 0
        %9081 = vmatpush.bf16.msra.mxu0 0
        %9082 = vmatpush.bf16.msra.mxu0 0
        %9083 = vmatpush.bf16.msra.mxu0 0
        %9084 = vmatpush.bf16.msra.mxu0 0
        %9085 = vmatpush.bf16.msra.mxu0 %v9076
        %9086 = vmatmul.bf16.gmra.mxu0 %v9073
        %v9087 = vpop.f32.mrf.mxu0
        %v9088 = vadd.f32 0.0, %v9087
        %v9089 = vpop.f32.mrf.mxu0
        %9090 = vdwg.mxu0
        %v9092 = vunpack.c.l.b16 %v7209
        %v9093 = vpack.c.b16 %v9092, %v9092
        %9094 = vrot.lane.b32.xlu0 %v9093, 96
        %v9095 = vpop.permute.xlu0 %9094
        %v9097 = vsel %vm604, %v8749, 0
        %v9100 = vsel %vm2161, %v9095, 0
        %9102 = vmatpush.bf16.msra.mxu0 0
        %9103 = vmatpush.bf16.msra.mxu0 0
        %9104 = vmatpush.bf16.msra.mxu0 0
        %9105 = vmatpush.bf16.msra.mxu0 0
        %9106 = vmatpush.bf16.msra.mxu0 0
        %9107 = vmatpush.bf16.msra.mxu0 0
        %9108 = vmatpush.bf16.msra.mxu0 0
        %9109 = vmatpush.bf16.msra.mxu0 %v9100
        %9110 = vmatmul.bf16.gmra.mxu0 %v9097
        %v9111 = vpop.f32.mrf.mxu0
        %v9112 = vadd.f32 0.0, %v9111
        %v9113 = vpop.f32.mrf.mxu0
        %9114 = vdwg.mxu0
        %v9116 = vunpack.c.l.b16 %v7210
        %v9117 = vpack.c.b16 %v9116, %v9116
        %9118 = vrot.lane.b32.xlu0 %v9117, 96
        %v9119 = vpop.permute.xlu0 %9118
        %v9121 = vsel %vm604, %v8750, 0
        %v9124 = vsel %vm2161, %v9119, 0
        %9126 = vmatpush.bf16.msra.mxu0 0
        %9127 = vmatpush.bf16.msra.mxu0 0
        %9128 = vmatpush.bf16.msra.mxu0 0
        %9129 = vmatpush.bf16.msra.mxu0 0
        %9130 = vmatpush.bf16.msra.mxu0 0
        %9131 = vmatpush.bf16.msra.mxu0 0
        %9132 = vmatpush.bf16.msra.mxu0 0
        %9133 = vmatpush.bf16.msra.mxu0 %v9124
        %9134 = vmatmul.bf16.gmra.mxu0 %v9121
        %v9135 = vpop.f32.mrf.mxu0
        %v9136 = vadd.f32 0.0, %v9135
        %v9137 = vpop.f32.mrf.mxu0
        %9138 = vdwg.mxu0
        %v9140 = vunpack.c.l.b16 %v7211
        %v9141 = vpack.c.b16 %v9140, %v9140
        %9142 = vrot.lane.b32.xlu0 %v9141, 96
        %v9143 = vpop.permute.xlu0 %9142
        %v9145 = vsel %vm604, %v8751, 0
        %v9148 = vsel %vm2161, %v9143, 0
        %9150 = vmatpush.bf16.msra.mxu0 0
        %9151 = vmatpush.bf16.msra.mxu0 0
        %9152 = vmatpush.bf16.msra.mxu0 0
        %9153 = vmatpush.bf16.msra.mxu0 0
        %9154 = vmatpush.bf16.msra.mxu0 0
        %9155 = vmatpush.bf16.msra.mxu0 0
        %9156 = vmatpush.bf16.msra.mxu0 0
        %9157 = vmatpush.bf16.msra.mxu0 %v9148
        %9158 = vmatmul.bf16.gmra.mxu0 %v9145
        %v9159 = vpop.f32.mrf.mxu0
        %v9160 = vadd.f32 0.0, %v9159
        %v9161 = vpop.f32.mrf.mxu0
        %9162 = vdwg.mxu0
        %v9164 = vunpack.c.l.b16 %v7212
        %v9165 = vpack.c.b16 %v9164, %v9164
        %9166 = vrot.lane.b32.xlu0 %v9165, 96
        %v9167 = vpop.permute.xlu0 %9166
        %v9169 = vsel %vm604, %v8752, 0
        %v9172 = vsel %vm2161, %v9167, 0
        %9174 = vmatpush.bf16.msra.mxu0 0
        %9175 = vmatpush.bf16.msra.mxu0 0
        %9176 = vmatpush.bf16.msra.mxu0 0
        %9177 = vmatpush.bf16.msra.mxu0 0
        %9178 = vmatpush.bf16.msra.mxu0 0
        %9179 = vmatpush.bf16.msra.mxu0 0
        %9180 = vmatpush.bf16.msra.mxu0 0
        %9181 = vmatpush.bf16.msra.mxu0 %v9172
        %9182 = vmatmul.bf16.gmra.mxu0 %v9169
        %v9183 = vpop.f32.mrf.mxu0
        %v9184 = vadd.f32 0.0, %v9183
        %v9185 = vpop.f32.mrf.mxu0
        %9186 = vdwg.mxu0
        %v9188 = vunpack.c.l.b16 %v7213
        %v9189 = vpack.c.b16 %v9188, %v9188
        %9190 = vrot.lane.b32.xlu0 %v9189, 96
        %v9191 = vpop.permute.xlu0 %9190
        %v9193 = vsel %vm604, %v8753, 0
        %v9196 = vsel %vm2161, %v9191, 0
        %9198 = vmatpush.bf16.msra.mxu0 0
        %9199 = vmatpush.bf16.msra.mxu0 0
        %9200 = vmatpush.bf16.msra.mxu0 0
        %9201 = vmatpush.bf16.msra.mxu0 0
        %9202 = vmatpush.bf16.msra.mxu0 0
        %9203 = vmatpush.bf16.msra.mxu0 0
        %9204 = vmatpush.bf16.msra.mxu0 0
        %9205 = vmatpush.bf16.msra.mxu0 %v9196
        %9206 = vmatmul.bf16.gmra.mxu0 %v9193
        %v9207 = vpop.f32.mrf.mxu0
        %v9208 = vadd.f32 0.0, %v9207
        %v9209 = vpop.f32.mrf.mxu0
        %9210 = vdwg.mxu0
        %v9212 = vunpack.c.l.b16 %v7214
        %v9213 = vpack.c.b16 %v9212, %v9212
        %9214 = vrot.lane.b32.xlu0 %v9213, 96
        %v9215 = vpop.permute.xlu0 %9214
        %v9217 = vsel %vm604, %v8754, 0
        %v9220 = vsel %vm2161, %v9215, 0
        %9222 = vmatpush.bf16.msra.mxu0 0
        %9223 = vmatpush.bf16.msra.mxu0 0
        %9224 = vmatpush.bf16.msra.mxu0 0
        %9225 = vmatpush.bf16.msra.mxu0 0
        %9226 = vmatpush.bf16.msra.mxu0 0
        %9227 = vmatpush.bf16.msra.mxu0 0
        %9228 = vmatpush.bf16.msra.mxu0 0
        %9229 = vmatpush.bf16.msra.mxu0 %v9220
        %9230 = vmatmul.bf16.gmra.mxu0 %v9217
        %v9231 = vpop.f32.mrf.mxu0
        %v9232 = vadd.f32 0.0, %v9231
        %v9233 = vpop.f32.mrf.mxu0
        %9234 = vdwg.mxu0
        %v9235 = vadd.f32 %v7613, %v8776
        %v9236 = vadd.f32 %v7634, %v8800
        %v9237 = vadd.f32 %v7655, %v8824
        %v9238 = vadd.f32 %v7676, %v8848
        %v9239 = vadd.f32 %v7697, %v8872
        %v9240 = vadd.f32 %v7718, %v8896
        %v9241 = vadd.f32 %v7739, %v8920
        %v9242 = vadd.f32 %v7760, %v8944
        %v9243 = vadd.f32 %v7781, %v8968
        %v9244 = vadd.f32 %v7802, %v8992
        %v9245 = vadd.f32 %v7823, %v9016
        %v9246 = vadd.f32 %v7844, %v9040
        %v9247 = vadd.f32 %v7865, %v9064
        %v9248 = vadd.f32 %v7886, %v9088
        %v9249 = vadd.f32 %v7907, %v9112
        %v9250 = vadd.f32 %v7928, %v9136
        %v9251 = vadd.f32 %v7949, %v9160
        %v9252 = vadd.f32 %v7970, %v9184
        %v9253 = vadd.f32 %v7991, %v9208
        %v9254 = vadd.f32 %v8012, %v9232
        %9255 = vrot.lane.b32.xlu0 %v5657, 72
        %v9256 = vpop.permute.xlu0 %9255
        %9257 = vrot.lane.b32.xlu0 %v5657, 40
        %v9258 = vpop.permute.xlu0 %9257
        %v9260 = vsel %vm604, %v9256, 0
        %v9263 = vsel %vm604, %v9258, 0
        %9265 = vmatpush.bf16.xpose.msra.mxu0 0
        %9266 = vmatpush.bf16.xpose.msra.mxu0 0
        %9267 = vmatpush.bf16.xpose.msra.mxu0 0
        %9268 = vmatpush.bf16.xpose.msra.mxu0 0
        %9269 = vmatpush.bf16.xpose.msra.mxu0 0
        %9270 = vmatpush.bf16.xpose.msra.mxu0 0
        %9271 = vmatpush.bf16.xpose.msra.mxu0 0
        %9272 = vmatpush.bf16.xpose.msra.mxu0 %v9263
        %9273 = vmatmul.bf16.gmra.mxu0 %v9260
        %v9274 = vpop.f32.mrf.mxu0
        %v9275 = vadd.f32 0.0, %v9274
        %v9276 = vpop.f32.mrf.mxu0
        %9277 = vdwg.mxu0
        %9278 = vrot.lane.b32.xlu0 %v5683, 72
        %v9279 = vpop.permute.xlu0 %9278
        %9280 = vrot.lane.b32.xlu0 %v5683, 40
        %v9281 = vpop.permute.xlu0 %9280
        %v9283 = vsel %vm604, %v9279, 0
        %v9286 = vsel %vm604, %v9281, 0
        %9288 = vmatpush.bf16.xpose.msra.mxu0 0
        %9289 = vmatpush.bf16.xpose.msra.mxu0 0
        %9290 = vmatpush.bf16.xpose.msra.mxu0 0
        %9291 = vmatpush.bf16.xpose.msra.mxu0 0
        %9292 = vmatpush.bf16.xpose.msra.mxu0 0
        %9293 = vmatpush.bf16.xpose.msra.mxu0 0
        %9294 = vmatpush.bf16.xpose.msra.mxu0 0
        %9295 = vmatpush.bf16.xpose.msra.mxu0 %v9286
        %9296 = vmatmul.bf16.gmra.mxu0 %v9283
        %v9297 = vpop.f32.mrf.mxu0
        %v9298 = vadd.f32 0.0, %v9297
        %v9299 = vpop.f32.mrf.mxu0
        %9300 = vdwg.mxu0
        %9301 = vrot.lane.b32.xlu0 %v5709, 72
        %v9302 = vpop.permute.xlu0 %9301
        %9303 = vrot.lane.b32.xlu0 %v5709, 40
        %v9304 = vpop.permute.xlu0 %9303
        %v9306 = vsel %vm604, %v9302, 0
        %v9309 = vsel %vm604, %v9304, 0
        %9311 = vmatpush.bf16.xpose.msra.mxu0 0
        %9312 = vmatpush.bf16.xpose.msra.mxu0 0
        %9313 = vmatpush.bf16.xpose.msra.mxu0 0
        %9314 = vmatpush.bf16.xpose.msra.mxu0 0
        %9315 = vmatpush.bf16.xpose.msra.mxu0 0
        %9316 = vmatpush.bf16.xpose.msra.mxu0 0
        %9317 = vmatpush.bf16.xpose.msra.mxu0 0
        %9318 = vmatpush.bf16.xpose.msra.mxu0 %v9309
        %9319 = vmatmul.bf16.gmra.mxu0 %v9306
        %v9320 = vpop.f32.mrf.mxu0
        %v9321 = vadd.f32 0.0, %v9320
        %v9322 = vpop.f32.mrf.mxu0
        %9323 = vdwg.mxu0
        %9324 = vrot.lane.b32.xlu0 %v5735, 72
        %v9325 = vpop.permute.xlu0 %9324
        %9326 = vrot.lane.b32.xlu0 %v5735, 40
        %v9327 = vpop.permute.xlu0 %9326
        %v9329 = vsel %vm604, %v9325, 0
        %v9332 = vsel %vm604, %v9327, 0
        %9334 = vmatpush.bf16.xpose.msra.mxu0 0
        %9335 = vmatpush.bf16.xpose.msra.mxu0 0
        %9336 = vmatpush.bf16.xpose.msra.mxu0 0
        %9337 = vmatpush.bf16.xpose.msra.mxu0 0
        %9338 = vmatpush.bf16.xpose.msra.mxu0 0
        %9339 = vmatpush.bf16.xpose.msra.mxu0 0
        %9340 = vmatpush.bf16.xpose.msra.mxu0 0
        %9341 = vmatpush.bf16.xpose.msra.mxu0 %v9332
        %9342 = vmatmul.bf16.gmra.mxu0 %v9329
        %v9343 = vpop.f32.mrf.mxu0
        %v9344 = vadd.f32 0.0, %v9343
        %v9345 = vpop.f32.mrf.mxu0
        %9346 = vdwg.mxu0
        %9347 = vrot.lane.b32.xlu0 %v5761, 72
        %v9348 = vpop.permute.xlu0 %9347
        %9349 = vrot.lane.b32.xlu0 %v5761, 40
        %v9350 = vpop.permute.xlu0 %9349
        %v9352 = vsel %vm604, %v9348, 0
        %v9355 = vsel %vm604, %v9350, 0
        %9357 = vmatpush.bf16.xpose.msra.mxu0 0
        %9358 = vmatpush.bf16.xpose.msra.mxu0 0
        %9359 = vmatpush.bf16.xpose.msra.mxu0 0
        %9360 = vmatpush.bf16.xpose.msra.mxu0 0
        %9361 = vmatpush.bf16.xpose.msra.mxu0 0
        %9362 = vmatpush.bf16.xpose.msra.mxu0 0
        %9363 = vmatpush.bf16.xpose.msra.mxu0 0
        %9364 = vmatpush.bf16.xpose.msra.mxu0 %v9355
        %9365 = vmatmul.bf16.gmra.mxu0 %v9352
        %v9366 = vpop.f32.mrf.mxu0
        %v9367 = vadd.f32 0.0, %v9366
        %v9368 = vpop.f32.mrf.mxu0
        %9369 = vdwg.mxu0
        %9370 = vrot.lane.b32.xlu0 %v5787, 72
        %v9371 = vpop.permute.xlu0 %9370
        %9372 = vrot.lane.b32.xlu0 %v5787, 40
        %v9373 = vpop.permute.xlu0 %9372
        %v9375 = vsel %vm604, %v9371, 0
        %v9378 = vsel %vm604, %v9373, 0
        %9380 = vmatpush.bf16.xpose.msra.mxu0 0
        %9381 = vmatpush.bf16.xpose.msra.mxu0 0
        %9382 = vmatpush.bf16.xpose.msra.mxu0 0
        %9383 = vmatpush.bf16.xpose.msra.mxu0 0
        %9384 = vmatpush.bf16.xpose.msra.mxu0 0
        %9385 = vmatpush.bf16.xpose.msra.mxu0 0
        %9386 = vmatpush.bf16.xpose.msra.mxu0 0
        %9387 = vmatpush.bf16.xpose.msra.mxu0 %v9378
        %9388 = vmatmul.bf16.gmra.mxu0 %v9375
        %v9389 = vpop.f32.mrf.mxu0
        %v9390 = vadd.f32 0.0, %v9389
        %v9391 = vpop.f32.mrf.mxu0
        %9392 = vdwg.mxu0
        %9393 = vrot.lane.b32.xlu0 %v5813, 72
        %v9394 = vpop.permute.xlu0 %9393
        %9395 = vrot.lane.b32.xlu0 %v5813, 40
        %v9396 = vpop.permute.xlu0 %9395
        %v9398 = vsel %vm604, %v9394, 0
        %v9401 = vsel %vm604, %v9396, 0
        %9403 = vmatpush.bf16.xpose.msra.mxu0 0
        %9404 = vmatpush.bf16.xpose.msra.mxu0 0
        %9405 = vmatpush.bf16.xpose.msra.mxu0 0
        %9406 = vmatpush.bf16.xpose.msra.mxu0 0
        %9407 = vmatpush.bf16.xpose.msra.mxu0 0
        %9408 = vmatpush.bf16.xpose.msra.mxu0 0
        %9409 = vmatpush.bf16.xpose.msra.mxu0 0
        %9410 = vmatpush.bf16.xpose.msra.mxu0 %v9401
        %9411 = vmatmul.bf16.gmra.mxu0 %v9398
        %v9412 = vpop.f32.mrf.mxu0
        %v9413 = vadd.f32 0.0, %v9412
        %v9414 = vpop.f32.mrf.mxu0
        %9415 = vdwg.mxu0
        %9416 = vrot.lane.b32.xlu0 %v5839, 72
        %v9417 = vpop.permute.xlu0 %9416
        %9418 = vrot.lane.b32.xlu0 %v5839, 40
        %v9419 = vpop.permute.xlu0 %9418
        %v9421 = vsel %vm604, %v9417, 0
        %v9424 = vsel %vm604, %v9419, 0
        %9426 = vmatpush.bf16.xpose.msra.mxu0 0
        %9427 = vmatpush.bf16.xpose.msra.mxu0 0
        %9428 = vmatpush.bf16.xpose.msra.mxu0 0
        %9429 = vmatpush.bf16.xpose.msra.mxu0 0
        %9430 = vmatpush.bf16.xpose.msra.mxu0 0
        %9431 = vmatpush.bf16.xpose.msra.mxu0 0
        %9432 = vmatpush.bf16.xpose.msra.mxu0 0
        %9433 = vmatpush.bf16.xpose.msra.mxu0 %v9424
        %9434 = vmatmul.bf16.gmra.mxu0 %v9421
        %v9435 = vpop.f32.mrf.mxu0
        %v9436 = vadd.f32 0.0, %v9435
        %v9437 = vpop.f32.mrf.mxu0
        %9438 = vdwg.mxu0
        %9439 = vrot.lane.b32.xlu0 %v5865, 72
        %v9440 = vpop.permute.xlu0 %9439
        %9441 = vrot.lane.b32.xlu0 %v5865, 40
        %v9442 = vpop.permute.xlu0 %9441
        %v9444 = vsel %vm604, %v9440, 0
        %v9447 = vsel %vm604, %v9442, 0
        %9449 = vmatpush.bf16.xpose.msra.mxu0 0
        %9450 = vmatpush.bf16.xpose.msra.mxu0 0
        %9451 = vmatpush.bf16.xpose.msra.mxu0 0
        %9452 = vmatpush.bf16.xpose.msra.mxu0 0
        %9453 = vmatpush.bf16.xpose.msra.mxu0 0
        %9454 = vmatpush.bf16.xpose.msra.mxu0 0
        %9455 = vmatpush.bf16.xpose.msra.mxu0 0
        %9456 = vmatpush.bf16.xpose.msra.mxu0 %v9447
        %9457 = vmatmul.bf16.gmra.mxu0 %v9444
        %v9458 = vpop.f32.mrf.mxu0
        %v9459 = vadd.f32 0.0, %v9458
        %v9460 = vpop.f32.mrf.mxu0
        %9461 = vdwg.mxu0
        %9462 = vrot.lane.b32.xlu0 %v5891, 72
        %v9463 = vpop.permute.xlu0 %9462
        %9464 = vrot.lane.b32.xlu0 %v5891, 40
        %v9465 = vpop.permute.xlu0 %9464
        %v9467 = vsel %vm604, %v9463, 0
        %v9470 = vsel %vm604, %v9465, 0
        %9472 = vmatpush.bf16.xpose.msra.mxu0 0
        %9473 = vmatpush.bf16.xpose.msra.mxu0 0
        %9474 = vmatpush.bf16.xpose.msra.mxu0 0
        %9475 = vmatpush.bf16.xpose.msra.mxu0 0
        %9476 = vmatpush.bf16.xpose.msra.mxu0 0
        %9477 = vmatpush.bf16.xpose.msra.mxu0 0
        %9478 = vmatpush.bf16.xpose.msra.mxu0 0
        %9479 = vmatpush.bf16.xpose.msra.mxu0 %v9470
        %9480 = vmatmul.bf16.gmra.mxu0 %v9467
        %v9481 = vpop.f32.mrf.mxu0
        %v9482 = vadd.f32 0.0, %v9481
        %v9483 = vpop.f32.mrf.mxu0
        %9484 = vdwg.mxu0
        %9485 = vrot.lane.b32.xlu0 %v5917, 72
        %v9486 = vpop.permute.xlu0 %9485
        %9487 = vrot.lane.b32.xlu0 %v5917, 40
        %v9488 = vpop.permute.xlu0 %9487
        %v9490 = vsel %vm604, %v9486, 0
        %v9493 = vsel %vm604, %v9488, 0
        %9495 = vmatpush.bf16.xpose.msra.mxu0 0
        %9496 = vmatpush.bf16.xpose.msra.mxu0 0
        %9497 = vmatpush.bf16.xpose.msra.mxu0 0
        %9498 = vmatpush.bf16.xpose.msra.mxu0 0
        %9499 = vmatpush.bf16.xpose.msra.mxu0 0
        %9500 = vmatpush.bf16.xpose.msra.mxu0 0
        %9501 = vmatpush.bf16.xpose.msra.mxu0 0
        %9502 = vmatpush.bf16.xpose.msra.mxu0 %v9493
        %9503 = vmatmul.bf16.gmra.mxu0 %v9490
        %v9504 = vpop.f32.mrf.mxu0
        %v9505 = vadd.f32 0.0, %v9504
        %v9506 = vpop.f32.mrf.mxu0
        %9507 = vdwg.mxu0
        %9508 = vrot.lane.b32.xlu0 %v5943, 72
        %v9509 = vpop.permute.xlu0 %9508
        %9510 = vrot.lane.b32.xlu0 %v5943, 40
        %v9511 = vpop.permute.xlu0 %9510
        %v9513 = vsel %vm604, %v9509, 0
        %v9516 = vsel %vm604, %v9511, 0
        %9518 = vmatpush.bf16.xpose.msra.mxu0 0
        %9519 = vmatpush.bf16.xpose.msra.mxu0 0
        %9520 = vmatpush.bf16.xpose.msra.mxu0 0
        %9521 = vmatpush.bf16.xpose.msra.mxu0 0
        %9522 = vmatpush.bf16.xpose.msra.mxu0 0
        %9523 = vmatpush.bf16.xpose.msra.mxu0 0
        %9524 = vmatpush.bf16.xpose.msra.mxu0 0
        %9525 = vmatpush.bf16.xpose.msra.mxu0 %v9516
        %9526 = vmatmul.bf16.gmra.mxu0 %v9513
        %v9527 = vpop.f32.mrf.mxu0
        %v9528 = vadd.f32 0.0, %v9527
        %v9529 = vpop.f32.mrf.mxu0
        %9530 = vdwg.mxu0
        %9531 = vrot.lane.b32.xlu0 %v5969, 72
        %v9532 = vpop.permute.xlu0 %9531
        %9533 = vrot.lane.b32.xlu0 %v5969, 40
        %v9534 = vpop.permute.xlu0 %9533
        %v9536 = vsel %vm604, %v9532, 0
        %v9539 = vsel %vm604, %v9534, 0
        %9541 = vmatpush.bf16.xpose.msra.mxu0 0
        %9542 = vmatpush.bf16.xpose.msra.mxu0 0
        %9543 = vmatpush.bf16.xpose.msra.mxu0 0
        %9544 = vmatpush.bf16.xpose.msra.mxu0 0
        %9545 = vmatpush.bf16.xpose.msra.mxu0 0
        %9546 = vmatpush.bf16.xpose.msra.mxu0 0
        %9547 = vmatpush.bf16.xpose.msra.mxu0 0
        %9548 = vmatpush.bf16.xpose.msra.mxu0 %v9539
        %9549 = vmatmul.bf16.gmra.mxu0 %v9536
        %v9550 = vpop.f32.mrf.mxu0
        %v9551 = vadd.f32 0.0, %v9550
        %v9552 = vpop.f32.mrf.mxu0
        %9553 = vdwg.mxu0
        %9554 = vrot.lane.b32.xlu0 %v5995, 72
        %v9555 = vpop.permute.xlu0 %9554
        %9556 = vrot.lane.b32.xlu0 %v5995, 40
        %v9557 = vpop.permute.xlu0 %9556
        %v9559 = vsel %vm604, %v9555, 0
        %v9562 = vsel %vm604, %v9557, 0
        %9564 = vmatpush.bf16.xpose.msra.mxu0 0
        %9565 = vmatpush.bf16.xpose.msra.mxu0 0
        %9566 = vmatpush.bf16.xpose.msra.mxu0 0
        %9567 = vmatpush.bf16.xpose.msra.mxu0 0
        %9568 = vmatpush.bf16.xpose.msra.mxu0 0
        %9569 = vmatpush.bf16.xpose.msra.mxu0 0
        %9570 = vmatpush.bf16.xpose.msra.mxu0 0
        %9571 = vmatpush.bf16.xpose.msra.mxu0 %v9562
        %9572 = vmatmul.bf16.gmra.mxu0 %v9559
        %v9573 = vpop.f32.mrf.mxu0
        %v9574 = vadd.f32 0.0, %v9573
        %v9575 = vpop.f32.mrf.mxu0
        %9576 = vdwg.mxu0
        %9577 = vrot.lane.b32.xlu0 %v6021, 72
        %v9578 = vpop.permute.xlu0 %9577
        %9579 = vrot.lane.b32.xlu0 %v6021, 40
        %v9580 = vpop.permute.xlu0 %9579
        %v9582 = vsel %vm604, %v9578, 0
        %v9585 = vsel %vm604, %v9580, 0
        %9587 = vmatpush.bf16.xpose.msra.mxu0 0
        %9588 = vmatpush.bf16.xpose.msra.mxu0 0
        %9589 = vmatpush.bf16.xpose.msra.mxu0 0
        %9590 = vmatpush.bf16.xpose.msra.mxu0 0
        %9591 = vmatpush.bf16.xpose.msra.mxu0 0
        %9592 = vmatpush.bf16.xpose.msra.mxu0 0
        %9593 = vmatpush.bf16.xpose.msra.mxu0 0
        %9594 = vmatpush.bf16.xpose.msra.mxu0 %v9585
        %9595 = vmatmul.bf16.gmra.mxu0 %v9582
        %v9596 = vpop.f32.mrf.mxu0
        %v9597 = vadd.f32 0.0, %v9596
        %v9598 = vpop.f32.mrf.mxu0
        %9599 = vdwg.mxu0
        %9600 = vrot.lane.b32.xlu0 %v6047, 72
        %v9601 = vpop.permute.xlu0 %9600
        %9602 = vrot.lane.b32.xlu0 %v6047, 40
        %v9603 = vpop.permute.xlu0 %9602
        %v9605 = vsel %vm604, %v9601, 0
        %v9608 = vsel %vm604, %v9603, 0
        %9610 = vmatpush.bf16.xpose.msra.mxu0 0
        %9611 = vmatpush.bf16.xpose.msra.mxu0 0
        %9612 = vmatpush.bf16.xpose.msra.mxu0 0
        %9613 = vmatpush.bf16.xpose.msra.mxu0 0
        %9614 = vmatpush.bf16.xpose.msra.mxu0 0
        %9615 = vmatpush.bf16.xpose.msra.mxu0 0
        %9616 = vmatpush.bf16.xpose.msra.mxu0 0
        %9617 = vmatpush.bf16.xpose.msra.mxu0 %v9608
        %9618 = vmatmul.bf16.gmra.mxu0 %v9605
        %v9619 = vpop.f32.mrf.mxu0
        %v9620 = vadd.f32 0.0, %v9619
        %v9621 = vpop.f32.mrf.mxu0
        %9622 = vdwg.mxu0
        %9623 = vrot.lane.b32.xlu0 %v6073, 72
        %v9624 = vpop.permute.xlu0 %9623
        %9625 = vrot.lane.b32.xlu0 %v6073, 40
        %v9626 = vpop.permute.xlu0 %9625
        %v9628 = vsel %vm604, %v9624, 0
        %v9631 = vsel %vm604, %v9626, 0
        %9633 = vmatpush.bf16.xpose.msra.mxu0 0
        %9634 = vmatpush.bf16.xpose.msra.mxu0 0
        %9635 = vmatpush.bf16.xpose.msra.mxu0 0
        %9636 = vmatpush.bf16.xpose.msra.mxu0 0
        %9637 = vmatpush.bf16.xpose.msra.mxu0 0
        %9638 = vmatpush.bf16.xpose.msra.mxu0 0
        %9639 = vmatpush.bf16.xpose.msra.mxu0 0
        %9640 = vmatpush.bf16.xpose.msra.mxu0 %v9631
        %9641 = vmatmul.bf16.gmra.mxu0 %v9628
        %v9642 = vpop.f32.mrf.mxu0
        %v9643 = vadd.f32 0.0, %v9642
        %v9644 = vpop.f32.mrf.mxu0
        %9645 = vdwg.mxu0
        %9646 = vrot.lane.b32.xlu0 %v6099, 72
        %v9647 = vpop.permute.xlu0 %9646
        %9648 = vrot.lane.b32.xlu0 %v6099, 40
        %v9649 = vpop.permute.xlu0 %9648
        %v9651 = vsel %vm604, %v9647, 0
        %v9654 = vsel %vm604, %v9649, 0
        %9656 = vmatpush.bf16.xpose.msra.mxu0 0
        %9657 = vmatpush.bf16.xpose.msra.mxu0 0
        %9658 = vmatpush.bf16.xpose.msra.mxu0 0
        %9659 = vmatpush.bf16.xpose.msra.mxu0 0
        %9660 = vmatpush.bf16.xpose.msra.mxu0 0
        %9661 = vmatpush.bf16.xpose.msra.mxu0 0
        %9662 = vmatpush.bf16.xpose.msra.mxu0 0
        %9663 = vmatpush.bf16.xpose.msra.mxu0 %v9654
        %9664 = vmatmul.bf16.gmra.mxu0 %v9651
        %v9665 = vpop.f32.mrf.mxu0
        %v9666 = vadd.f32 0.0, %v9665
        %v9667 = vpop.f32.mrf.mxu0
        %9668 = vdwg.mxu0
        %9669 = vrot.lane.b32.xlu0 %v6125, 72
        %v9670 = vpop.permute.xlu0 %9669
        %9671 = vrot.lane.b32.xlu0 %v6125, 40
        %v9672 = vpop.permute.xlu0 %9671
        %v9674 = vsel %vm604, %v9670, 0
        %v9677 = vsel %vm604, %v9672, 0
        %9679 = vmatpush.bf16.xpose.msra.mxu0 0
        %9680 = vmatpush.bf16.xpose.msra.mxu0 0
        %9681 = vmatpush.bf16.xpose.msra.mxu0 0
        %9682 = vmatpush.bf16.xpose.msra.mxu0 0
        %9683 = vmatpush.bf16.xpose.msra.mxu0 0
        %9684 = vmatpush.bf16.xpose.msra.mxu0 0
        %9685 = vmatpush.bf16.xpose.msra.mxu0 0
        %9686 = vmatpush.bf16.xpose.msra.mxu0 %v9677
        %9687 = vmatmul.bf16.gmra.mxu0 %v9674
        %v9688 = vpop.f32.mrf.mxu0
        %v9689 = vadd.f32 0.0, %v9688
        %v9690 = vpop.f32.mrf.mxu0
        %9691 = vdwg.mxu0
        %9692 = vrot.lane.b32.xlu0 %v6151, 72
        %v9693 = vpop.permute.xlu0 %9692
        %9694 = vrot.lane.b32.xlu0 %v6151, 40
        %v9695 = vpop.permute.xlu0 %9694
        %v9697 = vsel %vm604, %v9693, 0
        %v9700 = vsel %vm604, %v9695, 0
        %9702 = vmatpush.bf16.xpose.msra.mxu0 0
        %9703 = vmatpush.bf16.xpose.msra.mxu0 0
        %9704 = vmatpush.bf16.xpose.msra.mxu0 0
        %9705 = vmatpush.bf16.xpose.msra.mxu0 0
        %9706 = vmatpush.bf16.xpose.msra.mxu0 0
        %9707 = vmatpush.bf16.xpose.msra.mxu0 0
        %9708 = vmatpush.bf16.xpose.msra.mxu0 0
        %9709 = vmatpush.bf16.xpose.msra.mxu0 %v9700
        %9710 = vmatmul.bf16.gmra.mxu0 %v9697
        %v9711 = vpop.f32.mrf.mxu0
        %v9712 = vadd.f32 0.0, %v9711
        %v9713 = vpop.f32.mrf.mxu0
        %9714 = vdwg.mxu0
        %v9715 = vmul.f32 %v9275, 0.35355338
        %v9716 = vmul.f32 %v9298, 0.35355338
        %v9717 = vmul.f32 %v9321, 0.35355338
        %v9718 = vmul.f32 %v9344, 0.35355338
        %v9719 = vmul.f32 %v9367, 0.35355338
        %v9720 = vmul.f32 %v9390, 0.35355338
        %v9721 = vmul.f32 %v9413, 0.35355338
        %v9722 = vmul.f32 %v9436, 0.35355338
        %v9723 = vmul.f32 %v9459, 0.35355338
        %v9724 = vmul.f32 %v9482, 0.35355338
        %v9725 = vmul.f32 %v9505, 0.35355338
        %v9726 = vmul.f32 %v9528, 0.35355338
        %v9727 = vmul.f32 %v9551, 0.35355338
        %v9728 = vmul.f32 %v9574, 0.35355338
        %v9729 = vmul.f32 %v9597, 0.35355338
        %v9730 = vmul.f32 %v9620, 0.35355338
        %v9731 = vmul.f32 %v9643, 0.35355338
        %v9732 = vmul.f32 %v9666, 0.35355338
        %v9733 = vmul.f32 %v9689, 0.35355338
        %v9734 = vmul.f32 %v9712, 0.35355338
        %v9735 = vadd.f32 %v9715, %v367
        %v9736 = vadd.f32 %v9716, %v367
        %v9737 = vadd.f32 %v9717, %v367
        %v9738 = vadd.f32 %v9718, %v367
        %v9739 = vadd.f32 %v9719, %v367
        %v9740 = vadd.f32 %v9720, %v367
        %v9741 = vadd.f32 %v9721, %v367
        %v9742 = vadd.f32 %v9722, %v367
        %v9743 = vadd.f32 %v9723, %v367
        %v9744 = vadd.f32 %v9724, %v367
        %v9745 = vadd.f32 %v9725, %v367
        %v9746 = vadd.f32 %v9726, %v367
        %v9747 = vadd.f32 %v9727, %v367
        %v9748 = vadd.f32 %v9728, %v367
        %v9749 = vadd.f32 %v9729, %v367
        %v9750 = vadd.f32 %v9730, %v367
        %v9751 = vadd.f32 %v9731, %v367
        %v9752 = vadd.f32 %v9732, %v367
        %v9753 = vadd.f32 %v9733, %v367
        %v9754 = vadd.f32 %v9734, %v367
        %v9755 = vsel %vm604, %v9735, -inf
        %9756 = vmax.xlane.f32.xlu0 %v9755
        %v9757 = vpop.xlane.xlu0 %9756
        %v9758 = vsel %vm604, %v9736, -inf
        %9759 = vmax.xlane.f32.xlu0 %v9758
        %v9760 = vpop.xlane.xlu0 %9759
        %v9761 = vsel %vm604, %v9737, -inf
        %9762 = vmax.xlane.f32.xlu0 %v9761
        %v9763 = vpop.xlane.xlu0 %9762
        %v9764 = vsel %vm604, %v9738, -inf
        %9765 = vmax.xlane.f32.xlu0 %v9764
        %v9766 = vpop.xlane.xlu0 %9765
        %v9767 = vsel %vm604, %v9739, -inf
        %9768 = vmax.xlane.f32.xlu0 %v9767
        %v9769 = vpop.xlane.xlu0 %9768
        %v9770 = vsel %vm604, %v9740, -inf
        %9771 = vmax.xlane.f32.xlu0 %v9770
        %v9772 = vpop.xlane.xlu0 %9771
        %v9773 = vsel %vm604, %v9741, -inf
        %9774 = vmax.xlane.f32.xlu0 %v9773
        %v9775 = vpop.xlane.xlu0 %9774
        %v9776 = vsel %vm604, %v9742, -inf
        %9777 = vmax.xlane.f32.xlu0 %v9776
        %v9778 = vpop.xlane.xlu0 %9777
        %v9779 = vsel %vm604, %v9743, -inf
        %9780 = vmax.xlane.f32.xlu0 %v9779
        %v9781 = vpop.xlane.xlu0 %9780
        %v9782 = vsel %vm604, %v9744, -inf
        %9783 = vmax.xlane.f32.xlu0 %v9782
        %v9784 = vpop.xlane.xlu0 %9783
        %v9785 = vsel %vm604, %v9745, -inf
        %9786 = vmax.xlane.f32.xlu0 %v9785
        %v9787 = vpop.xlane.xlu0 %9786
        %v9788 = vsel %vm604, %v9746, -inf
        %9789 = vmax.xlane.f32.xlu0 %v9788
        %v9790 = vpop.xlane.xlu0 %9789
        %v9791 = vsel %vm604, %v9747, -inf
        %9792 = vmax.xlane.f32.xlu0 %v9791
        %v9793 = vpop.xlane.xlu0 %9792
        %v9794 = vsel %vm604, %v9748, -inf
        %9795 = vmax.xlane.f32.xlu0 %v9794
        %v9796 = vpop.xlane.xlu0 %9795
        %v9797 = vsel %vm604, %v9749, -inf
        %9798 = vmax.xlane.f32.xlu0 %v9797
        %v9799 = vpop.xlane.xlu0 %9798
        %v9800 = vsel %vm604, %v9750, -inf
        %9801 = vmax.xlane.f32.xlu0 %v9800
        %v9802 = vpop.xlane.xlu0 %9801
        %v9803 = vsel %vm604, %v9751, -inf
        %9804 = vmax.xlane.f32.xlu0 %v9803
        %v9805 = vpop.xlane.xlu0 %9804
        %v9806 = vsel %vm604, %v9752, -inf
        %9807 = vmax.xlane.f32.xlu0 %v9806
        %v9808 = vpop.xlane.xlu0 %9807
        %v9809 = vsel %vm604, %v9753, -inf
        %9810 = vmax.xlane.f32.xlu0 %v9809
        %v9811 = vpop.xlane.xlu0 %9810
        %v9812 = vsel %vm604, %v9754, -inf
        %9813 = vmax.xlane.f32.xlu0 %v9812
        %v9814 = vpop.xlane.xlu0 %9813
        %v9815 = vsub.f32 %v9735, %v9757
        %v9816 = vsub.f32 %v9736, %v9760
        %v9817 = vsub.f32 %v9737, %v9763
        %v9818 = vsub.f32 %v9738, %v9766
        %v9819 = vsub.f32 %v9739, %v9769
        %v9820 = vsub.f32 %v9740, %v9772
        %v9821 = vsub.f32 %v9741, %v9775
        %v9822 = vsub.f32 %v9742, %v9778
        %v9823 = vsub.f32 %v9743, %v9781
        %v9824 = vsub.f32 %v9744, %v9784
        %v9825 = vsub.f32 %v9745, %v9787
        %v9826 = vsub.f32 %v9746, %v9790
        %v9827 = vsub.f32 %v9747, %v9793
        %v9828 = vsub.f32 %v9748, %v9796
        %v9829 = vsub.f32 %v9749, %v9799
        %v9830 = vsub.f32 %v9750, %v9802
        %v9831 = vsub.f32 %v9751, %v9805
        %v9832 = vsub.f32 %v9752, %v9808
        %v9833 = vsub.f32 %v9753, %v9811
        %v9834 = vsub.f32 %v9754, %v9814
        %v9835 = vmul.f32 %v9815, 1.442695
        %v9836 = vpow.pop %v9835
        %v9837 = vmul.f32 %v9816, 1.442695
        %v9838 = vpow.pop %v9837
        %v9839 = vmul.f32 %v9817, 1.442695
        %v9840 = vpow.pop %v9839
        %v9841 = vmul.f32 %v9818, 1.442695
        %v9842 = vpow.pop %v9841
        %v9843 = vmul.f32 %v9819, 1.442695
        %v9844 = vpow.pop %v9843
        %v9845 = vmul.f32 %v9820, 1.442695
        %v9846 = vpow.pop %v9845
        %v9847 = vmul.f32 %v9821, 1.442695
        %v9848 = vpow.pop %v9847
        %v9849 = vmul.f32 %v9822, 1.442695
        %v9850 = vpow.pop %v9849
        %v9851 = vmul.f32 %v9823, 1.442695
        %v9852 = vpow.pop %v9851
        %v9853 = vmul.f32 %v9824, 1.442695
        %v9854 = vpow.pop %v9853
        %v9855 = vmul.f32 %v9825, 1.442695
        %v9856 = vpow.pop %v9855
        %v9857 = vmul.f32 %v9826, 1.442695
        %v9858 = vpow.pop %v9857
        %v9859 = vmul.f32 %v9827, 1.442695
        %v9860 = vpow.pop %v9859
        %v9861 = vmul.f32 %v9828, 1.442695
        %v9862 = vpow.pop %v9861
        %v9863 = vmul.f32 %v9829, 1.442695
        %v9864 = vpow.pop %v9863
        %v9865 = vmul.f32 %v9830, 1.442695
        %v9866 = vpow.pop %v9865
        %v9867 = vmul.f32 %v9831, 1.442695
        %v9868 = vpow.pop %v9867
        %v9869 = vmul.f32 %v9832, 1.442695
        %v9870 = vpow.pop %v9869
        %v9871 = vmul.f32 %v9833, 1.442695
        %v9872 = vpow.pop %v9871
        %v9873 = vmul.f32 %v9834, 1.442695
        %v9874 = vpow.pop %v9873
        %v9875 = vsel %vm604, %v9836, 0.0
        %9876 = vadd.xlane.f32.xlu0 %v9875
        %v9877 = vpop.xlane.xlu0 %9876
        %v9878 = vsel %vm604, %v9838, 0.0
        %9879 = vadd.xlane.f32.xlu0 %v9878
        %v9880 = vpop.xlane.xlu0 %9879
        %v9881 = vsel %vm604, %v9840, 0.0
        %9882 = vadd.xlane.f32.xlu0 %v9881
        %v9883 = vpop.xlane.xlu0 %9882
        %v9884 = vsel %vm604, %v9842, 0.0
        %9885 = vadd.xlane.f32.xlu0 %v9884
        %v9886 = vpop.xlane.xlu0 %9885
        %v9887 = vsel %vm604, %v9844, 0.0
        %9888 = vadd.xlane.f32.xlu0 %v9887
        %v9889 = vpop.xlane.xlu0 %9888
        %v9890 = vsel %vm604, %v9846, 0.0
        %9891 = vadd.xlane.f32.xlu0 %v9890
        %v9892 = vpop.xlane.xlu0 %9891
        %v9893 = vsel %vm604, %v9848, 0.0
        %9894 = vadd.xlane.f32.xlu0 %v9893
        %v9895 = vpop.xlane.xlu0 %9894
        %v9896 = vsel %vm604, %v9850, 0.0
        %9897 = vadd.xlane.f32.xlu0 %v9896
        %v9898 = vpop.xlane.xlu0 %9897
        %v9899 = vsel %vm604, %v9852, 0.0
        %9900 = vadd.xlane.f32.xlu0 %v9899
        %v9901 = vpop.xlane.xlu0 %9900
        %v9902 = vsel %vm604, %v9854, 0.0
        %9903 = vadd.xlane.f32.xlu0 %v9902
        %v9904 = vpop.xlane.xlu0 %9903
        %v9905 = vsel %vm604, %v9856, 0.0
        %9906 = vadd.xlane.f32.xlu0 %v9905
        %v9907 = vpop.xlane.xlu0 %9906
        %v9908 = vsel %vm604, %v9858, 0.0
        %9909 = vadd.xlane.f32.xlu0 %v9908
        %v9910 = vpop.xlane.xlu0 %9909
        %v9911 = vsel %vm604, %v9860, 0.0
        %9912 = vadd.xlane.f32.xlu0 %v9911
        %v9913 = vpop.xlane.xlu0 %9912
        %v9914 = vsel %vm604, %v9862, 0.0
        %9915 = vadd.xlane.f32.xlu0 %v9914
        %v9916 = vpop.xlane.xlu0 %9915
        %v9917 = vsel %vm604, %v9864, 0.0
        %9918 = vadd.xlane.f32.xlu0 %v9917
        %v9919 = vpop.xlane.xlu0 %9918
        %v9920 = vsel %vm604, %v9866, 0.0
        %9921 = vadd.xlane.f32.xlu0 %v9920
        %v9922 = vpop.xlane.xlu0 %9921
        %v9923 = vsel %vm604, %v9868, 0.0
        %9924 = vadd.xlane.f32.xlu0 %v9923
        %v9925 = vpop.xlane.xlu0 %9924
        %v9926 = vsel %vm604, %v9870, 0.0
        %9927 = vadd.xlane.f32.xlu0 %v9926
        %v9928 = vpop.xlane.xlu0 %9927
        %v9929 = vsel %vm604, %v9872, 0.0
        %9930 = vadd.xlane.f32.xlu0 %v9929
        %v9931 = vpop.xlane.xlu0 %9930
        %v9932 = vsel %vm604, %v9874, 0.0
        %9933 = vadd.xlane.f32.xlu0 %v9932
        %v9934 = vpop.xlane.xlu0 %9933
        %v9935 = vrcp.pop %v9877
        %v9936 = vrcp.pop %v9880
        %v9937 = vrcp.pop %v9883
        %v9938 = vrcp.pop %v9886
        %v9939 = vrcp.pop %v9889
        %v9940 = vrcp.pop %v9892
        %v9941 = vrcp.pop %v9895
        %v9942 = vrcp.pop %v9898
        %v9943 = vrcp.pop %v9901
        %v9944 = vrcp.pop %v9904
        %v9945 = vrcp.pop %v9907
        %v9946 = vrcp.pop %v9910
        %v9947 = vrcp.pop %v9913
        %v9948 = vrcp.pop %v9916
        %v9949 = vrcp.pop %v9919
        %v9950 = vrcp.pop %v9922
        %v9951 = vrcp.pop %v9925
        %v9952 = vrcp.pop %v9928
        %v9953 = vrcp.pop %v9931
        %v9954 = vrcp.pop %v9934
        %v9955 = vmul.f32 %v9836, %v9935
        %v9956 = vmul.f32 %v9838, %v9936
        %v9957 = vmul.f32 %v9840, %v9937
        %v9958 = vmul.f32 %v9842, %v9938
        %v9959 = vmul.f32 %v9844, %v9939
        %v9960 = vmul.f32 %v9846, %v9940
        %v9961 = vmul.f32 %v9848, %v9941
        %v9962 = vmul.f32 %v9850, %v9942
        %v9963 = vmul.f32 %v9852, %v9943
        %v9964 = vmul.f32 %v9854, %v9944
        %v9965 = vmul.f32 %v9856, %v9945
        %v9966 = vmul.f32 %v9858, %v9946
        %v9967 = vmul.f32 %v9860, %v9947
        %v9968 = vmul.f32 %v9862, %v9948
        %v9969 = vmul.f32 %v9864, %v9949
        %v9970 = vmul.f32 %v9866, %v9950
        %v9971 = vmul.f32 %v9868, %v9951
        %v9972 = vmul.f32 %v9870, %v9952
        %v9973 = vmul.f32 %v9872, %v9953
        %v9974 = vmul.f32 %v9874, %v9954
        %v9975 = vpack.c.bf16 %v9955, %v9955
        %v9976 = vpack.c.bf16 %v9956, %v9956
        %v9977 = vpack.c.bf16 %v9957, %v9957
        %v9978 = vpack.c.bf16 %v9958, %v9958
        %v9979 = vpack.c.bf16 %v9959, %v9959
        %v9980 = vpack.c.bf16 %v9960, %v9960
        %v9981 = vpack.c.bf16 %v9961, %v9961
        %v9982 = vpack.c.bf16 %v9962, %v9962
        %v9983 = vpack.c.bf16 %v9963, %v9963
        %v9984 = vpack.c.bf16 %v9964, %v9964
        %v9985 = vpack.c.bf16 %v9965, %v9965
        %v9986 = vpack.c.bf16 %v9966, %v9966
        %v9987 = vpack.c.bf16 %v9967, %v9967
        %v9988 = vpack.c.bf16 %v9968, %v9968
        %v9989 = vpack.c.bf16 %v9969, %v9969
        %v9990 = vpack.c.bf16 %v9970, %v9970
        %v9991 = vpack.c.bf16 %v9971, %v9971
        %v9992 = vpack.c.bf16 %v9972, %v9972
        %v9993 = vpack.c.bf16 %v9973, %v9973
        %v9994 = vpack.c.bf16 %v9974, %v9974
        %9995 = vrot.lane.b32.xlu0 %v8757, 64
        %v9996 = vpop.permute.xlu0 %9995
        %v9998 = vsel %vm604, %v9975, 0
        %v10001 = vsel %vm2161, %v9996, 0
        %10003 = vmatpush.bf16.msra.mxu0 0
        %10004 = vmatpush.bf16.msra.mxu0 0
        %10005 = vmatpush.bf16.msra.mxu0 0
        %10006 = vmatpush.bf16.msra.mxu0 0
        %10007 = vmatpush.bf16.msra.mxu0 0
        %10008 = vmatpush.bf16.msra.mxu0 0
        %10009 = vmatpush.bf16.msra.mxu0 0
        %10010 = vmatpush.bf16.msra.mxu0 %v10001
        %10011 = vmatmul.bf16.gmra.mxu0 %v9998
        %v10012 = vpop.f32.mrf.mxu0
        %v10013 = vadd.f32 0.0, %v10012
        %v10014 = vpop.f32.mrf.mxu0
        %10015 = vdwg.mxu0
        %10016 = vrot.lane.b32.xlu0 %v8781, 64
        %v10017 = vpop.permute.xlu0 %10016
        %v10019 = vsel %vm604, %v9976, 0
        %v10022 = vsel %vm2161, %v10017, 0
        %10024 = vmatpush.bf16.msra.mxu0 0
        %10025 = vmatpush.bf16.msra.mxu0 0
        %10026 = vmatpush.bf16.msra.mxu0 0
        %10027 = vmatpush.bf16.msra.mxu0 0
        %10028 = vmatpush.bf16.msra.mxu0 0
        %10029 = vmatpush.bf16.msra.mxu0 0
        %10030 = vmatpush.bf16.msra.mxu0 0
        %10031 = vmatpush.bf16.msra.mxu0 %v10022
        %10032 = vmatmul.bf16.gmra.mxu0 %v10019
        %v10033 = vpop.f32.mrf.mxu0
        %v10034 = vadd.f32 0.0, %v10033
        %v10035 = vpop.f32.mrf.mxu0
        %10036 = vdwg.mxu0
        %10037 = vrot.lane.b32.xlu0 %v8805, 64
        %v10038 = vpop.permute.xlu0 %10037
        %v10040 = vsel %vm604, %v9977, 0
        %v10043 = vsel %vm2161, %v10038, 0
        %10045 = vmatpush.bf16.msra.mxu0 0
        %10046 = vmatpush.bf16.msra.mxu0 0
        %10047 = vmatpush.bf16.msra.mxu0 0
        %10048 = vmatpush.bf16.msra.mxu0 0
        %10049 = vmatpush.bf16.msra.mxu0 0
        %10050 = vmatpush.bf16.msra.mxu0 0
        %10051 = vmatpush.bf16.msra.mxu0 0
        %10052 = vmatpush.bf16.msra.mxu0 %v10043
        %10053 = vmatmul.bf16.gmra.mxu0 %v10040
        %v10054 = vpop.f32.mrf.mxu0
        %v10055 = vadd.f32 0.0, %v10054
        %v10056 = vpop.f32.mrf.mxu0
        %10057 = vdwg.mxu0
        %10058 = vrot.lane.b32.xlu0 %v8829, 64
        %v10059 = vpop.permute.xlu0 %10058
        %v10061 = vsel %vm604, %v9978, 0
        %v10064 = vsel %vm2161, %v10059, 0
        %10066 = vmatpush.bf16.msra.mxu0 0
        %10067 = vmatpush.bf16.msra.mxu0 0
        %10068 = vmatpush.bf16.msra.mxu0 0
        %10069 = vmatpush.bf16.msra.mxu0 0
        %10070 = vmatpush.bf16.msra.mxu0 0
        %10071 = vmatpush.bf16.msra.mxu0 0
        %10072 = vmatpush.bf16.msra.mxu0 0
        %10073 = vmatpush.bf16.msra.mxu0 %v10064
        %10074 = vmatmul.bf16.gmra.mxu0 %v10061
        %v10075 = vpop.f32.mrf.mxu0
        %v10076 = vadd.f32 0.0, %v10075
        %v10077 = vpop.f32.mrf.mxu0
        %10078 = vdwg.mxu0
        %10079 = vrot.lane.b32.xlu0 %v8853, 64
        %v10080 = vpop.permute.xlu0 %10079
        %v10082 = vsel %vm604, %v9979, 0
        %v10085 = vsel %vm2161, %v10080, 0
        %10087 = vmatpush.bf16.msra.mxu0 0
        %10088 = vmatpush.bf16.msra.mxu0 0
        %10089 = vmatpush.bf16.msra.mxu0 0
        %10090 = vmatpush.bf16.msra.mxu0 0
        %10091 = vmatpush.bf16.msra.mxu0 0
        %10092 = vmatpush.bf16.msra.mxu0 0
        %10093 = vmatpush.bf16.msra.mxu0 0
        %10094 = vmatpush.bf16.msra.mxu0 %v10085
        %10095 = vmatmul.bf16.gmra.mxu0 %v10082
        %v10096 = vpop.f32.mrf.mxu0
        %v10097 = vadd.f32 0.0, %v10096
        %v10098 = vpop.f32.mrf.mxu0
        %10099 = vdwg.mxu0
        %10100 = vrot.lane.b32.xlu0 %v8877, 64
        %v10101 = vpop.permute.xlu0 %10100
        %v10103 = vsel %vm604, %v9980, 0
        %v10106 = vsel %vm2161, %v10101, 0
        %10108 = vmatpush.bf16.msra.mxu0 0
        %10109 = vmatpush.bf16.msra.mxu0 0
        %10110 = vmatpush.bf16.msra.mxu0 0
        %10111 = vmatpush.bf16.msra.mxu0 0
        %10112 = vmatpush.bf16.msra.mxu0 0
        %10113 = vmatpush.bf16.msra.mxu0 0
        %10114 = vmatpush.bf16.msra.mxu0 0
        %10115 = vmatpush.bf16.msra.mxu0 %v10106
        %10116 = vmatmul.bf16.gmra.mxu0 %v10103
        %v10117 = vpop.f32.mrf.mxu0
        %v10118 = vadd.f32 0.0, %v10117
        %v10119 = vpop.f32.mrf.mxu0
        %10120 = vdwg.mxu0
        %10121 = vrot.lane.b32.xlu0 %v8901, 64
        %v10122 = vpop.permute.xlu0 %10121
        %v10124 = vsel %vm604, %v9981, 0
        %v10127 = vsel %vm2161, %v10122, 0
        %10129 = vmatpush.bf16.msra.mxu0 0
        %10130 = vmatpush.bf16.msra.mxu0 0
        %10131 = vmatpush.bf16.msra.mxu0 0
        %10132 = vmatpush.bf16.msra.mxu0 0
        %10133 = vmatpush.bf16.msra.mxu0 0
        %10134 = vmatpush.bf16.msra.mxu0 0
        %10135 = vmatpush.bf16.msra.mxu0 0
        %10136 = vmatpush.bf16.msra.mxu0 %v10127
        %10137 = vmatmul.bf16.gmra.mxu0 %v10124
        %v10138 = vpop.f32.mrf.mxu0
        %v10139 = vadd.f32 0.0, %v10138
        %v10140 = vpop.f32.mrf.mxu0
        %10141 = vdwg.mxu0
        %10142 = vrot.lane.b32.xlu0 %v8925, 64
        %v10143 = vpop.permute.xlu0 %10142
        %v10145 = vsel %vm604, %v9982, 0
        %v10148 = vsel %vm2161, %v10143, 0
        %10150 = vmatpush.bf16.msra.mxu0 0
        %10151 = vmatpush.bf16.msra.mxu0 0
        %10152 = vmatpush.bf16.msra.mxu0 0
        %10153 = vmatpush.bf16.msra.mxu0 0
        %10154 = vmatpush.bf16.msra.mxu0 0
        %10155 = vmatpush.bf16.msra.mxu0 0
        %10156 = vmatpush.bf16.msra.mxu0 0
        %10157 = vmatpush.bf16.msra.mxu0 %v10148
        %10158 = vmatmul.bf16.gmra.mxu0 %v10145
        %v10159 = vpop.f32.mrf.mxu0
        %v10160 = vadd.f32 0.0, %v10159
        %v10161 = vpop.f32.mrf.mxu0
        %10162 = vdwg.mxu0
        %10163 = vrot.lane.b32.xlu0 %v8949, 64
        %v10164 = vpop.permute.xlu0 %10163
        %v10166 = vsel %vm604, %v9983, 0
        %v10169 = vsel %vm2161, %v10164, 0
        %10171 = vmatpush.bf16.msra.mxu0 0
        %10172 = vmatpush.bf16.msra.mxu0 0
        %10173 = vmatpush.bf16.msra.mxu0 0
        %10174 = vmatpush.bf16.msra.mxu0 0
        %10175 = vmatpush.bf16.msra.mxu0 0
        %10176 = vmatpush.bf16.msra.mxu0 0
        %10177 = vmatpush.bf16.msra.mxu0 0
        %10178 = vmatpush.bf16.msra.mxu0 %v10169
        %10179 = vmatmul.bf16.gmra.mxu0 %v10166
        %v10180 = vpop.f32.mrf.mxu0
        %v10181 = vadd.f32 0.0, %v10180
        %v10182 = vpop.f32.mrf.mxu0
        %10183 = vdwg.mxu0
        %10184 = vrot.lane.b32.xlu0 %v8973, 64
        %v10185 = vpop.permute.xlu0 %10184
        %v10187 = vsel %vm604, %v9984, 0
        %v10190 = vsel %vm2161, %v10185, 0
        %10192 = vmatpush.bf16.msra.mxu0 0
        %10193 = vmatpush.bf16.msra.mxu0 0
        %10194 = vmatpush.bf16.msra.mxu0 0
        %10195 = vmatpush.bf16.msra.mxu0 0
        %10196 = vmatpush.bf16.msra.mxu0 0
        %10197 = vmatpush.bf16.msra.mxu0 0
        %10198 = vmatpush.bf16.msra.mxu0 0
        %10199 = vmatpush.bf16.msra.mxu0 %v10190
        %10200 = vmatmul.bf16.gmra.mxu0 %v10187
        %v10201 = vpop.f32.mrf.mxu0
        %v10202 = vadd.f32 0.0, %v10201
        %v10203 = vpop.f32.mrf.mxu0
        %10204 = vdwg.mxu0
        %10205 = vrot.lane.b32.xlu0 %v8997, 64
        %v10206 = vpop.permute.xlu0 %10205
        %v10208 = vsel %vm604, %v9985, 0
        %v10211 = vsel %vm2161, %v10206, 0
        %10213 = vmatpush.bf16.msra.mxu0 0
        %10214 = vmatpush.bf16.msra.mxu0 0
        %10215 = vmatpush.bf16.msra.mxu0 0
        %10216 = vmatpush.bf16.msra.mxu0 0
        %10217 = vmatpush.bf16.msra.mxu0 0
        %10218 = vmatpush.bf16.msra.mxu0 0
        %10219 = vmatpush.bf16.msra.mxu0 0
        %10220 = vmatpush.bf16.msra.mxu0 %v10211
        %10221 = vmatmul.bf16.gmra.mxu0 %v10208
        %v10222 = vpop.f32.mrf.mxu0
        %v10223 = vadd.f32 0.0, %v10222
        %v10224 = vpop.f32.mrf.mxu0
        %10225 = vdwg.mxu0
        %10226 = vrot.lane.b32.xlu0 %v9021, 64
        %v10227 = vpop.permute.xlu0 %10226
        %v10229 = vsel %vm604, %v9986, 0
        %v10232 = vsel %vm2161, %v10227, 0
        %10234 = vmatpush.bf16.msra.mxu0 0
        %10235 = vmatpush.bf16.msra.mxu0 0
        %10236 = vmatpush.bf16.msra.mxu0 0
        %10237 = vmatpush.bf16.msra.mxu0 0
        %10238 = vmatpush.bf16.msra.mxu0 0
        %10239 = vmatpush.bf16.msra.mxu0 0
        %10240 = vmatpush.bf16.msra.mxu0 0
        %10241 = vmatpush.bf16.msra.mxu0 %v10232
        %10242 = vmatmul.bf16.gmra.mxu0 %v10229
        %v10243 = vpop.f32.mrf.mxu0
        %v10244 = vadd.f32 0.0, %v10243
        %v10245 = vpop.f32.mrf.mxu0
        %10246 = vdwg.mxu0
        %10247 = vrot.lane.b32.xlu0 %v9045, 64
        %v10248 = vpop.permute.xlu0 %10247
        %v10250 = vsel %vm604, %v9987, 0
        %v10253 = vsel %vm2161, %v10248, 0
        %10255 = vmatpush.bf16.msra.mxu0 0
        %10256 = vmatpush.bf16.msra.mxu0 0
        %10257 = vmatpush.bf16.msra.mxu0 0
        %10258 = vmatpush.bf16.msra.mxu0 0
        %10259 = vmatpush.bf16.msra.mxu0 0
        %10260 = vmatpush.bf16.msra.mxu0 0
        %10261 = vmatpush.bf16.msra.mxu0 0
        %10262 = vmatpush.bf16.msra.mxu0 %v10253
        %10263 = vmatmul.bf16.gmra.mxu0 %v10250
        %v10264 = vpop.f32.mrf.mxu0
        %v10265 = vadd.f32 0.0, %v10264
        %v10266 = vpop.f32.mrf.mxu0
        %10267 = vdwg.mxu0
        %10268 = vrot.lane.b32.xlu0 %v9069, 64
        %v10269 = vpop.permute.xlu0 %10268
        %v10271 = vsel %vm604, %v9988, 0
        %v10274 = vsel %vm2161, %v10269, 0
        %10276 = vmatpush.bf16.msra.mxu0 0
        %10277 = vmatpush.bf16.msra.mxu0 0
        %10278 = vmatpush.bf16.msra.mxu0 0
        %10279 = vmatpush.bf16.msra.mxu0 0
        %10280 = vmatpush.bf16.msra.mxu0 0
        %10281 = vmatpush.bf16.msra.mxu0 0
        %10282 = vmatpush.bf16.msra.mxu0 0
        %10283 = vmatpush.bf16.msra.mxu0 %v10274
        %10284 = vmatmul.bf16.gmra.mxu0 %v10271
        %v10285 = vpop.f32.mrf.mxu0
        %v10286 = vadd.f32 0.0, %v10285
        %v10287 = vpop.f32.mrf.mxu0
        %10288 = vdwg.mxu0
        %10289 = vrot.lane.b32.xlu0 %v9093, 64
        %v10290 = vpop.permute.xlu0 %10289
        %v10292 = vsel %vm604, %v9989, 0
        %v10295 = vsel %vm2161, %v10290, 0
        %10297 = vmatpush.bf16.msra.mxu0 0
        %10298 = vmatpush.bf16.msra.mxu0 0
        %10299 = vmatpush.bf16.msra.mxu0 0
        %10300 = vmatpush.bf16.msra.mxu0 0
        %10301 = vmatpush.bf16.msra.mxu0 0
        %10302 = vmatpush.bf16.msra.mxu0 0
        %10303 = vmatpush.bf16.msra.mxu0 0
        %10304 = vmatpush.bf16.msra.mxu0 %v10295
        %10305 = vmatmul.bf16.gmra.mxu0 %v10292
        %v10306 = vpop.f32.mrf.mxu0
        %v10307 = vadd.f32 0.0, %v10306
        %v10308 = vpop.f32.mrf.mxu0
        %10309 = vdwg.mxu0
        %10310 = vrot.lane.b32.xlu0 %v9117, 64
        %v10311 = vpop.permute.xlu0 %10310
        %v10313 = vsel %vm604, %v9990, 0
        %v10316 = vsel %vm2161, %v10311, 0
        %10318 = vmatpush.bf16.msra.mxu0 0
        %10319 = vmatpush.bf16.msra.mxu0 0
        %10320 = vmatpush.bf16.msra.mxu0 0
        %10321 = vmatpush.bf16.msra.mxu0 0
        %10322 = vmatpush.bf16.msra.mxu0 0
        %10323 = vmatpush.bf16.msra.mxu0 0
        %10324 = vmatpush.bf16.msra.mxu0 0
        %10325 = vmatpush.bf16.msra.mxu0 %v10316
        %10326 = vmatmul.bf16.gmra.mxu0 %v10313
        %v10327 = vpop.f32.mrf.mxu0
        %v10328 = vadd.f32 0.0, %v10327
        %v10329 = vpop.f32.mrf.mxu0
        %10330 = vdwg.mxu0
        %10331 = vrot.lane.b32.xlu0 %v9141, 64
        %v10332 = vpop.permute.xlu0 %10331
        %v10334 = vsel %vm604, %v9991, 0
        %v10337 = vsel %vm2161, %v10332, 0
        %10339 = vmatpush.bf16.msra.mxu0 0
        %10340 = vmatpush.bf16.msra.mxu0 0
        %10341 = vmatpush.bf16.msra.mxu0 0
        %10342 = vmatpush.bf16.msra.mxu0 0
        %10343 = vmatpush.bf16.msra.mxu0 0
        %10344 = vmatpush.bf16.msra.mxu0 0
        %10345 = vmatpush.bf16.msra.mxu0 0
        %10346 = vmatpush.bf16.msra.mxu0 %v10337
        %10347 = vmatmul.bf16.gmra.mxu0 %v10334
        %v10348 = vpop.f32.mrf.mxu0
        %v10349 = vadd.f32 0.0, %v10348
        %v10350 = vpop.f32.mrf.mxu0
        %10351 = vdwg.mxu0
        %10352 = vrot.lane.b32.xlu0 %v9165, 64
        %v10353 = vpop.permute.xlu0 %10352
        %v10355 = vsel %vm604, %v9992, 0
        %v10358 = vsel %vm2161, %v10353, 0
        %10360 = vmatpush.bf16.msra.mxu0 0
        %10361 = vmatpush.bf16.msra.mxu0 0
        %10362 = vmatpush.bf16.msra.mxu0 0
        %10363 = vmatpush.bf16.msra.mxu0 0
        %10364 = vmatpush.bf16.msra.mxu0 0
        %10365 = vmatpush.bf16.msra.mxu0 0
        %10366 = vmatpush.bf16.msra.mxu0 0
        %10367 = vmatpush.bf16.msra.mxu0 %v10358
        %10368 = vmatmul.bf16.gmra.mxu0 %v10355
        %v10369 = vpop.f32.mrf.mxu0
        %v10370 = vadd.f32 0.0, %v10369
        %v10371 = vpop.f32.mrf.mxu0
        %10372 = vdwg.mxu0
        %10373 = vrot.lane.b32.xlu0 %v9189, 64
        %v10374 = vpop.permute.xlu0 %10373
        %v10376 = vsel %vm604, %v9993, 0
        %v10379 = vsel %vm2161, %v10374, 0
        %10381 = vmatpush.bf16.msra.mxu0 0
        %10382 = vmatpush.bf16.msra.mxu0 0
        %10383 = vmatpush.bf16.msra.mxu0 0
        %10384 = vmatpush.bf16.msra.mxu0 0
        %10385 = vmatpush.bf16.msra.mxu0 0
        %10386 = vmatpush.bf16.msra.mxu0 0
        %10387 = vmatpush.bf16.msra.mxu0 0
        %10388 = vmatpush.bf16.msra.mxu0 %v10379
        %10389 = vmatmul.bf16.gmra.mxu0 %v10376
        %v10390 = vpop.f32.mrf.mxu0
        %v10391 = vadd.f32 0.0, %v10390
        %v10392 = vpop.f32.mrf.mxu0
        %10393 = vdwg.mxu0
        %10394 = vrot.lane.b32.xlu0 %v9213, 64
        %v10395 = vpop.permute.xlu0 %10394
        %v10397 = vsel %vm604, %v9994, 0
        %v10400 = vsel %vm2161, %v10395, 0
        %10402 = vmatpush.bf16.msra.mxu0 0
        %10403 = vmatpush.bf16.msra.mxu0 0
        %10404 = vmatpush.bf16.msra.mxu0 0
        %10405 = vmatpush.bf16.msra.mxu0 0
        %10406 = vmatpush.bf16.msra.mxu0 0
        %10407 = vmatpush.bf16.msra.mxu0 0
        %10408 = vmatpush.bf16.msra.mxu0 0
        %10409 = vmatpush.bf16.msra.mxu0 %v10400
        %10410 = vmatmul.bf16.gmra.mxu0 %v10397
        %v10411 = vpop.f32.mrf.mxu0
        %v10412 = vadd.f32 0.0, %v10411
        %v10413 = vpop.f32.mrf.mxu0
        %10414 = vdwg.mxu0
        %v10415 = vadd.f32 %v9235, %v10013
        %v10416 = vadd.f32 %v9236, %v10034
        %v10417 = vadd.f32 %v9237, %v10055
        %v10418 = vadd.f32 %v9238, %v10076
        %v10419 = vadd.f32 %v9239, %v10097
        %v10420 = vadd.f32 %v9240, %v10118
        %v10421 = vadd.f32 %v9241, %v10139
        %v10422 = vadd.f32 %v9242, %v10160
        %v10423 = vadd.f32 %v9243, %v10181
        %v10424 = vadd.f32 %v9244, %v10202
        %v10425 = vadd.f32 %v9245, %v10223
        %v10426 = vadd.f32 %v9246, %v10244
        %v10427 = vadd.f32 %v9247, %v10265
        %v10428 = vadd.f32 %v9248, %v10286
        %v10429 = vadd.f32 %v9249, %v10307
        %v10430 = vadd.f32 %v9250, %v10328
        %v10431 = vadd.f32 %v9251, %v10349
        %v10432 = vadd.f32 %v9252, %v10370
        %v10433 = vadd.f32 %v9253, %v10391
        %v10434 = vadd.f32 %v9254, %v10412
        %s10435 = sld [smem:[#allocation3 + $0x1]]
        %s10436 = scalar_lea.vmem %s3, 1
        %v10437 = vld [vmem:[%s10436] sm:$0x1]
        %v10439 = vperm.slane %v10437, 0
        %v10441 = vadd.f32 %v10415, %v10439
        %v10442 = vadd.f32 %v10416, %v10439
        %v10443 = vadd.f32 %v10417, %v10439
        %v10444 = vadd.f32 %v10418, %v10439
        %v10445 = vadd.f32 %v10419, %v10439
        %v10446 = vadd.f32 %v10420, %v10439
        %v10447 = vadd.f32 %v10421, %v10439
        %v10448 = vadd.f32 %v10422, %v10439
        %v10449 = vadd.f32 %v10423, %v10439
        %v10450 = vadd.f32 %v10424, %v10439
        %v10451 = vadd.f32 %v10425, %v10439
        %v10452 = vadd.f32 %v10426, %v10439
        %v10453 = vadd.f32 %v10427, %v10439
        %v10454 = vadd.f32 %v10428, %v10439
        %v10455 = vadd.f32 %v10429, %v10439
        %v10456 = vadd.f32 %v10430, %v10439
        %v10457 = vadd.f32 %v10431, %v10439
        %v10458 = vadd.f32 %v10432, %v10439
        %v10459 = vadd.f32 %v10433, %v10439
        %v10460 = vadd.f32 %v10434, %v10439
        %v10461 = vstv %s10435
        %v10462 = vmul.f32 %v10461, %v10441
        %v10463 = vmul.f32 %v10461, %v10442
        %v10464 = vmul.f32 %v10461, %v10443
        %v10465 = vmul.f32 %v10461, %v10444
        %v10466 = vmul.f32 %v10461, %v10445
        %v10467 = vmul.f32 %v10461, %v10446
        %v10468 = vmul.f32 %v10461, %v10447
        %v10469 = vmul.f32 %v10461, %v10448
        %v10470 = vmul.f32 %v10461, %v10449
        %v10471 = vmul.f32 %v10461, %v10450
        %v10472 = vmul.f32 %v10461, %v10451
        %v10473 = vmul.f32 %v10461, %v10452
        %v10474 = vmul.f32 %v10461, %v10453
        %v10475 = vmul.f32 %v10461, %v10454
        %v10476 = vmul.f32 %v10461, %v10455
        %v10477 = vmul.f32 %v10461, %v10456
        %v10478 = vmul.f32 %v10461, %v10457
        %v10479 = vmul.f32 %v10461, %v10458
        %v10480 = vmul.f32 %v10461, %v10459
        %v10481 = vmul.f32 %v10461, %v10460
        %v10482 = vadd.f32 %v5425, %v10462
        %v10483 = vadd.f32 %v5426, %v10463
        %v10484 = vadd.f32 %v5427, %v10464
        %v10485 = vadd.f32 %v5428, %v10465
        %v10486 = vadd.f32 %v5429, %v10466
        %v10487 = vadd.f32 %v5430, %v10467
        %v10488 = vadd.f32 %v5431, %v10468
        %v10489 = vadd.f32 %v5432, %v10469
        %v10490 = vadd.f32 %v5433, %v10470
        %v10491 = vadd.f32 %v5434, %v10471
        %v10492 = vadd.f32 %v5435, %v10472
        %v10493 = vadd.f32 %v5436, %v10473
        %v10494 = vadd.f32 %v5437, %v10474
        %v10495 = vadd.f32 %v5438, %v10475
        %v10496 = vadd.f32 %v5439, %v10476
        %v10497 = vadd.f32 %v5440, %v10477
        %v10498 = vadd.f32 %v5441, %v10478
        %v10499 = vadd.f32 %v5442, %v10479
        %v10500 = vadd.f32 %v5443, %v10480
        %v10501 = vadd.f32 %v5444, %v10481
        %v10502 = vsub.f32 %v10482, %v557
        %v10503 = vsub.f32 %v10483, %v558
        %v10504 = vsub.f32 %v10484, %v559
        %v10505 = vsub.f32 %v10485, %v560
        %v10506 = vsub.f32 %v10486, %v561
        %v10507 = vsub.f32 %v10487, %v562
        %v10508 = vsub.f32 %v10488, %v563
        %v10509 = vsub.f32 %v10489, %v564
        %v10510 = vsub.f32 %v10490, %v565
        %v10511 = vsub.f32 %v10491, %v566
        %v10512 = vsub.f32 %v10492, %v567
        %v10513 = vsub.f32 %v10493, %v568
        %v10514 = vsub.f32 %v10494, %v569
        %v10515 = vsub.f32 %v10495, %v570
        %v10516 = vsub.f32 %v10496, %v571
        %v10517 = vsub.f32 %v10497, %v572
        %v10518 = vsub.f32 %v10498, %v573
        %v10519 = vsub.f32 %v10499, %v574
        %v10520 = vsub.f32 %v10500, %v575
        %v10521 = vsub.f32 %v10501, %v576
        %v10522 = vmul.f32 %v10502, %v10502
        %v10523 = vmul.f32 %v10503, %v10503
        %v10524 = vmul.f32 %v10504, %v10504
        %v10525 = vmul.f32 %v10505, %v10505
        %v10526 = vmul.f32 %v10506, %v10506
        %v10527 = vmul.f32 %v10507, %v10507
        %v10528 = vmul.f32 %v10508, %v10508
        %v10529 = vmul.f32 %v10509, %v10509
        %v10530 = vmul.f32 %v10510, %v10510
        %v10531 = vmul.f32 %v10511, %v10511
        %v10532 = vmul.f32 %v10512, %v10512
        %v10533 = vmul.f32 %v10513, %v10513
        %v10534 = vmul.f32 %v10514, %v10514
        %v10535 = vmul.f32 %v10515, %v10515
        %v10536 = vmul.f32 %v10516, %v10516
        %v10537 = vmul.f32 %v10517, %v10517
        %v10538 = vmul.f32 %v10518, %v10518
        %v10539 = vmul.f32 %v10519, %v10519
        %v10540 = vmul.f32 %v10520, %v10520
        %v10541 = vmul.f32 %v10521, %v10521
        %v10542 = vld [vmem:[%s4] sm:$0x1]
        %v10544 = vperm.slane %v10542, 0
        %v10546 = vmul.f32 %v10522, %v10544
        %v10547 = vmul.f32 %v10523, %v10544
        %v10548 = vmul.f32 %v10524, %v10544
        %v10549 = vmul.f32 %v10525, %v10544
        %v10550 = vmul.f32 %v10526, %v10544
        %v10551 = vmul.f32 %v10527, %v10544
        %v10552 = vmul.f32 %v10528, %v10544
        %v10553 = vmul.f32 %v10529, %v10544
        %v10554 = vmul.f32 %v10530, %v10544
        %v10555 = vmul.f32 %v10531, %v10544
        %v10556 = vmul.f32 %v10532, %v10544
        %v10557 = vmul.f32 %v10533, %v10544
        %v10558 = vmul.f32 %v10534, %v10544
        %v10559 = vmul.f32 %v10535, %v10544
        %v10560 = vmul.f32 %v10536, %v10544
        %v10561 = vmul.f32 %v10537, %v10544
        %v10562 = vmul.f32 %v10538, %v10544
        %v10563 = vmul.f32 %v10539, %v10544
        %v10564 = vmul.f32 %v10540, %v10544
        %v10565 = vmul.f32 %v10541, %v10544
        %v10566 = vld [vmem:[%s6] sm:$0xff]
        %v10567 = vld [vmem:[%s6 + $0x8] sm:$0xff]
        %v10568 = vld [vmem:[%s6 + $0x10] sm:$0xff]
        %v10569 = vld [vmem:[%s6 + $0x18] sm:$0xff]
        %v10570 = vld [vmem:[%s6 + $0x20] sm:$0xf]
        %v10571 = vld [vmem:[%s6 + $0x28] sm:$0xf]
        %v10573 = vsel %vm408, %v10567, 0
        %v10576 = vsel %vm408, %v10569, 0
        %v10579 = vsel %vm408, %v10571, 0
        %10581 = vmatpush.msra.mxu0 %v10561
        %10582 = vmatpush.msra.mxu0 %v10560
        %10583 = vmatpush.msra.mxu0 %v10559
        %10584 = vmatpush.msra.mxu0 %v10558
        %10585 = vmatpush.msra.mxu0 %v10557
        %10586 = vmatpush.msra.mxu0 %v10556
        %10587 = vmatpush.msra.mxu0 %v10555
        %10588 = vmatpush.msra.mxu0 %v10554
        %10589 = vmatpush.msra.mxu0 %v10553
        %10590 = vmatpush.msra.mxu0 %v10552
        %10591 = vmatpush.msra.mxu0 %v10551
        %10592 = vmatpush.msra.mxu0 %v10550
        %10593 = vmatpush.msra.mxu0 %v10549
        %10594 = vmatpush.msra.mxu0 %v10548
        %10595 = vmatpush.msra.mxu0 %v10547
        %10596 = vmatpush.msra.mxu0 %v10546
        %10597 = vmatmul.f32.gmra.mxu0 %v10566
        %v10598 = vpop.f32.mrf.mxu0
        %v10599 = vadd.f32 0.0, %v10598
        %10600 = vmatmul.f32.gmra.mxu0 %v10568
        %v10601 = vpop.f32.mrf.mxu0
        %v10602 = vadd.f32 0.0, %v10601
        %10603 = vmatmul.f32.gmra.mxu0 %v10570
        %v10604 = vpop.f32.mrf.mxu0
        %v10605 = vadd.f32 0.0, %v10604
        %10606 = vdwg.mxu0
        %10607 = vmatpush.msra.mxu0 0.0
        %10608 = vmatpush.msra.mxu0 0.0
        %10609 = vmatpush.msra.mxu0 0.0
        %10610 = vmatpush.msra.mxu0 0.0
        %10611 = vmatpush.msra.mxu0 0.0
        %10612 = vmatpush.msra.mxu0 0.0
        %10613 = vmatpush.msra.mxu0 0.0
        %10614 = vmatpush.msra.mxu0 0.0
        %10615 = vmatpush.msra.mxu0 0.0
        %10616 = vmatpush.msra.mxu0 0.0
        %10617 = vmatpush.msra.mxu0 0.0
        %10618 = vmatpush.msra.mxu0 0.0
        %10619 = vmatpush.msra.mxu0 %v10565
        %10620 = vmatpush.msra.mxu0 %v10564
        %10621 = vmatpush.msra.mxu0 %v10563
        %10622 = vmatpush.msra.mxu0 %v10562
        %10623 = vmatmul.f32.gmra.mxu0 %v10573
        %v10624 = vpop.f32.mrf.mxu0
        %v10625 = vadd.f32 %v10599, %v10624
        %10626 = vmatmul.f32.gmra.mxu0 %v10576
        %v10627 = vpop.f32.mrf.mxu0
        %v10628 = vadd.f32 %v10602, %v10627
        %10629 = vmatmul.f32.gmra.mxu0 %v10579
        %v10630 = vpop.f32.mrf.mxu0
        %v10631 = vadd.f32 %v10605, %v10630
        %10632 = vdwg.mxu0
        %10633 = vxpose.xlu0.b32.start [1/16] %v10625, 128
        %10634 = vxpose.xlu0.b32.cont [2/16] %v10628, 128
        %10635 = vxpose.xlu0.b32.cont [3/16] %v10631, 128
        %10636 = vxpose.xlu0.b32.cont [4/16] 0.0, 128
        %10637 = vxpose.xlu0.b32.cont [5/16] 0.0, 128
        %10638 = vxpose.xlu0.b32.cont [6/16] 0.0, 128
        %10639 = vxpose.xlu0.b32.cont [7/16] 0.0, 128
        %10640 = vxpose.xlu0.b32.cont [8/16] 0.0, 128
        %10641 = vxpose.xlu0.b32.cont [9/16] 0.0, 128
        %10642 = vxpose.xlu0.b32.cont [10/16] 0.0, 128
        %10643 = vxpose.xlu0.b32.cont [11/16] 0.0, 128
        %10644 = vxpose.xlu0.b32.cont [12/16] 0.0, 128
        %10645 = vxpose.xlu0.b32.cont [13/16] 0.0, 128
        %10646 = vxpose.xlu0.b32.cont [14/16] 0.0, 128
        %10647 = vxpose.xlu0.b32.cont [15/16] 0.0, 128
        %10648 = vxpose.xlu0.b32.end [16/16] 0.0, 128
        %v10649 = vpop.trf.xlu0
        %v10650 = vpop.trf.xlu0
        %v10651 = vpop.trf.xlu0
        %v10652 = vpop.trf.xlu0
        %v10653 = vpop.trf.xlu0
        %v10654 = vpop.trf.xlu0
        %v10655 = vpop.trf.xlu0
        %v10656 = vpop.trf.xlu0
        %v10657 = vpop.trf.xlu0
        %v10658 = vpop.trf.xlu0
        %v10659 = vpop.trf.xlu0
        %v10660 = vpop.trf.xlu0
        %v10661 = vpop.trf.xlu0
        %v10662 = vpop.trf.xlu0
        %v10663 = vpop.trf.xlu0
        %v10664 = vpop.trf.xlu0
        %vm10665 = vcmask 162816
        %v10666 = vsel %vm10665, %v10649, 0.0
        %v10667 = vsel %vm10665, %v10650, 0.0
        %v10668 = vadd.f32 %v10666, %v10667
        %v10669 = vsel %vm10665, %v10651, 0.0
        %v10670 = vadd.f32 %v10668, %v10669
        %v10671 = vsel %vm10665, %v10652, 0.0
        %v10672 = vadd.f32 %v10670, %v10671
        %v10673 = vrot.slane %v10672, 4
        %v10674 = vadd.f32 %v10672, %v10673
        %v10675 = vrot.slane %v10674, 2
        %v10676 = vadd.f32 %v10674, %v10675
        %v10677 = vrot.slane %v10676, 1
        %v10678 = vadd.f32 %v10676, %v10677
        %s10679 = sld [smem:[#allocation2]]
        %v10680 = vstv %s10679
        %v10681 = vadd.f32 %v10678, %v10680
        %vm10682 = vcmask 155648
        %10683 = vst.msk [vmem:[%s345] sm:$0x1] %vm10682, %v10681
        %p10684 = scmp.lt.s32.totalorder %s22, 1
        %s10685 = scalar_select %p10684, %s22, 1
        %s10686 = scalar_lea.vmem %s9, %s10685
        // Predicated region
        $region61: #{gene_interaction_forward.1} parent=55 // pred_check
          %p10687 = pneg %p234
        $region62: #{gene_interaction_forward.1} parent=55 // pred_check_branch
          %10689 = sbr.rel (%p10687) target = $region64
        $region63: #{gene_interaction_forward.1} parent=55 // pred_region
          _
        $region64: #{gene_interaction_forward.1} parent=55 // pred_fallthru
          _
      $region56: #{gene_interaction_forward.1} parent=5 // pred_fallthru
        _
      %p10690 = scmp.le.s32.totalorder 2, %s17
      // Predicated region
      $region65: #{gene_interaction_forward.1} parent=5 // pred_check
        %p10691 = pneg %p10690
      $region66: #{gene_interaction_forward.1} parent=5 // pred_check_branch
        %10693 = sbr.rel (%p10691) target = $region68
      $region67: #{gene_interaction_forward.1} parent=5 // pred_region
        %s10694 = ssub.s32 %s17, 2
        // Predicated region
        $region69: #{gene_interaction_forward.1} parent=67 // pred_check
          %p10695 = pneg %p240
        $region70: #{gene_interaction_forward.1} parent=67 // pred_check_branch
          %10697 = sbr.rel (%p10695) target = $region72
        $region71: #{gene_interaction_forward.1} parent=67 // pred_region
          %p10698 = scmp.lt.s32.totalorder %s23, 1
          %s10699 = scalar_select %p10698, %s23, 1
          %s10700 = scalar_lea.vmem %s9, %s10699
        $region72: #{gene_interaction_forward.1} parent=67 // pred_fallthru
          _
      $region68: #{gene_interaction_forward.1} parent=5 // pred_fallthru
        _
    $region6: #{gene_interaction_forward.1} parent=1 // loop_footer
      %s21 = sadd.s32 1, %s17
    $region7: #{gene_interaction_forward.1} parent=1 // loop_footer_branch
      %16 = sbr.rel target = $region3
    $region8: #{gene_interaction_forward.1} parent=1 // loop_exit
      _
    %10701 = vsyncpa [#allocation4], 1
    %s10702 = scalar_lea.sflag [#allocation4], 1
    %10703 = vsyncpa %s10702, 1

</llo_original>
